<compile_context>
chip_gen: v7x
topology: tpu7x:2x2x1
jax: 0.10.0
libtpu: 0.0.40
codegen_flags: <defaults>
</compile_context>

<pallas_src>
import functools
import math

import jax
import jax.numpy as jnp
from jax import lax
from jax.experimental import pallas as pl
from jax.experimental.pallas import tpu as pltpu

VOCAB = 50257                   # real vocabulary size from the module
EMBED = 768
NUM_HEADS = 6
HEAD_DIM = EMBED // NUM_HEADS   # 128


# -------------- fused kernel: QKV projection + per-(batch, head) attention + output proj --------------
def _attn_kernel(batch, seq, hidden_ref, w_in_ref, b_in_ref, w_out_ref, b_out_ref,
                 out_ref, attn_ref):
    # hidden_ref: (B*S, E) f32 already gathered+summed embeddings.
    hidden = hidden_ref[...].astype(jnp.bfloat16)                              # (M, E)

    # QKV projection once over the flattened batch: bf16 operands, f32 accumulation.
    qkv = jnp.dot(hidden, w_in_ref[...],
                  preferred_element_type=jnp.float32) + b_in_ref[...]          # (M, 3E) f32

    scale = 1.0 / math.sqrt(HEAD_DIM)
    # Per-(batch, head) attention.  Head slices are multiples of 128 lanes and batch row
    # slices are multiples of 8 sublanes (f32), so all slicing is free layout plumbing.
    for b in range(batch):
        r = b * seq
        for h in range(NUM_HEADS):
            c = h * HEAD_DIM
            q = qkv[r:r + seq, c:c + HEAD_DIM].astype(jnp.bfloat16)                    # (S, Dh)
            k = qkv[r:r + seq, EMBED + c:EMBED + c + HEAD_DIM].astype(jnp.bfloat16)    # (S, Dh)
            v = qkv[r:r + seq, 2 * EMBED + c:2 * EMBED + c + HEAD_DIM].astype(jnp.bfloat16)
            scores = lax.dot_general(q, k, (((1,), (1,)), ((), ())),
                                     preferred_element_type=jnp.float32) * scale       # (S, S) f32
            m = jnp.max(scores, axis=-1, keepdims=True)
            p = jnp.exp(scores - m)                                                    # softmax f32
            l = jnp.sum(p, axis=-1, keepdims=True)
            p = p * pl.reciprocal(l, approx=True)
            # Write this head's output directly into its lane-aligned column slice.
            attn_ref[r:r + seq, c:c + HEAD_DIM] = jnp.dot(
                p.astype(jnp.bfloat16), v, preferred_element_type=jnp.float32)         # (S, Dh) f32

    # Output projection once over the flattened batch.
    out = jnp.dot(attn_ref[...].astype(jnp.bfloat16), w_out_ref[...],
                  preferred_element_type=jnp.float32) + b_out_ref[...]         # (M, E) f32
    out_ref[...] = out.astype(out_ref.dtype)


def model_forward(x, params):
    b, s = x.shape
    m = b * s

    # Embedding gather + sum in the XLA wrapper: only B*S rows of each table are read from HBM.
    # (pos_emb is indexed by token ids, faithfully replicating the source module.)
    hidden = (params["tok_emb"][x] + params["pos_emb"][x]).reshape(m, EMBED)   # (M, E) f32

    w_in = params["w_in_bf16"]          # pre-cast once at setup
    w_out = params["w_out_bf16"]
    b_in = params["b_in"]
    b_out = params["b_out"]

    kernel = functools.partial(_attn_kernel, b, s)

    flops = (2 * m * EMBED * (3 * EMBED)            # QKV projection
             + b * NUM_HEADS * 2 * (2 * s * s * HEAD_DIM)   # QK^T and PV
             + 2 * m * EMBED * EMBED)               # output projection
    bytes_accessed = (hidden.size * 4 + w_in.size * 2 + b_in.size * 4
                      + w_out.size * 2 + b_out.size * 4 + m * EMBED * 4)
    cost = pl.CostEstimate(flops=flops,
                           transcendentals=b * NUM_HEADS * s * s,
                           bytes_accessed=bytes_accessed)

    out_flat = pl.pallas_call(
        kernel,
        out_shape=jax.ShapeDtypeStruct((m, EMBED), jnp.float32),
        grid=(1,),                                  # single step: weights fetched once, no per-TC duplication
        in_specs=[
            pl.BlockSpec((m, EMBED), lambda i: (0, 0)),            # hidden (f32)
            pl.BlockSpec((EMBED, 3 * EMBED), lambda i: (0, 0)),    # w_in (bf16)
            pl.BlockSpec((1, 3 * EMBED), lambda i: (0, 0)),        # b_in (f32)
            pl.BlockSpec((EMBED, EMBED), lambda i: (0, 0)),        # w_out (bf16)
            pl.BlockSpec((1, EMBED), lambda i: (0, 0)),            # b_out (f32)
        ],
        out_specs=pl.BlockSpec((m, EMBED), lambda i: (0, 0)),
        scratch_shapes=[pltpu.VMEM((m, EMBED), jnp.float32)],      # per-head attention output slab
        compiler_params=pltpu.CompilerParams(
            dimension_semantics=("arbitrary",),
            vmem_limit_bytes=32 * 1024 * 1024,
        ),
        cost_estimate=cost,
    )(hidden, w_in, b_in, w_out, b_out)

    return out_flat.reshape(b, s, EMBED)


# ---------------- pure-JAX (f32) reference for correctness check ----------------
def reference_forward(x, params):
    hidden = params["tok_emb"][x] + params["pos_emb"][x]                   # (B, S, E)
    b, s, e = hidden.shape
    qkv = hidden.reshape(-1, e) @ params["w_in"] + params["b_in"]
    qkv = qkv.reshape(b, s, 3, NUM_HEADS, HEAD_DIM)
    q, k, v = (qkv[:, :, i].transpose(0, 2, 1, 3) for i in range(3))
    scores = jnp.einsum("bhqd,bhkd->bhqk", q, k) / math.sqrt(HEAD_DIM)
    p = jax.nn.softmax(scores, axis=-1)
    o = jnp.einsum("bhqk,bhkd->bhqd", p, v)
    o = o.transpose(0, 2, 1, 3).reshape(b * s, e)
    out = o @ params["w_out"] + params["b_out"]
    return out.reshape(b, s, e)


if __name__ == "__main__":
    key = jax.random.PRNGKey(0)
    k1, k2, k3, k4, k5, k6, kx = jax.random.split(key, 7)
    params = {
        "tok_emb": 0.02 * jax.random.normal(k1, (VOCAB, EMBED), jnp.float32),
        "pos_emb": 0.02 * jax.random.normal(k2, (VOCAB, EMBED), jnp.float32),
        "w_in":    0.02 * jax.random.normal(k3, (EMBED, 3 * EMBED), jnp.float32),
        "b_in":    0.02 * jax.random.normal(k4, (1, 3 * EMBED), jnp.float32),
        "w_out":   0.02 * jax.random.normal(k5, (EMBED, EMBED), jnp.float32),
        "b_out":   0.02 * jax.random.normal(k6, (1, EMBED), jnp.float32),
    }
    # Pre-cast the MXU weights to bf16 once (kernel inputs), keep f32 copies for the reference.
    params["w_in_bf16"] = params["w_in"].astype(jnp.bfloat16)
    params["w_out_bf16"] = params["w_out"].astype(jnp.bfloat16)

    B, S = 2, 8
    x = jax.random.randint(kx, (B, S), 0, VOCAB, dtype=jnp.int32)

    out = model_forward(x, params)
    jax.block_until_ready(out)

    ref = reference_forward(x, params)
    assert out.shape == (B, S, EMBED)
    # Kernel uses bf16 MXU operands (f32 accumulation); compare to the f32 reference with
    # correspondingly relaxed tolerances.
    assert jnp.allclose(out, ref, rtol=2e-2, atol=2e-3), "mismatch vs JAX reference"

    print("KERNEL_OK")
</pallas_src>

<mosaic_0001>
module attributes {stable_mosaic.version = 11 : i64} {
  func.func @_attn_kernel(%arg0: i32, %arg1: memref<16x768xf32, #tpu.memory_space<vmem>>, %arg2: memref<768x2304xbf16, #tpu.memory_space<vmem>>, %arg3: memref<1x2304xf32, #tpu.memory_space<vmem>>, %arg4: memref<768x768xbf16, #tpu.memory_space<vmem>>, %arg5: memref<1x768xf32, #tpu.memory_space<vmem>>, %arg6: memref<16x768xf32, #tpu.memory_space<vmem>>, %arg7: memref<16x768xf32, #tpu.memory_space<vmem>>) attributes {dimension_semantics = [#tpu.dimension_semantics<arbitrary>], iteration_bounds = array<i64: 1>, scalar_prefetch = 0 : i64, scratch_operands = 1 : i64, tpu.core_type = #tpu.core_type<tc>, window_params = [{pipeline_mode = #tpu.pipeline_mode<synchronous>, transform_indices = @transform_0, window_bounds = array<i64: 16, 768>}, {pipeline_mode = #tpu.pipeline_mode<synchronous>, transform_indices = @transform_1, window_bounds = array<i64: 768, 2304>}, {pipeline_mode = #tpu.pipeline_mode<synchronous>, transform_indices = @transform_2, window_bounds = array<i64: 1, 2304>}, {pipeline_mode = #tpu.pipeline_mode<synchronous>, transform_indices = @transform_3, window_bounds = array<i64: 768, 768>}, {pipeline_mode = #tpu.pipeline_mode<synchronous>, transform_indices = @transform_4, window_bounds = array<i64: 1, 768>}, {pipeline_mode = #tpu.pipeline_mode<synchronous>, transform_indices = @transform_5, window_bounds = array<i64: 16, 768>}]} {
    %c0 = arith.constant 0 : index
    %c0_0 = arith.constant 0 : index
    %0 = vector.load %arg1[%c0, %c0_0] : memref<16x768xf32, #tpu.memory_space<vmem>>, vector<16x768xf32>
    %1 = arith.truncf %0 : vector<16x768xf32> to vector<16x768xbf16>
    %c0_1 = arith.constant 0 : index
    %c0_2 = arith.constant 0 : index
    %2 = vector.load %arg2[%c0_1, %c0_2] : memref<768x2304xbf16, #tpu.memory_space<vmem>>, vector<768x2304xbf16>
    %cst = arith.constant dense<0.000000e+00> : vector<16x2304xf32>
    %3 = tpu.matmul %1, %2, %cst {dimension_numbers = #tpu.dot_dimension_numbers<[1], [0], [0], [1], [0, 0, 1, 1], [], []>} : vector<16x768xbf16>, vector<768x2304xbf16>, vector<16x2304xf32> -> vector<16x2304xf32>
    %c0_3 = arith.constant 0 : index
    %c0_4 = arith.constant 0 : index
    %4 = vector.load %arg3[%c0_3, %c0_4] : memref<1x2304xf32, #tpu.memory_space<vmem>>, vector<1x2304xf32>
    %5 = vector.broadcast %4 : vector<1x2304xf32> to vector<16x2304xf32>
    %6 = arith.addf %3, %5 : vector<16x2304xf32>
    %7 = vector.extract_strided_slice %6 {offsets = [0, 0], sizes = [8, 128], strides = [1, 1]} : vector<16x2304xf32> to vector<8x128xf32>
    %8 = arith.truncf %7 : vector<8x128xf32> to vector<8x128xbf16>
    %9 = vector.extract_strided_slice %6 {offsets = [0, 768], sizes = [8, 128], strides = [1, 1]} : vector<16x2304xf32> to vector<8x128xf32>
    %10 = arith.truncf %9 : vector<8x128xf32> to vector<8x128xbf16>
    %11 = vector.extract_strided_slice %6 {offsets = [0, 1536], sizes = [8, 128], strides = [1, 1]} : vector<16x2304xf32> to vector<8x128xf32>
    %12 = arith.truncf %11 : vector<8x128xf32> to vector<8x128xbf16>
    %cst_5 = arith.constant dense<0.000000e+00> : vector<8x8xf32>
    %13 = tpu.matmul %8, %10, %cst_5 {dimension_numbers = #tpu.dot_dimension_numbers<[1], [1], [0], [0], [0, 0, 1, 0], [], []>} : vector<8x128xbf16>, vector<8x128xbf16>, vector<8x8xf32> -> vector<8x8xf32>
    %cst_6 = arith.constant 0.0883883461 : f32
    %14 = vector.broadcast %cst_6 : f32 to vector<8x8xf32>
    %15 = arith.mulf %13, %14 : vector<8x8xf32>
    %cst_7 = arith.constant dense<0xFF800000> : vector<8xf32>
    %16 = vector.multi_reduction <maximumf>, %15, %cst_7 [1] : vector<8x8xf32> to vector<8xf32>
    %17 = vector.shape_cast %16 : vector<8xf32> to vector<8x1xf32>
    %18 = vector.broadcast %17 : vector<8x1xf32> to vector<8x8xf32>
    %19 = arith.subf %15, %18 : vector<8x8xf32>
    %20 = math.exp %19 : vector<8x8xf32>
    %cst_8 = arith.constant dense<0.000000e+00> : vector<8xf32>
    %21 = vector.multi_reduction <add>, %20, %cst_8 [1] : vector<8x8xf32> to vector<8xf32>
    %22 = vector.shape_cast %21 : vector<8xf32> to vector<8x1xf32>
    %23 = tpu.reciprocal %22 {approx = true} : vector<8x1xf32> -> vector<8x1xf32>
    %24 = vector.broadcast %23 : vector<8x1xf32> to vector<8x8xf32>
    %25 = arith.mulf %20, %24 : vector<8x8xf32>
    %26 = arith.truncf %25 : vector<8x8xf32> to vector<8x8xbf16>
    %cst_9 = arith.constant dense<0.000000e+00> : vector<8x128xf32>
    %27 = tpu.matmul %26, %12, %cst_9 {dimension_numbers = #tpu.dot_dimension_numbers<[1], [0], [0], [1], [0, 0, 1, 1], [], []>} : vector<8x8xbf16>, vector<8x128xbf16>, vector<8x128xf32> -> vector<8x128xf32>
    %c0_10 = arith.constant 0 : index
    %c0_11 = arith.constant 0 : index
    %28 = vector.load %arg7[%c0_10, %c0_11] : memref<16x768xf32, #tpu.memory_space<vmem>>, vector<8x128xf32>
    tpu.vector_store %arg7[%c0_10, %c0_11], %27 {strides = array<i32>} : memref<16x768xf32, #tpu.memory_space<vmem>>, vector<8x128xf32>,
    %29 = vector.extract_strided_slice %6 {offsets = [0, 128], sizes = [8, 128], strides = [1, 1]} : vector<16x2304xf32> to vector<8x128xf32>
    %30 = arith.truncf %29 : vector<8x128xf32> to vector<8x128xbf16>
    %31 = vector.extract_strided_slice %6 {offsets = [0, 896], sizes = [8, 128], strides = [1, 1]} : vector<16x2304xf32> to vector<8x128xf32>
    %32 = arith.truncf %31 : vector<8x128xf32> to vector<8x128xbf16>
    %33 = vector.extract_strided_slice %6 {offsets = [0, 1664], sizes = [8, 128], strides = [1, 1]} : vector<16x2304xf32> to vector<8x128xf32>
    %34 = arith.truncf %33 : vector<8x128xf32> to vector<8x128xbf16>
    %cst_12 = arith.constant dense<0.000000e+00> : vector<8x8xf32>
    %35 = tpu.matmul %30, %32, %cst_12 {dimension_numbers = #tpu.dot_dimension_numbers<[1], [1], [0], [0], [0, 0, 1, 0], [], []>} : vector<8x128xbf16>, vector<8x128xbf16>, vector<8x8xf32> -> vector<8x8xf32>
    %cst_13 = arith.constant 0.0883883461 : f32
    %36 = vector.broadcast %cst_13 : f32 to vector<8x8xf32>
    %37 = arith.mulf %35, %36 : vector<8x8xf32>
    %cst_14 = arith.constant dense<0xFF800000> : vector<8xf32>
    %38 = vector.multi_reduction <maximumf>, %37, %cst_14 [1] : vector<8x8xf32> to vector<8xf32>
    %39 = vector.shape_cast %38 : vector<8xf32> to vector<8x1xf32>
    %40 = vector.broadcast %39 : vector<8x1xf32> to vector<8x8xf32>
    %41 = arith.subf %37, %40 : vector<8x8xf32>
    %42 = math.exp %41 : vector<8x8xf32>
    %cst_15 = arith.constant dense<0.000000e+00> : vector<8xf32>
    %43 = vector.multi_reduction <add>, %42, %cst_15 [1] : vector<8x8xf32> to vector<8xf32>
    %44 = vector.shape_cast %43 : vector<8xf32> to vector<8x1xf32>
    %45 = tpu.reciprocal %44 {approx = true} : vector<8x1xf32> -> vector<8x1xf32>
    %46 = vector.broadcast %45 : vector<8x1xf32> to vector<8x8xf32>
    %47 = arith.mulf %42, %46 : vector<8x8xf32>
    %48 = arith.truncf %47 : vector<8x8xf32> to vector<8x8xbf16>
    %cst_16 = arith.constant dense<0.000000e+00> : vector<8x128xf32>
    %49 = tpu.matmul %48, %34, %cst_16 {dimension_numbers = #tpu.dot_dimension_numbers<[1], [0], [0], [1], [0, 0, 1, 1], [], []>} : vector<8x8xbf16>, vector<8x128xbf16>, vector<8x128xf32> -> vector<8x128xf32>
    %c0_17 = arith.constant 0 : index
    %c128 = arith.constant 128 : index
    %50 = vector.load %arg7[%c0_17, %c128] : memref<16x768xf32, #tpu.memory_space<vmem>>, vector<8x128xf32>
    tpu.vector_store %arg7[%c0_17, %c128], %49 {strides = array<i32>} : memref<16x768xf32, #tpu.memory_space<vmem>>, vector<8x128xf32>,
    %51 = vector.extract_strided_slice %6 {offsets = [0, 256], sizes = [8, 128], strides = [1, 1]} : vector<16x2304xf32> to vector<8x128xf32>
    %52 = arith.truncf %51 : vector<8x128xf32> to vector<8x128xbf16>
    %53 = vector.extract_strided_slice %6 {offsets = [0, 1024], sizes = [8, 128], strides = [1, 1]} : vector<16x2304xf32> to vector<8x128xf32>
    %54 = arith.truncf %53 : vector<8x128xf32> to vector<8x128xbf16>
    %55 = vector.extract_strided_slice %6 {offsets = [0, 1792], sizes = [8, 128], strides = [1, 1]} : vector<16x2304xf32> to vector<8x128xf32>
    %56 = arith.truncf %55 : vector<8x128xf32> to vector<8x128xbf16>
    %cst_18 = arith.constant dense<0.000000e+00> : vector<8x8xf32>
    %57 = tpu.matmul %52, %54, %cst_18 {dimension_numbers = #tpu.dot_dimension_numbers<[1], [1], [0], [0], [0, 0, 1, 0], [], []>} : vector<8x128xbf16>, vector<8x128xbf16>, vector<8x8xf32> -> vector<8x8xf32>
    %cst_19 = arith.constant 0.0883883461 : f32
    %58 = vector.broadcast %cst_19 : f32 to vector<8x8xf32>
    %59 = arith.mulf %57, %58 : vector<8x8xf32>
    %cst_20 = arith.constant dense<0xFF800000> : vector<8xf32>
    %60 = vector.multi_reduction <maximumf>, %59, %cst_20 [1] : vector<8x8xf32> to vector<8xf32>
    %61 = vector.shape_cast %60 : vector<8xf32> to vector<8x1xf32>
    %62 = vector.broadcast %61 : vector<8x1xf32> to vector<8x8xf32>
    %63 = arith.subf %59, %62 : vector<8x8xf32>
    %64 = math.exp %63 : vector<8x8xf32>
    %cst_21 = arith.constant dense<0.000000e+00> : vector<8xf32>
    %65 = vector.multi_reduction <add>, %64, %cst_21 [1] : vector<8x8xf32> to vector<8xf32>
    %66 = vector.shape_cast %65 : vector<8xf32> to vector<8x1xf32>
    %67 = tpu.reciprocal %66 {approx = true} : vector<8x1xf32> -> vector<8x1xf32>
    %68 = vector.broadcast %67 : vector<8x1xf32> to vector<8x8xf32>
    %69 = arith.mulf %64, %68 : vector<8x8xf32>
    %70 = arith.truncf %69 : vector<8x8xf32> to vector<8x8xbf16>
    %cst_22 = arith.constant dense<0.000000e+00> : vector<8x128xf32>
    %71 = tpu.matmul %70, %56, %cst_22 {dimension_numbers = #tpu.dot_dimension_numbers<[1], [0], [0], [1], [0, 0, 1, 1], [], []>} : vector<8x8xbf16>, vector<8x128xbf16>, vector<8x128xf32> -> vector<8x128xf32>
    %c0_23 = arith.constant 0 : index
    %c256 = arith.constant 256 : index
    %72 = vector.load %arg7[%c0_23, %c256] : memref<16x768xf32, #tpu.memory_space<vmem>>, vector<8x128xf32>
    tpu.vector_store %arg7[%c0_23, %c256], %71 {strides = array<i32>} : memref<16x768xf32, #tpu.memory_space<vmem>>, vector<8x128xf32>,
    %73 = vector.extract_strided_slice %6 {offsets = [0, 384], sizes = [8, 128], strides = [1, 1]} : vector<16x2304xf32> to vector<8x128xf32>
    %74 = arith.truncf %73 : vector<8x128xf32> to vector<8x128xbf16>
    %75 = vector.extract_strided_slice %6 {offsets = [0, 1152], sizes = [8, 128], strides = [1, 1]} : vector<16x2304xf32> to vector<8x128xf32>
    %76 = arith.truncf %75 : vector<8x128xf32> to vector<8x128xbf16>
    %77 = vector.extract_strided_slice %6 {offsets = [0, 1920], sizes = [8, 128], strides = [1, 1]} : vector<16x2304xf32> to vector<8x128xf32>
    %78 = arith.truncf %77 : vector<8x128xf32> to vector<8x128xbf16>
    %cst_24 = arith.constant dense<0.000000e+00> : vector<8x8xf32>
    %79 = tpu.matmul %74, %76, %cst_24 {dimension_numbers = #tpu.dot_dimension_numbers<[1], [1], [0], [0], [0, 0, 1, 0], [], []>} : vector<8x128xbf16>, vector<8x128xbf16>, vector<8x8xf32> -> vector<8x8xf32>
    %cst_25 = arith.constant 0.0883883461 : f32
    %80 = vector.broadcast %cst_25 : f32 to vector<8x8xf32>
    %81 = arith.mulf %79, %80 : vector<8x8xf32>
    %cst_26 = arith.constant dense<0xFF800000> : vector<8xf32>
    %82 = vector.multi_reduction <maximumf>, %81, %cst_26 [1] : vector<8x8xf32> to vector<8xf32>
    %83 = vector.shape_cast %82 : vector<8xf32> to vector<8x1xf32>
    %84 = vector.broadcast %83 : vector<8x1xf32> to vector<8x8xf32>
    %85 = arith.subf %81, %84 : vector<8x8xf32>
    %86 = math.exp %85 : vector<8x8xf32>
    %cst_27 = arith.constant dense<0.000000e+00> : vector<8xf32>
    %87 = vector.multi_reduction <add>, %86, %cst_27 [1] : vector<8x8xf32> to vector<8xf32>
    %88 = vector.shape_cast %87 : vector<8xf32> to vector<8x1xf32>
    %89 = tpu.reciprocal %88 {approx = true} : vector<8x1xf32> -> vector<8x1xf32>
    %90 = vector.broadcast %89 : vector<8x1xf32> to vector<8x8xf32>
    %91 = arith.mulf %86, %90 : vector<8x8xf32>
    %92 = arith.truncf %91 : vector<8x8xf32> to vector<8x8xbf16>
    %cst_28 = arith.constant dense<0.000000e+00> : vector<8x128xf32>
    %93 = tpu.matmul %92, %78, %cst_28 {dimension_numbers = #tpu.dot_dimension_numbers<[1], [0], [0], [1], [0, 0, 1, 1], [], []>} : vector<8x8xbf16>, vector<8x128xbf16>, vector<8x128xf32> -> vector<8x128xf32>
    %c0_29 = arith.constant 0 : index
    %c384 = arith.constant 384 : index
    %94 = vector.load %arg7[%c0_29, %c384] : memref<16x768xf32, #tpu.memory_space<vmem>>, vector<8x128xf32>
    tpu.vector_store %arg7[%c0_29, %c384], %93 {strides = array<i32>} : memref<16x768xf32, #tpu.memory_space<vmem>>, vector<8x128xf32>,
    %95 = vector.extract_strided_slice %6 {offsets = [0, 512], sizes = [8, 128], strides = [1, 1]} : vector<16x2304xf32> to vector<8x128xf32>
    %96 = arith.truncf %95 : vector<8x128xf32> to vector<8x128xbf16>
    %97 = vector.extract_strided_slice %6 {offsets = [0, 1280], sizes = [8, 128], strides = [1, 1]} : vector<16x2304xf32> to vector<8x128xf32>
    %98 = arith.truncf %97 : vector<8x128xf32> to vector<8x128xbf16>
    %99 = vector.extract_strided_slice %6 {offsets = [0, 2048], sizes = [8, 128], strides = [1, 1]} : vector<16x2304xf32> to vector<8x128xf32>
    %100 = arith.truncf %99 : vector<8x128xf32> to vector<8x128xbf16>
    %cst_30 = arith.constant dense<0.000000e+00> : vector<8x8xf32>
    %101 = tpu.matmul %96, %98, %cst_30 {dimension_numbers = #tpu.dot_dimension_numbers<[1], [1], [0], [0], [0, 0, 1, 0], [], []>} : vector<8x128xbf16>, vector<8x128xbf16>, vector<8x8xf32> -> vector<8x8xf32>
    %cst_31 = arith.constant 0.0883883461 : f32
    %102 = vector.broadcast %cst_31 : f32 to vector<8x8xf32>
    %103 = arith.mulf %101, %102 : vector<8x8xf32>
    %cst_32 = arith.constant dense<0xFF800000> : vector<8xf32>
    %104 = vector.multi_reduction <maximumf>, %103, %cst_32 [1] : vector<8x8xf32> to vector<8xf32>
    %105 = vector.shape_cast %104 : vector<8xf32> to vector<8x1xf32>
    %106 = vector.broadcast %105 : vector<8x1xf32> to vector<8x8xf32>
    %107 = arith.subf %103, %106 : vector<8x8xf32>
    %108 = math.exp %107 : vector<8x8xf32>
    %cst_33 = arith.constant dense<0.000000e+00> : vector<8xf32>
    %109 = vector.multi_reduction <add>, %108, %cst_33 [1] : vector<8x8xf32> to vector<8xf32>
    %110 = vector.shape_cast %109 : vector<8xf32> to vector<8x1xf32>
    %111 = tpu.reciprocal %110 {approx = true} : vector<8x1xf32> -> vector<8x1xf32>
    %112 = vector.broadcast %111 : vector<8x1xf32> to vector<8x8xf32>
    %113 = arith.mulf %108, %112 : vector<8x8xf32>
    %114 = arith.truncf %113 : vector<8x8xf32> to vector<8x8xbf16>
    %cst_34 = arith.constant dense<0.000000e+00> : vector<8x128xf32>
    %115 = tpu.matmul %114, %100, %cst_34 {dimension_numbers = #tpu.dot_dimension_numbers<[1], [0], [0], [1], [0, 0, 1, 1], [], []>} : vector<8x8xbf16>, vector<8x128xbf16>, vector<8x128xf32> -> vector<8x128xf32>
    %c0_35 = arith.constant 0 : index
    %c512 = arith.constant 512 : index
    %116 = vector.load %arg7[%c0_35, %c512] : memref<16x768xf32, #tpu.memory_space<vmem>>, vector<8x128xf32>
    tpu.vector_store %arg7[%c0_35, %c512], %115 {strides = array<i32>} : memref<16x768xf32, #tpu.memory_space<vmem>>, vector<8x128xf32>,
    %117 = vector.extract_strided_slice %6 {offsets = [0, 640], sizes = [8, 128], strides = [1, 1]} : vector<16x2304xf32> to vector<8x128xf32>
    %118 = arith.truncf %117 : vector<8x128xf32> to vector<8x128xbf16>
    %119 = vector.extract_strided_slice %6 {offsets = [0, 1408], sizes = [8, 128], strides = [1, 1]} : vector<16x2304xf32> to vector<8x128xf32>
    %120 = arith.truncf %119 : vector<8x128xf32> to vector<8x128xbf16>
    %121 = vector.extract_strided_slice %6 {offsets = [0, 2176], sizes = [8, 128], strides = [1, 1]} : vector<16x2304xf32> to vector<8x128xf32>
    %122 = arith.truncf %121 : vector<8x128xf32> to vector<8x128xbf16>
    %cst_36 = arith.constant dense<0.000000e+00> : vector<8x8xf32>
    %123 = tpu.matmul %118, %120, %cst_36 {dimension_numbers = #tpu.dot_dimension_numbers<[1], [1], [0], [0], [0, 0, 1, 0], [], []>} : vector<8x128xbf16>, vector<8x128xbf16>, vector<8x8xf32> -> vector<8x8xf32>
    %cst_37 = arith.constant 0.0883883461 : f32
    %124 = vector.broadcast %cst_37 : f32 to vector<8x8xf32>
    %125 = arith.mulf %123, %124 : vector<8x8xf32>
    %cst_38 = arith.constant dense<0xFF800000> : vector<8xf32>
    %126 = vector.multi_reduction <maximumf>, %125, %cst_38 [1] : vector<8x8xf32> to vector<8xf32>
    %127 = vector.shape_cast %126 : vector<8xf32> to vector<8x1xf32>
    %128 = vector.broadcast %127 : vector<8x1xf32> to vector<8x8xf32>
    %129 = arith.subf %125, %128 : vector<8x8xf32>
    %130 = math.exp %129 : vector<8x8xf32>
    %cst_39 = arith.constant dense<0.000000e+00> : vector<8xf32>
    %131 = vector.multi_reduction <add>, %130, %cst_39 [1] : vector<8x8xf32> to vector<8xf32>
    %132 = vector.shape_cast %131 : vector<8xf32> to vector<8x1xf32>
    %133 = tpu.reciprocal %132 {approx = true} : vector<8x1xf32> -> vector<8x1xf32>
    %134 = vector.broadcast %133 : vector<8x1xf32> to vector<8x8xf32>
    %135 = arith.mulf %130, %134 : vector<8x8xf32>
    %136 = arith.truncf %135 : vector<8x8xf32> to vector<8x8xbf16>
    %cst_40 = arith.constant dense<0.000000e+00> : vector<8x128xf32>
    %137 = tpu.matmul %136, %122, %cst_40 {dimension_numbers = #tpu.dot_dimension_numbers<[1], [0], [0], [1], [0, 0, 1, 1], [], []>} : vector<8x8xbf16>, vector<8x128xbf16>, vector<8x128xf32> -> vector<8x128xf32>
    %c0_41 = arith.constant 0 : index
    %c640 = arith.constant 640 : index
    %138 = vector.load %arg7[%c0_41, %c640] : memref<16x768xf32, #tpu.memory_space<vmem>>, vector<8x128xf32>
    tpu.vector_store %arg7[%c0_41, %c640], %137 {strides = array<i32>} : memref<16x768xf32, #tpu.memory_space<vmem>>, vector<8x128xf32>,
    %139 = vector.extract_strided_slice %6 {offsets = [8, 0], sizes = [8, 128], strides = [1, 1]} : vector<16x2304xf32> to vector<8x128xf32>
    %140 = arith.truncf %139 : vector<8x128xf32> to vector<8x128xbf16>
    %141 = vector.extract_strided_slice %6 {offsets = [8, 768], sizes = [8, 128], strides = [1, 1]} : vector<16x2304xf32> to vector<8x128xf32>
    %142 = arith.truncf %141 : vector<8x128xf32> to vector<8x128xbf16>
    %143 = vector.extract_strided_slice %6 {offsets = [8, 1536], sizes = [8, 128], strides = [1, 1]} : vector<16x2304xf32> to vector<8x128xf32>
    %144 = arith.truncf %143 : vector<8x128xf32> to vector<8x128xbf16>
    %cst_42 = arith.constant dense<0.000000e+00> : vector<8x8xf32>
    %145 = tpu.matmul %140, %142, %cst_42 {dimension_numbers = #tpu.dot_dimension_numbers<[1], [1], [0], [0], [0, 0, 1, 0], [], []>} : vector<8x128xbf16>, vector<8x128xbf16>, vector<8x8xf32> -> vector<8x8xf32>
    %cst_43 = arith.constant 0.0883883461 : f32
    %146 = vector.broadcast %cst_43 : f32 to vector<8x8xf32>
    %147 = arith.mulf %145, %146 : vector<8x8xf32>
    %cst_44 = arith.constant dense<0xFF800000> : vector<8xf32>
    %148 = vector.multi_reduction <maximumf>, %147, %cst_44 [1] : vector<8x8xf32> to vector<8xf32>
    %149 = vector.shape_cast %148 : vector<8xf32> to vector<8x1xf32>
    %150 = vector.broadcast %149 : vector<8x1xf32> to vector<8x8xf32>
    %151 = arith.subf %147, %150 : vector<8x8xf32>
    %152 = math.exp %151 : vector<8x8xf32>
    %cst_45 = arith.constant dense<0.000000e+00> : vector<8xf32>
    %153 = vector.multi_reduction <add>, %152, %cst_45 [1] : vector<8x8xf32> to vector<8xf32>
    %154 = vector.shape_cast %153 : vector<8xf32> to vector<8x1xf32>
    %155 = tpu.reciprocal %154 {approx = true} : vector<8x1xf32> -> vector<8x1xf32>
    %156 = vector.broadcast %155 : vector<8x1xf32> to vector<8x8xf32>
    %157 = arith.mulf %152, %156 : vector<8x8xf32>
    %158 = arith.truncf %157 : vector<8x8xf32> to vector<8x8xbf16>
    %cst_46 = arith.constant dense<0.000000e+00> : vector<8x128xf32>
    %159 = tpu.matmul %158, %144, %cst_46 {dimension_numbers = #tpu.dot_dimension_numbers<[1], [0], [0], [1], [0, 0, 1, 1], [], []>} : vector<8x8xbf16>, vector<8x128xbf16>, vector<8x128xf32> -> vector<8x128xf32>
    %c8 = arith.constant 8 : index
    %c0_47 = arith.constant 0 : index
    %160 = vector.load %arg7[%c8, %c0_47] : memref<16x768xf32, #tpu.memory_space<vmem>>, vector<8x128xf32>
    tpu.vector_store %arg7[%c8, %c0_47], %159 {strides = array<i32>} : memref<16x768xf32, #tpu.memory_space<vmem>>, vector<8x128xf32>,
    %161 = vector.extract_strided_slice %6 {offsets = [8, 128], sizes = [8, 128], strides = [1, 1]} : vector<16x2304xf32> to vector<8x128xf32>
    %162 = arith.truncf %161 : vector<8x128xf32> to vector<8x128xbf16>
    %163 = vector.extract_strided_slice %6 {offsets = [8, 896], sizes = [8, 128], strides = [1, 1]} : vector<16x2304xf32> to vector<8x128xf32>
    %164 = arith.truncf %163 : vector<8x128xf32> to vector<8x128xbf16>
    %165 = vector.extract_strided_slice %6 {offsets = [8, 1664], sizes = [8, 128], strides = [1, 1]} : vector<16x2304xf32> to vector<8x128xf32>
    %166 = arith.truncf %165 : vector<8x128xf32> to vector<8x128xbf16>
    %cst_48 = arith.constant dense<0.000000e+00> : vector<8x8xf32>
    %167 = tpu.matmul %162, %164, %cst_48 {dimension_numbers = #tpu.dot_dimension_numbers<[1], [1], [0], [0], [0, 0, 1, 0], [], []>} : vector<8x128xbf16>, vector<8x128xbf16>, vector<8x8xf32> -> vector<8x8xf32>
    %cst_49 = arith.constant 0.0883883461 : f32
    %168 = vector.broadcast %cst_49 : f32 to vector<8x8xf32>
    %169 = arith.mulf %167, %168 : vector<8x8xf32>
    %cst_50 = arith.constant dense<0xFF800000> : vector<8xf32>
    %170 = vector.multi_reduction <maximumf>, %169, %cst_50 [1] : vector<8x8xf32> to vector<8xf32>
    %171 = vector.shape_cast %170 : vector<8xf32> to vector<8x1xf32>
    %172 = vector.broadcast %171 : vector<8x1xf32> to vector<8x8xf32>
    %173 = arith.subf %169, %172 : vector<8x8xf32>
    %174 = math.exp %173 : vector<8x8xf32>
    %cst_51 = arith.constant dense<0.000000e+00> : vector<8xf32>
    %175 = vector.multi_reduction <add>, %174, %cst_51 [1] : vector<8x8xf32> to vector<8xf32>
    %176 = vector.shape_cast %175 : vector<8xf32> to vector<8x1xf32>
    %177 = tpu.reciprocal %176 {approx = true} : vector<8x1xf32> -> vector<8x1xf32>
    %178 = vector.broadcast %177 : vector<8x1xf32> to vector<8x8xf32>
    %179 = arith.mulf %174, %178 : vector<8x8xf32>
    %180 = arith.truncf %179 : vector<8x8xf32> to vector<8x8xbf16>
    %cst_52 = arith.constant dense<0.000000e+00> : vector<8x128xf32>
    %181 = tpu.matmul %180, %166, %cst_52 {dimension_numbers = #tpu.dot_dimension_numbers<[1], [0], [0], [1], [0, 0, 1, 1], [], []>} : vector<8x8xbf16>, vector<8x128xbf16>, vector<8x128xf32> -> vector<8x128xf32>
    %c8_53 = arith.constant 8 : index
    %c128_54 = arith.constant 128 : index
    %182 = vector.load %arg7[%c8_53, %c128_54] : memref<16x768xf32, #tpu.memory_space<vmem>>, vector<8x128xf32>
    tpu.vector_store %arg7[%c8_53, %c128_54], %181 {strides = array<i32>} : memref<16x768xf32, #tpu.memory_space<vmem>>, vector<8x128xf32>,
    %183 = vector.extract_strided_slice %6 {offsets = [8, 256], sizes = [8, 128], strides = [1, 1]} : vector<16x2304xf32> to vector<8x128xf32>
    %184 = arith.truncf %183 : vector<8x128xf32> to vector<8x128xbf16>
    %185 = vector.extract_strided_slice %6 {offsets = [8, 1024], sizes = [8, 128], strides = [1, 1]} : vector<16x2304xf32> to vector<8x128xf32>
    %186 = arith.truncf %185 : vector<8x128xf32> to vector<8x128xbf16>
    %187 = vector.extract_strided_slice %6 {offsets = [8, 1792], sizes = [8, 128], strides = [1, 1]} : vector<16x2304xf32> to vector<8x128xf32>
    %188 = arith.truncf %187 : vector<8x128xf32> to vector<8x128xbf16>
    %cst_55 = arith.constant dense<0.000000e+00> : vector<8x8xf32>
    %189 = tpu.matmul %184, %186, %cst_55 {dimension_numbers = #tpu.dot_dimension_numbers<[1], [1], [0], [0], [0, 0, 1, 0], [], []>} : vector<8x128xbf16>, vector<8x128xbf16>, vector<8x8xf32> -> vector<8x8xf32>
    %cst_56 = arith.constant 0.0883883461 : f32
    %190 = vector.broadcast %cst_56 : f32 to vector<8x8xf32>
    %191 = arith.mulf %189, %190 : vector<8x8xf32>
    %cst_57 = arith.constant dense<0xFF800000> : vector<8xf32>
    %192 = vector.multi_reduction <maximumf>, %191, %cst_57 [1] : vector<8x8xf32> to vector<8xf32>
    %193 = vector.shape_cast %192 : vector<8xf32> to vector<8x1xf32>
    %194 = vector.broadcast %193 : vector<8x1xf32> to vector<8x8xf32>
    %195 = arith.subf %191, %194 : vector<8x8xf32>
    %196 = math.exp %195 : vector<8x8xf32>
    %cst_58 = arith.constant dense<0.000000e+00> : vector<8xf32>
    %197 = vector.multi_reduction <add>, %196, %cst_58 [1] : vector<8x8xf32> to vector<8xf32>
    %198 = vector.shape_cast %197 : vector<8xf32> to vector<8x1xf32>
    %199 = tpu.reciprocal %198 {approx = true} : vector<8x1xf32> -> vector<8x1xf32>
    %200 = vector.broadcast %199 : vector<8x1xf32> to vector<8x8xf32>
    %201 = arith.mulf %196, %200 : vector<8x8xf32>
    %202 = arith.truncf %201 : vector<8x8xf32> to vector<8x8xbf16>
    %cst_59 = arith.constant dense<0.000000e+00> : vector<8x128xf32>
    %203 = tpu.matmul %202, %188, %cst_59 {dimension_numbers = #tpu.dot_dimension_numbers<[1], [0], [0], [1], [0, 0, 1, 1], [], []>} : vector<8x8xbf16>, vector<8x128xbf16>, vector<8x128xf32> -> vector<8x128xf32>
    %c8_60 = arith.constant 8 : index
    %c256_61 = arith.constant 256 : index
    %204 = vector.load %arg7[%c8_60, %c256_61] : memref<16x768xf32, #tpu.memory_space<vmem>>, vector<8x128xf32>
    tpu.vector_store %arg7[%c8_60, %c256_61], %203 {strides = array<i32>} : memref<16x768xf32, #tpu.memory_space<vmem>>, vector<8x128xf32>,
    %205 = vector.extract_strided_slice %6 {offsets = [8, 384], sizes = [8, 128], strides = [1, 1]} : vector<16x2304xf32> to vector<8x128xf32>
    %206 = arith.truncf %205 : vector<8x128xf32> to vector<8x128xbf16>
    %207 = vector.extract_strided_slice %6 {offsets = [8, 1152], sizes = [8, 128], strides = [1, 1]} : vector<16x2304xf32> to vector<8x128xf32>
    %208 = arith.truncf %207 : vector<8x128xf32> to vector<8x128xbf16>
    %209 = vector.extract_strided_slice %6 {offsets = [8, 1920], sizes = [8, 128], strides = [1, 1]} : vector<16x2304xf32> to vector<8x128xf32>
    %210 = arith.truncf %209 : vector<8x128xf32> to vector<8x128xbf16>
    %cst_62 = arith.constant dense<0.000000e+00> : vector<8x8xf32>
    %211 = tpu.matmul %206, %208, %cst_62 {dimension_numbers = #tpu.dot_dimension_numbers<[1], [1], [0], [0], [0, 0, 1, 0], [], []>} : vector<8x128xbf16>, vector<8x128xbf16>, vector<8x8xf32> -> vector<8x8xf32>
    %cst_63 = arith.constant 0.0883883461 : f32
    %212 = vector.broadcast %cst_63 : f32 to vector<8x8xf32>
    %213 = arith.mulf %211, %212 : vector<8x8xf32>
    %cst_64 = arith.constant dense<0xFF800000> : vector<8xf32>
    %214 = vector.multi_reduction <maximumf>, %213, %cst_64 [1] : vector<8x8xf32> to vector<8xf32>
    %215 = vector.shape_cast %214 : vector<8xf32> to vector<8x1xf32>
    %216 = vector.broadcast %215 : vector<8x1xf32> to vector<8x8xf32>
    %217 = arith.subf %213, %216 : vector<8x8xf32>
    %218 = math.exp %217 : vector<8x8xf32>
    %cst_65 = arith.constant dense<0.000000e+00> : vector<8xf32>
    %219 = vector.multi_reduction <add>, %218, %cst_65 [1] : vector<8x8xf32> to vector<8xf32>
    %220 = vector.shape_cast %219 : vector<8xf32> to vector<8x1xf32>
    %221 = tpu.reciprocal %220 {approx = true} : vector<8x1xf32> -> vector<8x1xf32>
    %222 = vector.broadcast %221 : vector<8x1xf32> to vector<8x8xf32>
    %223 = arith.mulf %218, %222 : vector<8x8xf32>
    %224 = arith.truncf %223 : vector<8x8xf32> to vector<8x8xbf16>
    %cst_66 = arith.constant dense<0.000000e+00> : vector<8x128xf32>
    %225 = tpu.matmul %224, %210, %cst_66 {dimension_numbers = #tpu.dot_dimension_numbers<[1], [0], [0], [1], [0, 0, 1, 1], [], []>} : vector<8x8xbf16>, vector<8x128xbf16>, vector<8x128xf32> -> vector<8x128xf32>
    %c8_67 = arith.constant 8 : index
    %c384_68 = arith.constant 384 : index
    %226 = vector.load %arg7[%c8_67, %c384_68] : memref<16x768xf32, #tpu.memory_space<vmem>>, vector<8x128xf32>
    tpu.vector_store %arg7[%c8_67, %c384_68], %225 {strides = array<i32>} : memref<16x768xf32, #tpu.memory_space<vmem>>, vector<8x128xf32>,
    %227 = vector.extract_strided_slice %6 {offsets = [8, 512], sizes = [8, 128], strides = [1, 1]} : vector<16x2304xf32> to vector<8x128xf32>
    %228 = arith.truncf %227 : vector<8x128xf32> to vector<8x128xbf16>
    %229 = vector.extract_strided_slice %6 {offsets = [8, 1280], sizes = [8, 128], strides = [1, 1]} : vector<16x2304xf32> to vector<8x128xf32>
    %230 = arith.truncf %229 : vector<8x128xf32> to vector<8x128xbf16>
    %231 = vector.extract_strided_slice %6 {offsets = [8, 2048], sizes = [8, 128], strides = [1, 1]} : vector<16x2304xf32> to vector<8x128xf32>
    %232 = arith.truncf %231 : vector<8x128xf32> to vector<8x128xbf16>
    %cst_69 = arith.constant dense<0.000000e+00> : vector<8x8xf32>
    %233 = tpu.matmul %228, %230, %cst_69 {dimension_numbers = #tpu.dot_dimension_numbers<[1], [1], [0], [0], [0, 0, 1, 0], [], []>} : vector<8x128xbf16>, vector<8x128xbf16>, vector<8x8xf32> -> vector<8x8xf32>
    %cst_70 = arith.constant 0.0883883461 : f32
    %234 = vector.broadcast %cst_70 : f32 to vector<8x8xf32>
    %235 = arith.mulf %233, %234 : vector<8x8xf32>
    %cst_71 = arith.constant dense<0xFF800000> : vector<8xf32>
    %236 = vector.multi_reduction <maximumf>, %235, %cst_71 [1] : vector<8x8xf32> to vector<8xf32>
    %237 = vector.shape_cast %236 : vector<8xf32> to vector<8x1xf32>
    %238 = vector.broadcast %237 : vector<8x1xf32> to vector<8x8xf32>
    %239 = arith.subf %235, %238 : vector<8x8xf32>
    %240 = math.exp %239 : vector<8x8xf32>
    %cst_72 = arith.constant dense<0.000000e+00> : vector<8xf32>
    %241 = vector.multi_reduction <add>, %240, %cst_72 [1] : vector<8x8xf32> to vector<8xf32>
    %242 = vector.shape_cast %241 : vector<8xf32> to vector<8x1xf32>
    %243 = tpu.reciprocal %242 {approx = true} : vector<8x1xf32> -> vector<8x1xf32>
    %244 = vector.broadcast %243 : vector<8x1xf32> to vector<8x8xf32>
    %245 = arith.mulf %240, %244 : vector<8x8xf32>
    %246 = arith.truncf %245 : vector<8x8xf32> to vector<8x8xbf16>
    %cst_73 = arith.constant dense<0.000000e+00> : vector<8x128xf32>
    %247 = tpu.matmul %246, %232, %cst_73 {dimension_numbers = #tpu.dot_dimension_numbers<[1], [0], [0], [1], [0, 0, 1, 1], [], []>} : vector<8x8xbf16>, vector<8x128xbf16>, vector<8x128xf32> -> vector<8x128xf32>
    %c8_74 = arith.constant 8 : index
    %c512_75 = arith.constant 512 : index
    %248 = vector.load %arg7[%c8_74, %c512_75] : memref<16x768xf32, #tpu.memory_space<vmem>>, vector<8x128xf32>
    tpu.vector_store %arg7[%c8_74, %c512_75], %247 {strides = array<i32>} : memref<16x768xf32, #tpu.memory_space<vmem>>, vector<8x128xf32>,
    %249 = vector.extract_strided_slice %6 {offsets = [8, 640], sizes = [8, 128], strides = [1, 1]} : vector<16x2304xf32> to vector<8x128xf32>
    %250 = arith.truncf %249 : vector<8x128xf32> to vector<8x128xbf16>
    %251 = vector.extract_strided_slice %6 {offsets = [8, 1408], sizes = [8, 128], strides = [1, 1]} : vector<16x2304xf32> to vector<8x128xf32>
    %252 = arith.truncf %251 : vector<8x128xf32> to vector<8x128xbf16>
    %253 = vector.extract_strided_slice %6 {offsets = [8, 2176], sizes = [8, 128], strides = [1, 1]} : vector<16x2304xf32> to vector<8x128xf32>
    %254 = arith.truncf %253 : vector<8x128xf32> to vector<8x128xbf16>
    %cst_76 = arith.constant dense<0.000000e+00> : vector<8x8xf32>
    %255 = tpu.matmul %250, %252, %cst_76 {dimension_numbers = #tpu.dot_dimension_numbers<[1], [1], [0], [0], [0, 0, 1, 0], [], []>} : vector<8x128xbf16>, vector<8x128xbf16>, vector<8x8xf32> -> vector<8x8xf32>
    %cst_77 = arith.constant 0.0883883461 : f32
    %256 = vector.broadcast %cst_77 : f32 to vector<8x8xf32>
    %257 = arith.mulf %255, %256 : vector<8x8xf32>
    %cst_78 = arith.constant dense<0xFF800000> : vector<8xf32>
    %258 = vector.multi_reduction <maximumf>, %257, %cst_78 [1] : vector<8x8xf32> to vector<8xf32>
    %259 = vector.shape_cast %258 : vector<8xf32> to vector<8x1xf32>
    %260 = vector.broadcast %259 : vector<8x1xf32> to vector<8x8xf32>
    %261 = arith.subf %257, %260 : vector<8x8xf32>
    %262 = math.exp %261 : vector<8x8xf32>
    %cst_79 = arith.constant dense<0.000000e+00> : vector<8xf32>
    %263 = vector.multi_reduction <add>, %262, %cst_79 [1] : vector<8x8xf32> to vector<8xf32>
    %264 = vector.shape_cast %263 : vector<8xf32> to vector<8x1xf32>
    %265 = tpu.reciprocal %264 {approx = true} : vector<8x1xf32> -> vector<8x1xf32>
    %266 = vector.broadcast %265 : vector<8x1xf32> to vector<8x8xf32>
    %267 = arith.mulf %262, %266 : vector<8x8xf32>
    %268 = arith.truncf %267 : vector<8x8xf32> to vector<8x8xbf16>
    %cst_80 = arith.constant dense<0.000000e+00> : vector<8x128xf32>
    %269 = tpu.matmul %268, %254, %cst_80 {dimension_numbers = #tpu.dot_dimension_numbers<[1], [0], [0], [1], [0, 0, 1, 1], [], []>} : vector<8x8xbf16>, vector<8x128xbf16>, vector<8x128xf32> -> vector<8x128xf32>
    %c8_81 = arith.constant 8 : index
    %c640_82 = arith.constant 640 : index
    %270 = vector.load %arg7[%c8_81, %c640_82] : memref<16x768xf32, #tpu.memory_space<vmem>>, vector<8x128xf32>
    tpu.vector_store %arg7[%c8_81, %c640_82], %269 {strides = array<i32>} : memref<16x768xf32, #tpu.memory_space<vmem>>, vector<8x128xf32>,
    %c0_83 = arith.constant 0 : index
    %c0_84 = arith.constant 0 : index
    %271 = vector.load %arg7[%c0_83, %c0_84] : memref<16x768xf32, #tpu.memory_space<vmem>>, vector<16x768xf32>
    %272 = arith.truncf %271 : vector<16x768xf32> to vector<16x768xbf16>
    %c0_85 = arith.constant 0 : index
    %c0_86 = arith.constant 0 : index
    %273 = vector.load %arg4[%c0_85, %c0_86] : memref<768x768xbf16, #tpu.memory_space<vmem>>, vector<768x768xbf16>
    %cst_87 = arith.constant dense<0.000000e+00> : vector<16x768xf32>
    %274 = tpu.matmul %272, %273, %cst_87 {dimension_numbers = #tpu.dot_dimension_numbers<[1], [0], [0], [1], [0, 0, 1, 1], [], []>} : vector<16x768xbf16>, vector<768x768xbf16>, vector<16x768xf32> -> vector<16x768xf32>
    %c0_88 = arith.constant 0 : index
    %c0_89 = arith.constant 0 : index
    %275 = vector.load %arg5[%c0_88, %c0_89] : memref<1x768xf32, #tpu.memory_space<vmem>>, vector<1x768xf32>
    %276 = vector.broadcast %275 : vector<1x768xf32> to vector<16x768xf32>
    %277 = arith.addf %274, %276 : vector<16x768xf32>
    %c0_90 = arith.constant 0 : index
    %c0_91 = arith.constant 0 : index
    %278 = vector.load %arg6[%c0_90, %c0_91] : memref<16x768xf32, #tpu.memory_space<vmem>>, vector<16x768xf32>
    tpu.vector_store %arg6[%c0_90, %c0_91], %277 {strides = array<i32>} : memref<16x768xf32, #tpu.memory_space<vmem>>, vector<16x768xf32>,
    return
  }
  func.func @transform_0(%arg0: i32) -> (i32, i32) {
    %c0_i32 = arith.constant 0 : i32
    %c0_i32_0 = arith.constant 0 : i32
    %c0_i32_1 = arith.constant 0 : i32
    return %c0_i32, %c0_i32_0 : i32, i32
  }
  func.func @transform_1(%arg0: i32) -> (i32, i32) {
    %c0_i32 = arith.constant 0 : i32
    %c0_i32_0 = arith.constant 0 : i32
    %c0_i32_1 = arith.constant 0 : i32
    return %c0_i32, %c0_i32_0 : i32, i32
  }
  func.func @transform_2(%arg0: i32) -> (i32, i32) {
    %c0_i32 = arith.constant 0 : i32
    %c0_i32_0 = arith.constant 0 : i32
    %c0_i32_1 = arith.constant 0 : i32
    return %c0_i32, %c0_i32_0 : i32, i32
  }
  func.func @transform_3(%arg0: i32) -> (i32, i32) {
    %c0_i32 = arith.constant 0 : i32
    %c0_i32_0 = arith.constant 0 : i32
    %c0_i32_1 = arith.constant 0 : i32
    return %c0_i32, %c0_i32_0 : i32, i32
  }
  func.func @transform_4(%arg0: i32) -> (i32, i32) {
    %c0_i32 = arith.constant 0 : i32
    %c0_i32_0 = arith.constant 0 : i32
    %c0_i32_1 = arith.constant 0 : i32
    return %c0_i32, %c0_i32_0 : i32, i32
  }
  func.func @transform_5(%arg0: i32) -> (i32, i32) {
    %c0_i32 = arith.constant 0 : i32
    %c0_i32_0 = arith.constant 0 : i32
    %c0_i32_1 = arith.constant 0 : i32
    return %c0_i32, %c0_i32_0 : i32, i32
  }
}

</mosaic_0001>

<llo_original>
// kernel: tpu_custom_call.1
$region0: #{tpu_custom_call.1}
  #allocation0 [shape = 'u32[]', space=smem, size = 0x4, offset = 0x4, fixed_abs, tag = 'smem constant byte address 0x4 - core index']
  #allocation1 [shape = 'u32[144,128]{1,0:T(1,128)}', space=vmem, size = 0x12000, scoped, tag = 'internal scratch']
  #allocation2 [shape = 'f32[16,768]{1,0:T(8,128)}', space=vmem, size = 0xc000, scoped, tag = 'scratch operand']
  %s0 = inlined_call_operand.hbm [shape: f32[16,768], index: 0, kind: input, shape index: {}]
  %s1 = inlined_call_operand.hbm [shape: bf16[768,2304], index: 1, kind: input, shape index: {}]
  %s2 = inlined_call_operand.hbm [shape: f32[1,2304], index: 2, kind: input, shape index: {}]
  %s3 = inlined_call_operand.hbm [shape: bf16[768,768], index: 3, kind: input, shape index: {}]
  %s4 = inlined_call_operand.hbm [shape: f32[1,768], index: 4, kind: input, shape index: {}]
  %s5 = inlined_call_operand.hbm [shape: f32[16,768], index: 5, kind: output, shape index: {}]
  %s6 = sld [smem:[#allocation0]]
  $region50: #{tpu_custom_call.1} parent=0
    _
  %s8 = ssub.s32 1, %s6
  %s9 = scalar_select 0, %s8, %s6
  $region1: #{tpu_custom_call.1} parent=0
    #allocation3 [shape = 'u8[49152]{0}', space=vmem, size = 0xc000, scoped, tag = 'input window, operand 0, single buffered']
    #allocation4 [shape = 's32[1]{0}', space=sflag, size = 0x4, scoped, tag = 'scoped memory for tpu_custom_call.1']
    #allocation5 [shape = 's32[1]{0}', space=sflag, size = 0x4, scoped, tag = 'scoped memory for tpu_custom_call.1']
    #allocation6 [shape = 'u8[3538944]{0}', space=vmem, size = 0x360000, scoped, tag = 'input window, operand 1, single buffered']
    #allocation7 [shape = 's32[1]{0}', space=sflag, size = 0x4, scoped, tag = 'scoped memory for tpu_custom_call.1']
    #allocation8 [shape = 'u8[9216]{0}', space=vmem, size = 0x2400, scoped, tag = 'input window, operand 2, single buffered']
    #allocation9 [shape = 'u8[1179648]{0}', space=vmem, size = 0x120000, scoped, tag = 'input window, operand 3, single buffered']
    #allocation10 [shape = 's32[1]{0}', space=sflag, size = 0x4, scoped, tag = 'scoped memory for tpu_custom_call.1']
    #allocation11 [shape = 'u8[3072]{0}', space=vmem, size = 0xc00, scoped, tag = 'input window, operand 4, single buffered']
    #allocation12 [shape = 'u8[49152]{0}', space=vmem, size = 0xc000, scoped, tag = 'output window, operand 0, single buffered']
    %10 = vsyncpa [#allocation4], 0
    %11 = vsyncpa [#allocation7], 0
    %12 = vsyncpa [#allocation10], 0
    %13 = vsyncpa [#allocation5], 0
    // Predicated region
    $region2: #{tpu_custom_call.1} parent=1 // pred_check
      _
    $region3: #{tpu_custom_call.1} parent=1 // pred_check_branch
      %15 = sbr.rel (0) target = $region5
    $region4: #{tpu_custom_call.1} parent=1 // pred_region
      %s17 = ssub.s32 1536, 1536
      %18 = vsyncadd [#allocation4], %s17
      %s19 = sshll.u32 [#allocation3], 4
      %s20 = int_to_ptr.vmem [resolvable:$true] %s19
      %25 = dma.hbm_to_vmem [thread:$0]  %s0, 1536, %s20, [#allocation4], 768, 768, 48
    $region5: #{tpu_custom_call.1} parent=1 // pred_fallthru
      _
    // Predicated region
    $region6: #{tpu_custom_call.1} parent=1 // pred_check
      _
    $region7: #{tpu_custom_call.1} parent=1 // pred_check_branch
      %27 = sbr.rel (0) target = $region9
    $region8: #{tpu_custom_call.1} parent=1 // pred_region
      %s29 = ssub.s32 110592, 110592
      %30 = vsyncadd [#allocation7], %s29
      %s31 = sshll.u32 [#allocation6], 4
      %s32 = int_to_ptr.vmem [resolvable:$true] %s31
      %37 = dma.hbm_to_vmem [thread:$0]  %s1, 110592, %s32, [#allocation7], 1152, 1152, 72
    $region9: #{tpu_custom_call.1} parent=1 // pred_fallthru
      _
    // Predicated region
    $region10: #{tpu_custom_call.1} parent=1 // pred_check
      _
    $region11: #{tpu_custom_call.1} parent=1 // pred_check_branch
      %39 = sbr.rel (0) target = $region13
    $region12: #{tpu_custom_call.1} parent=1 // pred_region
      %s41 = ssub.s32 288, 288
      %42 = vsyncadd [#allocation7], %s41
      %s44 = sshll.u32 [#allocation8], 4
      %s45 = int_to_ptr.vmem [resolvable:$true] %s44
      %47 = dma.hbm_to_vmem [thread:$0]  %s2, 288, %s45, [#allocation7]
    $region13: #{tpu_custom_call.1} parent=1 // pred_fallthru
      _
    // Predicated region
    $region14: #{tpu_custom_call.1} parent=1 // pred_check
      _
    $region15: #{tpu_custom_call.1} parent=1 // pred_check_branch
      %49 = sbr.rel (0) target = $region17
    $region16: #{tpu_custom_call.1} parent=1 // pred_region
      %s51 = ssub.s32 36864, 36864
      %52 = vsyncadd [#allocation10], %s51
      %s53 = sshll.u32 [#allocation9], 4
      %s54 = int_to_ptr.vmem [resolvable:$true] %s53
      %59 = dma.hbm_to_vmem [thread:$0]  %s3, 36864, %s54, [#allocation10], 384, 384, 24
    $region17: #{tpu_custom_call.1} parent=1 // pred_fallthru
      _
    // Predicated region
    $region18: #{tpu_custom_call.1} parent=1 // pred_check
      _
    $region19: #{tpu_custom_call.1} parent=1 // pred_check_branch
      %61 = sbr.rel (0) target = $region21
    $region20: #{tpu_custom_call.1} parent=1 // pred_region
      %s63 = ssub.s32 96, 96
      %64 = vsyncadd [#allocation10], %s63
      %s66 = sshll.u32 [#allocation11], 4
      %s67 = int_to_ptr.vmem [resolvable:$true] %s66
      %69 = dma.hbm_to_vmem [thread:$0]  %s4, 96, %s67, [#allocation10]
    $region21: #{tpu_custom_call.1} parent=1 // pred_fallthru
      _
    // Predicated region
    $region22: #{tpu_custom_call.1} parent=1 // pred_check
      _
    $region23: #{tpu_custom_call.1} parent=1 // pred_check_branch
      %71 = sbr.rel (0) target = $region25
    $region24: #{tpu_custom_call.1} parent=1 // pred_region
      %72 = dma.done [#allocation4], 1536
    $region25: #{tpu_custom_call.1} parent=1 // pred_fallthru
      _
    // Predicated region
    $region26: #{tpu_custom_call.1} parent=1 // pred_check
      _
    $region27: #{tpu_custom_call.1} parent=1 // pred_check_branch
      %74 = sbr.rel (0) target = $region29
    $region28: #{tpu_custom_call.1} parent=1 // pred_region
      %75 = dma.done [#allocation7], 110592
    $region29: #{tpu_custom_call.1} parent=1 // pred_fallthru
      _
    // Predicated region
    $region30: #{tpu_custom_call.1} parent=1 // pred_check
      _
    $region31: #{tpu_custom_call.1} parent=1 // pred_check_branch
      %77 = sbr.rel (0) target = $region33
    $region32: #{tpu_custom_call.1} parent=1 // pred_region
      %78 = dma.done [#allocation7], 288
    $region33: #{tpu_custom_call.1} parent=1 // pred_fallthru
      _
    // Predicated region
    $region34: #{tpu_custom_call.1} parent=1 // pred_check
      _
    $region35: #{tpu_custom_call.1} parent=1 // pred_check_branch
      %80 = sbr.rel (0) target = $region37
    $region36: #{tpu_custom_call.1} parent=1 // pred_region
      %81 = dma.done [#allocation10], 36864
    $region37: #{tpu_custom_call.1} parent=1 // pred_fallthru
      _
    // Predicated region
    $region38: #{tpu_custom_call.1} parent=1 // pred_check
      _
    $region39: #{tpu_custom_call.1} parent=1 // pred_check_branch
      %83 = sbr.rel (0) target = $region41
    $region40: #{tpu_custom_call.1} parent=1 // pred_region
      %84 = dma.done [#allocation10], 96
    $region41: #{tpu_custom_call.1} parent=1 // pred_fallthru
      _
    %v86 = vld [vmem:[#allocation3] sm:$0xff]
    %v87 = vld [vmem:[#allocation3 + $0x8] sm:$0xff]
    %v88 = vld [vmem:[#allocation3 + $0x10] sm:$0xff]
    %v89 = vld [vmem:[#allocation3 + $0x18] sm:$0xff]
    %v90 = vld [vmem:[#allocation3 + $0x20] sm:$0xff]
    %v91 = vld [vmem:[#allocation3 + $0x28] sm:$0xff]
    %v92 = vld [vmem:[#allocation3 + $0x30] sm:$0xff]
    %v93 = vld [vmem:[#allocation3 + $0x38] sm:$0xff]
    %v94 = vld [vmem:[#allocation3 + $0x40] sm:$0xff]
    %v95 = vld [vmem:[#allocation3 + $0x48] sm:$0xff]
    %v96 = vld [vmem:[#allocation3 + $0x50] sm:$0xff]
    %v97 = vld [vmem:[#allocation3 + $0x58] sm:$0xff]
    %v98 = vpack.c.bf16 %v92, %v86
    %v99 = vpack.c.bf16 %v93, %v87
    %v100 = vpack.c.bf16 %v94, %v88
    %v101 = vpack.c.bf16 %v95, %v89
    %v102 = vpack.c.bf16 %v96, %v90
    %v103 = vpack.c.bf16 %v97, %v91
    %v104 = vld [vmem:[#allocation6] sm:$0xff]
    %v105 = vld [vmem:[#allocation6 + $0x8] sm:$0xff]
    %v106 = vld [vmem:[#allocation6 + $0x10] sm:$0xff]
    %v107 = vld [vmem:[#allocation6 + $0x18] sm:$0xff]
    %v108 = vld [vmem:[#allocation6 + $0x20] sm:$0xff]
    %v109 = vld [vmem:[#allocation6 + $0x28] sm:$0xff]
    %v110 = vld [vmem:[#allocation6 + $0x30] sm:$0xff]
    %v111 = vld [vmem:[#allocation6 + $0x38] sm:$0xff]
    %v112 = vld [vmem:[#allocation6 + $0x40] sm:$0xff]
    %v113 = vld [vmem:[#allocation6 + $0x48] sm:$0xff]
    %v114 = vld [vmem:[#allocation6 + $0x50] sm:$0xff]
    %v115 = vld [vmem:[#allocation6 + $0x58] sm:$0xff]
    %v116 = vld [vmem:[#allocation6 + $0x60] sm:$0xff]
    %v117 = vld [vmem:[#allocation6 + $0x68] sm:$0xff]
    %v118 = vld [vmem:[#allocation6 + $0x70] sm:$0xff]
    %v119 = vld [vmem:[#allocation6 + $0x78] sm:$0xff]
    %v120 = vld [vmem:[#allocation6 + $0x80] sm:$0xff]
    %v121 = vld [vmem:[#allocation6 + $0x88] sm:$0xff]
    %v122 = vld [vmem:[#allocation6 + $0x90] sm:$0xff]
    %v123 = vld [vmem:[#allocation6 + $0x98] sm:$0xff]
    %v124 = vld [vmem:[#allocation6 + $0xa0] sm:$0xff]
    %v125 = vld [vmem:[#allocation6 + $0xa8] sm:$0xff]
    %v126 = vld [vmem:[#allocation6 + $0xb0] sm:$0xff]
    %v127 = vld [vmem:[#allocation6 + $0xb8] sm:$0xff]
    %v128 = vld [vmem:[#allocation6 + $0xc0] sm:$0xff]
    %v129 = vld [vmem:[#allocation6 + $0xc8] sm:$0xff]
    %v130 = vld [vmem:[#allocation6 + $0xd0] sm:$0xff]
    %v131 = vld [vmem:[#allocation6 + $0xd8] sm:$0xff]
    %v132 = vld [vmem:[#allocation6 + $0xe0] sm:$0xff]
    %v133 = vld [vmem:[#allocation6 + $0xe8] sm:$0xff]
    %v134 = vld [vmem:[#allocation6 + $0xf0] sm:$0xff]
    %v135 = vld [vmem:[#allocation6 + $0xf8] sm:$0xff]
    %v136 = vld [vmem:[#allocation6 + $0x100] sm:$0xff]
    %v137 = vld [vmem:[#allocation6 + $0x108] sm:$0xff]
    %v138 = vld [vmem:[#allocation6 + $0x110] sm:$0xff]
    %v139 = vld [vmem:[#allocation6 + $0x118] sm:$0xff]
    %v140 = vld [vmem:[#allocation6 + $0x120] sm:$0xff]
    %v141 = vld [vmem:[#allocation6 + $0x128] sm:$0xff]
    %v142 = vld [vmem:[#allocation6 + $0x130] sm:$0xff]
    %v143 = vld [vmem:[#allocation6 + $0x138] sm:$0xff]
    %v144 = vld [vmem:[#allocation6 + $0x140] sm:$0xff]
    %v145 = vld [vmem:[#allocation6 + $0x148] sm:$0xff]
    %v146 = vld [vmem:[#allocation6 + $0x150] sm:$0xff]
    %v147 = vld [vmem:[#allocation6 + $0x158] sm:$0xff]
    %v148 = vld [vmem:[#allocation6 + $0x160] sm:$0xff]
    %v149 = vld [vmem:[#allocation6 + $0x168] sm:$0xff]
    %v150 = vld [vmem:[#allocation6 + $0x170] sm:$0xff]
    %v151 = vld [vmem:[#allocation6 + $0x178] sm:$0xff]
    %v152 = vld [vmem:[#allocation6 + $0x180] sm:$0xff]
    %v153 = vld [vmem:[#allocation6 + $0x188] sm:$0xff]
    %v154 = vld [vmem:[#allocation6 + $0x190] sm:$0xff]
    %v155 = vld [vmem:[#allocation6 + $0x198] sm:$0xff]
    %v156 = vld [vmem:[#allocation6 + $0x1a0] sm:$0xff]
    %v157 = vld [vmem:[#allocation6 + $0x1a8] sm:$0xff]
    %v158 = vld [vmem:[#allocation6 + $0x1b0] sm:$0xff]
    %v159 = vld [vmem:[#allocation6 + $0x1b8] sm:$0xff]
    %v160 = vld [vmem:[#allocation6 + $0x1c0] sm:$0xff]
    %v161 = vld [vmem:[#allocation6 + $0x1c8] sm:$0xff]
    %v162 = vld [vmem:[#allocation6 + $0x1d0] sm:$0xff]
    %v163 = vld [vmem:[#allocation6 + $0x1d8] sm:$0xff]
    %v164 = vld [vmem:[#allocation6 + $0x1e0] sm:$0xff]
    %v165 = vld [vmem:[#allocation6 + $0x1e8] sm:$0xff]
    %v166 = vld [vmem:[#allocation6 + $0x1f0] sm:$0xff]
    %v167 = vld [vmem:[#allocation6 + $0x1f8] sm:$0xff]
    %v168 = vld [vmem:[#allocation6 + $0x200] sm:$0xff]
    %v169 = vld [vmem:[#allocation6 + $0x208] sm:$0xff]
    %v170 = vld [vmem:[#allocation6 + $0x210] sm:$0xff]
    %v171 = vld [vmem:[#allocation6 + $0x218] sm:$0xff]
    %v172 = vld [vmem:[#allocation6 + $0x220] sm:$0xff]
    %v173 = vld [vmem:[#allocation6 + $0x228] sm:$0xff]
    %v174 = vld [vmem:[#allocation6 + $0x230] sm:$0xff]
    %v175 = vld [vmem:[#allocation6 + $0x238] sm:$0xff]
    %v176 = vld [vmem:[#allocation6 + $0x240] sm:$0xff]
    %v177 = vld [vmem:[#allocation6 + $0x248] sm:$0xff]
    %v178 = vld [vmem:[#allocation6 + $0x250] sm:$0xff]
    %v179 = vld [vmem:[#allocation6 + $0x258] sm:$0xff]
    %v180 = vld [vmem:[#allocation6 + $0x260] sm:$0xff]
    %v181 = vld [vmem:[#allocation6 + $0x268] sm:$0xff]
    %v182 = vld [vmem:[#allocation6 + $0x270] sm:$0xff]
    %v183 = vld [vmem:[#allocation6 + $0x278] sm:$0xff]
    %v184 = vld [vmem:[#allocation6 + $0x280] sm:$0xff]
    %v185 = vld [vmem:[#allocation6 + $0x288] sm:$0xff]
    %v186 = vld [vmem:[#allocation6 + $0x290] sm:$0xff]
    %v187 = vld [vmem:[#allocation6 + $0x298] sm:$0xff]
    %v188 = vld [vmem:[#allocation6 + $0x2a0] sm:$0xff]
    %v189 = vld [vmem:[#allocation6 + $0x2a8] sm:$0xff]
    %v190 = vld [vmem:[#allocation6 + $0x2b0] sm:$0xff]
    %v191 = vld [vmem:[#allocation6 + $0x2b8] sm:$0xff]
    %v192 = vld [vmem:[#allocation6 + $0x2c0] sm:$0xff]
    %v193 = vld [vmem:[#allocation6 + $0x2c8] sm:$0xff]
    %v194 = vld [vmem:[#allocation6 + $0x2d0] sm:$0xff]
    %v195 = vld [vmem:[#allocation6 + $0x2d8] sm:$0xff]
    %v196 = vld [vmem:[#allocation6 + $0x2e0] sm:$0xff]
    %v197 = vld [vmem:[#allocation6 + $0x2e8] sm:$0xff]
    %v198 = vld [vmem:[#allocation6 + $0x2f0] sm:$0xff]
    %v199 = vld [vmem:[#allocation6 + $0x2f8] sm:$0xff]
    %v200 = vld [vmem:[#allocation6 + $0x300] sm:$0xff]
    %v201 = vld [vmem:[#allocation6 + $0x308] sm:$0xff]
    %v202 = vld [vmem:[#allocation6 + $0x310] sm:$0xff]
    %v203 = vld [vmem:[#allocation6 + $0x318] sm:$0xff]
    %v204 = vld [vmem:[#allocation6 + $0x320] sm:$0xff]
    %v205 = vld [vmem:[#allocation6 + $0x328] sm:$0xff]
    %v206 = vld [vmem:[#allocation6 + $0x330] sm:$0xff]
    %v207 = vld [vmem:[#allocation6 + $0x338] sm:$0xff]
    %v208 = vld [vmem:[#allocation6 + $0x340] sm:$0xff]
    %v209 = vld [vmem:[#allocation6 + $0x348] sm:$0xff]
    %v210 = vld [vmem:[#allocation6 + $0x350] sm:$0xff]
    %v211 = vld [vmem:[#allocation6 + $0x358] sm:$0xff]
    %v212 = vld [vmem:[#allocation6 + $0x360] sm:$0xff]
    %v213 = vld [vmem:[#allocation6 + $0x368] sm:$0xff]
    %v214 = vld [vmem:[#allocation6 + $0x370] sm:$0xff]
    %v215 = vld [vmem:[#allocation6 + $0x378] sm:$0xff]
    %v216 = vld [vmem:[#allocation6 + $0x380] sm:$0xff]
    %v217 = vld [vmem:[#allocation6 + $0x388] sm:$0xff]
    %v218 = vld [vmem:[#allocation6 + $0x390] sm:$0xff]
    %v219 = vld [vmem:[#allocation6 + $0x398] sm:$0xff]
    %v220 = vld [vmem:[#allocation6 + $0x3a0] sm:$0xff]
    %v221 = vld [vmem:[#allocation6 + $0x3a8] sm:$0xff]
    %v222 = vld [vmem:[#allocation6 + $0x3b0] sm:$0xff]
    %v223 = vld [vmem:[#allocation6 + $0x3b8] sm:$0xff]
    %v224 = vld [vmem:[#allocation6 + $0x3c0] sm:$0xff]
    %v225 = vld [vmem:[#allocation6 + $0x3c8] sm:$0xff]
    %v226 = vld [vmem:[#allocation6 + $0x3d0] sm:$0xff]
    %v227 = vld [vmem:[#allocation6 + $0x3d8] sm:$0xff]
    %v228 = vld [vmem:[#allocation6 + $0x3e0] sm:$0xff]
    %v229 = vld [vmem:[#allocation6 + $0x3e8] sm:$0xff]
    %v230 = vld [vmem:[#allocation6 + $0x3f0] sm:$0xff]
    %v231 = vld [vmem:[#allocation6 + $0x3f8] sm:$0xff]
    %v232 = vld [vmem:[#allocation6 + $0x400] sm:$0xff]
    %v233 = vld [vmem:[#allocation6 + $0x408] sm:$0xff]
    %v234 = vld [vmem:[#allocation6 + $0x410] sm:$0xff]
    %v235 = vld [vmem:[#allocation6 + $0x418] sm:$0xff]
    %v236 = vld [vmem:[#allocation6 + $0x420] sm:$0xff]
    %v237 = vld [vmem:[#allocation6 + $0x428] sm:$0xff]
    %v238 = vld [vmem:[#allocation6 + $0x430] sm:$0xff]
    %v239 = vld [vmem:[#allocation6 + $0x438] sm:$0xff]
    %v240 = vld [vmem:[#allocation6 + $0x440] sm:$0xff]
    %v241 = vld [vmem:[#allocation6 + $0x448] sm:$0xff]
    %v242 = vld [vmem:[#allocation6 + $0x450] sm:$0xff]
    %v243 = vld [vmem:[#allocation6 + $0x458] sm:$0xff]
    %v244 = vld [vmem:[#allocation6 + $0x460] sm:$0xff]
    %v245 = vld [vmem:[#allocation6 + $0x468] sm:$0xff]
    %v246 = vld [vmem:[#allocation6 + $0x470] sm:$0xff]
    %v247 = vld [vmem:[#allocation6 + $0x478] sm:$0xff]
    %v248 = vld [vmem:[#allocation6 + $0x480] sm:$0xff]
    %v249 = vld [vmem:[#allocation6 + $0x488] sm:$0xff]
    %v250 = vld [vmem:[#allocation6 + $0x490] sm:$0xff]
    %v251 = vld [vmem:[#allocation6 + $0x498] sm:$0xff]
    %v252 = vld [vmem:[#allocation6 + $0x4a0] sm:$0xff]
    %v253 = vld [vmem:[#allocation6 + $0x4a8] sm:$0xff]
    %v254 = vld [vmem:[#allocation6 + $0x4b0] sm:$0xff]
    %v255 = vld [vmem:[#allocation6 + $0x4b8] sm:$0xff]
    %v256 = vld [vmem:[#allocation6 + $0x4c0] sm:$0xff]
    %v257 = vld [vmem:[#allocation6 + $0x4c8] sm:$0xff]
    %v258 = vld [vmem:[#allocation6 + $0x4d0] sm:$0xff]
    %v259 = vld [vmem:[#allocation6 + $0x4d8] sm:$0xff]
    %v260 = vld [vmem:[#allocation6 + $0x4e0] sm:$0xff]
    %v261 = vld [vmem:[#allocation6 + $0x4e8] sm:$0xff]
    %v262 = vld [vmem:[#allocation6 + $0x4f0] sm:$0xff]
    %v263 = vld [vmem:[#allocation6 + $0x4f8] sm:$0xff]
    %v264 = vld [vmem:[#allocation6 + $0x500] sm:$0xff]
    %v265 = vld [vmem:[#allocation6 + $0x508] sm:$0xff]
    %v266 = vld [vmem:[#allocation6 + $0x510] sm:$0xff]
    %v267 = vld [vmem:[#allocation6 + $0x518] sm:$0xff]
    %v268 = vld [vmem:[#allocation6 + $0x520] sm:$0xff]
    %v269 = vld [vmem:[#allocation6 + $0x528] sm:$0xff]
    %v270 = vld [vmem:[#allocation6 + $0x530] sm:$0xff]
    %v271 = vld [vmem:[#allocation6 + $0x538] sm:$0xff]
    %v272 = vld [vmem:[#allocation6 + $0x540] sm:$0xff]
    %v273 = vld [vmem:[#allocation6 + $0x548] sm:$0xff]
    %v274 = vld [vmem:[#allocation6 + $0x550] sm:$0xff]
    %v275 = vld [vmem:[#allocation6 + $0x558] sm:$0xff]
    %v276 = vld [vmem:[#allocation6 + $0x560] sm:$0xff]
    %v277 = vld [vmem:[#allocation6 + $0x568] sm:$0xff]
    %v278 = vld [vmem:[#allocation6 + $0x570] sm:$0xff]
    %v279 = vld [vmem:[#allocation6 + $0x578] sm:$0xff]
    %v280 = vld [vmem:[#allocation6 + $0x580] sm:$0xff]
    %v281 = vld [vmem:[#allocation6 + $0x588] sm:$0xff]
    %v282 = vld [vmem:[#allocation6 + $0x590] sm:$0xff]
    %v283 = vld [vmem:[#allocation6 + $0x598] sm:$0xff]
    %v284 = vld [vmem:[#allocation6 + $0x5a0] sm:$0xff]
    %v285 = vld [vmem:[#allocation6 + $0x5a8] sm:$0xff]
    %v286 = vld [vmem:[#allocation6 + $0x5b0] sm:$0xff]
    %v287 = vld [vmem:[#allocation6 + $0x5b8] sm:$0xff]
    %v288 = vld [vmem:[#allocation6 + $0x5c0] sm:$0xff]
    %v289 = vld [vmem:[#allocation6 + $0x5c8] sm:$0xff]
    %v290 = vld [vmem:[#allocation6 + $0x5d0] sm:$0xff]
    %v291 = vld [vmem:[#allocation6 + $0x5d8] sm:$0xff]
    %v292 = vld [vmem:[#allocation6 + $0x5e0] sm:$0xff]
    %v293 = vld [vmem:[#allocation6 + $0x5e8] sm:$0xff]
    %v294 = vld [vmem:[#allocation6 + $0x5f0] sm:$0xff]
    %v295 = vld [vmem:[#allocation6 + $0x5f8] sm:$0xff]
    %v296 = vld [vmem:[#allocation6 + $0x600] sm:$0xff]
    %v297 = vld [vmem:[#allocation6 + $0x608] sm:$0xff]
    %v298 = vld [vmem:[#allocation6 + $0x610] sm:$0xff]
    %v299 = vld [vmem:[#allocation6 + $0x618] sm:$0xff]
    %v300 = vld [vmem:[#allocation6 + $0x620] sm:$0xff]
    %v301 = vld [vmem:[#allocation6 + $0x628] sm:$0xff]
    %v302 = vld [vmem:[#allocation6 + $0x630] sm:$0xff]
    %v303 = vld [vmem:[#allocation6 + $0x638] sm:$0xff]
    %v304 = vld [vmem:[#allocation6 + $0x640] sm:$0xff]
    %v305 = vld [vmem:[#allocation6 + $0x648] sm:$0xff]
    %v306 = vld [vmem:[#allocation6 + $0x650] sm:$0xff]
    %v307 = vld [vmem:[#allocation6 + $0x658] sm:$0xff]
    %v308 = vld [vmem:[#allocation6 + $0x660] sm:$0xff]
    %v309 = vld [vmem:[#allocation6 + $0x668] sm:$0xff]
    %v310 = vld [vmem:[#allocation6 + $0x670] sm:$0xff]
    %v311 = vld [vmem:[#allocation6 + $0x678] sm:$0xff]
    %v312 = vld [vmem:[#allocation6 + $0x680] sm:$0xff]
    %v313 = vld [vmem:[#allocation6 + $0x688] sm:$0xff]
    %v314 = vld [vmem:[#allocation6 + $0x690] sm:$0xff]
    %v315 = vld [vmem:[#allocation6 + $0x698] sm:$0xff]
    %v316 = vld [vmem:[#allocation6 + $0x6a0] sm:$0xff]
    %v317 = vld [vmem:[#allocation6 + $0x6a8] sm:$0xff]
    %v318 = vld [vmem:[#allocation6 + $0x6b0] sm:$0xff]
    %v319 = vld [vmem:[#allocation6 + $0x6b8] sm:$0xff]
    %v320 = vld [vmem:[#allocation6 + $0x6c0] sm:$0xff]
    %v321 = vld [vmem:[#allocation6 + $0x6c8] sm:$0xff]
    %v322 = vld [vmem:[#allocation6 + $0x6d0] sm:$0xff]
    %v323 = vld [vmem:[#allocation6 + $0x6d8] sm:$0xff]
    %v324 = vld [vmem:[#allocation6 + $0x6e0] sm:$0xff]
    %v325 = vld [vmem:[#allocation6 + $0x6e8] sm:$0xff]
    %v326 = vld [vmem:[#allocation6 + $0x6f0] sm:$0xff]
    %v327 = vld [vmem:[#allocation6 + $0x6f8] sm:$0xff]
    %v328 = vld [vmem:[#allocation6 + $0x700] sm:$0xff]
    %v329 = vld [vmem:[#allocation6 + $0x708] sm:$0xff]
    %v330 = vld [vmem:[#allocation6 + $0x710] sm:$0xff]
    %v331 = vld [vmem:[#allocation6 + $0x718] sm:$0xff]
    %v332 = vld [vmem:[#allocation6 + $0x720] sm:$0xff]
    %v333 = vld [vmem:[#allocation6 + $0x728] sm:$0xff]
    %v334 = vld [vmem:[#allocation6 + $0x730] sm:$0xff]
    %v335 = vld [vmem:[#allocation6 + $0x738] sm:$0xff]
    %v336 = vld [vmem:[#allocation6 + $0x740] sm:$0xff]
    %v337 = vld [vmem:[#allocation6 + $0x748] sm:$0xff]
    %v338 = vld [vmem:[#allocation6 + $0x750] sm:$0xff]
    %v339 = vld [vmem:[#allocation6 + $0x758] sm:$0xff]
    %v340 = vld [vmem:[#allocation6 + $0x760] sm:$0xff]
    %v341 = vld [vmem:[#allocation6 + $0x768] sm:$0xff]
    %v342 = vld [vmem:[#allocation6 + $0x770] sm:$0xff]
    %v343 = vld [vmem:[#allocation6 + $0x778] sm:$0xff]
    %v344 = vld [vmem:[#allocation6 + $0x780] sm:$0xff]
    %v345 = vld [vmem:[#allocation6 + $0x788] sm:$0xff]
    %v346 = vld [vmem:[#allocation6 + $0x790] sm:$0xff]
    %v347 = vld [vmem:[#allocation6 + $0x798] sm:$0xff]
    %v348 = vld [vmem:[#allocation6 + $0x7a0] sm:$0xff]
    %v349 = vld [vmem:[#allocation6 + $0x7a8] sm:$0xff]
    %v350 = vld [vmem:[#allocation6 + $0x7b0] sm:$0xff]
    %v351 = vld [vmem:[#allocation6 + $0x7b8] sm:$0xff]
    %v352 = vld [vmem:[#allocation6 + $0x7c0] sm:$0xff]
    %v353 = vld [vmem:[#allocation6 + $0x7c8] sm:$0xff]
    %v354 = vld [vmem:[#allocation6 + $0x7d0] sm:$0xff]
    %v355 = vld [vmem:[#allocation6 + $0x7d8] sm:$0xff]
    %v356 = vld [vmem:[#allocation6 + $0x7e0] sm:$0xff]
    %v357 = vld [vmem:[#allocation6 + $0x7e8] sm:$0xff]
    %v358 = vld [vmem:[#allocation6 + $0x7f0] sm:$0xff]
    %v359 = vld [vmem:[#allocation6 + $0x7f8] sm:$0xff]
    %v360 = vld [vmem:[#allocation6 + $0x800] sm:$0xff]
    %v361 = vld [vmem:[#allocation6 + $0x808] sm:$0xff]
    %v362 = vld [vmem:[#allocation6 + $0x810] sm:$0xff]
    %v363 = vld [vmem:[#allocation6 + $0x818] sm:$0xff]
    %v364 = vld [vmem:[#allocation6 + $0x820] sm:$0xff]
    %v365 = vld [vmem:[#allocation6 + $0x828] sm:$0xff]
    %v366 = vld [vmem:[#allocation6 + $0x830] sm:$0xff]
    %v367 = vld [vmem:[#allocation6 + $0x838] sm:$0xff]
    %v368 = vld [vmem:[#allocation6 + $0x840] sm:$0xff]
    %v369 = vld [vmem:[#allocation6 + $0x848] sm:$0xff]
    %v370 = vld [vmem:[#allocation6 + $0x850] sm:$0xff]
    %v371 = vld [vmem:[#allocation6 + $0x858] sm:$0xff]
    %v372 = vld [vmem:[#allocation6 + $0x860] sm:$0xff]
    %v373 = vld [vmem:[#allocation6 + $0x868] sm:$0xff]
    %v374 = vld [vmem:[#allocation6 + $0x870] sm:$0xff]
    %v375 = vld [vmem:[#allocation6 + $0x878] sm:$0xff]
    %v376 = vld [vmem:[#allocation6 + $0x880] sm:$0xff]
    %v377 = vld [vmem:[#allocation6 + $0x888] sm:$0xff]
    %v378 = vld [vmem:[#allocation6 + $0x890] sm:$0xff]
    %v379 = vld [vmem:[#allocation6 + $0x898] sm:$0xff]
    %v380 = vld [vmem:[#allocation6 + $0x8a0] sm:$0xff]
    %v381 = vld [vmem:[#allocation6 + $0x8a8] sm:$0xff]
    %v382 = vld [vmem:[#allocation6 + $0x8b0] sm:$0xff]
    %v383 = vld [vmem:[#allocation6 + $0x8b8] sm:$0xff]
    %v384 = vld [vmem:[#allocation6 + $0x8c0] sm:$0xff]
    %v385 = vld [vmem:[#allocation6 + $0x8c8] sm:$0xff]
    %v386 = vld [vmem:[#allocation6 + $0x8d0] sm:$0xff]
    %v387 = vld [vmem:[#allocation6 + $0x8d8] sm:$0xff]
    %v388 = vld [vmem:[#allocation6 + $0x8e0] sm:$0xff]
    %v389 = vld [vmem:[#allocation6 + $0x8e8] sm:$0xff]
    %v390 = vld [vmem:[#allocation6 + $0x8f0] sm:$0xff]
    %v391 = vld [vmem:[#allocation6 + $0x8f8] sm:$0xff]
    %v392 = vld [vmem:[#allocation6 + $0x900] sm:$0xff]
    %v393 = vld [vmem:[#allocation6 + $0x908] sm:$0xff]
    %v394 = vld [vmem:[#allocation6 + $0x910] sm:$0xff]
    %v395 = vld [vmem:[#allocation6 + $0x918] sm:$0xff]
    %v396 = vld [vmem:[#allocation6 + $0x920] sm:$0xff]
    %v397 = vld [vmem:[#allocation6 + $0x928] sm:$0xff]
    %v398 = vld [vmem:[#allocation6 + $0x930] sm:$0xff]
    %v399 = vld [vmem:[#allocation6 + $0x938] sm:$0xff]
    %v400 = vld [vmem:[#allocation6 + $0x940] sm:$0xff]
    %v401 = vld [vmem:[#allocation6 + $0x948] sm:$0xff]
    %v402 = vld [vmem:[#allocation6 + $0x950] sm:$0xff]
    %v403 = vld [vmem:[#allocation6 + $0x958] sm:$0xff]
    %v404 = vld [vmem:[#allocation6 + $0x960] sm:$0xff]
    %v405 = vld [vmem:[#allocation6 + $0x968] sm:$0xff]
    %v406 = vld [vmem:[#allocation6 + $0x970] sm:$0xff]
    %v407 = vld [vmem:[#allocation6 + $0x978] sm:$0xff]
    %v408 = vld [vmem:[#allocation6 + $0x980] sm:$0xff]
    %v409 = vld [vmem:[#allocation6 + $0x988] sm:$0xff]
    %v410 = vld [vmem:[#allocation6 + $0x990] sm:$0xff]
    %v411 = vld [vmem:[#allocation6 + $0x998] sm:$0xff]
    %v412 = vld [vmem:[#allocation6 + $0x9a0] sm:$0xff]
    %v413 = vld [vmem:[#allocation6 + $0x9a8] sm:$0xff]
    %v414 = vld [vmem:[#allocation6 + $0x9b0] sm:$0xff]
    %v415 = vld [vmem:[#allocation6 + $0x9b8] sm:$0xff]
    %v416 = vld [vmem:[#allocation6 + $0x9c0] sm:$0xff]
    %v417 = vld [vmem:[#allocation6 + $0x9c8] sm:$0xff]
    %v418 = vld [vmem:[#allocation6 + $0x9d0] sm:$0xff]
    %v419 = vld [vmem:[#allocation6 + $0x9d8] sm:$0xff]
    %v420 = vld [vmem:[#allocation6 + $0x9e0] sm:$0xff]
    %v421 = vld [vmem:[#allocation6 + $0x9e8] sm:$0xff]
    %v422 = vld [vmem:[#allocation6 + $0x9f0] sm:$0xff]
    %v423 = vld [vmem:[#allocation6 + $0x9f8] sm:$0xff]
    %v424 = vld [vmem:[#allocation6 + $0xa00] sm:$0xff]
    %v425 = vld [vmem:[#allocation6 + $0xa08] sm:$0xff]
    %v426 = vld [vmem:[#allocation6 + $0xa10] sm:$0xff]
    %v427 = vld [vmem:[#allocation6 + $0xa18] sm:$0xff]
    %v428 = vld [vmem:[#allocation6 + $0xa20] sm:$0xff]
    %v429 = vld [vmem:[#allocation6 + $0xa28] sm:$0xff]
    %v430 = vld [vmem:[#allocation6 + $0xa30] sm:$0xff]
    %v431 = vld [vmem:[#allocation6 + $0xa38] sm:$0xff]
    %v432 = vld [vmem:[#allocation6 + $0xa40] sm:$0xff]
    %v433 = vld [vmem:[#allocation6 + $0xa48] sm:$0xff]
    %v434 = vld [vmem:[#allocation6 + $0xa50] sm:$0xff]
    %v435 = vld [vmem:[#allocation6 + $0xa58] sm:$0xff]
    %v436 = vld [vmem:[#allocation6 + $0xa60] sm:$0xff]
    %v437 = vld [vmem:[#allocation6 + $0xa68] sm:$0xff]
    %v438 = vld [vmem:[#allocation6 + $0xa70] sm:$0xff]
    %v439 = vld [vmem:[#allocation6 + $0xa78] sm:$0xff]
    %v440 = vld [vmem:[#allocation6 + $0xa80] sm:$0xff]
    %v441 = vld [vmem:[#allocation6 + $0xa88] sm:$0xff]
    %v442 = vld [vmem:[#allocation6 + $0xa90] sm:$0xff]
    %v443 = vld [vmem:[#allocation6 + $0xa98] sm:$0xff]
    %v444 = vld [vmem:[#allocation6 + $0xaa0] sm:$0xff]
    %v445 = vld [vmem:[#allocation6 + $0xaa8] sm:$0xff]
    %v446 = vld [vmem:[#allocation6 + $0xab0] sm:$0xff]
    %v447 = vld [vmem:[#allocation6 + $0xab8] sm:$0xff]
    %v448 = vld [vmem:[#allocation6 + $0xac0] sm:$0xff]
    %v449 = vld [vmem:[#allocation6 + $0xac8] sm:$0xff]
    %v450 = vld [vmem:[#allocation6 + $0xad0] sm:$0xff]
    %v451 = vld [vmem:[#allocation6 + $0xad8] sm:$0xff]
    %v452 = vld [vmem:[#allocation6 + $0xae0] sm:$0xff]
    %v453 = vld [vmem:[#allocation6 + $0xae8] sm:$0xff]
    %v454 = vld [vmem:[#allocation6 + $0xaf0] sm:$0xff]
    %v455 = vld [vmem:[#allocation6 + $0xaf8] sm:$0xff]
    %v456 = vld [vmem:[#allocation6 + $0xb00] sm:$0xff]
    %v457 = vld [vmem:[#allocation6 + $0xb08] sm:$0xff]
    %v458 = vld [vmem:[#allocation6 + $0xb10] sm:$0xff]
    %v459 = vld [vmem:[#allocation6 + $0xb18] sm:$0xff]
    %v460 = vld [vmem:[#allocation6 + $0xb20] sm:$0xff]
    %v461 = vld [vmem:[#allocation6 + $0xb28] sm:$0xff]
    %v462 = vld [vmem:[#allocation6 + $0xb30] sm:$0xff]
    %v463 = vld [vmem:[#allocation6 + $0xb38] sm:$0xff]
    %v464 = vld [vmem:[#allocation6 + $0xb40] sm:$0xff]
    %v465 = vld [vmem:[#allocation6 + $0xb48] sm:$0xff]
    %v466 = vld [vmem:[#allocation6 + $0xb50] sm:$0xff]
    %v467 = vld [vmem:[#allocation6 + $0xb58] sm:$0xff]
    %v468 = vld [vmem:[#allocation6 + $0xb60] sm:$0xff]
    %v469 = vld [vmem:[#allocation6 + $0xb68] sm:$0xff]
    %v470 = vld [vmem:[#allocation6 + $0xb70] sm:$0xff]
    %v471 = vld [vmem:[#allocation6 + $0xb78] sm:$0xff]
    %v472 = vld [vmem:[#allocation6 + $0xb80] sm:$0xff]
    %v473 = vld [vmem:[#allocation6 + $0xb88] sm:$0xff]
    %v474 = vld [vmem:[#allocation6 + $0xb90] sm:$0xff]
    %v475 = vld [vmem:[#allocation6 + $0xb98] sm:$0xff]
    %v476 = vld [vmem:[#allocation6 + $0xba0] sm:$0xff]
    %v477 = vld [vmem:[#allocation6 + $0xba8] sm:$0xff]
    %v478 = vld [vmem:[#allocation6 + $0xbb0] sm:$0xff]
    %v479 = vld [vmem:[#allocation6 + $0xbb8] sm:$0xff]
    %v480 = vld [vmem:[#allocation6 + $0xbc0] sm:$0xff]
    %v481 = vld [vmem:[#allocation6 + $0xbc8] sm:$0xff]
    %v482 = vld [vmem:[#allocation6 + $0xbd0] sm:$0xff]
    %v483 = vld [vmem:[#allocation6 + $0xbd8] sm:$0xff]
    %v484 = vld [vmem:[#allocation6 + $0xbe0] sm:$0xff]
    %v485 = vld [vmem:[#allocation6 + $0xbe8] sm:$0xff]
    %v486 = vld [vmem:[#allocation6 + $0xbf0] sm:$0xff]
    %v487 = vld [vmem:[#allocation6 + $0xbf8] sm:$0xff]
    %v488 = vld [vmem:[#allocation6 + $0xc00] sm:$0xff]
    %v489 = vld [vmem:[#allocation6 + $0xc08] sm:$0xff]
    %v490 = vld [vmem:[#allocation6 + $0xc10] sm:$0xff]
    %v491 = vld [vmem:[#allocation6 + $0xc18] sm:$0xff]
    %v492 = vld [vmem:[#allocation6 + $0xc20] sm:$0xff]
    %v493 = vld [vmem:[#allocation6 + $0xc28] sm:$0xff]
    %v494 = vld [vmem:[#allocation6 + $0xc30] sm:$0xff]
    %v495 = vld [vmem:[#allocation6 + $0xc38] sm:$0xff]
    %v496 = vld [vmem:[#allocation6 + $0xc40] sm:$0xff]
    %v497 = vld [vmem:[#allocation6 + $0xc48] sm:$0xff]
    %v498 = vld [vmem:[#allocation6 + $0xc50] sm:$0xff]
    %v499 = vld [vmem:[#allocation6 + $0xc58] sm:$0xff]
    %v500 = vld [vmem:[#allocation6 + $0xc60] sm:$0xff]
    %v501 = vld [vmem:[#allocation6 + $0xc68] sm:$0xff]
    %v502 = vld [vmem:[#allocation6 + $0xc70] sm:$0xff]
    %v503 = vld [vmem:[#allocation6 + $0xc78] sm:$0xff]
    %v504 = vld [vmem:[#allocation6 + $0xc80] sm:$0xff]
    %v505 = vld [vmem:[#allocation6 + $0xc88] sm:$0xff]
    %v506 = vld [vmem:[#allocation6 + $0xc90] sm:$0xff]
    %v507 = vld [vmem:[#allocation6 + $0xc98] sm:$0xff]
    %v508 = vld [vmem:[#allocation6 + $0xca0] sm:$0xff]
    %v509 = vld [vmem:[#allocation6 + $0xca8] sm:$0xff]
    %v510 = vld [vmem:[#allocation6 + $0xcb0] sm:$0xff]
    %v511 = vld [vmem:[#allocation6 + $0xcb8] sm:$0xff]
    %v512 = vld [vmem:[#allocation6 + $0xcc0] sm:$0xff]
    %v513 = vld [vmem:[#allocation6 + $0xcc8] sm:$0xff]
    %v514 = vld [vmem:[#allocation6 + $0xcd0] sm:$0xff]
    %v515 = vld [vmem:[#allocation6 + $0xcd8] sm:$0xff]
    %v516 = vld [vmem:[#allocation6 + $0xce0] sm:$0xff]
    %v517 = vld [vmem:[#allocation6 + $0xce8] sm:$0xff]
    %v518 = vld [vmem:[#allocation6 + $0xcf0] sm:$0xff]
    %v519 = vld [vmem:[#allocation6 + $0xcf8] sm:$0xff]
    %v520 = vld [vmem:[#allocation6 + $0xd00] sm:$0xff]
    %v521 = vld [vmem:[#allocation6 + $0xd08] sm:$0xff]
    %v522 = vld [vmem:[#allocation6 + $0xd10] sm:$0xff]
    %v523 = vld [vmem:[#allocation6 + $0xd18] sm:$0xff]
    %v524 = vld [vmem:[#allocation6 + $0xd20] sm:$0xff]
    %v525 = vld [vmem:[#allocation6 + $0xd28] sm:$0xff]
    %v526 = vld [vmem:[#allocation6 + $0xd30] sm:$0xff]
    %v527 = vld [vmem:[#allocation6 + $0xd38] sm:$0xff]
    %v528 = vld [vmem:[#allocation6 + $0xd40] sm:$0xff]
    %v529 = vld [vmem:[#allocation6 + $0xd48] sm:$0xff]
    %v530 = vld [vmem:[#allocation6 + $0xd50] sm:$0xff]
    %v531 = vld [vmem:[#allocation6 + $0xd58] sm:$0xff]
    %v532 = vld [vmem:[#allocation6 + $0xd60] sm:$0xff]
    %v533 = vld [vmem:[#allocation6 + $0xd68] sm:$0xff]
    %v534 = vld [vmem:[#allocation6 + $0xd70] sm:$0xff]
    %v535 = vld [vmem:[#allocation6 + $0xd78] sm:$0xff]
    %v536 = vld [vmem:[#allocation6 + $0xd80] sm:$0xff]
    %v537 = vld [vmem:[#allocation6 + $0xd88] sm:$0xff]
    %v538 = vld [vmem:[#allocation6 + $0xd90] sm:$0xff]
    %v539 = vld [vmem:[#allocation6 + $0xd98] sm:$0xff]
    %v540 = vld [vmem:[#allocation6 + $0xda0] sm:$0xff]
    %v541 = vld [vmem:[#allocation6 + $0xda8] sm:$0xff]
    %v542 = vld [vmem:[#allocation6 + $0xdb0] sm:$0xff]
    %v543 = vld [vmem:[#allocation6 + $0xdb8] sm:$0xff]
    %v544 = vld [vmem:[#allocation6 + $0xdc0] sm:$0xff]
    %v545 = vld [vmem:[#allocation6 + $0xdc8] sm:$0xff]
    %v546 = vld [vmem:[#allocation6 + $0xdd0] sm:$0xff]
    %v547 = vld [vmem:[#allocation6 + $0xdd8] sm:$0xff]
    %v548 = vld [vmem:[#allocation6 + $0xde0] sm:$0xff]
    %v549 = vld [vmem:[#allocation6 + $0xde8] sm:$0xff]
    %v550 = vld [vmem:[#allocation6 + $0xdf0] sm:$0xff]
    %v551 = vld [vmem:[#allocation6 + $0xdf8] sm:$0xff]
    %v552 = vld [vmem:[#allocation6 + $0xe00] sm:$0xff]
    %v553 = vld [vmem:[#allocation6 + $0xe08] sm:$0xff]
    %v554 = vld [vmem:[#allocation6 + $0xe10] sm:$0xff]
    %v555 = vld [vmem:[#allocation6 + $0xe18] sm:$0xff]
    %v556 = vld [vmem:[#allocation6 + $0xe20] sm:$0xff]
    %v557 = vld [vmem:[#allocation6 + $0xe28] sm:$0xff]
    %v558 = vld [vmem:[#allocation6 + $0xe30] sm:$0xff]
    %v559 = vld [vmem:[#allocation6 + $0xe38] sm:$0xff]
    %v560 = vld [vmem:[#allocation6 + $0xe40] sm:$0xff]
    %v561 = vld [vmem:[#allocation6 + $0xe48] sm:$0xff]
    %v562 = vld [vmem:[#allocation6 + $0xe50] sm:$0xff]
    %v563 = vld [vmem:[#allocation6 + $0xe58] sm:$0xff]
    %v564 = vld [vmem:[#allocation6 + $0xe60] sm:$0xff]
    %v565 = vld [vmem:[#allocation6 + $0xe68] sm:$0xff]
    %v566 = vld [vmem:[#allocation6 + $0xe70] sm:$0xff]
    %v567 = vld [vmem:[#allocation6 + $0xe78] sm:$0xff]
    %v568 = vld [vmem:[#allocation6 + $0xe80] sm:$0xff]
    %v569 = vld [vmem:[#allocation6 + $0xe88] sm:$0xff]
    %v570 = vld [vmem:[#allocation6 + $0xe90] sm:$0xff]
    %v571 = vld [vmem:[#allocation6 + $0xe98] sm:$0xff]
    %v572 = vld [vmem:[#allocation6 + $0xea0] sm:$0xff]
    %v573 = vld [vmem:[#allocation6 + $0xea8] sm:$0xff]
    %v574 = vld [vmem:[#allocation6 + $0xeb0] sm:$0xff]
    %v575 = vld [vmem:[#allocation6 + $0xeb8] sm:$0xff]
    %v576 = vld [vmem:[#allocation6 + $0xec0] sm:$0xff]
    %v577 = vld [vmem:[#allocation6 + $0xec8] sm:$0xff]
    %v578 = vld [vmem:[#allocation6 + $0xed0] sm:$0xff]
    %v579 = vld [vmem:[#allocation6 + $0xed8] sm:$0xff]
    %v580 = vld [vmem:[#allocation6 + $0xee0] sm:$0xff]
    %v581 = vld [vmem:[#allocation6 + $0xee8] sm:$0xff]
    %v582 = vld [vmem:[#allocation6 + $0xef0] sm:$0xff]
    %v583 = vld [vmem:[#allocation6 + $0xef8] sm:$0xff]
    %v584 = vld [vmem:[#allocation6 + $0xf00] sm:$0xff]
    %v585 = vld [vmem:[#allocation6 + $0xf08] sm:$0xff]
    %v586 = vld [vmem:[#allocation6 + $0xf10] sm:$0xff]
    %v587 = vld [vmem:[#allocation6 + $0xf18] sm:$0xff]
    %v588 = vld [vmem:[#allocation6 + $0xf20] sm:$0xff]
    %v589 = vld [vmem:[#allocation6 + $0xf28] sm:$0xff]
    %v590 = vld [vmem:[#allocation6 + $0xf30] sm:$0xff]
    %v591 = vld [vmem:[#allocation6 + $0xf38] sm:$0xff]
    %v592 = vld [vmem:[#allocation6 + $0xf40] sm:$0xff]
    %v593 = vld [vmem:[#allocation6 + $0xf48] sm:$0xff]
    %v594 = vld [vmem:[#allocation6 + $0xf50] sm:$0xff]
    %v595 = vld [vmem:[#allocation6 + $0xf58] sm:$0xff]
    %v596 = vld [vmem:[#allocation6 + $0xf60] sm:$0xff]
    %v597 = vld [vmem:[#allocation6 + $0xf68] sm:$0xff]
    %v598 = vld [vmem:[#allocation6 + $0xf70] sm:$0xff]
    %v599 = vld [vmem:[#allocation6 + $0xf78] sm:$0xff]
    %v600 = vld [vmem:[#allocation6 + $0xf80] sm:$0xff]
    %v601 = vld [vmem:[#allocation6 + $0xf88] sm:$0xff]
    %v602 = vld [vmem:[#allocation6 + $0xf90] sm:$0xff]
    %v603 = vld [vmem:[#allocation6 + $0xf98] sm:$0xff]
    %v604 = vld [vmem:[#allocation6 + $0xfa0] sm:$0xff]
    %v605 = vld [vmem:[#allocation6 + $0xfa8] sm:$0xff]
    %v606 = vld [vmem:[#allocation6 + $0xfb0] sm:$0xff]
    %v607 = vld [vmem:[#allocation6 + $0xfb8] sm:$0xff]
    %v608 = vld [vmem:[#allocation6 + $0xfc0] sm:$0xff]
    %v609 = vld [vmem:[#allocation6 + $0xfc8] sm:$0xff]
    %v610 = vld [vmem:[#allocation6 + $0xfd0] sm:$0xff]
    %v611 = vld [vmem:[#allocation6 + $0xfd8] sm:$0xff]
    %v612 = vld [vmem:[#allocation6 + $0xfe0] sm:$0xff]
    %v613 = vld [vmem:[#allocation6 + $0xfe8] sm:$0xff]
    %v614 = vld [vmem:[#allocation6 + $0xff0] sm:$0xff]
    %v615 = vld [vmem:[#allocation6 + $0xff8] sm:$0xff]
    %v616 = vld [vmem:[#allocation6 + $0x1000] sm:$0xff]
    %v617 = vld [vmem:[#allocation6 + $0x1008] sm:$0xff]
    %v618 = vld [vmem:[#allocation6 + $0x1010] sm:$0xff]
    %v619 = vld [vmem:[#allocation6 + $0x1018] sm:$0xff]
    %v620 = vld [vmem:[#allocation6 + $0x1020] sm:$0xff]
    %v621 = vld [vmem:[#allocation6 + $0x1028] sm:$0xff]
    %v622 = vld [vmem:[#allocation6 + $0x1030] sm:$0xff]
    %v623 = vld [vmem:[#allocation6 + $0x1038] sm:$0xff]
    %v624 = vld [vmem:[#allocation6 + $0x1040] sm:$0xff]
    %v625 = vld [vmem:[#allocation6 + $0x1048] sm:$0xff]
    %v626 = vld [vmem:[#allocation6 + $0x1050] sm:$0xff]
    %v627 = vld [vmem:[#allocation6 + $0x1058] sm:$0xff]
    %v628 = vld [vmem:[#allocation6 + $0x1060] sm:$0xff]
    %v629 = vld [vmem:[#allocation6 + $0x1068] sm:$0xff]
    %v630 = vld [vmem:[#allocation6 + $0x1070] sm:$0xff]
    %v631 = vld [vmem:[#allocation6 + $0x1078] sm:$0xff]
    %v632 = vld [vmem:[#allocation6 + $0x1080] sm:$0xff]
    %v633 = vld [vmem:[#allocation6 + $0x1088] sm:$0xff]
    %v634 = vld [vmem:[#allocation6 + $0x1090] sm:$0xff]
    %v635 = vld [vmem:[#allocation6 + $0x1098] sm:$0xff]
    %v636 = vld [vmem:[#allocation6 + $0x10a0] sm:$0xff]
    %v637 = vld [vmem:[#allocation6 + $0x10a8] sm:$0xff]
    %v638 = vld [vmem:[#allocation6 + $0x10b0] sm:$0xff]
    %v639 = vld [vmem:[#allocation6 + $0x10b8] sm:$0xff]
    %v640 = vld [vmem:[#allocation6 + $0x10c0] sm:$0xff]
    %v641 = vld [vmem:[#allocation6 + $0x10c8] sm:$0xff]
    %v642 = vld [vmem:[#allocation6 + $0x10d0] sm:$0xff]
    %v643 = vld [vmem:[#allocation6 + $0x10d8] sm:$0xff]
    %v644 = vld [vmem:[#allocation6 + $0x10e0] sm:$0xff]
    %v645 = vld [vmem:[#allocation6 + $0x10e8] sm:$0xff]
    %v646 = vld [vmem:[#allocation6 + $0x10f0] sm:$0xff]
    %v647 = vld [vmem:[#allocation6 + $0x10f8] sm:$0xff]
    %v648 = vld [vmem:[#allocation6 + $0x1100] sm:$0xff]
    %v649 = vld [vmem:[#allocation6 + $0x1108] sm:$0xff]
    %v650 = vld [vmem:[#allocation6 + $0x1110] sm:$0xff]
    %v651 = vld [vmem:[#allocation6 + $0x1118] sm:$0xff]
    %v652 = vld [vmem:[#allocation6 + $0x1120] sm:$0xff]
    %v653 = vld [vmem:[#allocation6 + $0x1128] sm:$0xff]
    %v654 = vld [vmem:[#allocation6 + $0x1130] sm:$0xff]
    %v655 = vld [vmem:[#allocation6 + $0x1138] sm:$0xff]
    %v656 = vld [vmem:[#allocation6 + $0x1140] sm:$0xff]
    %v657 = vld [vmem:[#allocation6 + $0x1148] sm:$0xff]
    %v658 = vld [vmem:[#allocation6 + $0x1150] sm:$0xff]
    %v659 = vld [vmem:[#allocation6 + $0x1158] sm:$0xff]
    %v660 = vld [vmem:[#allocation6 + $0x1160] sm:$0xff]
    %v661 = vld [vmem:[#allocation6 + $0x1168] sm:$0xff]
    %v662 = vld [vmem:[#allocation6 + $0x1170] sm:$0xff]
    %v663 = vld [vmem:[#allocation6 + $0x1178] sm:$0xff]
    %v664 = vld [vmem:[#allocation6 + $0x1180] sm:$0xff]
    %v665 = vld [vmem:[#allocation6 + $0x1188] sm:$0xff]
    %v666 = vld [vmem:[#allocation6 + $0x1190] sm:$0xff]
    %v667 = vld [vmem:[#allocation6 + $0x1198] sm:$0xff]
    %v668 = vld [vmem:[#allocation6 + $0x11a0] sm:$0xff]
    %v669 = vld [vmem:[#allocation6 + $0x11a8] sm:$0xff]
    %v670 = vld [vmem:[#allocation6 + $0x11b0] sm:$0xff]
    %v671 = vld [vmem:[#allocation6 + $0x11b8] sm:$0xff]
    %v672 = vld [vmem:[#allocation6 + $0x11c0] sm:$0xff]
    %v673 = vld [vmem:[#allocation6 + $0x11c8] sm:$0xff]
    %v674 = vld [vmem:[#allocation6 + $0x11d0] sm:$0xff]
    %v675 = vld [vmem:[#allocation6 + $0x11d8] sm:$0xff]
    %v676 = vld [vmem:[#allocation6 + $0x11e0] sm:$0xff]
    %v677 = vld [vmem:[#allocation6 + $0x11e8] sm:$0xff]
    %v678 = vld [vmem:[#allocation6 + $0x11f0] sm:$0xff]
    %v679 = vld [vmem:[#allocation6 + $0x11f8] sm:$0xff]
    %v680 = vld [vmem:[#allocation6 + $0x1200] sm:$0xff]
    %v681 = vld [vmem:[#allocation6 + $0x1208] sm:$0xff]
    %v682 = vld [vmem:[#allocation6 + $0x1210] sm:$0xff]
    %v683 = vld [vmem:[#allocation6 + $0x1218] sm:$0xff]
    %v684 = vld [vmem:[#allocation6 + $0x1220] sm:$0xff]
    %v685 = vld [vmem:[#allocation6 + $0x1228] sm:$0xff]
    %v686 = vld [vmem:[#allocation6 + $0x1230] sm:$0xff]
    %v687 = vld [vmem:[#allocation6 + $0x1238] sm:$0xff]
    %v688 = vld [vmem:[#allocation6 + $0x1240] sm:$0xff]
    %v689 = vld [vmem:[#allocation6 + $0x1248] sm:$0xff]
    %v690 = vld [vmem:[#allocation6 + $0x1250] sm:$0xff]
    %v691 = vld [vmem:[#allocation6 + $0x1258] sm:$0xff]
    %v692 = vld [vmem:[#allocation6 + $0x1260] sm:$0xff]
    %v693 = vld [vmem:[#allocation6 + $0x1268] sm:$0xff]
    %v694 = vld [vmem:[#allocation6 + $0x1270] sm:$0xff]
    %v695 = vld [vmem:[#allocation6 + $0x1278] sm:$0xff]
    %v696 = vld [vmem:[#allocation6 + $0x1280] sm:$0xff]
    %v697 = vld [vmem:[#allocation6 + $0x1288] sm:$0xff]
    %v698 = vld [vmem:[#allocation6 + $0x1290] sm:$0xff]
    %v699 = vld [vmem:[#allocation6 + $0x1298] sm:$0xff]
    %v700 = vld [vmem:[#allocation6 + $0x12a0] sm:$0xff]
    %v701 = vld [vmem:[#allocation6 + $0x12a8] sm:$0xff]
    %v702 = vld [vmem:[#allocation6 + $0x12b0] sm:$0xff]
    %v703 = vld [vmem:[#allocation6 + $0x12b8] sm:$0xff]
    %v704 = vld [vmem:[#allocation6 + $0x12c0] sm:$0xff]
    %v705 = vld [vmem:[#allocation6 + $0x12c8] sm:$0xff]
    %v706 = vld [vmem:[#allocation6 + $0x12d0] sm:$0xff]
    %v707 = vld [vmem:[#allocation6 + $0x12d8] sm:$0xff]
    %v708 = vld [vmem:[#allocation6 + $0x12e0] sm:$0xff]
    %v709 = vld [vmem:[#allocation6 + $0x12e8] sm:$0xff]
    %v710 = vld [vmem:[#allocation6 + $0x12f0] sm:$0xff]
    %v711 = vld [vmem:[#allocation6 + $0x12f8] sm:$0xff]
    %v712 = vld [vmem:[#allocation6 + $0x1300] sm:$0xff]
    %v713 = vld [vmem:[#allocation6 + $0x1308] sm:$0xff]
    %v714 = vld [vmem:[#allocation6 + $0x1310] sm:$0xff]
    %v715 = vld [vmem:[#allocation6 + $0x1318] sm:$0xff]
    %v716 = vld [vmem:[#allocation6 + $0x1320] sm:$0xff]
    %v717 = vld [vmem:[#allocation6 + $0x1328] sm:$0xff]
    %v718 = vld [vmem:[#allocation6 + $0x1330] sm:$0xff]
    %v719 = vld [vmem:[#allocation6 + $0x1338] sm:$0xff]
    %v720 = vld [vmem:[#allocation6 + $0x1340] sm:$0xff]
    %v721 = vld [vmem:[#allocation6 + $0x1348] sm:$0xff]
    %v722 = vld [vmem:[#allocation6 + $0x1350] sm:$0xff]
    %v723 = vld [vmem:[#allocation6 + $0x1358] sm:$0xff]
    %v724 = vld [vmem:[#allocation6 + $0x1360] sm:$0xff]
    %v725 = vld [vmem:[#allocation6 + $0x1368] sm:$0xff]
    %v726 = vld [vmem:[#allocation6 + $0x1370] sm:$0xff]
    %v727 = vld [vmem:[#allocation6 + $0x1378] sm:$0xff]
    %v728 = vld [vmem:[#allocation6 + $0x1380] sm:$0xff]
    %v729 = vld [vmem:[#allocation6 + $0x1388] sm:$0xff]
    %v730 = vld [vmem:[#allocation6 + $0x1390] sm:$0xff]
    %v731 = vld [vmem:[#allocation6 + $0x1398] sm:$0xff]
    %v732 = vld [vmem:[#allocation6 + $0x13a0] sm:$0xff]
    %v733 = vld [vmem:[#allocation6 + $0x13a8] sm:$0xff]
    %v734 = vld [vmem:[#allocation6 + $0x13b0] sm:$0xff]
    %v735 = vld [vmem:[#allocation6 + $0x13b8] sm:$0xff]
    %v736 = vld [vmem:[#allocation6 + $0x13c0] sm:$0xff]
    %v737 = vld [vmem:[#allocation6 + $0x13c8] sm:$0xff]
    %v738 = vld [vmem:[#allocation6 + $0x13d0] sm:$0xff]
    %v739 = vld [vmem:[#allocation6 + $0x13d8] sm:$0xff]
    %v740 = vld [vmem:[#allocation6 + $0x13e0] sm:$0xff]
    %v741 = vld [vmem:[#allocation6 + $0x13e8] sm:$0xff]
    %v742 = vld [vmem:[#allocation6 + $0x13f0] sm:$0xff]
    %v743 = vld [vmem:[#allocation6 + $0x13f8] sm:$0xff]
    %v744 = vld [vmem:[#allocation6 + $0x1400] sm:$0xff]
    %v745 = vld [vmem:[#allocation6 + $0x1408] sm:$0xff]
    %v746 = vld [vmem:[#allocation6 + $0x1410] sm:$0xff]
    %v747 = vld [vmem:[#allocation6 + $0x1418] sm:$0xff]
    %v748 = vld [vmem:[#allocation6 + $0x1420] sm:$0xff]
    %v749 = vld [vmem:[#allocation6 + $0x1428] sm:$0xff]
    %v750 = vld [vmem:[#allocation6 + $0x1430] sm:$0xff]
    %v751 = vld [vmem:[#allocation6 + $0x1438] sm:$0xff]
    %v752 = vld [vmem:[#allocation6 + $0x1440] sm:$0xff]
    %v753 = vld [vmem:[#allocation6 + $0x1448] sm:$0xff]
    %v754 = vld [vmem:[#allocation6 + $0x1450] sm:$0xff]
    %v755 = vld [vmem:[#allocation6 + $0x1458] sm:$0xff]
    %v756 = vld [vmem:[#allocation6 + $0x1460] sm:$0xff]
    %v757 = vld [vmem:[#allocation6 + $0x1468] sm:$0xff]
    %v758 = vld [vmem:[#allocation6 + $0x1470] sm:$0xff]
    %v759 = vld [vmem:[#allocation6 + $0x1478] sm:$0xff]
    %v760 = vld [vmem:[#allocation6 + $0x1480] sm:$0xff]
    %v761 = vld [vmem:[#allocation6 + $0x1488] sm:$0xff]
    %v762 = vld [vmem:[#allocation6 + $0x1490] sm:$0xff]
    %v763 = vld [vmem:[#allocation6 + $0x1498] sm:$0xff]
    %v764 = vld [vmem:[#allocation6 + $0x14a0] sm:$0xff]
    %v765 = vld [vmem:[#allocation6 + $0x14a8] sm:$0xff]
    %v766 = vld [vmem:[#allocation6 + $0x14b0] sm:$0xff]
    %v767 = vld [vmem:[#allocation6 + $0x14b8] sm:$0xff]
    %v768 = vld [vmem:[#allocation6 + $0x14c0] sm:$0xff]
    %v769 = vld [vmem:[#allocation6 + $0x14c8] sm:$0xff]
    %v770 = vld [vmem:[#allocation6 + $0x14d0] sm:$0xff]
    %v771 = vld [vmem:[#allocation6 + $0x14d8] sm:$0xff]
    %v772 = vld [vmem:[#allocation6 + $0x14e0] sm:$0xff]
    %v773 = vld [vmem:[#allocation6 + $0x14e8] sm:$0xff]
    %v774 = vld [vmem:[#allocation6 + $0x14f0] sm:$0xff]
    %v775 = vld [vmem:[#allocation6 + $0x14f8] sm:$0xff]
    %v776 = vld [vmem:[#allocation6 + $0x1500] sm:$0xff]
    %v777 = vld [vmem:[#allocation6 + $0x1508] sm:$0xff]
    %v778 = vld [vmem:[#allocation6 + $0x1510] sm:$0xff]
    %v779 = vld [vmem:[#allocation6 + $0x1518] sm:$0xff]
    %v780 = vld [vmem:[#allocation6 + $0x1520] sm:$0xff]
    %v781 = vld [vmem:[#allocation6 + $0x1528] sm:$0xff]
    %v782 = vld [vmem:[#allocation6 + $0x1530] sm:$0xff]
    %v783 = vld [vmem:[#allocation6 + $0x1538] sm:$0xff]
    %v784 = vld [vmem:[#allocation6 + $0x1540] sm:$0xff]
    %v785 = vld [vmem:[#allocation6 + $0x1548] sm:$0xff]
    %v786 = vld [vmem:[#allocation6 + $0x1550] sm:$0xff]
    %v787 = vld [vmem:[#allocation6 + $0x1558] sm:$0xff]
    %v788 = vld [vmem:[#allocation6 + $0x1560] sm:$0xff]
    %v789 = vld [vmem:[#allocation6 + $0x1568] sm:$0xff]
    %v790 = vld [vmem:[#allocation6 + $0x1570] sm:$0xff]
    %v791 = vld [vmem:[#allocation6 + $0x1578] sm:$0xff]
    %v792 = vld [vmem:[#allocation6 + $0x1580] sm:$0xff]
    %v793 = vld [vmem:[#allocation6 + $0x1588] sm:$0xff]
    %v794 = vld [vmem:[#allocation6 + $0x1590] sm:$0xff]
    %v795 = vld [vmem:[#allocation6 + $0x1598] sm:$0xff]
    %v796 = vld [vmem:[#allocation6 + $0x15a0] sm:$0xff]
    %v797 = vld [vmem:[#allocation6 + $0x15a8] sm:$0xff]
    %v798 = vld [vmem:[#allocation6 + $0x15b0] sm:$0xff]
    %v799 = vld [vmem:[#allocation6 + $0x15b8] sm:$0xff]
    %v800 = vld [vmem:[#allocation6 + $0x15c0] sm:$0xff]
    %v801 = vld [vmem:[#allocation6 + $0x15c8] sm:$0xff]
    %v802 = vld [vmem:[#allocation6 + $0x15d0] sm:$0xff]
    %v803 = vld [vmem:[#allocation6 + $0x15d8] sm:$0xff]
    %v804 = vld [vmem:[#allocation6 + $0x15e0] sm:$0xff]
    %v805 = vld [vmem:[#allocation6 + $0x15e8] sm:$0xff]
    %v806 = vld [vmem:[#allocation6 + $0x15f0] sm:$0xff]
    %v807 = vld [vmem:[#allocation6 + $0x15f8] sm:$0xff]
    %v808 = vld [vmem:[#allocation6 + $0x1600] sm:$0xff]
    %v809 = vld [vmem:[#allocation6 + $0x1608] sm:$0xff]
    %v810 = vld [vmem:[#allocation6 + $0x1610] sm:$0xff]
    %v811 = vld [vmem:[#allocation6 + $0x1618] sm:$0xff]
    %v812 = vld [vmem:[#allocation6 + $0x1620] sm:$0xff]
    %v813 = vld [vmem:[#allocation6 + $0x1628] sm:$0xff]
    %v814 = vld [vmem:[#allocation6 + $0x1630] sm:$0xff]
    %v815 = vld [vmem:[#allocation6 + $0x1638] sm:$0xff]
    %v816 = vld [vmem:[#allocation6 + $0x1640] sm:$0xff]
    %v817 = vld [vmem:[#allocation6 + $0x1648] sm:$0xff]
    %v818 = vld [vmem:[#allocation6 + $0x1650] sm:$0xff]
    %v819 = vld [vmem:[#allocation6 + $0x1658] sm:$0xff]
    %v820 = vld [vmem:[#allocation6 + $0x1660] sm:$0xff]
    %v821 = vld [vmem:[#allocation6 + $0x1668] sm:$0xff]
    %v822 = vld [vmem:[#allocation6 + $0x1670] sm:$0xff]
    %v823 = vld [vmem:[#allocation6 + $0x1678] sm:$0xff]
    %v824 = vld [vmem:[#allocation6 + $0x1680] sm:$0xff]
    %v825 = vld [vmem:[#allocation6 + $0x1688] sm:$0xff]
    %v826 = vld [vmem:[#allocation6 + $0x1690] sm:$0xff]
    %v827 = vld [vmem:[#allocation6 + $0x1698] sm:$0xff]
    %v828 = vld [vmem:[#allocation6 + $0x16a0] sm:$0xff]
    %v829 = vld [vmem:[#allocation6 + $0x16a8] sm:$0xff]
    %v830 = vld [vmem:[#allocation6 + $0x16b0] sm:$0xff]
    %v831 = vld [vmem:[#allocation6 + $0x16b8] sm:$0xff]
    %v832 = vld [vmem:[#allocation6 + $0x16c0] sm:$0xff]
    %v833 = vld [vmem:[#allocation6 + $0x16c8] sm:$0xff]
    %v834 = vld [vmem:[#allocation6 + $0x16d0] sm:$0xff]
    %v835 = vld [vmem:[#allocation6 + $0x16d8] sm:$0xff]
    %v836 = vld [vmem:[#allocation6 + $0x16e0] sm:$0xff]
    %v837 = vld [vmem:[#allocation6 + $0x16e8] sm:$0xff]
    %v838 = vld [vmem:[#allocation6 + $0x16f0] sm:$0xff]
    %v839 = vld [vmem:[#allocation6 + $0x16f8] sm:$0xff]
    %v840 = vld [vmem:[#allocation6 + $0x1700] sm:$0xff]
    %v841 = vld [vmem:[#allocation6 + $0x1708] sm:$0xff]
    %v842 = vld [vmem:[#allocation6 + $0x1710] sm:$0xff]
    %v843 = vld [vmem:[#allocation6 + $0x1718] sm:$0xff]
    %v844 = vld [vmem:[#allocation6 + $0x1720] sm:$0xff]
    %v845 = vld [vmem:[#allocation6 + $0x1728] sm:$0xff]
    %v846 = vld [vmem:[#allocation6 + $0x1730] sm:$0xff]
    %v847 = vld [vmem:[#allocation6 + $0x1738] sm:$0xff]
    %v848 = vld [vmem:[#allocation6 + $0x1740] sm:$0xff]
    %v849 = vld [vmem:[#allocation6 + $0x1748] sm:$0xff]
    %v850 = vld [vmem:[#allocation6 + $0x1750] sm:$0xff]
    %v851 = vld [vmem:[#allocation6 + $0x1758] sm:$0xff]
    %v852 = vld [vmem:[#allocation6 + $0x1760] sm:$0xff]
    %v853 = vld [vmem:[#allocation6 + $0x1768] sm:$0xff]
    %v854 = vld [vmem:[#allocation6 + $0x1770] sm:$0xff]
    %v855 = vld [vmem:[#allocation6 + $0x1778] sm:$0xff]
    %v856 = vld [vmem:[#allocation6 + $0x1780] sm:$0xff]
    %v857 = vld [vmem:[#allocation6 + $0x1788] sm:$0xff]
    %v858 = vld [vmem:[#allocation6 + $0x1790] sm:$0xff]
    %v859 = vld [vmem:[#allocation6 + $0x1798] sm:$0xff]
    %v860 = vld [vmem:[#allocation6 + $0x17a0] sm:$0xff]
    %v861 = vld [vmem:[#allocation6 + $0x17a8] sm:$0xff]
    %v862 = vld [vmem:[#allocation6 + $0x17b0] sm:$0xff]
    %v863 = vld [vmem:[#allocation6 + $0x17b8] sm:$0xff]
    %v864 = vld [vmem:[#allocation6 + $0x17c0] sm:$0xff]
    %v865 = vld [vmem:[#allocation6 + $0x17c8] sm:$0xff]
    %v866 = vld [vmem:[#allocation6 + $0x17d0] sm:$0xff]
    %v867 = vld [vmem:[#allocation6 + $0x17d8] sm:$0xff]
    %v868 = vld [vmem:[#allocation6 + $0x17e0] sm:$0xff]
    %v869 = vld [vmem:[#allocation6 + $0x17e8] sm:$0xff]
    %v870 = vld [vmem:[#allocation6 + $0x17f0] sm:$0xff]
    %v871 = vld [vmem:[#allocation6 + $0x17f8] sm:$0xff]
    %v872 = vld [vmem:[#allocation6 + $0x1800] sm:$0xff]
    %v873 = vld [vmem:[#allocation6 + $0x1808] sm:$0xff]
    %v874 = vld [vmem:[#allocation6 + $0x1810] sm:$0xff]
    %v875 = vld [vmem:[#allocation6 + $0x1818] sm:$0xff]
    %v876 = vld [vmem:[#allocation6 + $0x1820] sm:$0xff]
    %v877 = vld [vmem:[#allocation6 + $0x1828] sm:$0xff]
    %v878 = vld [vmem:[#allocation6 + $0x1830] sm:$0xff]
    %v879 = vld [vmem:[#allocation6 + $0x1838] sm:$0xff]
    %v880 = vld [vmem:[#allocation6 + $0x1840] sm:$0xff]
    %v881 = vld [vmem:[#allocation6 + $0x1848] sm:$0xff]
    %v882 = vld [vmem:[#allocation6 + $0x1850] sm:$0xff]
    %v883 = vld [vmem:[#allocation6 + $0x1858] sm:$0xff]
    %v884 = vld [vmem:[#allocation6 + $0x1860] sm:$0xff]
    %v885 = vld [vmem:[#allocation6 + $0x1868] sm:$0xff]
    %v886 = vld [vmem:[#allocation6 + $0x1870] sm:$0xff]
    %v887 = vld [vmem:[#allocation6 + $0x1878] sm:$0xff]
    %v888 = vld [vmem:[#allocation6 + $0x1880] sm:$0xff]
    %v889 = vld [vmem:[#allocation6 + $0x1888] sm:$0xff]
    %v890 = vld [vmem:[#allocation6 + $0x1890] sm:$0xff]
    %v891 = vld [vmem:[#allocation6 + $0x1898] sm:$0xff]
    %v892 = vld [vmem:[#allocation6 + $0x18a0] sm:$0xff]
    %v893 = vld [vmem:[#allocation6 + $0x18a8] sm:$0xff]
    %v894 = vld [vmem:[#allocation6 + $0x18b0] sm:$0xff]
    %v895 = vld [vmem:[#allocation6 + $0x18b8] sm:$0xff]
    %v896 = vld [vmem:[#allocation6 + $0x18c0] sm:$0xff]
    %v897 = vld [vmem:[#allocation6 + $0x18c8] sm:$0xff]
    %v898 = vld [vmem:[#allocation6 + $0x18d0] sm:$0xff]
    %v899 = vld [vmem:[#allocation6 + $0x18d8] sm:$0xff]
    %v900 = vld [vmem:[#allocation6 + $0x18e0] sm:$0xff]
    %v901 = vld [vmem:[#allocation6 + $0x18e8] sm:$0xff]
    %v902 = vld [vmem:[#allocation6 + $0x18f0] sm:$0xff]
    %v903 = vld [vmem:[#allocation6 + $0x18f8] sm:$0xff]
    %v904 = vld [vmem:[#allocation6 + $0x1900] sm:$0xff]
    %v905 = vld [vmem:[#allocation6 + $0x1908] sm:$0xff]
    %v906 = vld [vmem:[#allocation6 + $0x1910] sm:$0xff]
    %v907 = vld [vmem:[#allocation6 + $0x1918] sm:$0xff]
    %v908 = vld [vmem:[#allocation6 + $0x1920] sm:$0xff]
    %v909 = vld [vmem:[#allocation6 + $0x1928] sm:$0xff]
    %v910 = vld [vmem:[#allocation6 + $0x1930] sm:$0xff]
    %v911 = vld [vmem:[#allocation6 + $0x1938] sm:$0xff]
    %v912 = vld [vmem:[#allocation6 + $0x1940] sm:$0xff]
    %v913 = vld [vmem:[#allocation6 + $0x1948] sm:$0xff]
    %v914 = vld [vmem:[#allocation6 + $0x1950] sm:$0xff]
    %v915 = vld [vmem:[#allocation6 + $0x1958] sm:$0xff]
    %v916 = vld [vmem:[#allocation6 + $0x1960] sm:$0xff]
    %v917 = vld [vmem:[#allocation6 + $0x1968] sm:$0xff]
    %v918 = vld [vmem:[#allocation6 + $0x1970] sm:$0xff]
    %v919 = vld [vmem:[#allocation6 + $0x1978] sm:$0xff]
    %v920 = vld [vmem:[#allocation6 + $0x1980] sm:$0xff]
    %v921 = vld [vmem:[#allocation6 + $0x1988] sm:$0xff]
    %v922 = vld [vmem:[#allocation6 + $0x1990] sm:$0xff]
    %v923 = vld [vmem:[#allocation6 + $0x1998] sm:$0xff]
    %v924 = vld [vmem:[#allocation6 + $0x19a0] sm:$0xff]
    %v925 = vld [vmem:[#allocation6 + $0x19a8] sm:$0xff]
    %v926 = vld [vmem:[#allocation6 + $0x19b0] sm:$0xff]
    %v927 = vld [vmem:[#allocation6 + $0x19b8] sm:$0xff]
    %v928 = vld [vmem:[#allocation6 + $0x19c0] sm:$0xff]
    %v929 = vld [vmem:[#allocation6 + $0x19c8] sm:$0xff]
    %v930 = vld [vmem:[#allocation6 + $0x19d0] sm:$0xff]
    %v931 = vld [vmem:[#allocation6 + $0x19d8] sm:$0xff]
    %v932 = vld [vmem:[#allocation6 + $0x19e0] sm:$0xff]
    %v933 = vld [vmem:[#allocation6 + $0x19e8] sm:$0xff]
    %v934 = vld [vmem:[#allocation6 + $0x19f0] sm:$0xff]
    %v935 = vld [vmem:[#allocation6 + $0x19f8] sm:$0xff]
    %v936 = vld [vmem:[#allocation6 + $0x1a00] sm:$0xff]
    %v937 = vld [vmem:[#allocation6 + $0x1a08] sm:$0xff]
    %v938 = vld [vmem:[#allocation6 + $0x1a10] sm:$0xff]
    %v939 = vld [vmem:[#allocation6 + $0x1a18] sm:$0xff]
    %v940 = vld [vmem:[#allocation6 + $0x1a20] sm:$0xff]
    %v941 = vld [vmem:[#allocation6 + $0x1a28] sm:$0xff]
    %v942 = vld [vmem:[#allocation6 + $0x1a30] sm:$0xff]
    %v943 = vld [vmem:[#allocation6 + $0x1a38] sm:$0xff]
    %v944 = vld [vmem:[#allocation6 + $0x1a40] sm:$0xff]
    %v945 = vld [vmem:[#allocation6 + $0x1a48] sm:$0xff]
    %v946 = vld [vmem:[#allocation6 + $0x1a50] sm:$0xff]
    %v947 = vld [vmem:[#allocation6 + $0x1a58] sm:$0xff]
    %v948 = vld [vmem:[#allocation6 + $0x1a60] sm:$0xff]
    %v949 = vld [vmem:[#allocation6 + $0x1a68] sm:$0xff]
    %v950 = vld [vmem:[#allocation6 + $0x1a70] sm:$0xff]
    %v951 = vld [vmem:[#allocation6 + $0x1a78] sm:$0xff]
    %v952 = vld [vmem:[#allocation6 + $0x1a80] sm:$0xff]
    %v953 = vld [vmem:[#allocation6 + $0x1a88] sm:$0xff]
    %v954 = vld [vmem:[#allocation6 + $0x1a90] sm:$0xff]
    %v955 = vld [vmem:[#allocation6 + $0x1a98] sm:$0xff]
    %v956 = vld [vmem:[#allocation6 + $0x1aa0] sm:$0xff]
    %v957 = vld [vmem:[#allocation6 + $0x1aa8] sm:$0xff]
    %v958 = vld [vmem:[#allocation6 + $0x1ab0] sm:$0xff]
    %v959 = vld [vmem:[#allocation6 + $0x1ab8] sm:$0xff]
    %v960 = vld [vmem:[#allocation6 + $0x1ac0] sm:$0xff]
    %v961 = vld [vmem:[#allocation6 + $0x1ac8] sm:$0xff]
    %v962 = vld [vmem:[#allocation6 + $0x1ad0] sm:$0xff]
    %v963 = vld [vmem:[#allocation6 + $0x1ad8] sm:$0xff]
    %v964 = vld [vmem:[#allocation6 + $0x1ae0] sm:$0xff]
    %v965 = vld [vmem:[#allocation6 + $0x1ae8] sm:$0xff]
    %v966 = vld [vmem:[#allocation6 + $0x1af0] sm:$0xff]
    %v967 = vld [vmem:[#allocation6 + $0x1af8] sm:$0xff]
    %v968 = vld [vmem:[#allocation8] sm:$0xff]
    %v969 = vld [vmem:[#allocation8 + $0x8] sm:$0xff]
    %v970 = vld [vmem:[#allocation8 + $0x10] sm:$0x3]
    %v974 = vlaneseq
    %v975 = vshrl.u32 %v974, 7
    %v976 = vsub.s32 0, %v975
    %v977 = vrot.slane %v968, %v976
    %v978 = vlaneseq
    %v979 = vshrl.u32 %v978, 7
    %v980 = vsub.s32 1, %v979
    %v981 = vrot.slane %v968, %v980
    %v982 = vlaneseq
    %v983 = vshrl.u32 %v982, 7
    %v984 = vsub.s32 2, %v983
    %v985 = vrot.slane %v968, %v984
    %v986 = vlaneseq
    %v987 = vshrl.u32 %v986, 7
    %v988 = vsub.s32 3, %v987
    %v989 = vrot.slane %v968, %v988
    %v990 = vlaneseq
    %v991 = vshrl.u32 %v990, 7
    %v992 = vsub.s32 4, %v991
    %v993 = vrot.slane %v968, %v992
    %v994 = vlaneseq
    %v995 = vshrl.u32 %v994, 7
    %v996 = vsub.s32 5, %v995
    %v997 = vrot.slane %v968, %v996
    %v998 = vlaneseq
    %v999 = vshrl.u32 %v998, 7
    %v1000 = vsub.s32 6, %v999
    %v1001 = vrot.slane %v968, %v1000
    %v1002 = vlaneseq
    %v1003 = vshrl.u32 %v1002, 7
    %v1004 = vsub.s32 7, %v1003
    %v1005 = vrot.slane %v968, %v1004
    %v1006 = vlaneseq
    %v1007 = vshrl.u32 %v1006, 7
    %v1008 = vsub.s32 0, %v1007
    %v1009 = vrot.slane %v969, %v1008
    %v1010 = vlaneseq
    %v1011 = vshrl.u32 %v1010, 7
    %v1012 = vsub.s32 1, %v1011
    %v1013 = vrot.slane %v969, %v1012
    %v1014 = vlaneseq
    %v1015 = vshrl.u32 %v1014, 7
    %v1016 = vsub.s32 2, %v1015
    %v1017 = vrot.slane %v969, %v1016
    %v1018 = vlaneseq
    %v1019 = vshrl.u32 %v1018, 7
    %v1020 = vsub.s32 3, %v1019
    %v1021 = vrot.slane %v969, %v1020
    %v1022 = vlaneseq
    %v1023 = vshrl.u32 %v1022, 7
    %v1024 = vsub.s32 4, %v1023
    %v1025 = vrot.slane %v969, %v1024
    %v1026 = vlaneseq
    %v1027 = vshrl.u32 %v1026, 7
    %v1028 = vsub.s32 5, %v1027
    %v1029 = vrot.slane %v969, %v1028
    %v1030 = vlaneseq
    %v1031 = vshrl.u32 %v1030, 7
    %v1032 = vsub.s32 6, %v1031
    %v1033 = vrot.slane %v969, %v1032
    %v1034 = vlaneseq
    %v1035 = vshrl.u32 %v1034, 7
    %v1036 = vsub.s32 7, %v1035
    %v1037 = vrot.slane %v969, %v1036
    %v1038 = vlaneseq
    %v1039 = vshrl.u32 %v1038, 7
    %v1040 = vsub.s32 0, %v1039
    %v1041 = vrot.slane %v970, %v1040
    %v1042 = vlaneseq
    %v1043 = vshrl.u32 %v1042, 7
    %v1044 = vsub.s32 1, %v1043
    %v1045 = vrot.slane %v970, %v1044
    %v1928 = vunpack.c.l.b16 %v104
    %v1929 = vunpack.c.h.b16 %v104
    %v1930 = vunpack.c.l.b16 %v105
    %v1931 = vunpack.c.h.b16 %v105
    %v1932 = vunpack.c.l.b16 %v106
    %v1933 = vunpack.c.h.b16 %v106
    %v1934 = vunpack.c.l.b16 %v107
    %v1935 = vunpack.c.h.b16 %v107
    %v1936 = vunpack.c.l.b16 %v108
    %v1937 = vunpack.c.h.b16 %v108
    %v1938 = vunpack.c.l.b16 %v109
    %v1939 = vunpack.c.h.b16 %v109
    %v1940 = vunpack.c.l.b16 %v110
    %v1941 = vunpack.c.h.b16 %v110
    %v1942 = vunpack.c.l.b16 %v111
    %v1943 = vunpack.c.h.b16 %v111
    %v1944 = vunpack.c.l.b16 %v112
    %v1945 = vunpack.c.h.b16 %v112
    %v1946 = vunpack.c.l.b16 %v113
    %v1947 = vunpack.c.h.b16 %v113
    %v1948 = vunpack.c.l.b16 %v114
    %v1949 = vunpack.c.h.b16 %v114
    %v1950 = vunpack.c.l.b16 %v115
    %v1951 = vunpack.c.h.b16 %v115
    %v1952 = vunpack.c.l.b16 %v116
    %v1953 = vunpack.c.h.b16 %v116
    %v1954 = vunpack.c.l.b16 %v117
    %v1955 = vunpack.c.h.b16 %v117
    %v1956 = vunpack.c.l.b16 %v118
    %v1957 = vunpack.c.h.b16 %v118
    %v1958 = vunpack.c.l.b16 %v119
    %v1959 = vunpack.c.h.b16 %v119
    %v1960 = vunpack.c.l.b16 %v120
    %v1961 = vunpack.c.h.b16 %v120
    %v1962 = vunpack.c.l.b16 %v121
    %v1963 = vunpack.c.h.b16 %v121
    %v1964 = vunpack.c.l.b16 %v122
    %v1965 = vunpack.c.h.b16 %v122
    %v1966 = vunpack.c.l.b16 %v123
    %v1967 = vunpack.c.h.b16 %v123
    %v1968 = vunpack.c.l.b16 %v124
    %v1969 = vunpack.c.h.b16 %v124
    %v1970 = vunpack.c.l.b16 %v125
    %v1971 = vunpack.c.h.b16 %v125
    %v1972 = vunpack.c.l.b16 %v126
    %v1973 = vunpack.c.h.b16 %v126
    %v1974 = vunpack.c.l.b16 %v127
    %v1975 = vunpack.c.h.b16 %v127
    %v1976 = vunpack.c.l.b16 %v128
    %v1977 = vunpack.c.h.b16 %v128
    %v1978 = vunpack.c.l.b16 %v129
    %v1979 = vunpack.c.h.b16 %v129
    %v1980 = vunpack.c.l.b16 %v130
    %v1981 = vunpack.c.h.b16 %v130
    %v1982 = vunpack.c.l.b16 %v131
    %v1983 = vunpack.c.h.b16 %v131
    %v1984 = vunpack.c.l.b16 %v132
    %v1985 = vunpack.c.h.b16 %v132
    %v1986 = vunpack.c.l.b16 %v133
    %v1987 = vunpack.c.h.b16 %v133
    %v1988 = vunpack.c.l.b16 %v134
    %v1989 = vunpack.c.h.b16 %v134
    %v1990 = vunpack.c.l.b16 %v135
    %v1991 = vunpack.c.h.b16 %v135
    %v1992 = vunpack.c.l.b16 %v136
    %v1993 = vunpack.c.h.b16 %v136
    %v1994 = vunpack.c.l.b16 %v137
    %v1995 = vunpack.c.h.b16 %v137
    %v1996 = vunpack.c.l.b16 %v138
    %v1997 = vunpack.c.h.b16 %v138
    %v1998 = vunpack.c.l.b16 %v139
    %v1999 = vunpack.c.h.b16 %v139
    %v2000 = vunpack.c.l.b16 %v140
    %v2001 = vunpack.c.h.b16 %v140
    %v2002 = vunpack.c.l.b16 %v141
    %v2003 = vunpack.c.h.b16 %v141
    %v2004 = vunpack.c.l.b16 %v142
    %v2005 = vunpack.c.h.b16 %v142
    %v2006 = vunpack.c.l.b16 %v143
    %v2007 = vunpack.c.h.b16 %v143
    %v2008 = vunpack.c.l.b16 %v144
    %v2009 = vunpack.c.h.b16 %v144
    %v2010 = vunpack.c.l.b16 %v145
    %v2011 = vunpack.c.h.b16 %v145
    %v2012 = vunpack.c.l.b16 %v146
    %v2013 = vunpack.c.h.b16 %v146
    %v2014 = vunpack.c.l.b16 %v147
    %v2015 = vunpack.c.h.b16 %v147
    %v2016 = vunpack.c.l.b16 %v148
    %v2017 = vunpack.c.h.b16 %v148
    %v2018 = vunpack.c.l.b16 %v149
    %v2019 = vunpack.c.h.b16 %v149
    %v2020 = vunpack.c.l.b16 %v150
    %v2021 = vunpack.c.h.b16 %v150
    %v2022 = vunpack.c.l.b16 %v151
    %v2023 = vunpack.c.h.b16 %v151
    %v2024 = vunpack.c.l.b16 %v152
    %v2025 = vunpack.c.h.b16 %v152
    %v2026 = vunpack.c.l.b16 %v153
    %v2027 = vunpack.c.h.b16 %v153
    %v2028 = vunpack.c.l.b16 %v154
    %v2029 = vunpack.c.h.b16 %v154
    %v2030 = vunpack.c.l.b16 %v155
    %v2031 = vunpack.c.h.b16 %v155
    %v2032 = vunpack.c.l.b16 %v156
    %v2033 = vunpack.c.h.b16 %v156
    %v2034 = vunpack.c.l.b16 %v157
    %v2035 = vunpack.c.h.b16 %v157
    %v2036 = vunpack.c.l.b16 %v158
    %v2037 = vunpack.c.h.b16 %v158
    %v2038 = vunpack.c.l.b16 %v159
    %v2039 = vunpack.c.h.b16 %v159
    %v2040 = vunpack.c.l.b16 %v160
    %v2041 = vunpack.c.h.b16 %v160
    %v2042 = vunpack.c.l.b16 %v161
    %v2043 = vunpack.c.h.b16 %v161
    %v2044 = vunpack.c.l.b16 %v162
    %v2045 = vunpack.c.h.b16 %v162
    %v2046 = vunpack.c.l.b16 %v163
    %v2047 = vunpack.c.h.b16 %v163
    %v2048 = vunpack.c.l.b16 %v164
    %v2049 = vunpack.c.h.b16 %v164
    %v2050 = vunpack.c.l.b16 %v165
    %v2051 = vunpack.c.h.b16 %v165
    %v2052 = vunpack.c.l.b16 %v166
    %v2053 = vunpack.c.h.b16 %v166
    %v2054 = vunpack.c.l.b16 %v167
    %v2055 = vunpack.c.h.b16 %v167
    %v2056 = vunpack.c.l.b16 %v168
    %v2057 = vunpack.c.h.b16 %v168
    %v2058 = vunpack.c.l.b16 %v169
    %v2059 = vunpack.c.h.b16 %v169
    %v2060 = vunpack.c.l.b16 %v170
    %v2061 = vunpack.c.h.b16 %v170
    %v2062 = vunpack.c.l.b16 %v171
    %v2063 = vunpack.c.h.b16 %v171
    %v2064 = vunpack.c.l.b16 %v172
    %v2065 = vunpack.c.h.b16 %v172
    %v2066 = vunpack.c.l.b16 %v173
    %v2067 = vunpack.c.h.b16 %v173
    %v2068 = vunpack.c.l.b16 %v174
    %v2069 = vunpack.c.h.b16 %v174
    %v2070 = vunpack.c.l.b16 %v175
    %v2071 = vunpack.c.h.b16 %v175
    %v2072 = vunpack.c.l.b16 %v176
    %v2073 = vunpack.c.h.b16 %v176
    %v2074 = vunpack.c.l.b16 %v177
    %v2075 = vunpack.c.h.b16 %v177
    %v2076 = vunpack.c.l.b16 %v178
    %v2077 = vunpack.c.h.b16 %v178
    %v2078 = vunpack.c.l.b16 %v179
    %v2079 = vunpack.c.h.b16 %v179
    %v2080 = vunpack.c.l.b16 %v180
    %v2081 = vunpack.c.h.b16 %v180
    %v2082 = vunpack.c.l.b16 %v181
    %v2083 = vunpack.c.h.b16 %v181
    %v2084 = vunpack.c.l.b16 %v182
    %v2085 = vunpack.c.h.b16 %v182
    %v2086 = vunpack.c.l.b16 %v183
    %v2087 = vunpack.c.h.b16 %v183
    %v2088 = vunpack.c.l.b16 %v184
    %v2089 = vunpack.c.h.b16 %v184
    %v2090 = vunpack.c.l.b16 %v185
    %v2091 = vunpack.c.h.b16 %v185
    %v2092 = vunpack.c.l.b16 %v186
    %v2093 = vunpack.c.h.b16 %v186
    %v2094 = vunpack.c.l.b16 %v187
    %v2095 = vunpack.c.h.b16 %v187
    %v2096 = vunpack.c.l.b16 %v188
    %v2097 = vunpack.c.h.b16 %v188
    %v2098 = vunpack.c.l.b16 %v189
    %v2099 = vunpack.c.h.b16 %v189
    %v2100 = vunpack.c.l.b16 %v190
    %v2101 = vunpack.c.h.b16 %v190
    %v2102 = vunpack.c.l.b16 %v191
    %v2103 = vunpack.c.h.b16 %v191
    %v2104 = vunpack.c.l.b16 %v192
    %v2105 = vunpack.c.h.b16 %v192
    %v2106 = vunpack.c.l.b16 %v193
    %v2107 = vunpack.c.h.b16 %v193
    %v2108 = vunpack.c.l.b16 %v194
    %v2109 = vunpack.c.h.b16 %v194
    %v2110 = vunpack.c.l.b16 %v195
    %v2111 = vunpack.c.h.b16 %v195
    %v2112 = vunpack.c.l.b16 %v196
    %v2113 = vunpack.c.h.b16 %v196
    %v2114 = vunpack.c.l.b16 %v197
    %v2115 = vunpack.c.h.b16 %v197
    %v2116 = vunpack.c.l.b16 %v198
    %v2117 = vunpack.c.h.b16 %v198
    %v2118 = vunpack.c.l.b16 %v199
    %v2119 = vunpack.c.h.b16 %v199
    %v2120 = vunpack.c.l.b16 %v200
    %v2121 = vunpack.c.h.b16 %v200
    %v2122 = vunpack.c.l.b16 %v201
    %v2123 = vunpack.c.h.b16 %v201
    %v2124 = vunpack.c.l.b16 %v202
    %v2125 = vunpack.c.h.b16 %v202
    %v2126 = vunpack.c.l.b16 %v203
    %v2127 = vunpack.c.h.b16 %v203
    %v2128 = vunpack.c.l.b16 %v204
    %v2129 = vunpack.c.h.b16 %v204
    %v2130 = vunpack.c.l.b16 %v205
    %v2131 = vunpack.c.h.b16 %v205
    %v2132 = vunpack.c.l.b16 %v206
    %v2133 = vunpack.c.h.b16 %v206
    %v2134 = vunpack.c.l.b16 %v207
    %v2135 = vunpack.c.h.b16 %v207
    %v2136 = vunpack.c.l.b16 %v208
    %v2137 = vunpack.c.h.b16 %v208
    %v2138 = vunpack.c.l.b16 %v209
    %v2139 = vunpack.c.h.b16 %v209
    %v2140 = vunpack.c.l.b16 %v210
    %v2141 = vunpack.c.h.b16 %v210
    %v2142 = vunpack.c.l.b16 %v211
    %v2143 = vunpack.c.h.b16 %v211
    %v2144 = vunpack.c.l.b16 %v212
    %v2145 = vunpack.c.h.b16 %v212
    %v2146 = vunpack.c.l.b16 %v213
    %v2147 = vunpack.c.h.b16 %v213
    %v2148 = vunpack.c.l.b16 %v214
    %v2149 = vunpack.c.h.b16 %v214
    %v2150 = vunpack.c.l.b16 %v215
    %v2151 = vunpack.c.h.b16 %v215
    %v2152 = vunpack.c.l.b16 %v216
    %v2153 = vunpack.c.h.b16 %v216
    %v2154 = vunpack.c.l.b16 %v217
    %v2155 = vunpack.c.h.b16 %v217
    %v2156 = vunpack.c.l.b16 %v218
    %v2157 = vunpack.c.h.b16 %v218
    %v2158 = vunpack.c.l.b16 %v219
    %v2159 = vunpack.c.h.b16 %v219
    %v2160 = vunpack.c.l.b16 %v220
    %v2161 = vunpack.c.h.b16 %v220
    %v2162 = vunpack.c.l.b16 %v221
    %v2163 = vunpack.c.h.b16 %v221
    %v2164 = vunpack.c.l.b16 %v222
    %v2165 = vunpack.c.h.b16 %v222
    %v2166 = vunpack.c.l.b16 %v223
    %v2167 = vunpack.c.h.b16 %v223
    %v2168 = vunpack.c.l.b16 %v224
    %v2169 = vunpack.c.h.b16 %v224
    %v2170 = vunpack.c.l.b16 %v225
    %v2171 = vunpack.c.h.b16 %v225
    %v2172 = vunpack.c.l.b16 %v226
    %v2173 = vunpack.c.h.b16 %v226
    %v2174 = vunpack.c.l.b16 %v227
    %v2175 = vunpack.c.h.b16 %v227
    %v2176 = vunpack.c.l.b16 %v228
    %v2177 = vunpack.c.h.b16 %v228
    %v2178 = vunpack.c.l.b16 %v229
    %v2179 = vunpack.c.h.b16 %v229
    %v2180 = vunpack.c.l.b16 %v230
    %v2181 = vunpack.c.h.b16 %v230
    %v2182 = vunpack.c.l.b16 %v231
    %v2183 = vunpack.c.h.b16 %v231
    %v2184 = vunpack.c.l.b16 %v232
    %v2185 = vunpack.c.h.b16 %v232
    %v2186 = vunpack.c.l.b16 %v233
    %v2187 = vunpack.c.h.b16 %v233
    %v2188 = vunpack.c.l.b16 %v234
    %v2189 = vunpack.c.h.b16 %v234
    %v2190 = vunpack.c.l.b16 %v235
    %v2191 = vunpack.c.h.b16 %v235
    %v2192 = vunpack.c.l.b16 %v236
    %v2193 = vunpack.c.h.b16 %v236
    %v2194 = vunpack.c.l.b16 %v237
    %v2195 = vunpack.c.h.b16 %v237
    %v2196 = vunpack.c.l.b16 %v238
    %v2197 = vunpack.c.h.b16 %v238
    %v2198 = vunpack.c.l.b16 %v239
    %v2199 = vunpack.c.h.b16 %v239
    %v2200 = vunpack.c.l.b16 %v240
    %v2201 = vunpack.c.h.b16 %v240
    %v2202 = vunpack.c.l.b16 %v241
    %v2203 = vunpack.c.h.b16 %v241
    %v2204 = vunpack.c.l.b16 %v242
    %v2205 = vunpack.c.h.b16 %v242
    %v2206 = vunpack.c.l.b16 %v243
    %v2207 = vunpack.c.h.b16 %v243
    %v2208 = vunpack.c.l.b16 %v244
    %v2209 = vunpack.c.h.b16 %v244
    %v2210 = vunpack.c.l.b16 %v245
    %v2211 = vunpack.c.h.b16 %v245
    %v2212 = vunpack.c.l.b16 %v246
    %v2213 = vunpack.c.h.b16 %v246
    %v2214 = vunpack.c.l.b16 %v247
    %v2215 = vunpack.c.h.b16 %v247
    %v2216 = vunpack.c.l.b16 %v248
    %v2217 = vunpack.c.h.b16 %v248
    %v2218 = vunpack.c.l.b16 %v249
    %v2219 = vunpack.c.h.b16 %v249
    %v2220 = vunpack.c.l.b16 %v250
    %v2221 = vunpack.c.h.b16 %v250
    %v2222 = vunpack.c.l.b16 %v251
    %v2223 = vunpack.c.h.b16 %v251
    %v2224 = vunpack.c.l.b16 %v252
    %v2225 = vunpack.c.h.b16 %v252
    %v2226 = vunpack.c.l.b16 %v253
    %v2227 = vunpack.c.h.b16 %v253
    %v2228 = vunpack.c.l.b16 %v254
    %v2229 = vunpack.c.h.b16 %v254
    %v2230 = vunpack.c.l.b16 %v255
    %v2231 = vunpack.c.h.b16 %v255
    %v2232 = vunpack.c.l.b16 %v256
    %v2233 = vunpack.c.h.b16 %v256
    %v2234 = vunpack.c.l.b16 %v257
    %v2235 = vunpack.c.h.b16 %v257
    %v2236 = vunpack.c.l.b16 %v258
    %v2237 = vunpack.c.h.b16 %v258
    %v2238 = vunpack.c.l.b16 %v259
    %v2239 = vunpack.c.h.b16 %v259
    %v2240 = vunpack.c.l.b16 %v260
    %v2241 = vunpack.c.h.b16 %v260
    %v2242 = vunpack.c.l.b16 %v261
    %v2243 = vunpack.c.h.b16 %v261
    %v2244 = vunpack.c.l.b16 %v262
    %v2245 = vunpack.c.h.b16 %v262
    %v2246 = vunpack.c.l.b16 %v263
    %v2247 = vunpack.c.h.b16 %v263
    %v2248 = vunpack.c.l.b16 %v264
    %v2249 = vunpack.c.h.b16 %v264
    %v2250 = vunpack.c.l.b16 %v265
    %v2251 = vunpack.c.h.b16 %v265
    %v2252 = vunpack.c.l.b16 %v266
    %v2253 = vunpack.c.h.b16 %v266
    %v2254 = vunpack.c.l.b16 %v267
    %v2255 = vunpack.c.h.b16 %v267
    %v2256 = vunpack.c.l.b16 %v268
    %v2257 = vunpack.c.h.b16 %v268
    %v2258 = vunpack.c.l.b16 %v269
    %v2259 = vunpack.c.h.b16 %v269
    %v2260 = vunpack.c.l.b16 %v270
    %v2261 = vunpack.c.h.b16 %v270
    %v2262 = vunpack.c.l.b16 %v271
    %v2263 = vunpack.c.h.b16 %v271
    %v2264 = vunpack.c.l.b16 %v272
    %v2265 = vunpack.c.h.b16 %v272
    %v2266 = vunpack.c.l.b16 %v273
    %v2267 = vunpack.c.h.b16 %v273
    %v2268 = vunpack.c.l.b16 %v274
    %v2269 = vunpack.c.h.b16 %v274
    %v2270 = vunpack.c.l.b16 %v275
    %v2271 = vunpack.c.h.b16 %v275
    %v2272 = vunpack.c.l.b16 %v276
    %v2273 = vunpack.c.h.b16 %v276
    %v2274 = vunpack.c.l.b16 %v277
    %v2275 = vunpack.c.h.b16 %v277
    %v2276 = vunpack.c.l.b16 %v278
    %v2277 = vunpack.c.h.b16 %v278
    %v2278 = vunpack.c.l.b16 %v279
    %v2279 = vunpack.c.h.b16 %v279
    %v2280 = vunpack.c.l.b16 %v280
    %v2281 = vunpack.c.h.b16 %v280
    %v2282 = vunpack.c.l.b16 %v281
    %v2283 = vunpack.c.h.b16 %v281
    %v2284 = vunpack.c.l.b16 %v282
    %v2285 = vunpack.c.h.b16 %v282
    %v2286 = vunpack.c.l.b16 %v283
    %v2287 = vunpack.c.h.b16 %v283
    %v2288 = vunpack.c.l.b16 %v284
    %v2289 = vunpack.c.h.b16 %v284
    %v2290 = vunpack.c.l.b16 %v285
    %v2291 = vunpack.c.h.b16 %v285
    %v2292 = vunpack.c.l.b16 %v286
    %v2293 = vunpack.c.h.b16 %v286
    %v2294 = vunpack.c.l.b16 %v287
    %v2295 = vunpack.c.h.b16 %v287
    %v2296 = vunpack.c.l.b16 %v288
    %v2297 = vunpack.c.h.b16 %v288
    %v2298 = vunpack.c.l.b16 %v289
    %v2299 = vunpack.c.h.b16 %v289
    %v2300 = vunpack.c.l.b16 %v290
    %v2301 = vunpack.c.h.b16 %v290
    %v2302 = vunpack.c.l.b16 %v291
    %v2303 = vunpack.c.h.b16 %v291
    %v2304 = vunpack.c.l.b16 %v292
    %v2305 = vunpack.c.h.b16 %v292
    %v2306 = vunpack.c.l.b16 %v293
    %v2307 = vunpack.c.h.b16 %v293
    %v2308 = vunpack.c.l.b16 %v294
    %v2309 = vunpack.c.h.b16 %v294
    %v2310 = vunpack.c.l.b16 %v295
    %v2311 = vunpack.c.h.b16 %v295
    %v2312 = vunpack.c.l.b16 %v296
    %v2313 = vunpack.c.h.b16 %v296
    %v2314 = vunpack.c.l.b16 %v297
    %v2315 = vunpack.c.h.b16 %v297
    %v2316 = vunpack.c.l.b16 %v298
    %v2317 = vunpack.c.h.b16 %v298
    %v2318 = vunpack.c.l.b16 %v299
    %v2319 = vunpack.c.h.b16 %v299
    %v2320 = vunpack.c.l.b16 %v300
    %v2321 = vunpack.c.h.b16 %v300
    %v2322 = vunpack.c.l.b16 %v301
    %v2323 = vunpack.c.h.b16 %v301
    %v2324 = vunpack.c.l.b16 %v302
    %v2325 = vunpack.c.h.b16 %v302
    %v2326 = vunpack.c.l.b16 %v303
    %v2327 = vunpack.c.h.b16 %v303
    %v2328 = vunpack.c.l.b16 %v304
    %v2329 = vunpack.c.h.b16 %v304
    %v2330 = vunpack.c.l.b16 %v305
    %v2331 = vunpack.c.h.b16 %v305
    %v2332 = vunpack.c.l.b16 %v306
    %v2333 = vunpack.c.h.b16 %v306
    %v2334 = vunpack.c.l.b16 %v307
    %v2335 = vunpack.c.h.b16 %v307
    %v2336 = vunpack.c.l.b16 %v308
    %v2337 = vunpack.c.h.b16 %v308
    %v2338 = vunpack.c.l.b16 %v309
    %v2339 = vunpack.c.h.b16 %v309
    %v2340 = vunpack.c.l.b16 %v310
    %v2341 = vunpack.c.h.b16 %v310
    %v2342 = vunpack.c.l.b16 %v311
    %v2343 = vunpack.c.h.b16 %v311
    %v2344 = vunpack.c.l.b16 %v312
    %v2345 = vunpack.c.h.b16 %v312
    %v2346 = vunpack.c.l.b16 %v313
    %v2347 = vunpack.c.h.b16 %v313
    %v2348 = vunpack.c.l.b16 %v314
    %v2349 = vunpack.c.h.b16 %v314
    %v2350 = vunpack.c.l.b16 %v315
    %v2351 = vunpack.c.h.b16 %v315
    %v2352 = vunpack.c.l.b16 %v316
    %v2353 = vunpack.c.h.b16 %v316
    %v2354 = vunpack.c.l.b16 %v317
    %v2355 = vunpack.c.h.b16 %v317
    %v2356 = vunpack.c.l.b16 %v318
    %v2357 = vunpack.c.h.b16 %v318
    %v2358 = vunpack.c.l.b16 %v319
    %v2359 = vunpack.c.h.b16 %v319
    %v2360 = vunpack.c.l.b16 %v320
    %v2361 = vunpack.c.h.b16 %v320
    %v2362 = vunpack.c.l.b16 %v321
    %v2363 = vunpack.c.h.b16 %v321
    %v2364 = vunpack.c.l.b16 %v322
    %v2365 = vunpack.c.h.b16 %v322
    %v2366 = vunpack.c.l.b16 %v323
    %v2367 = vunpack.c.h.b16 %v323
    %v2368 = vunpack.c.l.b16 %v324
    %v2369 = vunpack.c.h.b16 %v324
    %v2370 = vunpack.c.l.b16 %v325
    %v2371 = vunpack.c.h.b16 %v325
    %v2372 = vunpack.c.l.b16 %v326
    %v2373 = vunpack.c.h.b16 %v326
    %v2374 = vunpack.c.l.b16 %v327
    %v2375 = vunpack.c.h.b16 %v327
    %v2376 = vunpack.c.l.b16 %v328
    %v2377 = vunpack.c.h.b16 %v328
    %v2378 = vunpack.c.l.b16 %v329
    %v2379 = vunpack.c.h.b16 %v329
    %v2380 = vunpack.c.l.b16 %v330
    %v2381 = vunpack.c.h.b16 %v330
    %v2382 = vunpack.c.l.b16 %v331
    %v2383 = vunpack.c.h.b16 %v331
    %v2384 = vunpack.c.l.b16 %v332
    %v2385 = vunpack.c.h.b16 %v332
    %v2386 = vunpack.c.l.b16 %v333
    %v2387 = vunpack.c.h.b16 %v333
    %v2388 = vunpack.c.l.b16 %v334
    %v2389 = vunpack.c.h.b16 %v334
    %v2390 = vunpack.c.l.b16 %v335
    %v2391 = vunpack.c.h.b16 %v335
    %v2392 = vunpack.c.l.b16 %v336
    %v2393 = vunpack.c.h.b16 %v336
    %v2394 = vunpack.c.l.b16 %v337
    %v2395 = vunpack.c.h.b16 %v337
    %v2396 = vunpack.c.l.b16 %v338
    %v2397 = vunpack.c.h.b16 %v338
    %v2398 = vunpack.c.l.b16 %v339
    %v2399 = vunpack.c.h.b16 %v339
    %v2400 = vunpack.c.l.b16 %v340
    %v2401 = vunpack.c.h.b16 %v340
    %v2402 = vunpack.c.l.b16 %v341
    %v2403 = vunpack.c.h.b16 %v341
    %v2404 = vunpack.c.l.b16 %v342
    %v2405 = vunpack.c.h.b16 %v342
    %v2406 = vunpack.c.l.b16 %v343
    %v2407 = vunpack.c.h.b16 %v343
    %v2408 = vunpack.c.l.b16 %v344
    %v2409 = vunpack.c.h.b16 %v344
    %v2410 = vunpack.c.l.b16 %v345
    %v2411 = vunpack.c.h.b16 %v345
    %v2412 = vunpack.c.l.b16 %v346
    %v2413 = vunpack.c.h.b16 %v346
    %v2414 = vunpack.c.l.b16 %v347
    %v2415 = vunpack.c.h.b16 %v347
    %v2416 = vunpack.c.l.b16 %v348
    %v2417 = vunpack.c.h.b16 %v348
    %v2418 = vunpack.c.l.b16 %v349
    %v2419 = vunpack.c.h.b16 %v349
    %v2420 = vunpack.c.l.b16 %v350
    %v2421 = vunpack.c.h.b16 %v350
    %v2422 = vunpack.c.l.b16 %v351
    %v2423 = vunpack.c.h.b16 %v351
    %v2424 = vunpack.c.l.b16 %v352
    %v2425 = vunpack.c.h.b16 %v352
    %v2426 = vunpack.c.l.b16 %v353
    %v2427 = vunpack.c.h.b16 %v353
    %v2428 = vunpack.c.l.b16 %v354
    %v2429 = vunpack.c.h.b16 %v354
    %v2430 = vunpack.c.l.b16 %v355
    %v2431 = vunpack.c.h.b16 %v355
    %v2432 = vunpack.c.l.b16 %v356
    %v2433 = vunpack.c.h.b16 %v356
    %v2434 = vunpack.c.l.b16 %v357
    %v2435 = vunpack.c.h.b16 %v357
    %v2436 = vunpack.c.l.b16 %v358
    %v2437 = vunpack.c.h.b16 %v358
    %v2438 = vunpack.c.l.b16 %v359
    %v2439 = vunpack.c.h.b16 %v359
    %v2440 = vunpack.c.l.b16 %v360
    %v2441 = vunpack.c.h.b16 %v360
    %v2442 = vunpack.c.l.b16 %v361
    %v2443 = vunpack.c.h.b16 %v361
    %v2444 = vunpack.c.l.b16 %v362
    %v2445 = vunpack.c.h.b16 %v362
    %v2446 = vunpack.c.l.b16 %v363
    %v2447 = vunpack.c.h.b16 %v363
    %v2448 = vunpack.c.l.b16 %v364
    %v2449 = vunpack.c.h.b16 %v364
    %v2450 = vunpack.c.l.b16 %v365
    %v2451 = vunpack.c.h.b16 %v365
    %v2452 = vunpack.c.l.b16 %v366
    %v2453 = vunpack.c.h.b16 %v366
    %v2454 = vunpack.c.l.b16 %v367
    %v2455 = vunpack.c.h.b16 %v367
    %v2456 = vunpack.c.l.b16 %v368
    %v2457 = vunpack.c.h.b16 %v368
    %v2458 = vunpack.c.l.b16 %v369
    %v2459 = vunpack.c.h.b16 %v369
    %v2460 = vunpack.c.l.b16 %v370
    %v2461 = vunpack.c.h.b16 %v370
    %v2462 = vunpack.c.l.b16 %v371
    %v2463 = vunpack.c.h.b16 %v371
    %v2464 = vunpack.c.l.b16 %v372
    %v2465 = vunpack.c.h.b16 %v372
    %v2466 = vunpack.c.l.b16 %v373
    %v2467 = vunpack.c.h.b16 %v373
    %v2468 = vunpack.c.l.b16 %v374
    %v2469 = vunpack.c.h.b16 %v374
    %v2470 = vunpack.c.l.b16 %v375
    %v2471 = vunpack.c.h.b16 %v375
    %v2472 = vunpack.c.l.b16 %v376
    %v2473 = vunpack.c.h.b16 %v376
    %v2474 = vunpack.c.l.b16 %v377
    %v2475 = vunpack.c.h.b16 %v377
    %v2476 = vunpack.c.l.b16 %v378
    %v2477 = vunpack.c.h.b16 %v378
    %v2478 = vunpack.c.l.b16 %v379
    %v2479 = vunpack.c.h.b16 %v379
    %v2480 = vunpack.c.l.b16 %v380
    %v2481 = vunpack.c.h.b16 %v380
    %v2482 = vunpack.c.l.b16 %v381
    %v2483 = vunpack.c.h.b16 %v381
    %v2484 = vunpack.c.l.b16 %v382
    %v2485 = vunpack.c.h.b16 %v382
    %v2486 = vunpack.c.l.b16 %v383
    %v2487 = vunpack.c.h.b16 %v383
    %v2488 = vunpack.c.l.b16 %v384
    %v2489 = vunpack.c.h.b16 %v384
    %v2490 = vunpack.c.l.b16 %v385
    %v2491 = vunpack.c.h.b16 %v385
    %v2492 = vunpack.c.l.b16 %v386
    %v2493 = vunpack.c.h.b16 %v386
    %v2494 = vunpack.c.l.b16 %v387
    %v2495 = vunpack.c.h.b16 %v387
    %v2496 = vunpack.c.l.b16 %v388
    %v2497 = vunpack.c.h.b16 %v388
    %v2498 = vunpack.c.l.b16 %v389
    %v2499 = vunpack.c.h.b16 %v389
    %v2500 = vunpack.c.l.b16 %v390
    %v2501 = vunpack.c.h.b16 %v390
    %v2502 = vunpack.c.l.b16 %v391
    %v2503 = vunpack.c.h.b16 %v391
    %v2504 = vunpack.c.l.b16 %v392
    %v2505 = vunpack.c.h.b16 %v392
    %v2506 = vunpack.c.l.b16 %v393
    %v2507 = vunpack.c.h.b16 %v393
    %v2508 = vunpack.c.l.b16 %v394
    %v2509 = vunpack.c.h.b16 %v394
    %v2510 = vunpack.c.l.b16 %v395
    %v2511 = vunpack.c.h.b16 %v395
    %v2512 = vunpack.c.l.b16 %v396
    %v2513 = vunpack.c.h.b16 %v396
    %v2514 = vunpack.c.l.b16 %v397
    %v2515 = vunpack.c.h.b16 %v397
    %v2516 = vunpack.c.l.b16 %v398
    %v2517 = vunpack.c.h.b16 %v398
    %v2518 = vunpack.c.l.b16 %v399
    %v2519 = vunpack.c.h.b16 %v399
    %v2520 = vunpack.c.l.b16 %v400
    %v2521 = vunpack.c.h.b16 %v400
    %v2522 = vunpack.c.l.b16 %v401
    %v2523 = vunpack.c.h.b16 %v401
    %v2524 = vunpack.c.l.b16 %v402
    %v2525 = vunpack.c.h.b16 %v402
    %v2526 = vunpack.c.l.b16 %v403
    %v2527 = vunpack.c.h.b16 %v403
    %v2528 = vunpack.c.l.b16 %v404
    %v2529 = vunpack.c.h.b16 %v404
    %v2530 = vunpack.c.l.b16 %v405
    %v2531 = vunpack.c.h.b16 %v405
    %v2532 = vunpack.c.l.b16 %v406
    %v2533 = vunpack.c.h.b16 %v406
    %v2534 = vunpack.c.l.b16 %v407
    %v2535 = vunpack.c.h.b16 %v407
    %v2536 = vunpack.c.l.b16 %v408
    %v2537 = vunpack.c.h.b16 %v408
    %v2538 = vunpack.c.l.b16 %v409
    %v2539 = vunpack.c.h.b16 %v409
    %v2540 = vunpack.c.l.b16 %v410
    %v2541 = vunpack.c.h.b16 %v410
    %v2542 = vunpack.c.l.b16 %v411
    %v2543 = vunpack.c.h.b16 %v411
    %v2544 = vunpack.c.l.b16 %v412
    %v2545 = vunpack.c.h.b16 %v412
    %v2546 = vunpack.c.l.b16 %v413
    %v2547 = vunpack.c.h.b16 %v413
    %v2548 = vunpack.c.l.b16 %v414
    %v2549 = vunpack.c.h.b16 %v414
    %v2550 = vunpack.c.l.b16 %v415
    %v2551 = vunpack.c.h.b16 %v415
    %v2552 = vunpack.c.l.b16 %v416
    %v2553 = vunpack.c.h.b16 %v416
    %v2554 = vunpack.c.l.b16 %v417
    %v2555 = vunpack.c.h.b16 %v417
    %v2556 = vunpack.c.l.b16 %v418
    %v2557 = vunpack.c.h.b16 %v418
    %v2558 = vunpack.c.l.b16 %v419
    %v2559 = vunpack.c.h.b16 %v419
    %v2560 = vunpack.c.l.b16 %v420
    %v2561 = vunpack.c.h.b16 %v420
    %v2562 = vunpack.c.l.b16 %v421
    %v2563 = vunpack.c.h.b16 %v421
    %v2564 = vunpack.c.l.b16 %v422
    %v2565 = vunpack.c.h.b16 %v422
    %v2566 = vunpack.c.l.b16 %v423
    %v2567 = vunpack.c.h.b16 %v423
    %v2568 = vunpack.c.l.b16 %v424
    %v2569 = vunpack.c.h.b16 %v424
    %v2570 = vunpack.c.l.b16 %v425
    %v2571 = vunpack.c.h.b16 %v425
    %v2572 = vunpack.c.l.b16 %v426
    %v2573 = vunpack.c.h.b16 %v426
    %v2574 = vunpack.c.l.b16 %v427
    %v2575 = vunpack.c.h.b16 %v427
    %v2576 = vunpack.c.l.b16 %v428
    %v2577 = vunpack.c.h.b16 %v428
    %v2578 = vunpack.c.l.b16 %v429
    %v2579 = vunpack.c.h.b16 %v429
    %v2580 = vunpack.c.l.b16 %v430
    %v2581 = vunpack.c.h.b16 %v430
    %v2582 = vunpack.c.l.b16 %v431
    %v2583 = vunpack.c.h.b16 %v431
    %v2584 = vunpack.c.l.b16 %v432
    %v2585 = vunpack.c.h.b16 %v432
    %v2586 = vunpack.c.l.b16 %v433
    %v2587 = vunpack.c.h.b16 %v433
    %v2588 = vunpack.c.l.b16 %v434
    %v2589 = vunpack.c.h.b16 %v434
    %v2590 = vunpack.c.l.b16 %v435
    %v2591 = vunpack.c.h.b16 %v435
    %v2592 = vunpack.c.l.b16 %v436
    %v2593 = vunpack.c.h.b16 %v436
    %v2594 = vunpack.c.l.b16 %v437
    %v2595 = vunpack.c.h.b16 %v437
    %v2596 = vunpack.c.l.b16 %v438
    %v2597 = vunpack.c.h.b16 %v438
    %v2598 = vunpack.c.l.b16 %v439
    %v2599 = vunpack.c.h.b16 %v439
    %v2600 = vunpack.c.l.b16 %v440
    %v2601 = vunpack.c.h.b16 %v440
    %v2602 = vunpack.c.l.b16 %v441
    %v2603 = vunpack.c.h.b16 %v441
    %v2604 = vunpack.c.l.b16 %v442
    %v2605 = vunpack.c.h.b16 %v442
    %v2606 = vunpack.c.l.b16 %v443
    %v2607 = vunpack.c.h.b16 %v443
    %v2608 = vunpack.c.l.b16 %v444
    %v2609 = vunpack.c.h.b16 %v444
    %v2610 = vunpack.c.l.b16 %v445
    %v2611 = vunpack.c.h.b16 %v445
    %v2612 = vunpack.c.l.b16 %v446
    %v2613 = vunpack.c.h.b16 %v446
    %v2614 = vunpack.c.l.b16 %v447
    %v2615 = vunpack.c.h.b16 %v447
    %v2616 = vunpack.c.l.b16 %v448
    %v2617 = vunpack.c.h.b16 %v448
    %v2618 = vunpack.c.l.b16 %v449
    %v2619 = vunpack.c.h.b16 %v449
    %v2620 = vunpack.c.l.b16 %v450
    %v2621 = vunpack.c.h.b16 %v450
    %v2622 = vunpack.c.l.b16 %v451
    %v2623 = vunpack.c.h.b16 %v451
    %v2624 = vunpack.c.l.b16 %v452
    %v2625 = vunpack.c.h.b16 %v452
    %v2626 = vunpack.c.l.b16 %v453
    %v2627 = vunpack.c.h.b16 %v453
    %v2628 = vunpack.c.l.b16 %v454
    %v2629 = vunpack.c.h.b16 %v454
    %v2630 = vunpack.c.l.b16 %v455
    %v2631 = vunpack.c.h.b16 %v455
    %v2632 = vunpack.c.l.b16 %v456
    %v2633 = vunpack.c.h.b16 %v456
    %v2634 = vunpack.c.l.b16 %v457
    %v2635 = vunpack.c.h.b16 %v457
    %v2636 = vunpack.c.l.b16 %v458
    %v2637 = vunpack.c.h.b16 %v458
    %v2638 = vunpack.c.l.b16 %v459
    %v2639 = vunpack.c.h.b16 %v459
    %v2640 = vunpack.c.l.b16 %v460
    %v2641 = vunpack.c.h.b16 %v460
    %v2642 = vunpack.c.l.b16 %v461
    %v2643 = vunpack.c.h.b16 %v461
    %v2644 = vunpack.c.l.b16 %v462
    %v2645 = vunpack.c.h.b16 %v462
    %v2646 = vunpack.c.l.b16 %v463
    %v2647 = vunpack.c.h.b16 %v463
    %v2648 = vunpack.c.l.b16 %v464
    %v2649 = vunpack.c.h.b16 %v464
    %v2650 = vunpack.c.l.b16 %v465
    %v2651 = vunpack.c.h.b16 %v465
    %v2652 = vunpack.c.l.b16 %v466
    %v2653 = vunpack.c.h.b16 %v466
    %v2654 = vunpack.c.l.b16 %v467
    %v2655 = vunpack.c.h.b16 %v467
    %v2656 = vunpack.c.l.b16 %v468
    %v2657 = vunpack.c.h.b16 %v468
    %v2658 = vunpack.c.l.b16 %v469
    %v2659 = vunpack.c.h.b16 %v469
    %v2660 = vunpack.c.l.b16 %v470
    %v2661 = vunpack.c.h.b16 %v470
    %v2662 = vunpack.c.l.b16 %v471
    %v2663 = vunpack.c.h.b16 %v471
    %v2664 = vunpack.c.l.b16 %v472
    %v2665 = vunpack.c.h.b16 %v472
    %v2666 = vunpack.c.l.b16 %v473
    %v2667 = vunpack.c.h.b16 %v473
    %v2668 = vunpack.c.l.b16 %v474
    %v2669 = vunpack.c.h.b16 %v474
    %v2670 = vunpack.c.l.b16 %v475
    %v2671 = vunpack.c.h.b16 %v475
    %v2672 = vunpack.c.l.b16 %v476
    %v2673 = vunpack.c.h.b16 %v476
    %v2674 = vunpack.c.l.b16 %v477
    %v2675 = vunpack.c.h.b16 %v477
    %v2676 = vunpack.c.l.b16 %v478
    %v2677 = vunpack.c.h.b16 %v478
    %v2678 = vunpack.c.l.b16 %v479
    %v2679 = vunpack.c.h.b16 %v479
    %v2680 = vunpack.c.l.b16 %v480
    %v2681 = vunpack.c.h.b16 %v480
    %v2682 = vunpack.c.l.b16 %v481
    %v2683 = vunpack.c.h.b16 %v481
    %v2684 = vunpack.c.l.b16 %v482
    %v2685 = vunpack.c.h.b16 %v482
    %v2686 = vunpack.c.l.b16 %v483
    %v2687 = vunpack.c.h.b16 %v483
    %v2688 = vunpack.c.l.b16 %v484
    %v2689 = vunpack.c.h.b16 %v484
    %v2690 = vunpack.c.l.b16 %v485
    %v2691 = vunpack.c.h.b16 %v485
    %v2692 = vunpack.c.l.b16 %v486
    %v2693 = vunpack.c.h.b16 %v486
    %v2694 = vunpack.c.l.b16 %v487
    %v2695 = vunpack.c.h.b16 %v487
    %v2696 = vunpack.c.l.b16 %v488
    %v2697 = vunpack.c.h.b16 %v488
    %v2698 = vunpack.c.l.b16 %v489
    %v2699 = vunpack.c.h.b16 %v489
    %v2700 = vunpack.c.l.b16 %v490
    %v2701 = vunpack.c.h.b16 %v490
    %v2702 = vunpack.c.l.b16 %v491
    %v2703 = vunpack.c.h.b16 %v491
    %v2704 = vunpack.c.l.b16 %v492
    %v2705 = vunpack.c.h.b16 %v492
    %v2706 = vunpack.c.l.b16 %v493
    %v2707 = vunpack.c.h.b16 %v493
    %v2708 = vunpack.c.l.b16 %v494
    %v2709 = vunpack.c.h.b16 %v494
    %v2710 = vunpack.c.l.b16 %v495
    %v2711 = vunpack.c.h.b16 %v495
    %v2712 = vunpack.c.l.b16 %v496
    %v2713 = vunpack.c.h.b16 %v496
    %v2714 = vunpack.c.l.b16 %v497
    %v2715 = vunpack.c.h.b16 %v497
    %v2716 = vunpack.c.l.b16 %v498
    %v2717 = vunpack.c.h.b16 %v498
    %v2718 = vunpack.c.l.b16 %v499
    %v2719 = vunpack.c.h.b16 %v499
    %v2720 = vunpack.c.l.b16 %v500
    %v2721 = vunpack.c.h.b16 %v500
    %v2722 = vunpack.c.l.b16 %v501
    %v2723 = vunpack.c.h.b16 %v501
    %v2724 = vunpack.c.l.b16 %v502
    %v2725 = vunpack.c.h.b16 %v502
    %v2726 = vunpack.c.l.b16 %v503
    %v2727 = vunpack.c.h.b16 %v503
    %v2728 = vunpack.c.l.b16 %v504
    %v2729 = vunpack.c.h.b16 %v504
    %v2730 = vunpack.c.l.b16 %v505
    %v2731 = vunpack.c.h.b16 %v505
    %v2732 = vunpack.c.l.b16 %v506
    %v2733 = vunpack.c.h.b16 %v506
    %v2734 = vunpack.c.l.b16 %v507
    %v2735 = vunpack.c.h.b16 %v507
    %v2736 = vunpack.c.l.b16 %v508
    %v2737 = vunpack.c.h.b16 %v508
    %v2738 = vunpack.c.l.b16 %v509
    %v2739 = vunpack.c.h.b16 %v509
    %v2740 = vunpack.c.l.b16 %v510
    %v2741 = vunpack.c.h.b16 %v510
    %v2742 = vunpack.c.l.b16 %v511
    %v2743 = vunpack.c.h.b16 %v511
    %v2744 = vunpack.c.l.b16 %v512
    %v2745 = vunpack.c.h.b16 %v512
    %v2746 = vunpack.c.l.b16 %v513
    %v2747 = vunpack.c.h.b16 %v513
    %v2748 = vunpack.c.l.b16 %v514
    %v2749 = vunpack.c.h.b16 %v514
    %v2750 = vunpack.c.l.b16 %v515
    %v2751 = vunpack.c.h.b16 %v515
    %v2752 = vunpack.c.l.b16 %v516
    %v2753 = vunpack.c.h.b16 %v516
    %v2754 = vunpack.c.l.b16 %v517
    %v2755 = vunpack.c.h.b16 %v517
    %v2756 = vunpack.c.l.b16 %v518
    %v2757 = vunpack.c.h.b16 %v518
    %v2758 = vunpack.c.l.b16 %v519
    %v2759 = vunpack.c.h.b16 %v519
    %v2760 = vunpack.c.l.b16 %v520
    %v2761 = vunpack.c.h.b16 %v520
    %v2762 = vunpack.c.l.b16 %v521
    %v2763 = vunpack.c.h.b16 %v521
    %v2764 = vunpack.c.l.b16 %v522
    %v2765 = vunpack.c.h.b16 %v522
    %v2766 = vunpack.c.l.b16 %v523
    %v2767 = vunpack.c.h.b16 %v523
    %v2768 = vunpack.c.l.b16 %v524
    %v2769 = vunpack.c.h.b16 %v524
    %v2770 = vunpack.c.l.b16 %v525
    %v2771 = vunpack.c.h.b16 %v525
    %v2772 = vunpack.c.l.b16 %v526
    %v2773 = vunpack.c.h.b16 %v526
    %v2774 = vunpack.c.l.b16 %v527
    %v2775 = vunpack.c.h.b16 %v527
    %v2776 = vunpack.c.l.b16 %v528
    %v2777 = vunpack.c.h.b16 %v528
    %v2778 = vunpack.c.l.b16 %v529
    %v2779 = vunpack.c.h.b16 %v529
    %v2780 = vunpack.c.l.b16 %v530
    %v2781 = vunpack.c.h.b16 %v530
    %v2782 = vunpack.c.l.b16 %v531
    %v2783 = vunpack.c.h.b16 %v531
    %v2784 = vunpack.c.l.b16 %v532
    %v2785 = vunpack.c.h.b16 %v532
    %v2786 = vunpack.c.l.b16 %v533
    %v2787 = vunpack.c.h.b16 %v533
    %v2788 = vunpack.c.l.b16 %v534
    %v2789 = vunpack.c.h.b16 %v534
    %v2790 = vunpack.c.l.b16 %v535
    %v2791 = vunpack.c.h.b16 %v535
    %v2792 = vunpack.c.l.b16 %v536
    %v2793 = vunpack.c.h.b16 %v536
    %v2794 = vunpack.c.l.b16 %v537
    %v2795 = vunpack.c.h.b16 %v537
    %v2796 = vunpack.c.l.b16 %v538
    %v2797 = vunpack.c.h.b16 %v538
    %v2798 = vunpack.c.l.b16 %v539
    %v2799 = vunpack.c.h.b16 %v539
    %v2800 = vunpack.c.l.b16 %v540
    %v2801 = vunpack.c.h.b16 %v540
    %v2802 = vunpack.c.l.b16 %v541
    %v2803 = vunpack.c.h.b16 %v541
    %v2804 = vunpack.c.l.b16 %v542
    %v2805 = vunpack.c.h.b16 %v542
    %v2806 = vunpack.c.l.b16 %v543
    %v2807 = vunpack.c.h.b16 %v543
    %v2808 = vunpack.c.l.b16 %v544
    %v2809 = vunpack.c.h.b16 %v544
    %v2810 = vunpack.c.l.b16 %v545
    %v2811 = vunpack.c.h.b16 %v545
    %v2812 = vunpack.c.l.b16 %v546
    %v2813 = vunpack.c.h.b16 %v546
    %v2814 = vunpack.c.l.b16 %v547
    %v2815 = vunpack.c.h.b16 %v547
    %v2816 = vunpack.c.l.b16 %v548
    %v2817 = vunpack.c.h.b16 %v548
    %v2818 = vunpack.c.l.b16 %v549
    %v2819 = vunpack.c.h.b16 %v549
    %v2820 = vunpack.c.l.b16 %v550
    %v2821 = vunpack.c.h.b16 %v550
    %v2822 = vunpack.c.l.b16 %v551
    %v2823 = vunpack.c.h.b16 %v551
    %v2824 = vunpack.c.l.b16 %v552
    %v2825 = vunpack.c.h.b16 %v552
    %v2826 = vunpack.c.l.b16 %v553
    %v2827 = vunpack.c.h.b16 %v553
    %v2828 = vunpack.c.l.b16 %v554
    %v2829 = vunpack.c.h.b16 %v554
    %v2830 = vunpack.c.l.b16 %v555
    %v2831 = vunpack.c.h.b16 %v555
    %v2832 = vunpack.c.l.b16 %v556
    %v2833 = vunpack.c.h.b16 %v556
    %v2834 = vunpack.c.l.b16 %v557
    %v2835 = vunpack.c.h.b16 %v557
    %v2836 = vunpack.c.l.b16 %v558
    %v2837 = vunpack.c.h.b16 %v558
    %v2838 = vunpack.c.l.b16 %v559
    %v2839 = vunpack.c.h.b16 %v559
    %v2840 = vunpack.c.l.b16 %v560
    %v2841 = vunpack.c.h.b16 %v560
    %v2842 = vunpack.c.l.b16 %v561
    %v2843 = vunpack.c.h.b16 %v561
    %v2844 = vunpack.c.l.b16 %v562
    %v2845 = vunpack.c.h.b16 %v562
    %v2846 = vunpack.c.l.b16 %v563
    %v2847 = vunpack.c.h.b16 %v563
    %v2848 = vunpack.c.l.b16 %v564
    %v2849 = vunpack.c.h.b16 %v564
    %v2850 = vunpack.c.l.b16 %v565
    %v2851 = vunpack.c.h.b16 %v565
    %v2852 = vunpack.c.l.b16 %v566
    %v2853 = vunpack.c.h.b16 %v566
    %v2854 = vunpack.c.l.b16 %v567
    %v2855 = vunpack.c.h.b16 %v567
    %v2856 = vunpack.c.l.b16 %v568
    %v2857 = vunpack.c.h.b16 %v568
    %v2858 = vunpack.c.l.b16 %v569
    %v2859 = vunpack.c.h.b16 %v569
    %v2860 = vunpack.c.l.b16 %v570
    %v2861 = vunpack.c.h.b16 %v570
    %v2862 = vunpack.c.l.b16 %v571
    %v2863 = vunpack.c.h.b16 %v571
    %v2864 = vunpack.c.l.b16 %v572
    %v2865 = vunpack.c.h.b16 %v572
    %v2866 = vunpack.c.l.b16 %v573
    %v2867 = vunpack.c.h.b16 %v573
    %v2868 = vunpack.c.l.b16 %v574
    %v2869 = vunpack.c.h.b16 %v574
    %v2870 = vunpack.c.l.b16 %v575
    %v2871 = vunpack.c.h.b16 %v575
    %v2872 = vunpack.c.l.b16 %v576
    %v2873 = vunpack.c.h.b16 %v576
    %v2874 = vunpack.c.l.b16 %v577
    %v2875 = vunpack.c.h.b16 %v577
    %v2876 = vunpack.c.l.b16 %v578
    %v2877 = vunpack.c.h.b16 %v578
    %v2878 = vunpack.c.l.b16 %v579
    %v2879 = vunpack.c.h.b16 %v579
    %v2880 = vunpack.c.l.b16 %v580
    %v2881 = vunpack.c.h.b16 %v580
    %v2882 = vunpack.c.l.b16 %v581
    %v2883 = vunpack.c.h.b16 %v581
    %v2884 = vunpack.c.l.b16 %v582
    %v2885 = vunpack.c.h.b16 %v582
    %v2886 = vunpack.c.l.b16 %v583
    %v2887 = vunpack.c.h.b16 %v583
    %v2888 = vunpack.c.l.b16 %v584
    %v2889 = vunpack.c.h.b16 %v584
    %v2890 = vunpack.c.l.b16 %v585
    %v2891 = vunpack.c.h.b16 %v585
    %v2892 = vunpack.c.l.b16 %v586
    %v2893 = vunpack.c.h.b16 %v586
    %v2894 = vunpack.c.l.b16 %v587
    %v2895 = vunpack.c.h.b16 %v587
    %v2896 = vunpack.c.l.b16 %v588
    %v2897 = vunpack.c.h.b16 %v588
    %v2898 = vunpack.c.l.b16 %v589
    %v2899 = vunpack.c.h.b16 %v589
    %v2900 = vunpack.c.l.b16 %v590
    %v2901 = vunpack.c.h.b16 %v590
    %v2902 = vunpack.c.l.b16 %v591
    %v2903 = vunpack.c.h.b16 %v591
    %v2904 = vunpack.c.l.b16 %v592
    %v2905 = vunpack.c.h.b16 %v592
    %v2906 = vunpack.c.l.b16 %v593
    %v2907 = vunpack.c.h.b16 %v593
    %v2908 = vunpack.c.l.b16 %v594
    %v2909 = vunpack.c.h.b16 %v594
    %v2910 = vunpack.c.l.b16 %v595
    %v2911 = vunpack.c.h.b16 %v595
    %v2912 = vunpack.c.l.b16 %v596
    %v2913 = vunpack.c.h.b16 %v596
    %v2914 = vunpack.c.l.b16 %v597
    %v2915 = vunpack.c.h.b16 %v597
    %v2916 = vunpack.c.l.b16 %v598
    %v2917 = vunpack.c.h.b16 %v598
    %v2918 = vunpack.c.l.b16 %v599
    %v2919 = vunpack.c.h.b16 %v599
    %v2920 = vunpack.c.l.b16 %v600
    %v2921 = vunpack.c.h.b16 %v600
    %v2922 = vunpack.c.l.b16 %v601
    %v2923 = vunpack.c.h.b16 %v601
    %v2924 = vunpack.c.l.b16 %v602
    %v2925 = vunpack.c.h.b16 %v602
    %v2926 = vunpack.c.l.b16 %v603
    %v2927 = vunpack.c.h.b16 %v603
    %v2928 = vunpack.c.l.b16 %v604
    %v2929 = vunpack.c.h.b16 %v604
    %v2930 = vunpack.c.l.b16 %v605
    %v2931 = vunpack.c.h.b16 %v605
    %v2932 = vunpack.c.l.b16 %v606
    %v2933 = vunpack.c.h.b16 %v606
    %v2934 = vunpack.c.l.b16 %v607
    %v2935 = vunpack.c.h.b16 %v607
    %v2936 = vunpack.c.l.b16 %v608
    %v2937 = vunpack.c.h.b16 %v608
    %v2938 = vunpack.c.l.b16 %v609
    %v2939 = vunpack.c.h.b16 %v609
    %v2940 = vunpack.c.l.b16 %v610
    %v2941 = vunpack.c.h.b16 %v610
    %v2942 = vunpack.c.l.b16 %v611
    %v2943 = vunpack.c.h.b16 %v611
    %v2944 = vunpack.c.l.b16 %v612
    %v2945 = vunpack.c.h.b16 %v612
    %v2946 = vunpack.c.l.b16 %v613
    %v2947 = vunpack.c.h.b16 %v613
    %v2948 = vunpack.c.l.b16 %v614
    %v2949 = vunpack.c.h.b16 %v614
    %v2950 = vunpack.c.l.b16 %v615
    %v2951 = vunpack.c.h.b16 %v615
    %v2952 = vunpack.c.l.b16 %v616
    %v2953 = vunpack.c.h.b16 %v616
    %v2954 = vunpack.c.l.b16 %v617
    %v2955 = vunpack.c.h.b16 %v617
    %v2956 = vunpack.c.l.b16 %v618
    %v2957 = vunpack.c.h.b16 %v618
    %v2958 = vunpack.c.l.b16 %v619
    %v2959 = vunpack.c.h.b16 %v619
    %v2960 = vunpack.c.l.b16 %v620
    %v2961 = vunpack.c.h.b16 %v620
    %v2962 = vunpack.c.l.b16 %v621
    %v2963 = vunpack.c.h.b16 %v621
    %v2964 = vunpack.c.l.b16 %v622
    %v2965 = vunpack.c.h.b16 %v622
    %v2966 = vunpack.c.l.b16 %v623
    %v2967 = vunpack.c.h.b16 %v623
    %v2968 = vunpack.c.l.b16 %v624
    %v2969 = vunpack.c.h.b16 %v624
    %v2970 = vunpack.c.l.b16 %v625
    %v2971 = vunpack.c.h.b16 %v625
    %v2972 = vunpack.c.l.b16 %v626
    %v2973 = vunpack.c.h.b16 %v626
    %v2974 = vunpack.c.l.b16 %v627
    %v2975 = vunpack.c.h.b16 %v627
    %v2976 = vunpack.c.l.b16 %v628
    %v2977 = vunpack.c.h.b16 %v628
    %v2978 = vunpack.c.l.b16 %v629
    %v2979 = vunpack.c.h.b16 %v629
    %v2980 = vunpack.c.l.b16 %v630
    %v2981 = vunpack.c.h.b16 %v630
    %v2982 = vunpack.c.l.b16 %v631
    %v2983 = vunpack.c.h.b16 %v631
    %v2984 = vunpack.c.l.b16 %v632
    %v2985 = vunpack.c.h.b16 %v632
    %v2986 = vunpack.c.l.b16 %v633
    %v2987 = vunpack.c.h.b16 %v633
    %v2988 = vunpack.c.l.b16 %v634
    %v2989 = vunpack.c.h.b16 %v634
    %v2990 = vunpack.c.l.b16 %v635
    %v2991 = vunpack.c.h.b16 %v635
    %v2992 = vunpack.c.l.b16 %v636
    %v2993 = vunpack.c.h.b16 %v636
    %v2994 = vunpack.c.l.b16 %v637
    %v2995 = vunpack.c.h.b16 %v637
    %v2996 = vunpack.c.l.b16 %v638
    %v2997 = vunpack.c.h.b16 %v638
    %v2998 = vunpack.c.l.b16 %v639
    %v2999 = vunpack.c.h.b16 %v639
    %v3000 = vunpack.c.l.b16 %v640
    %v3001 = vunpack.c.h.b16 %v640
    %v3002 = vunpack.c.l.b16 %v641
    %v3003 = vunpack.c.h.b16 %v641
    %v3004 = vunpack.c.l.b16 %v642
    %v3005 = vunpack.c.h.b16 %v642
    %v3006 = vunpack.c.l.b16 %v643
    %v3007 = vunpack.c.h.b16 %v643
    %v3008 = vunpack.c.l.b16 %v644
    %v3009 = vunpack.c.h.b16 %v644
    %v3010 = vunpack.c.l.b16 %v645
    %v3011 = vunpack.c.h.b16 %v645
    %v3012 = vunpack.c.l.b16 %v646
    %v3013 = vunpack.c.h.b16 %v646
    %v3014 = vunpack.c.l.b16 %v647
    %v3015 = vunpack.c.h.b16 %v647
    %v3016 = vunpack.c.l.b16 %v648
    %v3017 = vunpack.c.h.b16 %v648
    %v3018 = vunpack.c.l.b16 %v649
    %v3019 = vunpack.c.h.b16 %v649
    %v3020 = vunpack.c.l.b16 %v650
    %v3021 = vunpack.c.h.b16 %v650
    %v3022 = vunpack.c.l.b16 %v651
    %v3023 = vunpack.c.h.b16 %v651
    %v3024 = vunpack.c.l.b16 %v652
    %v3025 = vunpack.c.h.b16 %v652
    %v3026 = vunpack.c.l.b16 %v653
    %v3027 = vunpack.c.h.b16 %v653
    %v3028 = vunpack.c.l.b16 %v654
    %v3029 = vunpack.c.h.b16 %v654
    %v3030 = vunpack.c.l.b16 %v655
    %v3031 = vunpack.c.h.b16 %v655
    %v3032 = vunpack.c.l.b16 %v656
    %v3033 = vunpack.c.h.b16 %v656
    %v3034 = vunpack.c.l.b16 %v657
    %v3035 = vunpack.c.h.b16 %v657
    %v3036 = vunpack.c.l.b16 %v658
    %v3037 = vunpack.c.h.b16 %v658
    %v3038 = vunpack.c.l.b16 %v659
    %v3039 = vunpack.c.h.b16 %v659
    %v3040 = vunpack.c.l.b16 %v660
    %v3041 = vunpack.c.h.b16 %v660
    %v3042 = vunpack.c.l.b16 %v661
    %v3043 = vunpack.c.h.b16 %v661
    %v3044 = vunpack.c.l.b16 %v662
    %v3045 = vunpack.c.h.b16 %v662
    %v3046 = vunpack.c.l.b16 %v663
    %v3047 = vunpack.c.h.b16 %v663
    %v3048 = vunpack.c.l.b16 %v664
    %v3049 = vunpack.c.h.b16 %v664
    %v3050 = vunpack.c.l.b16 %v665
    %v3051 = vunpack.c.h.b16 %v665
    %v3052 = vunpack.c.l.b16 %v666
    %v3053 = vunpack.c.h.b16 %v666
    %v3054 = vunpack.c.l.b16 %v667
    %v3055 = vunpack.c.h.b16 %v667
    %v3056 = vunpack.c.l.b16 %v668
    %v3057 = vunpack.c.h.b16 %v668
    %v3058 = vunpack.c.l.b16 %v669
    %v3059 = vunpack.c.h.b16 %v669
    %v3060 = vunpack.c.l.b16 %v670
    %v3061 = vunpack.c.h.b16 %v670
    %v3062 = vunpack.c.l.b16 %v671
    %v3063 = vunpack.c.h.b16 %v671
    %v3064 = vunpack.c.l.b16 %v672
    %v3065 = vunpack.c.h.b16 %v672
    %v3066 = vunpack.c.l.b16 %v673
    %v3067 = vunpack.c.h.b16 %v673
    %v3068 = vunpack.c.l.b16 %v674
    %v3069 = vunpack.c.h.b16 %v674
    %v3070 = vunpack.c.l.b16 %v675
    %v3071 = vunpack.c.h.b16 %v675
    %v3072 = vunpack.c.l.b16 %v676
    %v3073 = vunpack.c.h.b16 %v676
    %v3074 = vunpack.c.l.b16 %v677
    %v3075 = vunpack.c.h.b16 %v677
    %v3076 = vunpack.c.l.b16 %v678
    %v3077 = vunpack.c.h.b16 %v678
    %v3078 = vunpack.c.l.b16 %v679
    %v3079 = vunpack.c.h.b16 %v679
    %v3080 = vunpack.c.l.b16 %v680
    %v3081 = vunpack.c.h.b16 %v680
    %v3082 = vunpack.c.l.b16 %v681
    %v3083 = vunpack.c.h.b16 %v681
    %v3084 = vunpack.c.l.b16 %v682
    %v3085 = vunpack.c.h.b16 %v682
    %v3086 = vunpack.c.l.b16 %v683
    %v3087 = vunpack.c.h.b16 %v683
    %v3088 = vunpack.c.l.b16 %v684
    %v3089 = vunpack.c.h.b16 %v684
    %v3090 = vunpack.c.l.b16 %v685
    %v3091 = vunpack.c.h.b16 %v685
    %v3092 = vunpack.c.l.b16 %v686
    %v3093 = vunpack.c.h.b16 %v686
    %v3094 = vunpack.c.l.b16 %v687
    %v3095 = vunpack.c.h.b16 %v687
    %v3096 = vunpack.c.l.b16 %v688
    %v3097 = vunpack.c.h.b16 %v688
    %v3098 = vunpack.c.l.b16 %v689
    %v3099 = vunpack.c.h.b16 %v689
    %v3100 = vunpack.c.l.b16 %v690
    %v3101 = vunpack.c.h.b16 %v690
    %v3102 = vunpack.c.l.b16 %v691
    %v3103 = vunpack.c.h.b16 %v691
    %v3104 = vunpack.c.l.b16 %v692
    %v3105 = vunpack.c.h.b16 %v692
    %v3106 = vunpack.c.l.b16 %v693
    %v3107 = vunpack.c.h.b16 %v693
    %v3108 = vunpack.c.l.b16 %v694
    %v3109 = vunpack.c.h.b16 %v694
    %v3110 = vunpack.c.l.b16 %v695
    %v3111 = vunpack.c.h.b16 %v695
    %v3112 = vunpack.c.l.b16 %v696
    %v3113 = vunpack.c.h.b16 %v696
    %v3114 = vunpack.c.l.b16 %v697
    %v3115 = vunpack.c.h.b16 %v697
    %v3116 = vunpack.c.l.b16 %v698
    %v3117 = vunpack.c.h.b16 %v698
    %v3118 = vunpack.c.l.b16 %v699
    %v3119 = vunpack.c.h.b16 %v699
    %v3120 = vunpack.c.l.b16 %v700
    %v3121 = vunpack.c.h.b16 %v700
    %v3122 = vunpack.c.l.b16 %v701
    %v3123 = vunpack.c.h.b16 %v701
    %v3124 = vunpack.c.l.b16 %v702
    %v3125 = vunpack.c.h.b16 %v702
    %v3126 = vunpack.c.l.b16 %v703
    %v3127 = vunpack.c.h.b16 %v703
    %v3128 = vunpack.c.l.b16 %v704
    %v3129 = vunpack.c.h.b16 %v704
    %v3130 = vunpack.c.l.b16 %v705
    %v3131 = vunpack.c.h.b16 %v705
    %v3132 = vunpack.c.l.b16 %v706
    %v3133 = vunpack.c.h.b16 %v706
    %v3134 = vunpack.c.l.b16 %v707
    %v3135 = vunpack.c.h.b16 %v707
    %v3136 = vunpack.c.l.b16 %v708
    %v3137 = vunpack.c.h.b16 %v708
    %v3138 = vunpack.c.l.b16 %v709
    %v3139 = vunpack.c.h.b16 %v709
    %v3140 = vunpack.c.l.b16 %v710
    %v3141 = vunpack.c.h.b16 %v710
    %v3142 = vunpack.c.l.b16 %v711
    %v3143 = vunpack.c.h.b16 %v711
    %v3144 = vunpack.c.l.b16 %v712
    %v3145 = vunpack.c.h.b16 %v712
    %v3146 = vunpack.c.l.b16 %v713
    %v3147 = vunpack.c.h.b16 %v713
    %v3148 = vunpack.c.l.b16 %v714
    %v3149 = vunpack.c.h.b16 %v714
    %v3150 = vunpack.c.l.b16 %v715
    %v3151 = vunpack.c.h.b16 %v715
    %v3152 = vunpack.c.l.b16 %v716
    %v3153 = vunpack.c.h.b16 %v716
    %v3154 = vunpack.c.l.b16 %v717
    %v3155 = vunpack.c.h.b16 %v717
    %v3156 = vunpack.c.l.b16 %v718
    %v3157 = vunpack.c.h.b16 %v718
    %v3158 = vunpack.c.l.b16 %v719
    %v3159 = vunpack.c.h.b16 %v719
    %v3160 = vunpack.c.l.b16 %v720
    %v3161 = vunpack.c.h.b16 %v720
    %v3162 = vunpack.c.l.b16 %v721
    %v3163 = vunpack.c.h.b16 %v721
    %v3164 = vunpack.c.l.b16 %v722
    %v3165 = vunpack.c.h.b16 %v722
    %v3166 = vunpack.c.l.b16 %v723
    %v3167 = vunpack.c.h.b16 %v723
    %v3168 = vunpack.c.l.b16 %v724
    %v3169 = vunpack.c.h.b16 %v724
    %v3170 = vunpack.c.l.b16 %v725
    %v3171 = vunpack.c.h.b16 %v725
    %v3172 = vunpack.c.l.b16 %v726
    %v3173 = vunpack.c.h.b16 %v726
    %v3174 = vunpack.c.l.b16 %v727
    %v3175 = vunpack.c.h.b16 %v727
    %v3176 = vunpack.c.l.b16 %v728
    %v3177 = vunpack.c.h.b16 %v728
    %v3178 = vunpack.c.l.b16 %v729
    %v3179 = vunpack.c.h.b16 %v729
    %v3180 = vunpack.c.l.b16 %v730
    %v3181 = vunpack.c.h.b16 %v730
    %v3182 = vunpack.c.l.b16 %v731
    %v3183 = vunpack.c.h.b16 %v731
    %v3184 = vunpack.c.l.b16 %v732
    %v3185 = vunpack.c.h.b16 %v732
    %v3186 = vunpack.c.l.b16 %v733
    %v3187 = vunpack.c.h.b16 %v733
    %v3188 = vunpack.c.l.b16 %v734
    %v3189 = vunpack.c.h.b16 %v734
    %v3190 = vunpack.c.l.b16 %v735
    %v3191 = vunpack.c.h.b16 %v735
    %v3192 = vunpack.c.l.b16 %v736
    %v3193 = vunpack.c.h.b16 %v736
    %v3194 = vunpack.c.l.b16 %v737
    %v3195 = vunpack.c.h.b16 %v737
    %v3196 = vunpack.c.l.b16 %v738
    %v3197 = vunpack.c.h.b16 %v738
    %v3198 = vunpack.c.l.b16 %v739
    %v3199 = vunpack.c.h.b16 %v739
    %v3200 = vunpack.c.l.b16 %v740
    %v3201 = vunpack.c.h.b16 %v740
    %v3202 = vunpack.c.l.b16 %v741
    %v3203 = vunpack.c.h.b16 %v741
    %v3204 = vunpack.c.l.b16 %v742
    %v3205 = vunpack.c.h.b16 %v742
    %v3206 = vunpack.c.l.b16 %v743
    %v3207 = vunpack.c.h.b16 %v743
    %v3208 = vunpack.c.l.b16 %v744
    %v3209 = vunpack.c.h.b16 %v744
    %v3210 = vunpack.c.l.b16 %v745
    %v3211 = vunpack.c.h.b16 %v745
    %v3212 = vunpack.c.l.b16 %v746
    %v3213 = vunpack.c.h.b16 %v746
    %v3214 = vunpack.c.l.b16 %v747
    %v3215 = vunpack.c.h.b16 %v747
    %v3216 = vunpack.c.l.b16 %v748
    %v3217 = vunpack.c.h.b16 %v748
    %v3218 = vunpack.c.l.b16 %v749
    %v3219 = vunpack.c.h.b16 %v749
    %v3220 = vunpack.c.l.b16 %v750
    %v3221 = vunpack.c.h.b16 %v750
    %v3222 = vunpack.c.l.b16 %v751
    %v3223 = vunpack.c.h.b16 %v751
    %v3224 = vunpack.c.l.b16 %v752
    %v3225 = vunpack.c.h.b16 %v752
    %v3226 = vunpack.c.l.b16 %v753
    %v3227 = vunpack.c.h.b16 %v753
    %v3228 = vunpack.c.l.b16 %v754
    %v3229 = vunpack.c.h.b16 %v754
    %v3230 = vunpack.c.l.b16 %v755
    %v3231 = vunpack.c.h.b16 %v755
    %v3232 = vunpack.c.l.b16 %v756
    %v3233 = vunpack.c.h.b16 %v756
    %v3234 = vunpack.c.l.b16 %v757
    %v3235 = vunpack.c.h.b16 %v757
    %v3236 = vunpack.c.l.b16 %v758
    %v3237 = vunpack.c.h.b16 %v758
    %v3238 = vunpack.c.l.b16 %v759
    %v3239 = vunpack.c.h.b16 %v759
    %v3240 = vunpack.c.l.b16 %v760
    %v3241 = vunpack.c.h.b16 %v760
    %v3242 = vunpack.c.l.b16 %v761
    %v3243 = vunpack.c.h.b16 %v761
    %v3244 = vunpack.c.l.b16 %v762
    %v3245 = vunpack.c.h.b16 %v762
    %v3246 = vunpack.c.l.b16 %v763
    %v3247 = vunpack.c.h.b16 %v763
    %v3248 = vunpack.c.l.b16 %v764
    %v3249 = vunpack.c.h.b16 %v764
    %v3250 = vunpack.c.l.b16 %v765
    %v3251 = vunpack.c.h.b16 %v765
    %v3252 = vunpack.c.l.b16 %v766
    %v3253 = vunpack.c.h.b16 %v766
    %v3254 = vunpack.c.l.b16 %v767
    %v3255 = vunpack.c.h.b16 %v767
    %v3256 = vunpack.c.l.b16 %v768
    %v3257 = vunpack.c.h.b16 %v768
    %v3258 = vunpack.c.l.b16 %v769
    %v3259 = vunpack.c.h.b16 %v769
    %v3260 = vunpack.c.l.b16 %v770
    %v3261 = vunpack.c.h.b16 %v770
    %v3262 = vunpack.c.l.b16 %v771
    %v3263 = vunpack.c.h.b16 %v771
    %v3264 = vunpack.c.l.b16 %v772
    %v3265 = vunpack.c.h.b16 %v772
    %v3266 = vunpack.c.l.b16 %v773
    %v3267 = vunpack.c.h.b16 %v773
    %v3268 = vunpack.c.l.b16 %v774
    %v3269 = vunpack.c.h.b16 %v774
    %v3270 = vunpack.c.l.b16 %v775
    %v3271 = vunpack.c.h.b16 %v775
    %v3272 = vunpack.c.l.b16 %v776
    %v3273 = vunpack.c.h.b16 %v776
    %v3274 = vunpack.c.l.b16 %v777
    %v3275 = vunpack.c.h.b16 %v777
    %v3276 = vunpack.c.l.b16 %v778
    %v3277 = vunpack.c.h.b16 %v778
    %v3278 = vunpack.c.l.b16 %v779
    %v3279 = vunpack.c.h.b16 %v779
    %v3280 = vunpack.c.l.b16 %v780
    %v3281 = vunpack.c.h.b16 %v780
    %v3282 = vunpack.c.l.b16 %v781
    %v3283 = vunpack.c.h.b16 %v781
    %v3284 = vunpack.c.l.b16 %v782
    %v3285 = vunpack.c.h.b16 %v782
    %v3286 = vunpack.c.l.b16 %v783
    %v3287 = vunpack.c.h.b16 %v783
    %v3288 = vunpack.c.l.b16 %v784
    %v3289 = vunpack.c.h.b16 %v784
    %v3290 = vunpack.c.l.b16 %v785
    %v3291 = vunpack.c.h.b16 %v785
    %v3292 = vunpack.c.l.b16 %v786
    %v3293 = vunpack.c.h.b16 %v786
    %v3294 = vunpack.c.l.b16 %v787
    %v3295 = vunpack.c.h.b16 %v787
    %v3296 = vunpack.c.l.b16 %v788
    %v3297 = vunpack.c.h.b16 %v788
    %v3298 = vunpack.c.l.b16 %v789
    %v3299 = vunpack.c.h.b16 %v789
    %v3300 = vunpack.c.l.b16 %v790
    %v3301 = vunpack.c.h.b16 %v790
    %v3302 = vunpack.c.l.b16 %v791
    %v3303 = vunpack.c.h.b16 %v791
    %v3304 = vunpack.c.l.b16 %v792
    %v3305 = vunpack.c.h.b16 %v792
    %v3306 = vunpack.c.l.b16 %v793
    %v3307 = vunpack.c.h.b16 %v793
    %v3308 = vunpack.c.l.b16 %v794
    %v3309 = vunpack.c.h.b16 %v794
    %v3310 = vunpack.c.l.b16 %v795
    %v3311 = vunpack.c.h.b16 %v795
    %v3312 = vunpack.c.l.b16 %v796
    %v3313 = vunpack.c.h.b16 %v796
    %v3314 = vunpack.c.l.b16 %v797
    %v3315 = vunpack.c.h.b16 %v797
    %v3316 = vunpack.c.l.b16 %v798
    %v3317 = vunpack.c.h.b16 %v798
    %v3318 = vunpack.c.l.b16 %v799
    %v3319 = vunpack.c.h.b16 %v799
    %v3320 = vunpack.c.l.b16 %v800
    %v3321 = vunpack.c.h.b16 %v800
    %v3322 = vunpack.c.l.b16 %v801
    %v3323 = vunpack.c.h.b16 %v801
    %v3324 = vunpack.c.l.b16 %v802
    %v3325 = vunpack.c.h.b16 %v802
    %v3326 = vunpack.c.l.b16 %v803
    %v3327 = vunpack.c.h.b16 %v803
    %v3328 = vunpack.c.l.b16 %v804
    %v3329 = vunpack.c.h.b16 %v804
    %v3330 = vunpack.c.l.b16 %v805
    %v3331 = vunpack.c.h.b16 %v805
    %v3332 = vunpack.c.l.b16 %v806
    %v3333 = vunpack.c.h.b16 %v806
    %v3334 = vunpack.c.l.b16 %v807
    %v3335 = vunpack.c.h.b16 %v807
    %v3336 = vunpack.c.l.b16 %v808
    %v3337 = vunpack.c.h.b16 %v808
    %v3338 = vunpack.c.l.b16 %v809
    %v3339 = vunpack.c.h.b16 %v809
    %v3340 = vunpack.c.l.b16 %v810
    %v3341 = vunpack.c.h.b16 %v810
    %v3342 = vunpack.c.l.b16 %v811
    %v3343 = vunpack.c.h.b16 %v811
    %v3344 = vunpack.c.l.b16 %v812
    %v3345 = vunpack.c.h.b16 %v812
    %v3346 = vunpack.c.l.b16 %v813
    %v3347 = vunpack.c.h.b16 %v813
    %v3348 = vunpack.c.l.b16 %v814
    %v3349 = vunpack.c.h.b16 %v814
    %v3350 = vunpack.c.l.b16 %v815
    %v3351 = vunpack.c.h.b16 %v815
    %v3352 = vunpack.c.l.b16 %v816
    %v3353 = vunpack.c.h.b16 %v816
    %v3354 = vunpack.c.l.b16 %v817
    %v3355 = vunpack.c.h.b16 %v817
    %v3356 = vunpack.c.l.b16 %v818
    %v3357 = vunpack.c.h.b16 %v818
    %v3358 = vunpack.c.l.b16 %v819
    %v3359 = vunpack.c.h.b16 %v819
    %v3360 = vunpack.c.l.b16 %v820
    %v3361 = vunpack.c.h.b16 %v820
    %v3362 = vunpack.c.l.b16 %v821
    %v3363 = vunpack.c.h.b16 %v821
    %v3364 = vunpack.c.l.b16 %v822
    %v3365 = vunpack.c.h.b16 %v822
    %v3366 = vunpack.c.l.b16 %v823
    %v3367 = vunpack.c.h.b16 %v823
    %v3368 = vunpack.c.l.b16 %v824
    %v3369 = vunpack.c.h.b16 %v824
    %v3370 = vunpack.c.l.b16 %v825
    %v3371 = vunpack.c.h.b16 %v825
    %v3372 = vunpack.c.l.b16 %v826
    %v3373 = vunpack.c.h.b16 %v826
    %v3374 = vunpack.c.l.b16 %v827
    %v3375 = vunpack.c.h.b16 %v827
    %v3376 = vunpack.c.l.b16 %v828
    %v3377 = vunpack.c.h.b16 %v828
    %v3378 = vunpack.c.l.b16 %v829
    %v3379 = vunpack.c.h.b16 %v829
    %v3380 = vunpack.c.l.b16 %v830
    %v3381 = vunpack.c.h.b16 %v830
    %v3382 = vunpack.c.l.b16 %v831
    %v3383 = vunpack.c.h.b16 %v831
    %v3384 = vunpack.c.l.b16 %v832
    %v3385 = vunpack.c.h.b16 %v832
    %v3386 = vunpack.c.l.b16 %v833
    %v3387 = vunpack.c.h.b16 %v833
    %v3388 = vunpack.c.l.b16 %v834
    %v3389 = vunpack.c.h.b16 %v834
    %v3390 = vunpack.c.l.b16 %v835
    %v3391 = vunpack.c.h.b16 %v835
    %v3392 = vunpack.c.l.b16 %v836
    %v3393 = vunpack.c.h.b16 %v836
    %v3394 = vunpack.c.l.b16 %v837
    %v3395 = vunpack.c.h.b16 %v837
    %v3396 = vunpack.c.l.b16 %v838
    %v3397 = vunpack.c.h.b16 %v838
    %v3398 = vunpack.c.l.b16 %v839
    %v3399 = vunpack.c.h.b16 %v839
    %v3400 = vunpack.c.l.b16 %v840
    %v3401 = vunpack.c.h.b16 %v840
    %v3402 = vunpack.c.l.b16 %v841
    %v3403 = vunpack.c.h.b16 %v841
    %v3404 = vunpack.c.l.b16 %v842
    %v3405 = vunpack.c.h.b16 %v842
    %v3406 = vunpack.c.l.b16 %v843
    %v3407 = vunpack.c.h.b16 %v843
    %v3408 = vunpack.c.l.b16 %v844
    %v3409 = vunpack.c.h.b16 %v844
    %v3410 = vunpack.c.l.b16 %v845
    %v3411 = vunpack.c.h.b16 %v845
    %v3412 = vunpack.c.l.b16 %v846
    %v3413 = vunpack.c.h.b16 %v846
    %v3414 = vunpack.c.l.b16 %v847
    %v3415 = vunpack.c.h.b16 %v847
    %v3416 = vunpack.c.l.b16 %v848
    %v3417 = vunpack.c.h.b16 %v848
    %v3418 = vunpack.c.l.b16 %v849
    %v3419 = vunpack.c.h.b16 %v849
    %v3420 = vunpack.c.l.b16 %v850
    %v3421 = vunpack.c.h.b16 %v850
    %v3422 = vunpack.c.l.b16 %v851
    %v3423 = vunpack.c.h.b16 %v851
    %v3424 = vunpack.c.l.b16 %v852
    %v3425 = vunpack.c.h.b16 %v852
    %v3426 = vunpack.c.l.b16 %v853
    %v3427 = vunpack.c.h.b16 %v853
    %v3428 = vunpack.c.l.b16 %v854
    %v3429 = vunpack.c.h.b16 %v854
    %v3430 = vunpack.c.l.b16 %v855
    %v3431 = vunpack.c.h.b16 %v855
    %v3432 = vunpack.c.l.b16 %v856
    %v3433 = vunpack.c.h.b16 %v856
    %v3434 = vunpack.c.l.b16 %v857
    %v3435 = vunpack.c.h.b16 %v857
    %v3436 = vunpack.c.l.b16 %v858
    %v3437 = vunpack.c.h.b16 %v858
    %v3438 = vunpack.c.l.b16 %v859
    %v3439 = vunpack.c.h.b16 %v859
    %v3440 = vunpack.c.l.b16 %v860
    %v3441 = vunpack.c.h.b16 %v860
    %v3442 = vunpack.c.l.b16 %v861
    %v3443 = vunpack.c.h.b16 %v861
    %v3444 = vunpack.c.l.b16 %v862
    %v3445 = vunpack.c.h.b16 %v862
    %v3446 = vunpack.c.l.b16 %v863
    %v3447 = vunpack.c.h.b16 %v863
    %v3448 = vunpack.c.l.b16 %v864
    %v3449 = vunpack.c.h.b16 %v864
    %v3450 = vunpack.c.l.b16 %v865
    %v3451 = vunpack.c.h.b16 %v865
    %v3452 = vunpack.c.l.b16 %v866
    %v3453 = vunpack.c.h.b16 %v866
    %v3454 = vunpack.c.l.b16 %v867
    %v3455 = vunpack.c.h.b16 %v867
    %v3456 = vunpack.c.l.b16 %v868
    %v3457 = vunpack.c.h.b16 %v868
    %v3458 = vunpack.c.l.b16 %v869
    %v3459 = vunpack.c.h.b16 %v869
    %v3460 = vunpack.c.l.b16 %v870
    %v3461 = vunpack.c.h.b16 %v870
    %v3462 = vunpack.c.l.b16 %v871
    %v3463 = vunpack.c.h.b16 %v871
    %v3464 = vunpack.c.l.b16 %v872
    %v3465 = vunpack.c.h.b16 %v872
    %v3466 = vunpack.c.l.b16 %v873
    %v3467 = vunpack.c.h.b16 %v873
    %v3468 = vunpack.c.l.b16 %v874
    %v3469 = vunpack.c.h.b16 %v874
    %v3470 = vunpack.c.l.b16 %v875
    %v3471 = vunpack.c.h.b16 %v875
    %v3472 = vunpack.c.l.b16 %v876
    %v3473 = vunpack.c.h.b16 %v876
    %v3474 = vunpack.c.l.b16 %v877
    %v3475 = vunpack.c.h.b16 %v877
    %v3476 = vunpack.c.l.b16 %v878
    %v3477 = vunpack.c.h.b16 %v878
    %v3478 = vunpack.c.l.b16 %v879
    %v3479 = vunpack.c.h.b16 %v879
    %v3480 = vunpack.c.l.b16 %v880
    %v3481 = vunpack.c.h.b16 %v880
    %v3482 = vunpack.c.l.b16 %v881
    %v3483 = vunpack.c.h.b16 %v881
    %v3484 = vunpack.c.l.b16 %v882
    %v3485 = vunpack.c.h.b16 %v882
    %v3486 = vunpack.c.l.b16 %v883
    %v3487 = vunpack.c.h.b16 %v883
    %v3488 = vunpack.c.l.b16 %v884
    %v3489 = vunpack.c.h.b16 %v884
    %v3490 = vunpack.c.l.b16 %v885
    %v3491 = vunpack.c.h.b16 %v885
    %v3492 = vunpack.c.l.b16 %v886
    %v3493 = vunpack.c.h.b16 %v886
    %v3494 = vunpack.c.l.b16 %v887
    %v3495 = vunpack.c.h.b16 %v887
    %v3496 = vunpack.c.l.b16 %v888
    %v3497 = vunpack.c.h.b16 %v888
    %v3498 = vunpack.c.l.b16 %v889
    %v3499 = vunpack.c.h.b16 %v889
    %v3500 = vunpack.c.l.b16 %v890
    %v3501 = vunpack.c.h.b16 %v890
    %v3502 = vunpack.c.l.b16 %v891
    %v3503 = vunpack.c.h.b16 %v891
    %v3504 = vunpack.c.l.b16 %v892
    %v3505 = vunpack.c.h.b16 %v892
    %v3506 = vunpack.c.l.b16 %v893
    %v3507 = vunpack.c.h.b16 %v893
    %v3508 = vunpack.c.l.b16 %v894
    %v3509 = vunpack.c.h.b16 %v894
    %v3510 = vunpack.c.l.b16 %v895
    %v3511 = vunpack.c.h.b16 %v895
    %v3512 = vunpack.c.l.b16 %v896
    %v3513 = vunpack.c.h.b16 %v896
    %v3514 = vunpack.c.l.b16 %v897
    %v3515 = vunpack.c.h.b16 %v897
    %v3516 = vunpack.c.l.b16 %v898
    %v3517 = vunpack.c.h.b16 %v898
    %v3518 = vunpack.c.l.b16 %v899
    %v3519 = vunpack.c.h.b16 %v899
    %v3520 = vunpack.c.l.b16 %v900
    %v3521 = vunpack.c.h.b16 %v900
    %v3522 = vunpack.c.l.b16 %v901
    %v3523 = vunpack.c.h.b16 %v901
    %v3524 = vunpack.c.l.b16 %v902
    %v3525 = vunpack.c.h.b16 %v902
    %v3526 = vunpack.c.l.b16 %v903
    %v3527 = vunpack.c.h.b16 %v903
    %v3528 = vunpack.c.l.b16 %v904
    %v3529 = vunpack.c.h.b16 %v904
    %v3530 = vunpack.c.l.b16 %v905
    %v3531 = vunpack.c.h.b16 %v905
    %v3532 = vunpack.c.l.b16 %v906
    %v3533 = vunpack.c.h.b16 %v906
    %v3534 = vunpack.c.l.b16 %v907
    %v3535 = vunpack.c.h.b16 %v907
    %v3536 = vunpack.c.l.b16 %v908
    %v3537 = vunpack.c.h.b16 %v908
    %v3538 = vunpack.c.l.b16 %v909
    %v3539 = vunpack.c.h.b16 %v909
    %v3540 = vunpack.c.l.b16 %v910
    %v3541 = vunpack.c.h.b16 %v910
    %v3542 = vunpack.c.l.b16 %v911
    %v3543 = vunpack.c.h.b16 %v911
    %v3544 = vunpack.c.l.b16 %v912
    %v3545 = vunpack.c.h.b16 %v912
    %v3546 = vunpack.c.l.b16 %v913
    %v3547 = vunpack.c.h.b16 %v913
    %v3548 = vunpack.c.l.b16 %v914
    %v3549 = vunpack.c.h.b16 %v914
    %v3550 = vunpack.c.l.b16 %v915
    %v3551 = vunpack.c.h.b16 %v915
    %v3552 = vunpack.c.l.b16 %v916
    %v3553 = vunpack.c.h.b16 %v916
    %v3554 = vunpack.c.l.b16 %v917
    %v3555 = vunpack.c.h.b16 %v917
    %v3556 = vunpack.c.l.b16 %v918
    %v3557 = vunpack.c.h.b16 %v918
    %v3558 = vunpack.c.l.b16 %v919
    %v3559 = vunpack.c.h.b16 %v919
    %v3560 = vunpack.c.l.b16 %v920
    %v3561 = vunpack.c.h.b16 %v920
    %v3562 = vunpack.c.l.b16 %v921
    %v3563 = vunpack.c.h.b16 %v921
    %v3564 = vunpack.c.l.b16 %v922
    %v3565 = vunpack.c.h.b16 %v922
    %v3566 = vunpack.c.l.b16 %v923
    %v3567 = vunpack.c.h.b16 %v923
    %v3568 = vunpack.c.l.b16 %v924
    %v3569 = vunpack.c.h.b16 %v924
    %v3570 = vunpack.c.l.b16 %v925
    %v3571 = vunpack.c.h.b16 %v925
    %v3572 = vunpack.c.l.b16 %v926
    %v3573 = vunpack.c.h.b16 %v926
    %v3574 = vunpack.c.l.b16 %v927
    %v3575 = vunpack.c.h.b16 %v927
    %v3576 = vunpack.c.l.b16 %v928
    %v3577 = vunpack.c.h.b16 %v928
    %v3578 = vunpack.c.l.b16 %v929
    %v3579 = vunpack.c.h.b16 %v929
    %v3580 = vunpack.c.l.b16 %v930
    %v3581 = vunpack.c.h.b16 %v930
    %v3582 = vunpack.c.l.b16 %v931
    %v3583 = vunpack.c.h.b16 %v931
    %v3584 = vunpack.c.l.b16 %v932
    %v3585 = vunpack.c.h.b16 %v932
    %v3586 = vunpack.c.l.b16 %v933
    %v3587 = vunpack.c.h.b16 %v933
    %v3588 = vunpack.c.l.b16 %v934
    %v3589 = vunpack.c.h.b16 %v934
    %v3590 = vunpack.c.l.b16 %v935
    %v3591 = vunpack.c.h.b16 %v935
    %v3592 = vunpack.c.l.b16 %v936
    %v3593 = vunpack.c.h.b16 %v936
    %v3594 = vunpack.c.l.b16 %v937
    %v3595 = vunpack.c.h.b16 %v937
    %v3596 = vunpack.c.l.b16 %v938
    %v3597 = vunpack.c.h.b16 %v938
    %v3598 = vunpack.c.l.b16 %v939
    %v3599 = vunpack.c.h.b16 %v939
    %v3600 = vunpack.c.l.b16 %v940
    %v3601 = vunpack.c.h.b16 %v940
    %v3602 = vunpack.c.l.b16 %v941
    %v3603 = vunpack.c.h.b16 %v941
    %v3604 = vunpack.c.l.b16 %v942
    %v3605 = vunpack.c.h.b16 %v942
    %v3606 = vunpack.c.l.b16 %v943
    %v3607 = vunpack.c.h.b16 %v943
    %v3608 = vunpack.c.l.b16 %v944
    %v3609 = vunpack.c.h.b16 %v944
    %v3610 = vunpack.c.l.b16 %v945
    %v3611 = vunpack.c.h.b16 %v945
    %v3612 = vunpack.c.l.b16 %v946
    %v3613 = vunpack.c.h.b16 %v946
    %v3614 = vunpack.c.l.b16 %v947
    %v3615 = vunpack.c.h.b16 %v947
    %v3616 = vunpack.c.l.b16 %v948
    %v3617 = vunpack.c.h.b16 %v948
    %v3618 = vunpack.c.l.b16 %v949
    %v3619 = vunpack.c.h.b16 %v949
    %v3620 = vunpack.c.l.b16 %v950
    %v3621 = vunpack.c.h.b16 %v950
    %v3622 = vunpack.c.l.b16 %v951
    %v3623 = vunpack.c.h.b16 %v951
    %v3624 = vunpack.c.l.b16 %v952
    %v3625 = vunpack.c.h.b16 %v952
    %v3626 = vunpack.c.l.b16 %v953
    %v3627 = vunpack.c.h.b16 %v953
    %v3628 = vunpack.c.l.b16 %v954
    %v3629 = vunpack.c.h.b16 %v954
    %v3630 = vunpack.c.l.b16 %v955
    %v3631 = vunpack.c.h.b16 %v955
    %v3632 = vunpack.c.l.b16 %v956
    %v3633 = vunpack.c.h.b16 %v956
    %v3634 = vunpack.c.l.b16 %v957
    %v3635 = vunpack.c.h.b16 %v957
    %v3636 = vunpack.c.l.b16 %v958
    %v3637 = vunpack.c.h.b16 %v958
    %v3638 = vunpack.c.l.b16 %v959
    %v3639 = vunpack.c.h.b16 %v959
    %v3640 = vunpack.c.l.b16 %v960
    %v3641 = vunpack.c.h.b16 %v960
    %v3642 = vunpack.c.l.b16 %v961
    %v3643 = vunpack.c.h.b16 %v961
    %v3644 = vunpack.c.l.b16 %v962
    %v3645 = vunpack.c.h.b16 %v962
    %v3646 = vunpack.c.l.b16 %v963
    %v3647 = vunpack.c.h.b16 %v963
    %v3648 = vunpack.c.l.b16 %v964
    %v3649 = vunpack.c.h.b16 %v964
    %v3650 = vunpack.c.l.b16 %v965
    %v3651 = vunpack.c.h.b16 %v965
    %v3652 = vunpack.c.l.b16 %v966
    %v3653 = vunpack.c.h.b16 %v966
    %v3654 = vunpack.c.l.b16 %v967
    %v3655 = vunpack.c.h.b16 %v967
    %v3656 = vpack.c.b16 %v1946, %v1928
    %v3657 = vpack.c.b16 %v1947, %v1929
    %v3658 = vpack.c.b16 %v1948, %v1930
    %v3659 = vpack.c.b16 %v1949, %v1931
    %v3660 = vpack.c.b16 %v1950, %v1932
    %v3661 = vpack.c.b16 %v1951, %v1933
    %v3662 = vpack.c.b16 %v1952, %v1934
    %v3663 = vpack.c.b16 %v1953, %v1935
    %v3664 = vpack.c.b16 %v1954, %v1936
    %v3665 = vpack.c.b16 %v1955, %v1937
    %v3666 = vpack.c.b16 %v1956, %v1938
    %v3667 = vpack.c.b16 %v1957, %v1939
    %v3668 = vpack.c.b16 %v1958, %v1940
    %v3669 = vpack.c.b16 %v1959, %v1941
    %v3670 = vpack.c.b16 %v1960, %v1942
    %v3671 = vpack.c.b16 %v1961, %v1943
    %v3672 = vpack.c.b16 %v1962, %v1944
    %v3673 = vpack.c.b16 %v1963, %v1945
    %v3674 = vpack.c.b16 %v1982, %v1964
    %v3675 = vpack.c.b16 %v1983, %v1965
    %v3676 = vpack.c.b16 %v1984, %v1966
    %v3677 = vpack.c.b16 %v1985, %v1967
    %v3678 = vpack.c.b16 %v1986, %v1968
    %v3679 = vpack.c.b16 %v1987, %v1969
    %v3680 = vpack.c.b16 %v1988, %v1970
    %v3681 = vpack.c.b16 %v1989, %v1971
    %v3682 = vpack.c.b16 %v1990, %v1972
    %v3683 = vpack.c.b16 %v1991, %v1973
    %v3684 = vpack.c.b16 %v1992, %v1974
    %v3685 = vpack.c.b16 %v1993, %v1975
    %v3686 = vpack.c.b16 %v1994, %v1976
    %v3687 = vpack.c.b16 %v1995, %v1977
    %v3688 = vpack.c.b16 %v1996, %v1978
    %v3689 = vpack.c.b16 %v1997, %v1979
    %v3690 = vpack.c.b16 %v1998, %v1980
    %v3691 = vpack.c.b16 %v1999, %v1981
    %v3692 = vpack.c.b16 %v2018, %v2000
    %v3693 = vpack.c.b16 %v2019, %v2001
    %v3694 = vpack.c.b16 %v2020, %v2002
    %v3695 = vpack.c.b16 %v2021, %v2003
    %v3696 = vpack.c.b16 %v2022, %v2004
    %v3697 = vpack.c.b16 %v2023, %v2005
    %v3698 = vpack.c.b16 %v2024, %v2006
    %v3699 = vpack.c.b16 %v2025, %v2007
    %v3700 = vpack.c.b16 %v2026, %v2008
    %v3701 = vpack.c.b16 %v2027, %v2009
    %v3702 = vpack.c.b16 %v2028, %v2010
    %v3703 = vpack.c.b16 %v2029, %v2011
    %v3704 = vpack.c.b16 %v2030, %v2012
    %v3705 = vpack.c.b16 %v2031, %v2013
    %v3706 = vpack.c.b16 %v2032, %v2014
    %v3707 = vpack.c.b16 %v2033, %v2015
    %v3708 = vpack.c.b16 %v2034, %v2016
    %v3709 = vpack.c.b16 %v2035, %v2017
    %v3710 = vpack.c.b16 %v2054, %v2036
    %v3711 = vpack.c.b16 %v2055, %v2037
    %v3712 = vpack.c.b16 %v2056, %v2038
    %v3713 = vpack.c.b16 %v2057, %v2039
    %v3714 = vpack.c.b16 %v2058, %v2040
    %v3715 = vpack.c.b16 %v2059, %v2041
    %v3716 = vpack.c.b16 %v2060, %v2042
    %v3717 = vpack.c.b16 %v2061, %v2043
    %v3718 = vpack.c.b16 %v2062, %v2044
    %v3719 = vpack.c.b16 %v2063, %v2045
    %v3720 = vpack.c.b16 %v2064, %v2046
    %v3721 = vpack.c.b16 %v2065, %v2047
    %v3722 = vpack.c.b16 %v2066, %v2048
    %v3723 = vpack.c.b16 %v2067, %v2049
    %v3724 = vpack.c.b16 %v2068, %v2050
    %v3725 = vpack.c.b16 %v2069, %v2051
    %v3726 = vpack.c.b16 %v2070, %v2052
    %v3727 = vpack.c.b16 %v2071, %v2053
    %v3728 = vpack.c.b16 %v2090, %v2072
    %v3729 = vpack.c.b16 %v2091, %v2073
    %v3730 = vpack.c.b16 %v2092, %v2074
    %v3731 = vpack.c.b16 %v2093, %v2075
    %v3732 = vpack.c.b16 %v2094, %v2076
    %v3733 = vpack.c.b16 %v2095, %v2077
    %v3734 = vpack.c.b16 %v2096, %v2078
    %v3735 = vpack.c.b16 %v2097, %v2079
    %v3736 = vpack.c.b16 %v2098, %v2080
    %v3737 = vpack.c.b16 %v2099, %v2081
    %v3738 = vpack.c.b16 %v2100, %v2082
    %v3739 = vpack.c.b16 %v2101, %v2083
    %v3740 = vpack.c.b16 %v2102, %v2084
    %v3741 = vpack.c.b16 %v2103, %v2085
    %v3742 = vpack.c.b16 %v2104, %v2086
    %v3743 = vpack.c.b16 %v2105, %v2087
    %v3744 = vpack.c.b16 %v2106, %v2088
    %v3745 = vpack.c.b16 %v2107, %v2089
    %v3746 = vpack.c.b16 %v2126, %v2108
    %v3747 = vpack.c.b16 %v2127, %v2109
    %v3748 = vpack.c.b16 %v2128, %v2110
    %v3749 = vpack.c.b16 %v2129, %v2111
    %v3750 = vpack.c.b16 %v2130, %v2112
    %v3751 = vpack.c.b16 %v2131, %v2113
    %v3752 = vpack.c.b16 %v2132, %v2114
    %v3753 = vpack.c.b16 %v2133, %v2115
    %v3754 = vpack.c.b16 %v2134, %v2116
    %v3755 = vpack.c.b16 %v2135, %v2117
    %v3756 = vpack.c.b16 %v2136, %v2118
    %v3757 = vpack.c.b16 %v2137, %v2119
    %v3758 = vpack.c.b16 %v2138, %v2120
    %v3759 = vpack.c.b16 %v2139, %v2121
    %v3760 = vpack.c.b16 %v2140, %v2122
    %v3761 = vpack.c.b16 %v2141, %v2123
    %v3762 = vpack.c.b16 %v2142, %v2124
    %v3763 = vpack.c.b16 %v2143, %v2125
    %v3764 = vpack.c.b16 %v2162, %v2144
    %v3765 = vpack.c.b16 %v2163, %v2145
    %v3766 = vpack.c.b16 %v2164, %v2146
    %v3767 = vpack.c.b16 %v2165, %v2147
    %v3768 = vpack.c.b16 %v2166, %v2148
    %v3769 = vpack.c.b16 %v2167, %v2149
    %v3770 = vpack.c.b16 %v2168, %v2150
    %v3771 = vpack.c.b16 %v2169, %v2151
    %v3772 = vpack.c.b16 %v2170, %v2152
    %v3773 = vpack.c.b16 %v2171, %v2153
    %v3774 = vpack.c.b16 %v2172, %v2154
    %v3775 = vpack.c.b16 %v2173, %v2155
    %v3776 = vpack.c.b16 %v2174, %v2156
    %v3777 = vpack.c.b16 %v2175, %v2157
    %v3778 = vpack.c.b16 %v2176, %v2158
    %v3779 = vpack.c.b16 %v2177, %v2159
    %v3780 = vpack.c.b16 %v2178, %v2160
    %v3781 = vpack.c.b16 %v2179, %v2161
    %v3782 = vpack.c.b16 %v2198, %v2180
    %v3783 = vpack.c.b16 %v2199, %v2181
    %v3784 = vpack.c.b16 %v2200, %v2182
    %v3785 = vpack.c.b16 %v2201, %v2183
    %v3786 = vpack.c.b16 %v2202, %v2184
    %v3787 = vpack.c.b16 %v2203, %v2185
    %v3788 = vpack.c.b16 %v2204, %v2186
    %v3789 = vpack.c.b16 %v2205, %v2187
    %v3790 = vpack.c.b16 %v2206, %v2188
    %v3791 = vpack.c.b16 %v2207, %v2189
    %v3792 = vpack.c.b16 %v2208, %v2190
    %v3793 = vpack.c.b16 %v2209, %v2191
    %v3794 = vpack.c.b16 %v2210, %v2192
    %v3795 = vpack.c.b16 %v2211, %v2193
    %v3796 = vpack.c.b16 %v2212, %v2194
    %v3797 = vpack.c.b16 %v2213, %v2195
    %v3798 = vpack.c.b16 %v2214, %v2196
    %v3799 = vpack.c.b16 %v2215, %v2197
    %v3800 = vpack.c.b16 %v2234, %v2216
    %v3801 = vpack.c.b16 %v2235, %v2217
    %v3802 = vpack.c.b16 %v2236, %v2218
    %v3803 = vpack.c.b16 %v2237, %v2219
    %v3804 = vpack.c.b16 %v2238, %v2220
    %v3805 = vpack.c.b16 %v2239, %v2221
    %v3806 = vpack.c.b16 %v2240, %v2222
    %v3807 = vpack.c.b16 %v2241, %v2223
    %v3808 = vpack.c.b16 %v2242, %v2224
    %v3809 = vpack.c.b16 %v2243, %v2225
    %v3810 = vpack.c.b16 %v2244, %v2226
    %v3811 = vpack.c.b16 %v2245, %v2227
    %v3812 = vpack.c.b16 %v2246, %v2228
    %v3813 = vpack.c.b16 %v2247, %v2229
    %v3814 = vpack.c.b16 %v2248, %v2230
    %v3815 = vpack.c.b16 %v2249, %v2231
    %v3816 = vpack.c.b16 %v2250, %v2232
    %v3817 = vpack.c.b16 %v2251, %v2233
    %v3818 = vpack.c.b16 %v2270, %v2252
    %v3819 = vpack.c.b16 %v2271, %v2253
    %v3820 = vpack.c.b16 %v2272, %v2254
    %v3821 = vpack.c.b16 %v2273, %v2255
    %v3822 = vpack.c.b16 %v2274, %v2256
    %v3823 = vpack.c.b16 %v2275, %v2257
    %v3824 = vpack.c.b16 %v2276, %v2258
    %v3825 = vpack.c.b16 %v2277, %v2259
    %v3826 = vpack.c.b16 %v2278, %v2260
    %v3827 = vpack.c.b16 %v2279, %v2261
    %v3828 = vpack.c.b16 %v2280, %v2262
    %v3829 = vpack.c.b16 %v2281, %v2263
    %v3830 = vpack.c.b16 %v2282, %v2264
    %v3831 = vpack.c.b16 %v2283, %v2265
    %v3832 = vpack.c.b16 %v2284, %v2266
    %v3833 = vpack.c.b16 %v2285, %v2267
    %v3834 = vpack.c.b16 %v2286, %v2268
    %v3835 = vpack.c.b16 %v2287, %v2269
    %v3836 = vpack.c.b16 %v2306, %v2288
    %v3837 = vpack.c.b16 %v2307, %v2289
    %v3838 = vpack.c.b16 %v2308, %v2290
    %v3839 = vpack.c.b16 %v2309, %v2291
    %v3840 = vpack.c.b16 %v2310, %v2292
    %v3841 = vpack.c.b16 %v2311, %v2293
    %v3842 = vpack.c.b16 %v2312, %v2294
    %v3843 = vpack.c.b16 %v2313, %v2295
    %v3844 = vpack.c.b16 %v2314, %v2296
    %v3845 = vpack.c.b16 %v2315, %v2297
    %v3846 = vpack.c.b16 %v2316, %v2298
    %v3847 = vpack.c.b16 %v2317, %v2299
    %v3848 = vpack.c.b16 %v2318, %v2300
    %v3849 = vpack.c.b16 %v2319, %v2301
    %v3850 = vpack.c.b16 %v2320, %v2302
    %v3851 = vpack.c.b16 %v2321, %v2303
    %v3852 = vpack.c.b16 %v2322, %v2304
    %v3853 = vpack.c.b16 %v2323, %v2305
    %v3854 = vpack.c.b16 %v2342, %v2324
    %v3855 = vpack.c.b16 %v2343, %v2325
    %v3856 = vpack.c.b16 %v2344, %v2326
    %v3857 = vpack.c.b16 %v2345, %v2327
    %v3858 = vpack.c.b16 %v2346, %v2328
    %v3859 = vpack.c.b16 %v2347, %v2329
    %v3860 = vpack.c.b16 %v2348, %v2330
    %v3861 = vpack.c.b16 %v2349, %v2331
    %v3862 = vpack.c.b16 %v2350, %v2332
    %v3863 = vpack.c.b16 %v2351, %v2333
    %v3864 = vpack.c.b16 %v2352, %v2334
    %v3865 = vpack.c.b16 %v2353, %v2335
    %v3866 = vpack.c.b16 %v2354, %v2336
    %v3867 = vpack.c.b16 %v2355, %v2337
    %v3868 = vpack.c.b16 %v2356, %v2338
    %v3869 = vpack.c.b16 %v2357, %v2339
    %v3870 = vpack.c.b16 %v2358, %v2340
    %v3871 = vpack.c.b16 %v2359, %v2341
    %v3872 = vpack.c.b16 %v2378, %v2360
    %v3873 = vpack.c.b16 %v2379, %v2361
    %v3874 = vpack.c.b16 %v2380, %v2362
    %v3875 = vpack.c.b16 %v2381, %v2363
    %v3876 = vpack.c.b16 %v2382, %v2364
    %v3877 = vpack.c.b16 %v2383, %v2365
    %v3878 = vpack.c.b16 %v2384, %v2366
    %v3879 = vpack.c.b16 %v2385, %v2367
    %v3880 = vpack.c.b16 %v2386, %v2368
    %v3881 = vpack.c.b16 %v2387, %v2369
    %v3882 = vpack.c.b16 %v2388, %v2370
    %v3883 = vpack.c.b16 %v2389, %v2371
    %v3884 = vpack.c.b16 %v2390, %v2372
    %v3885 = vpack.c.b16 %v2391, %v2373
    %v3886 = vpack.c.b16 %v2392, %v2374
    %v3887 = vpack.c.b16 %v2393, %v2375
    %v3888 = vpack.c.b16 %v2394, %v2376
    %v3889 = vpack.c.b16 %v2395, %v2377
    %v3890 = vpack.c.b16 %v2414, %v2396
    %v3891 = vpack.c.b16 %v2415, %v2397
    %v3892 = vpack.c.b16 %v2416, %v2398
    %v3893 = vpack.c.b16 %v2417, %v2399
    %v3894 = vpack.c.b16 %v2418, %v2400
    %v3895 = vpack.c.b16 %v2419, %v2401
    %v3896 = vpack.c.b16 %v2420, %v2402
    %v3897 = vpack.c.b16 %v2421, %v2403
    %v3898 = vpack.c.b16 %v2422, %v2404
    %v3899 = vpack.c.b16 %v2423, %v2405
    %v3900 = vpack.c.b16 %v2424, %v2406
    %v3901 = vpack.c.b16 %v2425, %v2407
    %v3902 = vpack.c.b16 %v2426, %v2408
    %v3903 = vpack.c.b16 %v2427, %v2409
    %v3904 = vpack.c.b16 %v2428, %v2410
    %v3905 = vpack.c.b16 %v2429, %v2411
    %v3906 = vpack.c.b16 %v2430, %v2412
    %v3907 = vpack.c.b16 %v2431, %v2413
    %v3908 = vpack.c.b16 %v2450, %v2432
    %v3909 = vpack.c.b16 %v2451, %v2433
    %v3910 = vpack.c.b16 %v2452, %v2434
    %v3911 = vpack.c.b16 %v2453, %v2435
    %v3912 = vpack.c.b16 %v2454, %v2436
    %v3913 = vpack.c.b16 %v2455, %v2437
    %v3914 = vpack.c.b16 %v2456, %v2438
    %v3915 = vpack.c.b16 %v2457, %v2439
    %v3916 = vpack.c.b16 %v2458, %v2440
    %v3917 = vpack.c.b16 %v2459, %v2441
    %v3918 = vpack.c.b16 %v2460, %v2442
    %v3919 = vpack.c.b16 %v2461, %v2443
    %v3920 = vpack.c.b16 %v2462, %v2444
    %v3921 = vpack.c.b16 %v2463, %v2445
    %v3922 = vpack.c.b16 %v2464, %v2446
    %v3923 = vpack.c.b16 %v2465, %v2447
    %v3924 = vpack.c.b16 %v2466, %v2448
    %v3925 = vpack.c.b16 %v2467, %v2449
    %v3926 = vpack.c.b16 %v2486, %v2468
    %v3927 = vpack.c.b16 %v2487, %v2469
    %v3928 = vpack.c.b16 %v2488, %v2470
    %v3929 = vpack.c.b16 %v2489, %v2471
    %v3930 = vpack.c.b16 %v2490, %v2472
    %v3931 = vpack.c.b16 %v2491, %v2473
    %v3932 = vpack.c.b16 %v2492, %v2474
    %v3933 = vpack.c.b16 %v2493, %v2475
    %v3934 = vpack.c.b16 %v2494, %v2476
    %v3935 = vpack.c.b16 %v2495, %v2477
    %v3936 = vpack.c.b16 %v2496, %v2478
    %v3937 = vpack.c.b16 %v2497, %v2479
    %v3938 = vpack.c.b16 %v2498, %v2480
    %v3939 = vpack.c.b16 %v2499, %v2481
    %v3940 = vpack.c.b16 %v2500, %v2482
    %v3941 = vpack.c.b16 %v2501, %v2483
    %v3942 = vpack.c.b16 %v2502, %v2484
    %v3943 = vpack.c.b16 %v2503, %v2485
    %v3944 = vpack.c.b16 %v2522, %v2504
    %v3945 = vpack.c.b16 %v2523, %v2505
    %v3946 = vpack.c.b16 %v2524, %v2506
    %v3947 = vpack.c.b16 %v2525, %v2507
    %v3948 = vpack.c.b16 %v2526, %v2508
    %v3949 = vpack.c.b16 %v2527, %v2509
    %v3950 = vpack.c.b16 %v2528, %v2510
    %v3951 = vpack.c.b16 %v2529, %v2511
    %v3952 = vpack.c.b16 %v2530, %v2512
    %v3953 = vpack.c.b16 %v2531, %v2513
    %v3954 = vpack.c.b16 %v2532, %v2514
    %v3955 = vpack.c.b16 %v2533, %v2515
    %v3956 = vpack.c.b16 %v2534, %v2516
    %v3957 = vpack.c.b16 %v2535, %v2517
    %v3958 = vpack.c.b16 %v2536, %v2518
    %v3959 = vpack.c.b16 %v2537, %v2519
    %v3960 = vpack.c.b16 %v2538, %v2520
    %v3961 = vpack.c.b16 %v2539, %v2521
    %v3962 = vpack.c.b16 %v2558, %v2540
    %v3963 = vpack.c.b16 %v2559, %v2541
    %v3964 = vpack.c.b16 %v2560, %v2542
    %v3965 = vpack.c.b16 %v2561, %v2543
    %v3966 = vpack.c.b16 %v2562, %v2544
    %v3967 = vpack.c.b16 %v2563, %v2545
    %v3968 = vpack.c.b16 %v2564, %v2546
    %v3969 = vpack.c.b16 %v2565, %v2547
    %v3970 = vpack.c.b16 %v2566, %v2548
    %v3971 = vpack.c.b16 %v2567, %v2549
    %v3972 = vpack.c.b16 %v2568, %v2550
    %v3973 = vpack.c.b16 %v2569, %v2551
    %v3974 = vpack.c.b16 %v2570, %v2552
    %v3975 = vpack.c.b16 %v2571, %v2553
    %v3976 = vpack.c.b16 %v2572, %v2554
    %v3977 = vpack.c.b16 %v2573, %v2555
    %v3978 = vpack.c.b16 %v2574, %v2556
    %v3979 = vpack.c.b16 %v2575, %v2557
    %v3980 = vpack.c.b16 %v2594, %v2576
    %v3981 = vpack.c.b16 %v2595, %v2577
    %v3982 = vpack.c.b16 %v2596, %v2578
    %v3983 = vpack.c.b16 %v2597, %v2579
    %v3984 = vpack.c.b16 %v2598, %v2580
    %v3985 = vpack.c.b16 %v2599, %v2581
    %v3986 = vpack.c.b16 %v2600, %v2582
    %v3987 = vpack.c.b16 %v2601, %v2583
    %v3988 = vpack.c.b16 %v2602, %v2584
    %v3989 = vpack.c.b16 %v2603, %v2585
    %v3990 = vpack.c.b16 %v2604, %v2586
    %v3991 = vpack.c.b16 %v2605, %v2587
    %v3992 = vpack.c.b16 %v2606, %v2588
    %v3993 = vpack.c.b16 %v2607, %v2589
    %v3994 = vpack.c.b16 %v2608, %v2590
    %v3995 = vpack.c.b16 %v2609, %v2591
    %v3996 = vpack.c.b16 %v2610, %v2592
    %v3997 = vpack.c.b16 %v2611, %v2593
    %v3998 = vpack.c.b16 %v2630, %v2612
    %v3999 = vpack.c.b16 %v2631, %v2613
    %v4000 = vpack.c.b16 %v2632, %v2614
    %v4001 = vpack.c.b16 %v2633, %v2615
    %v4002 = vpack.c.b16 %v2634, %v2616
    %v4003 = vpack.c.b16 %v2635, %v2617
    %v4004 = vpack.c.b16 %v2636, %v2618
    %v4005 = vpack.c.b16 %v2637, %v2619
    %v4006 = vpack.c.b16 %v2638, %v2620
    %v4007 = vpack.c.b16 %v2639, %v2621
    %v4008 = vpack.c.b16 %v2640, %v2622
    %v4009 = vpack.c.b16 %v2641, %v2623
    %v4010 = vpack.c.b16 %v2642, %v2624
    %v4011 = vpack.c.b16 %v2643, %v2625
    %v4012 = vpack.c.b16 %v2644, %v2626
    %v4013 = vpack.c.b16 %v2645, %v2627
    %v4014 = vpack.c.b16 %v2646, %v2628
    %v4015 = vpack.c.b16 %v2647, %v2629
    %v4016 = vpack.c.b16 %v2666, %v2648
    %v4017 = vpack.c.b16 %v2667, %v2649
    %v4018 = vpack.c.b16 %v2668, %v2650
    %v4019 = vpack.c.b16 %v2669, %v2651
    %v4020 = vpack.c.b16 %v2670, %v2652
    %v4021 = vpack.c.b16 %v2671, %v2653
    %v4022 = vpack.c.b16 %v2672, %v2654
    %v4023 = vpack.c.b16 %v2673, %v2655
    %v4024 = vpack.c.b16 %v2674, %v2656
    %v4025 = vpack.c.b16 %v2675, %v2657
    %v4026 = vpack.c.b16 %v2676, %v2658
    %v4027 = vpack.c.b16 %v2677, %v2659
    %v4028 = vpack.c.b16 %v2678, %v2660
    %v4029 = vpack.c.b16 %v2679, %v2661
    %v4030 = vpack.c.b16 %v2680, %v2662
    %v4031 = vpack.c.b16 %v2681, %v2663
    %v4032 = vpack.c.b16 %v2682, %v2664
    %v4033 = vpack.c.b16 %v2683, %v2665
    %v4034 = vpack.c.b16 %v2702, %v2684
    %v4035 = vpack.c.b16 %v2703, %v2685
    %v4036 = vpack.c.b16 %v2704, %v2686
    %v4037 = vpack.c.b16 %v2705, %v2687
    %v4038 = vpack.c.b16 %v2706, %v2688
    %v4039 = vpack.c.b16 %v2707, %v2689
    %v4040 = vpack.c.b16 %v2708, %v2690
    %v4041 = vpack.c.b16 %v2709, %v2691
    %v4042 = vpack.c.b16 %v2710, %v2692
    %v4043 = vpack.c.b16 %v2711, %v2693
    %v4044 = vpack.c.b16 %v2712, %v2694
    %v4045 = vpack.c.b16 %v2713, %v2695
    %v4046 = vpack.c.b16 %v2714, %v2696
    %v4047 = vpack.c.b16 %v2715, %v2697
    %v4048 = vpack.c.b16 %v2716, %v2698
    %v4049 = vpack.c.b16 %v2717, %v2699
    %v4050 = vpack.c.b16 %v2718, %v2700
    %v4051 = vpack.c.b16 %v2719, %v2701
    %v4052 = vpack.c.b16 %v2738, %v2720
    %v4053 = vpack.c.b16 %v2739, %v2721
    %v4054 = vpack.c.b16 %v2740, %v2722
    %v4055 = vpack.c.b16 %v2741, %v2723
    %v4056 = vpack.c.b16 %v2742, %v2724
    %v4057 = vpack.c.b16 %v2743, %v2725
    %v4058 = vpack.c.b16 %v2744, %v2726
    %v4059 = vpack.c.b16 %v2745, %v2727
    %v4060 = vpack.c.b16 %v2746, %v2728
    %v4061 = vpack.c.b16 %v2747, %v2729
    %v4062 = vpack.c.b16 %v2748, %v2730
    %v4063 = vpack.c.b16 %v2749, %v2731
    %v4064 = vpack.c.b16 %v2750, %v2732
    %v4065 = vpack.c.b16 %v2751, %v2733
    %v4066 = vpack.c.b16 %v2752, %v2734
    %v4067 = vpack.c.b16 %v2753, %v2735
    %v4068 = vpack.c.b16 %v2754, %v2736
    %v4069 = vpack.c.b16 %v2755, %v2737
    %v4070 = vpack.c.b16 %v2774, %v2756
    %v4071 = vpack.c.b16 %v2775, %v2757
    %v4072 = vpack.c.b16 %v2776, %v2758
    %v4073 = vpack.c.b16 %v2777, %v2759
    %v4074 = vpack.c.b16 %v2778, %v2760
    %v4075 = vpack.c.b16 %v2779, %v2761
    %v4076 = vpack.c.b16 %v2780, %v2762
    %v4077 = vpack.c.b16 %v2781, %v2763
    %v4078 = vpack.c.b16 %v2782, %v2764
    %v4079 = vpack.c.b16 %v2783, %v2765
    %v4080 = vpack.c.b16 %v2784, %v2766
    %v4081 = vpack.c.b16 %v2785, %v2767
    %v4082 = vpack.c.b16 %v2786, %v2768
    %v4083 = vpack.c.b16 %v2787, %v2769
    %v4084 = vpack.c.b16 %v2788, %v2770
    %v4085 = vpack.c.b16 %v2789, %v2771
    %v4086 = vpack.c.b16 %v2790, %v2772
    %v4087 = vpack.c.b16 %v2791, %v2773
    %v4088 = vpack.c.b16 %v2810, %v2792
    %v4089 = vpack.c.b16 %v2811, %v2793
    %v4090 = vpack.c.b16 %v2812, %v2794
    %v4091 = vpack.c.b16 %v2813, %v2795
    %v4092 = vpack.c.b16 %v2814, %v2796
    %v4093 = vpack.c.b16 %v2815, %v2797
    %v4094 = vpack.c.b16 %v2816, %v2798
    %v4095 = vpack.c.b16 %v2817, %v2799
    %v4096 = vpack.c.b16 %v2818, %v2800
    %v4097 = vpack.c.b16 %v2819, %v2801
    %v4098 = vpack.c.b16 %v2820, %v2802
    %v4099 = vpack.c.b16 %v2821, %v2803
    %v4100 = vpack.c.b16 %v2822, %v2804
    %v4101 = vpack.c.b16 %v2823, %v2805
    %v4102 = vpack.c.b16 %v2824, %v2806
    %v4103 = vpack.c.b16 %v2825, %v2807
    %v4104 = vpack.c.b16 %v2826, %v2808
    %v4105 = vpack.c.b16 %v2827, %v2809
    %v4106 = vpack.c.b16 %v2846, %v2828
    %v4107 = vpack.c.b16 %v2847, %v2829
    %v4108 = vpack.c.b16 %v2848, %v2830
    %v4109 = vpack.c.b16 %v2849, %v2831
    %v4110 = vpack.c.b16 %v2850, %v2832
    %v4111 = vpack.c.b16 %v2851, %v2833
    %v4112 = vpack.c.b16 %v2852, %v2834
    %v4113 = vpack.c.b16 %v2853, %v2835
    %v4114 = vpack.c.b16 %v2854, %v2836
    %v4115 = vpack.c.b16 %v2855, %v2837
    %v4116 = vpack.c.b16 %v2856, %v2838
    %v4117 = vpack.c.b16 %v2857, %v2839
    %v4118 = vpack.c.b16 %v2858, %v2840
    %v4119 = vpack.c.b16 %v2859, %v2841
    %v4120 = vpack.c.b16 %v2860, %v2842
    %v4121 = vpack.c.b16 %v2861, %v2843
    %v4122 = vpack.c.b16 %v2862, %v2844
    %v4123 = vpack.c.b16 %v2863, %v2845
    %v4124 = vpack.c.b16 %v2882, %v2864
    %v4125 = vpack.c.b16 %v2883, %v2865
    %v4126 = vpack.c.b16 %v2884, %v2866
    %v4127 = vpack.c.b16 %v2885, %v2867
    %v4128 = vpack.c.b16 %v2886, %v2868
    %v4129 = vpack.c.b16 %v2887, %v2869
    %v4130 = vpack.c.b16 %v2888, %v2870
    %v4131 = vpack.c.b16 %v2889, %v2871
    %v4132 = vpack.c.b16 %v2890, %v2872
    %v4133 = vpack.c.b16 %v2891, %v2873
    %v4134 = vpack.c.b16 %v2892, %v2874
    %v4135 = vpack.c.b16 %v2893, %v2875
    %v4136 = vpack.c.b16 %v2894, %v2876
    %v4137 = vpack.c.b16 %v2895, %v2877
    %v4138 = vpack.c.b16 %v2896, %v2878
    %v4139 = vpack.c.b16 %v2897, %v2879
    %v4140 = vpack.c.b16 %v2898, %v2880
    %v4141 = vpack.c.b16 %v2899, %v2881
    %v4142 = vpack.c.b16 %v2918, %v2900
    %v4143 = vpack.c.b16 %v2919, %v2901
    %v4144 = vpack.c.b16 %v2920, %v2902
    %v4145 = vpack.c.b16 %v2921, %v2903
    %v4146 = vpack.c.b16 %v2922, %v2904
    %v4147 = vpack.c.b16 %v2923, %v2905
    %v4148 = vpack.c.b16 %v2924, %v2906
    %v4149 = vpack.c.b16 %v2925, %v2907
    %v4150 = vpack.c.b16 %v2926, %v2908
    %v4151 = vpack.c.b16 %v2927, %v2909
    %v4152 = vpack.c.b16 %v2928, %v2910
    %v4153 = vpack.c.b16 %v2929, %v2911
    %v4154 = vpack.c.b16 %v2930, %v2912
    %v4155 = vpack.c.b16 %v2931, %v2913
    %v4156 = vpack.c.b16 %v2932, %v2914
    %v4157 = vpack.c.b16 %v2933, %v2915
    %v4158 = vpack.c.b16 %v2934, %v2916
    %v4159 = vpack.c.b16 %v2935, %v2917
    %v4160 = vpack.c.b16 %v2954, %v2936
    %v4161 = vpack.c.b16 %v2955, %v2937
    %v4162 = vpack.c.b16 %v2956, %v2938
    %v4163 = vpack.c.b16 %v2957, %v2939
    %v4164 = vpack.c.b16 %v2958, %v2940
    %v4165 = vpack.c.b16 %v2959, %v2941
    %v4166 = vpack.c.b16 %v2960, %v2942
    %v4167 = vpack.c.b16 %v2961, %v2943
    %v4168 = vpack.c.b16 %v2962, %v2944
    %v4169 = vpack.c.b16 %v2963, %v2945
    %v4170 = vpack.c.b16 %v2964, %v2946
    %v4171 = vpack.c.b16 %v2965, %v2947
    %v4172 = vpack.c.b16 %v2966, %v2948
    %v4173 = vpack.c.b16 %v2967, %v2949
    %v4174 = vpack.c.b16 %v2968, %v2950
    %v4175 = vpack.c.b16 %v2969, %v2951
    %v4176 = vpack.c.b16 %v2970, %v2952
    %v4177 = vpack.c.b16 %v2971, %v2953
    %v4178 = vpack.c.b16 %v2990, %v2972
    %v4179 = vpack.c.b16 %v2991, %v2973
    %v4180 = vpack.c.b16 %v2992, %v2974
    %v4181 = vpack.c.b16 %v2993, %v2975
    %v4182 = vpack.c.b16 %v2994, %v2976
    %v4183 = vpack.c.b16 %v2995, %v2977
    %v4184 = vpack.c.b16 %v2996, %v2978
    %v4185 = vpack.c.b16 %v2997, %v2979
    %v4186 = vpack.c.b16 %v2998, %v2980
    %v4187 = vpack.c.b16 %v2999, %v2981
    %v4188 = vpack.c.b16 %v3000, %v2982
    %v4189 = vpack.c.b16 %v3001, %v2983
    %v4190 = vpack.c.b16 %v3002, %v2984
    %v4191 = vpack.c.b16 %v3003, %v2985
    %v4192 = vpack.c.b16 %v3004, %v2986
    %v4193 = vpack.c.b16 %v3005, %v2987
    %v4194 = vpack.c.b16 %v3006, %v2988
    %v4195 = vpack.c.b16 %v3007, %v2989
    %v4196 = vpack.c.b16 %v3026, %v3008
    %v4197 = vpack.c.b16 %v3027, %v3009
    %v4198 = vpack.c.b16 %v3028, %v3010
    %v4199 = vpack.c.b16 %v3029, %v3011
    %v4200 = vpack.c.b16 %v3030, %v3012
    %v4201 = vpack.c.b16 %v3031, %v3013
    %v4202 = vpack.c.b16 %v3032, %v3014
    %v4203 = vpack.c.b16 %v3033, %v3015
    %v4204 = vpack.c.b16 %v3034, %v3016
    %v4205 = vpack.c.b16 %v3035, %v3017
    %v4206 = vpack.c.b16 %v3036, %v3018
    %v4207 = vpack.c.b16 %v3037, %v3019
    %v4208 = vpack.c.b16 %v3038, %v3020
    %v4209 = vpack.c.b16 %v3039, %v3021
    %v4210 = vpack.c.b16 %v3040, %v3022
    %v4211 = vpack.c.b16 %v3041, %v3023
    %v4212 = vpack.c.b16 %v3042, %v3024
    %v4213 = vpack.c.b16 %v3043, %v3025
    %v4214 = vpack.c.b16 %v3062, %v3044
    %v4215 = vpack.c.b16 %v3063, %v3045
    %v4216 = vpack.c.b16 %v3064, %v3046
    %v4217 = vpack.c.b16 %v3065, %v3047
    %v4218 = vpack.c.b16 %v3066, %v3048
    %v4219 = vpack.c.b16 %v3067, %v3049
    %v4220 = vpack.c.b16 %v3068, %v3050
    %v4221 = vpack.c.b16 %v3069, %v3051
    %v4222 = vpack.c.b16 %v3070, %v3052
    %v4223 = vpack.c.b16 %v3071, %v3053
    %v4224 = vpack.c.b16 %v3072, %v3054
    %v4225 = vpack.c.b16 %v3073, %v3055
    %v4226 = vpack.c.b16 %v3074, %v3056
    %v4227 = vpack.c.b16 %v3075, %v3057
    %v4228 = vpack.c.b16 %v3076, %v3058
    %v4229 = vpack.c.b16 %v3077, %v3059
    %v4230 = vpack.c.b16 %v3078, %v3060
    %v4231 = vpack.c.b16 %v3079, %v3061
    %v4232 = vpack.c.b16 %v3098, %v3080
    %v4233 = vpack.c.b16 %v3099, %v3081
    %v4234 = vpack.c.b16 %v3100, %v3082
    %v4235 = vpack.c.b16 %v3101, %v3083
    %v4236 = vpack.c.b16 %v3102, %v3084
    %v4237 = vpack.c.b16 %v3103, %v3085
    %v4238 = vpack.c.b16 %v3104, %v3086
    %v4239 = vpack.c.b16 %v3105, %v3087
    %v4240 = vpack.c.b16 %v3106, %v3088
    %v4241 = vpack.c.b16 %v3107, %v3089
    %v4242 = vpack.c.b16 %v3108, %v3090
    %v4243 = vpack.c.b16 %v3109, %v3091
    %v4244 = vpack.c.b16 %v3110, %v3092
    %v4245 = vpack.c.b16 %v3111, %v3093
    %v4246 = vpack.c.b16 %v3112, %v3094
    %v4247 = vpack.c.b16 %v3113, %v3095
    %v4248 = vpack.c.b16 %v3114, %v3096
    %v4249 = vpack.c.b16 %v3115, %v3097
    %v4250 = vpack.c.b16 %v3134, %v3116
    %v4251 = vpack.c.b16 %v3135, %v3117
    %v4252 = vpack.c.b16 %v3136, %v3118
    %v4253 = vpack.c.b16 %v3137, %v3119
    %v4254 = vpack.c.b16 %v3138, %v3120
    %v4255 = vpack.c.b16 %v3139, %v3121
    %v4256 = vpack.c.b16 %v3140, %v3122
    %v4257 = vpack.c.b16 %v3141, %v3123
    %v4258 = vpack.c.b16 %v3142, %v3124
    %v4259 = vpack.c.b16 %v3143, %v3125
    %v4260 = vpack.c.b16 %v3144, %v3126
    %v4261 = vpack.c.b16 %v3145, %v3127
    %v4262 = vpack.c.b16 %v3146, %v3128
    %v4263 = vpack.c.b16 %v3147, %v3129
    %v4264 = vpack.c.b16 %v3148, %v3130
    %v4265 = vpack.c.b16 %v3149, %v3131
    %v4266 = vpack.c.b16 %v3150, %v3132
    %v4267 = vpack.c.b16 %v3151, %v3133
    %v4268 = vpack.c.b16 %v3170, %v3152
    %v4269 = vpack.c.b16 %v3171, %v3153
    %v4270 = vpack.c.b16 %v3172, %v3154
    %v4271 = vpack.c.b16 %v3173, %v3155
    %v4272 = vpack.c.b16 %v3174, %v3156
    %v4273 = vpack.c.b16 %v3175, %v3157
    %v4274 = vpack.c.b16 %v3176, %v3158
    %v4275 = vpack.c.b16 %v3177, %v3159
    %v4276 = vpack.c.b16 %v3178, %v3160
    %v4277 = vpack.c.b16 %v3179, %v3161
    %v4278 = vpack.c.b16 %v3180, %v3162
    %v4279 = vpack.c.b16 %v3181, %v3163
    %v4280 = vpack.c.b16 %v3182, %v3164
    %v4281 = vpack.c.b16 %v3183, %v3165
    %v4282 = vpack.c.b16 %v3184, %v3166
    %v4283 = vpack.c.b16 %v3185, %v3167
    %v4284 = vpack.c.b16 %v3186, %v3168
    %v4285 = vpack.c.b16 %v3187, %v3169
    %v4286 = vpack.c.b16 %v3206, %v3188
    %v4287 = vpack.c.b16 %v3207, %v3189
    %v4288 = vpack.c.b16 %v3208, %v3190
    %v4289 = vpack.c.b16 %v3209, %v3191
    %v4290 = vpack.c.b16 %v3210, %v3192
    %v4291 = vpack.c.b16 %v3211, %v3193
    %v4292 = vpack.c.b16 %v3212, %v3194
    %v4293 = vpack.c.b16 %v3213, %v3195
    %v4294 = vpack.c.b16 %v3214, %v3196
    %v4295 = vpack.c.b16 %v3215, %v3197
    %v4296 = vpack.c.b16 %v3216, %v3198
    %v4297 = vpack.c.b16 %v3217, %v3199
    %v4298 = vpack.c.b16 %v3218, %v3200
    %v4299 = vpack.c.b16 %v3219, %v3201
    %v4300 = vpack.c.b16 %v3220, %v3202
    %v4301 = vpack.c.b16 %v3221, %v3203
    %v4302 = vpack.c.b16 %v3222, %v3204
    %v4303 = vpack.c.b16 %v3223, %v3205
    %v4304 = vpack.c.b16 %v3242, %v3224
    %v4305 = vpack.c.b16 %v3243, %v3225
    %v4306 = vpack.c.b16 %v3244, %v3226
    %v4307 = vpack.c.b16 %v3245, %v3227
    %v4308 = vpack.c.b16 %v3246, %v3228
    %v4309 = vpack.c.b16 %v3247, %v3229
    %v4310 = vpack.c.b16 %v3248, %v3230
    %v4311 = vpack.c.b16 %v3249, %v3231
    %v4312 = vpack.c.b16 %v3250, %v3232
    %v4313 = vpack.c.b16 %v3251, %v3233
    %v4314 = vpack.c.b16 %v3252, %v3234
    %v4315 = vpack.c.b16 %v3253, %v3235
    %v4316 = vpack.c.b16 %v3254, %v3236
    %v4317 = vpack.c.b16 %v3255, %v3237
    %v4318 = vpack.c.b16 %v3256, %v3238
    %v4319 = vpack.c.b16 %v3257, %v3239
    %v4320 = vpack.c.b16 %v3258, %v3240
    %v4321 = vpack.c.b16 %v3259, %v3241
    %v4322 = vpack.c.b16 %v3278, %v3260
    %v4323 = vpack.c.b16 %v3279, %v3261
    %v4324 = vpack.c.b16 %v3280, %v3262
    %v4325 = vpack.c.b16 %v3281, %v3263
    %v4326 = vpack.c.b16 %v3282, %v3264
    %v4327 = vpack.c.b16 %v3283, %v3265
    %v4328 = vpack.c.b16 %v3284, %v3266
    %v4329 = vpack.c.b16 %v3285, %v3267
    %v4330 = vpack.c.b16 %v3286, %v3268
    %v4331 = vpack.c.b16 %v3287, %v3269
    %v4332 = vpack.c.b16 %v3288, %v3270
    %v4333 = vpack.c.b16 %v3289, %v3271
    %v4334 = vpack.c.b16 %v3290, %v3272
    %v4335 = vpack.c.b16 %v3291, %v3273
    %v4336 = vpack.c.b16 %v3292, %v3274
    %v4337 = vpack.c.b16 %v3293, %v3275
    %v4338 = vpack.c.b16 %v3294, %v3276
    %v4339 = vpack.c.b16 %v3295, %v3277
    %v4340 = vpack.c.b16 %v3314, %v3296
    %v4341 = vpack.c.b16 %v3315, %v3297
    %v4342 = vpack.c.b16 %v3316, %v3298
    %v4343 = vpack.c.b16 %v3317, %v3299
    %v4344 = vpack.c.b16 %v3318, %v3300
    %v4345 = vpack.c.b16 %v3319, %v3301
    %v4346 = vpack.c.b16 %v3320, %v3302
    %v4347 = vpack.c.b16 %v3321, %v3303
    %v4348 = vpack.c.b16 %v3322, %v3304
    %v4349 = vpack.c.b16 %v3323, %v3305
    %v4350 = vpack.c.b16 %v3324, %v3306
    %v4351 = vpack.c.b16 %v3325, %v3307
    %v4352 = vpack.c.b16 %v3326, %v3308
    %v4353 = vpack.c.b16 %v3327, %v3309
    %v4354 = vpack.c.b16 %v3328, %v3310
    %v4355 = vpack.c.b16 %v3329, %v3311
    %v4356 = vpack.c.b16 %v3330, %v3312
    %v4357 = vpack.c.b16 %v3331, %v3313
    %v4358 = vpack.c.b16 %v3350, %v3332
    %v4359 = vpack.c.b16 %v3351, %v3333
    %v4360 = vpack.c.b16 %v3352, %v3334
    %v4361 = vpack.c.b16 %v3353, %v3335
    %v4362 = vpack.c.b16 %v3354, %v3336
    %v4363 = vpack.c.b16 %v3355, %v3337
    %v4364 = vpack.c.b16 %v3356, %v3338
    %v4365 = vpack.c.b16 %v3357, %v3339
    %v4366 = vpack.c.b16 %v3358, %v3340
    %v4367 = vpack.c.b16 %v3359, %v3341
    %v4368 = vpack.c.b16 %v3360, %v3342
    %v4369 = vpack.c.b16 %v3361, %v3343
    %v4370 = vpack.c.b16 %v3362, %v3344
    %v4371 = vpack.c.b16 %v3363, %v3345
    %v4372 = vpack.c.b16 %v3364, %v3346
    %v4373 = vpack.c.b16 %v3365, %v3347
    %v4374 = vpack.c.b16 %v3366, %v3348
    %v4375 = vpack.c.b16 %v3367, %v3349
    %v4376 = vpack.c.b16 %v3386, %v3368
    %v4377 = vpack.c.b16 %v3387, %v3369
    %v4378 = vpack.c.b16 %v3388, %v3370
    %v4379 = vpack.c.b16 %v3389, %v3371
    %v4380 = vpack.c.b16 %v3390, %v3372
    %v4381 = vpack.c.b16 %v3391, %v3373
    %v4382 = vpack.c.b16 %v3392, %v3374
    %v4383 = vpack.c.b16 %v3393, %v3375
    %v4384 = vpack.c.b16 %v3394, %v3376
    %v4385 = vpack.c.b16 %v3395, %v3377
    %v4386 = vpack.c.b16 %v3396, %v3378
    %v4387 = vpack.c.b16 %v3397, %v3379
    %v4388 = vpack.c.b16 %v3398, %v3380
    %v4389 = vpack.c.b16 %v3399, %v3381
    %v4390 = vpack.c.b16 %v3400, %v3382
    %v4391 = vpack.c.b16 %v3401, %v3383
    %v4392 = vpack.c.b16 %v3402, %v3384
    %v4393 = vpack.c.b16 %v3403, %v3385
    %v4394 = vpack.c.b16 %v3422, %v3404
    %v4395 = vpack.c.b16 %v3423, %v3405
    %v4396 = vpack.c.b16 %v3424, %v3406
    %v4397 = vpack.c.b16 %v3425, %v3407
    %v4398 = vpack.c.b16 %v3426, %v3408
    %v4399 = vpack.c.b16 %v3427, %v3409
    %v4400 = vpack.c.b16 %v3428, %v3410
    %v4401 = vpack.c.b16 %v3429, %v3411
    %v4402 = vpack.c.b16 %v3430, %v3412
    %v4403 = vpack.c.b16 %v3431, %v3413
    %v4404 = vpack.c.b16 %v3432, %v3414
    %v4405 = vpack.c.b16 %v3433, %v3415
    %v4406 = vpack.c.b16 %v3434, %v3416
    %v4407 = vpack.c.b16 %v3435, %v3417
    %v4408 = vpack.c.b16 %v3436, %v3418
    %v4409 = vpack.c.b16 %v3437, %v3419
    %v4410 = vpack.c.b16 %v3438, %v3420
    %v4411 = vpack.c.b16 %v3439, %v3421
    %v4412 = vpack.c.b16 %v3458, %v3440
    %v4413 = vpack.c.b16 %v3459, %v3441
    %v4414 = vpack.c.b16 %v3460, %v3442
    %v4415 = vpack.c.b16 %v3461, %v3443
    %v4416 = vpack.c.b16 %v3462, %v3444
    %v4417 = vpack.c.b16 %v3463, %v3445
    %v4418 = vpack.c.b16 %v3464, %v3446
    %v4419 = vpack.c.b16 %v3465, %v3447
    %v4420 = vpack.c.b16 %v3466, %v3448
    %v4421 = vpack.c.b16 %v3467, %v3449
    %v4422 = vpack.c.b16 %v3468, %v3450
    %v4423 = vpack.c.b16 %v3469, %v3451
    %v4424 = vpack.c.b16 %v3470, %v3452
    %v4425 = vpack.c.b16 %v3471, %v3453
    %v4426 = vpack.c.b16 %v3472, %v3454
    %v4427 = vpack.c.b16 %v3473, %v3455
    %v4428 = vpack.c.b16 %v3474, %v3456
    %v4429 = vpack.c.b16 %v3475, %v3457
    %v4430 = vpack.c.b16 %v3494, %v3476
    %v4431 = vpack.c.b16 %v3495, %v3477
    %v4432 = vpack.c.b16 %v3496, %v3478
    %v4433 = vpack.c.b16 %v3497, %v3479
    %v4434 = vpack.c.b16 %v3498, %v3480
    %v4435 = vpack.c.b16 %v3499, %v3481
    %v4436 = vpack.c.b16 %v3500, %v3482
    %v4437 = vpack.c.b16 %v3501, %v3483
    %v4438 = vpack.c.b16 %v3502, %v3484
    %v4439 = vpack.c.b16 %v3503, %v3485
    %v4440 = vpack.c.b16 %v3504, %v3486
    %v4441 = vpack.c.b16 %v3505, %v3487
    %v4442 = vpack.c.b16 %v3506, %v3488
    %v4443 = vpack.c.b16 %v3507, %v3489
    %v4444 = vpack.c.b16 %v3508, %v3490
    %v4445 = vpack.c.b16 %v3509, %v3491
    %v4446 = vpack.c.b16 %v3510, %v3492
    %v4447 = vpack.c.b16 %v3511, %v3493
    %v4448 = vpack.c.b16 %v3530, %v3512
    %v4449 = vpack.c.b16 %v3531, %v3513
    %v4450 = vpack.c.b16 %v3532, %v3514
    %v4451 = vpack.c.b16 %v3533, %v3515
    %v4452 = vpack.c.b16 %v3534, %v3516
    %v4453 = vpack.c.b16 %v3535, %v3517
    %v4454 = vpack.c.b16 %v3536, %v3518
    %v4455 = vpack.c.b16 %v3537, %v3519
    %v4456 = vpack.c.b16 %v3538, %v3520
    %v4457 = vpack.c.b16 %v3539, %v3521
    %v4458 = vpack.c.b16 %v3540, %v3522
    %v4459 = vpack.c.b16 %v3541, %v3523
    %v4460 = vpack.c.b16 %v3542, %v3524
    %v4461 = vpack.c.b16 %v3543, %v3525
    %v4462 = vpack.c.b16 %v3544, %v3526
    %v4463 = vpack.c.b16 %v3545, %v3527
    %v4464 = vpack.c.b16 %v3546, %v3528
    %v4465 = vpack.c.b16 %v3547, %v3529
    %v4466 = vpack.c.b16 %v3566, %v3548
    %v4467 = vpack.c.b16 %v3567, %v3549
    %v4468 = vpack.c.b16 %v3568, %v3550
    %v4469 = vpack.c.b16 %v3569, %v3551
    %v4470 = vpack.c.b16 %v3570, %v3552
    %v4471 = vpack.c.b16 %v3571, %v3553
    %v4472 = vpack.c.b16 %v3572, %v3554
    %v4473 = vpack.c.b16 %v3573, %v3555
    %v4474 = vpack.c.b16 %v3574, %v3556
    %v4475 = vpack.c.b16 %v3575, %v3557
    %v4476 = vpack.c.b16 %v3576, %v3558
    %v4477 = vpack.c.b16 %v3577, %v3559
    %v4478 = vpack.c.b16 %v3578, %v3560
    %v4479 = vpack.c.b16 %v3579, %v3561
    %v4480 = vpack.c.b16 %v3580, %v3562
    %v4481 = vpack.c.b16 %v3581, %v3563
    %v4482 = vpack.c.b16 %v3582, %v3564
    %v4483 = vpack.c.b16 %v3583, %v3565
    %v4484 = vpack.c.b16 %v3602, %v3584
    %v4485 = vpack.c.b16 %v3603, %v3585
    %v4486 = vpack.c.b16 %v3604, %v3586
    %v4487 = vpack.c.b16 %v3605, %v3587
    %v4488 = vpack.c.b16 %v3606, %v3588
    %v4489 = vpack.c.b16 %v3607, %v3589
    %v4490 = vpack.c.b16 %v3608, %v3590
    %v4491 = vpack.c.b16 %v3609, %v3591
    %v4492 = vpack.c.b16 %v3610, %v3592
    %v4493 = vpack.c.b16 %v3611, %v3593
    %v4494 = vpack.c.b16 %v3612, %v3594
    %v4495 = vpack.c.b16 %v3613, %v3595
    %v4496 = vpack.c.b16 %v3614, %v3596
    %v4497 = vpack.c.b16 %v3615, %v3597
    %v4498 = vpack.c.b16 %v3616, %v3598
    %v4499 = vpack.c.b16 %v3617, %v3599
    %v4500 = vpack.c.b16 %v3618, %v3600
    %v4501 = vpack.c.b16 %v3619, %v3601
    %v4502 = vpack.c.b16 %v3638, %v3620
    %v4503 = vpack.c.b16 %v3639, %v3621
    %v4504 = vpack.c.b16 %v3640, %v3622
    %v4505 = vpack.c.b16 %v3641, %v3623
    %v4506 = vpack.c.b16 %v3642, %v3624
    %v4507 = vpack.c.b16 %v3643, %v3625
    %v4508 = vpack.c.b16 %v3644, %v3626
    %v4509 = vpack.c.b16 %v3645, %v3627
    %v4510 = vpack.c.b16 %v3646, %v3628
    %v4511 = vpack.c.b16 %v3647, %v3629
    %v4512 = vpack.c.b16 %v3648, %v3630
    %v4513 = vpack.c.b16 %v3649, %v3631
    %v4514 = vpack.c.b16 %v3650, %v3632
    %v4515 = vpack.c.b16 %v3651, %v3633
    %v4516 = vpack.c.b16 %v3652, %v3634
    %v4517 = vpack.c.b16 %v3653, %v3635
    %v4518 = vpack.c.b16 %v3654, %v3636
    %v4519 = vpack.c.b16 %v3655, %v3637
    %5384 = vmatprep.subr.bf16.mxu0 %v3657
    %5385 = vmatpush1.bf16.msra.mxu0 %v3656
    %5386 = vmatprep.subr.bf16.mxu0 %v3675
    %5387 = vmatpush1.bf16.msra.mxu0 %v3674
    %5388 = vmatprep.subr.bf16.mxu0 %v3693
    %5389 = vmatpush1.bf16.msra.mxu0 %v3692
    %5390 = vmatprep.subr.bf16.mxu0 %v3711
    %5391 = vmatpush1.bf16.msra.mxu0 %v3710
    %5392 = vmatprep.subr.bf16.mxu0 %v3729
    %5393 = vmatpush1.bf16.msra.mxu0 %v3728
    %5394 = vmatprep.subr.bf16.mxu0 %v3747
    %5395 = vmatpush1.bf16.msra.mxu0 %v3746
    %5396 = vmatprep.subr.bf16.mxu0 %v3765
    %5397 = vmatpush1.bf16.msra.mxu0 %v3764
    %5398 = vmatprep.subr.bf16.mxu0 %v3783
    %5399 = vmatpush1.bf16.msra.mxu0 %v3782
    %5400 = vmatprep.subr.bf16.mxu0 %v3801
    %5401 = vmatpush1.bf16.msra.mxu0 %v3800
    %5402 = vmatprep.subr.bf16.mxu0 %v3819
    %5403 = vmatpush1.bf16.msra.mxu0 %v3818
    %5404 = vmatprep.subr.bf16.mxu0 %v3837
    %5405 = vmatpush1.bf16.msra.mxu0 %v3836
    %5406 = vmatprep.subr.bf16.mxu0 %v3855
    %5407 = vmatpush1.bf16.msra.mxu0 %v3854
    %5408 = vmatprep.subr.bf16.mxu0 %v3873
    %5409 = vmatpush1.bf16.msra.mxu0 %v3872
    %5410 = vmatprep.subr.bf16.mxu0 %v3891
    %5411 = vmatpush1.bf16.msra.mxu0 %v3890
    %5412 = vmatprep.subr.bf16.mxu0 %v3909
    %5413 = vmatpush1.bf16.msra.mxu0 %v3908
    %5414 = vmatprep.subr.bf16.mxu0 %v3927
    %5415 = vmatpush1.bf16.msra.mxu0 %v3926
    %5416 = vmatprep.mubr.bf16.mxu0 %v99
    %5417 = vmatmul.mubr.bf16.gmra.mrb[0].mxu0 %v98
    %v5418 = vpop.f32.mrb[0].mxu0
    %v5419 = vadd.f32 %v977, %v5418
    %v5420 = vpop.f32.mrb[0].mxu0
    %v5421 = vadd.f32 %v981, %v5420
    %v5422 = vpop.f32.mrb[0].mxu0
    %v5423 = vadd.f32 %v977, %v5422
    %v5424 = vpop.f32.mrb[0].mxu0
    %v5425 = vadd.f32 %v981, %v5424
    %5426 = vdwg.mxu0
    %5427 = vmatprep.subr.bf16.mxu0 %v3945
    %5428 = vmatpush1.bf16.msra.mxu0 %v3944
    %5429 = vmatprep.subr.bf16.mxu0 %v3963
    %5430 = vmatpush1.bf16.msra.mxu0 %v3962
    %5431 = vmatprep.subr.bf16.mxu0 %v3981
    %5432 = vmatpush1.bf16.msra.mxu0 %v3980
    %5433 = vmatprep.subr.bf16.mxu0 %v3999
    %5434 = vmatpush1.bf16.msra.mxu0 %v3998
    %5435 = vmatprep.subr.bf16.mxu0 %v4017
    %5436 = vmatpush1.bf16.msra.mxu0 %v4016
    %5437 = vmatprep.subr.bf16.mxu0 %v4035
    %5438 = vmatpush1.bf16.msra.mxu0 %v4034
    %5439 = vmatprep.subr.bf16.mxu0 %v4053
    %5440 = vmatpush1.bf16.msra.mxu0 %v4052
    %5441 = vmatprep.subr.bf16.mxu0 %v4071
    %5442 = vmatpush1.bf16.msra.mxu0 %v4070
    %5443 = vmatprep.subr.bf16.mxu0 %v4089
    %5444 = vmatpush1.bf16.msra.mxu0 %v4088
    %5445 = vmatprep.subr.bf16.mxu0 %v4107
    %5446 = vmatpush1.bf16.msra.mxu0 %v4106
    %5447 = vmatprep.subr.bf16.mxu0 %v4125
    %5448 = vmatpush1.bf16.msra.mxu0 %v4124
    %5449 = vmatprep.subr.bf16.mxu0 %v4143
    %5450 = vmatpush1.bf16.msra.mxu0 %v4142
    %5451 = vmatprep.subr.bf16.mxu0 %v4161
    %5452 = vmatpush1.bf16.msra.mxu0 %v4160
    %5453 = vmatprep.subr.bf16.mxu0 %v4179
    %5454 = vmatpush1.bf16.msra.mxu0 %v4178
    %5455 = vmatprep.subr.bf16.mxu0 %v4197
    %5456 = vmatpush1.bf16.msra.mxu0 %v4196
    %5457 = vmatprep.subr.bf16.mxu0 %v4215
    %5458 = vmatpush1.bf16.msra.mxu0 %v4214
    %5459 = vmatprep.mubr.bf16.mxu0 %v101
    %5460 = vmatmul.mubr.bf16.gmra.mrb[0].mxu0 %v100
    %v5461 = vpop.f32.mrb[0].mxu0
    %v5462 = vadd.f32 %v5419, %v5461
    %v5463 = vpop.f32.mrb[0].mxu0
    %v5464 = vadd.f32 %v5421, %v5463
    %v5465 = vpop.f32.mrb[0].mxu0
    %v5466 = vadd.f32 %v5423, %v5465
    %v5467 = vpop.f32.mrb[0].mxu0
    %v5468 = vadd.f32 %v5425, %v5467
    %5469 = vdwg.mxu0
    %5470 = vmatprep.subr.bf16.mxu0 %v4233
    %5471 = vmatpush1.bf16.msra.mxu0 %v4232
    %5472 = vmatprep.subr.bf16.mxu0 %v4251
    %5473 = vmatpush1.bf16.msra.mxu0 %v4250
    %5474 = vmatprep.subr.bf16.mxu0 %v4269
    %5475 = vmatpush1.bf16.msra.mxu0 %v4268
    %5476 = vmatprep.subr.bf16.mxu0 %v4287
    %5477 = vmatpush1.bf16.msra.mxu0 %v4286
    %5478 = vmatprep.subr.bf16.mxu0 %v4305
    %5479 = vmatpush1.bf16.msra.mxu0 %v4304
    %5480 = vmatprep.subr.bf16.mxu0 %v4323
    %5481 = vmatpush1.bf16.msra.mxu0 %v4322
    %5482 = vmatprep.subr.bf16.mxu0 %v4341
    %5483 = vmatpush1.bf16.msra.mxu0 %v4340
    %5484 = vmatprep.subr.bf16.mxu0 %v4359
    %5485 = vmatpush1.bf16.msra.mxu0 %v4358
    %5486 = vmatprep.subr.bf16.mxu0 %v4377
    %5487 = vmatpush1.bf16.msra.mxu0 %v4376
    %5488 = vmatprep.subr.bf16.mxu0 %v4395
    %5489 = vmatpush1.bf16.msra.mxu0 %v4394
    %5490 = vmatprep.subr.bf16.mxu0 %v4413
    %5491 = vmatpush1.bf16.msra.mxu0 %v4412
    %5492 = vmatprep.subr.bf16.mxu0 %v4431
    %5493 = vmatpush1.bf16.msra.mxu0 %v4430
    %5494 = vmatprep.subr.bf16.mxu0 %v4449
    %5495 = vmatpush1.bf16.msra.mxu0 %v4448
    %5496 = vmatprep.subr.bf16.mxu0 %v4467
    %5497 = vmatpush1.bf16.msra.mxu0 %v4466
    %5498 = vmatprep.subr.bf16.mxu0 %v4485
    %5499 = vmatpush1.bf16.msra.mxu0 %v4484
    %5500 = vmatprep.subr.bf16.mxu0 %v4503
    %5501 = vmatpush1.bf16.msra.mxu0 %v4502
    %5502 = vmatprep.mubr.bf16.mxu0 %v103
    %5503 = vmatmul.mubr.bf16.gmra.mrb[0].mxu0 %v102
    %v5504 = vpop.f32.mrb[0].mxu0
    %v5505 = vadd.f32 %v5462, %v5504
    %v5506 = vpop.f32.mrb[0].mxu0
    %v5507 = vadd.f32 %v5464, %v5506
    %v5508 = vpop.f32.mrb[0].mxu0
    %v5509 = vadd.f32 %v5466, %v5508
    %v5510 = vpop.f32.mrb[0].mxu0
    %v5511 = vadd.f32 %v5468, %v5510
    %5512 = vdwg.mxu0
    %5513 = vmatprep.subr.bf16.mxu0 %v3659
    %5514 = vmatpush1.bf16.msra.mxu0 %v3658
    %5515 = vmatprep.subr.bf16.mxu0 %v3677
    %5516 = vmatpush1.bf16.msra.mxu0 %v3676
    %5517 = vmatprep.subr.bf16.mxu0 %v3695
    %5518 = vmatpush1.bf16.msra.mxu0 %v3694
    %5519 = vmatprep.subr.bf16.mxu0 %v3713
    %5520 = vmatpush1.bf16.msra.mxu0 %v3712
    %5521 = vmatprep.subr.bf16.mxu0 %v3731
    %5522 = vmatpush1.bf16.msra.mxu0 %v3730
    %5523 = vmatprep.subr.bf16.mxu0 %v3749
    %5524 = vmatpush1.bf16.msra.mxu0 %v3748
    %5525 = vmatprep.subr.bf16.mxu0 %v3767
    %5526 = vmatpush1.bf16.msra.mxu0 %v3766
    %5527 = vmatprep.subr.bf16.mxu0 %v3785
    %5528 = vmatpush1.bf16.msra.mxu0 %v3784
    %5529 = vmatprep.subr.bf16.mxu0 %v3803
    %5530 = vmatpush1.bf16.msra.mxu0 %v3802
    %5531 = vmatprep.subr.bf16.mxu0 %v3821
    %5532 = vmatpush1.bf16.msra.mxu0 %v3820
    %5533 = vmatprep.subr.bf16.mxu0 %v3839
    %5534 = vmatpush1.bf16.msra.mxu0 %v3838
    %5535 = vmatprep.subr.bf16.mxu0 %v3857
    %5536 = vmatpush1.bf16.msra.mxu0 %v3856
    %5537 = vmatprep.subr.bf16.mxu0 %v3875
    %5538 = vmatpush1.bf16.msra.mxu0 %v3874
    %5539 = vmatprep.subr.bf16.mxu0 %v3893
    %5540 = vmatpush1.bf16.msra.mxu0 %v3892
    %5541 = vmatprep.subr.bf16.mxu0 %v3911
    %5542 = vmatpush1.bf16.msra.mxu0 %v3910
    %5543 = vmatprep.subr.bf16.mxu0 %v3929
    %5544 = vmatpush1.bf16.msra.mxu0 %v3928
    %5545 = vmatprep.mubr.bf16.mxu0 %v99
    %5546 = vmatmul.mubr.bf16.gmra.mrb[0].mxu0 %v98
    %v5547 = vpop.f32.mrb[0].mxu0
    %v5548 = vadd.f32 %v985, %v5547
    %v5549 = vpop.f32.mrb[0].mxu0
    %v5550 = vadd.f32 %v989, %v5549
    %v5551 = vpop.f32.mrb[0].mxu0
    %v5552 = vadd.f32 %v985, %v5551
    %v5553 = vpop.f32.mrb[0].mxu0
    %v5554 = vadd.f32 %v989, %v5553
    %5555 = vdwg.mxu0
    %5556 = vmatprep.subr.bf16.mxu0 %v3947
    %5557 = vmatpush1.bf16.msra.mxu0 %v3946
    %5558 = vmatprep.subr.bf16.mxu0 %v3965
    %5559 = vmatpush1.bf16.msra.mxu0 %v3964
    %5560 = vmatprep.subr.bf16.mxu0 %v3983
    %5561 = vmatpush1.bf16.msra.mxu0 %v3982
    %5562 = vmatprep.subr.bf16.mxu0 %v4001
    %5563 = vmatpush1.bf16.msra.mxu0 %v4000
    %5564 = vmatprep.subr.bf16.mxu0 %v4019
    %5565 = vmatpush1.bf16.msra.mxu0 %v4018
    %5566 = vmatprep.subr.bf16.mxu0 %v4037
    %5567 = vmatpush1.bf16.msra.mxu0 %v4036
    %5568 = vmatprep.subr.bf16.mxu0 %v4055
    %5569 = vmatpush1.bf16.msra.mxu0 %v4054
    %5570 = vmatprep.subr.bf16.mxu0 %v4073
    %5571 = vmatpush1.bf16.msra.mxu0 %v4072
    %5572 = vmatprep.subr.bf16.mxu0 %v4091
    %5573 = vmatpush1.bf16.msra.mxu0 %v4090
    %5574 = vmatprep.subr.bf16.mxu0 %v4109
    %5575 = vmatpush1.bf16.msra.mxu0 %v4108
    %5576 = vmatprep.subr.bf16.mxu0 %v4127
    %5577 = vmatpush1.bf16.msra.mxu0 %v4126
    %5578 = vmatprep.subr.bf16.mxu0 %v4145
    %5579 = vmatpush1.bf16.msra.mxu0 %v4144
    %5580 = vmatprep.subr.bf16.mxu0 %v4163
    %5581 = vmatpush1.bf16.msra.mxu0 %v4162
    %5582 = vmatprep.subr.bf16.mxu0 %v4181
    %5583 = vmatpush1.bf16.msra.mxu0 %v4180
    %5584 = vmatprep.subr.bf16.mxu0 %v4199
    %5585 = vmatpush1.bf16.msra.mxu0 %v4198
    %5586 = vmatprep.subr.bf16.mxu0 %v4217
    %5587 = vmatpush1.bf16.msra.mxu0 %v4216
    %5588 = vmatprep.mubr.bf16.mxu0 %v101
    %5589 = vmatmul.mubr.bf16.gmra.mrb[0].mxu0 %v100
    %v5590 = vpop.f32.mrb[0].mxu0
    %v5591 = vadd.f32 %v5548, %v5590
    %v5592 = vpop.f32.mrb[0].mxu0
    %v5593 = vadd.f32 %v5550, %v5592
    %v5594 = vpop.f32.mrb[0].mxu0
    %v5595 = vadd.f32 %v5552, %v5594
    %v5596 = vpop.f32.mrb[0].mxu0
    %v5597 = vadd.f32 %v5554, %v5596
    %5598 = vdwg.mxu0
    %5599 = vmatprep.subr.bf16.mxu0 %v4235
    %5600 = vmatpush1.bf16.msra.mxu0 %v4234
    %5601 = vmatprep.subr.bf16.mxu0 %v4253
    %5602 = vmatpush1.bf16.msra.mxu0 %v4252
    %5603 = vmatprep.subr.bf16.mxu0 %v4271
    %5604 = vmatpush1.bf16.msra.mxu0 %v4270
    %5605 = vmatprep.subr.bf16.mxu0 %v4289
    %5606 = vmatpush1.bf16.msra.mxu0 %v4288
    %5607 = vmatprep.subr.bf16.mxu0 %v4307
    %5608 = vmatpush1.bf16.msra.mxu0 %v4306
    %5609 = vmatprep.subr.bf16.mxu0 %v4325
    %5610 = vmatpush1.bf16.msra.mxu0 %v4324
    %5611 = vmatprep.subr.bf16.mxu0 %v4343
    %5612 = vmatpush1.bf16.msra.mxu0 %v4342
    %5613 = vmatprep.subr.bf16.mxu0 %v4361
    %5614 = vmatpush1.bf16.msra.mxu0 %v4360
    %5615 = vmatprep.subr.bf16.mxu0 %v4379
    %5616 = vmatpush1.bf16.msra.mxu0 %v4378
    %5617 = vmatprep.subr.bf16.mxu0 %v4397
    %5618 = vmatpush1.bf16.msra.mxu0 %v4396
    %5619 = vmatprep.subr.bf16.mxu0 %v4415
    %5620 = vmatpush1.bf16.msra.mxu0 %v4414
    %5621 = vmatprep.subr.bf16.mxu0 %v4433
    %5622 = vmatpush1.bf16.msra.mxu0 %v4432
    %5623 = vmatprep.subr.bf16.mxu0 %v4451
    %5624 = vmatpush1.bf16.msra.mxu0 %v4450
    %5625 = vmatprep.subr.bf16.mxu0 %v4469
    %5626 = vmatpush1.bf16.msra.mxu0 %v4468
    %5627 = vmatprep.subr.bf16.mxu0 %v4487
    %5628 = vmatpush1.bf16.msra.mxu0 %v4486
    %5629 = vmatprep.subr.bf16.mxu0 %v4505
    %5630 = vmatpush1.bf16.msra.mxu0 %v4504
    %5631 = vmatprep.mubr.bf16.mxu0 %v103
    %5632 = vmatmul.mubr.bf16.gmra.mrb[0].mxu0 %v102
    %v5633 = vpop.f32.mrb[0].mxu0
    %v5634 = vadd.f32 %v5591, %v5633
    %v5635 = vpop.f32.mrb[0].mxu0
    %v5636 = vadd.f32 %v5593, %v5635
    %v5637 = vpop.f32.mrb[0].mxu0
    %v5638 = vadd.f32 %v5595, %v5637
    %v5639 = vpop.f32.mrb[0].mxu0
    %v5640 = vadd.f32 %v5597, %v5639
    %5641 = vdwg.mxu0
    %5642 = vmatprep.subr.bf16.mxu0 %v3661
    %5643 = vmatpush1.bf16.msra.mxu0 %v3660
    %5644 = vmatprep.subr.bf16.mxu0 %v3679
    %5645 = vmatpush1.bf16.msra.mxu0 %v3678
    %5646 = vmatprep.subr.bf16.mxu0 %v3697
    %5647 = vmatpush1.bf16.msra.mxu0 %v3696
    %5648 = vmatprep.subr.bf16.mxu0 %v3715
    %5649 = vmatpush1.bf16.msra.mxu0 %v3714
    %5650 = vmatprep.subr.bf16.mxu0 %v3733
    %5651 = vmatpush1.bf16.msra.mxu0 %v3732
    %5652 = vmatprep.subr.bf16.mxu0 %v3751
    %5653 = vmatpush1.bf16.msra.mxu0 %v3750
    %5654 = vmatprep.subr.bf16.mxu0 %v3769
    %5655 = vmatpush1.bf16.msra.mxu0 %v3768
    %5656 = vmatprep.subr.bf16.mxu0 %v3787
    %5657 = vmatpush1.bf16.msra.mxu0 %v3786
    %5658 = vmatprep.subr.bf16.mxu0 %v3805
    %5659 = vmatpush1.bf16.msra.mxu0 %v3804
    %5660 = vmatprep.subr.bf16.mxu0 %v3823
    %5661 = vmatpush1.bf16.msra.mxu0 %v3822
    %5662 = vmatprep.subr.bf16.mxu0 %v3841
    %5663 = vmatpush1.bf16.msra.mxu0 %v3840
    %5664 = vmatprep.subr.bf16.mxu0 %v3859
    %5665 = vmatpush1.bf16.msra.mxu0 %v3858
    %5666 = vmatprep.subr.bf16.mxu0 %v3877
    %5667 = vmatpush1.bf16.msra.mxu0 %v3876
    %5668 = vmatprep.subr.bf16.mxu0 %v3895
    %5669 = vmatpush1.bf16.msra.mxu0 %v3894
    %5670 = vmatprep.subr.bf16.mxu0 %v3913
    %5671 = vmatpush1.bf16.msra.mxu0 %v3912
    %5672 = vmatprep.subr.bf16.mxu0 %v3931
    %5673 = vmatpush1.bf16.msra.mxu0 %v3930
    %5674 = vmatprep.mubr.bf16.mxu0 %v99
    %5675 = vmatmul.mubr.bf16.gmra.mrb[0].mxu0 %v98
    %v5676 = vpop.f32.mrb[0].mxu0
    %v5677 = vadd.f32 %v993, %v5676
    %v5678 = vpop.f32.mrb[0].mxu0
    %v5679 = vadd.f32 %v997, %v5678
    %v5680 = vpop.f32.mrb[0].mxu0
    %v5681 = vadd.f32 %v993, %v5680
    %v5682 = vpop.f32.mrb[0].mxu0
    %v5683 = vadd.f32 %v997, %v5682
    %5684 = vdwg.mxu0
    %5685 = vmatprep.subr.bf16.mxu0 %v3949
    %5686 = vmatpush1.bf16.msra.mxu0 %v3948
    %5687 = vmatprep.subr.bf16.mxu0 %v3967
    %5688 = vmatpush1.bf16.msra.mxu0 %v3966
    %5689 = vmatprep.subr.bf16.mxu0 %v3985
    %5690 = vmatpush1.bf16.msra.mxu0 %v3984
    %5691 = vmatprep.subr.bf16.mxu0 %v4003
    %5692 = vmatpush1.bf16.msra.mxu0 %v4002
    %5693 = vmatprep.subr.bf16.mxu0 %v4021
    %5694 = vmatpush1.bf16.msra.mxu0 %v4020
    %5695 = vmatprep.subr.bf16.mxu0 %v4039
    %5696 = vmatpush1.bf16.msra.mxu0 %v4038
    %5697 = vmatprep.subr.bf16.mxu0 %v4057
    %5698 = vmatpush1.bf16.msra.mxu0 %v4056
    %5699 = vmatprep.subr.bf16.mxu0 %v4075
    %5700 = vmatpush1.bf16.msra.mxu0 %v4074
    %5701 = vmatprep.subr.bf16.mxu0 %v4093
    %5702 = vmatpush1.bf16.msra.mxu0 %v4092
    %5703 = vmatprep.subr.bf16.mxu0 %v4111
    %5704 = vmatpush1.bf16.msra.mxu0 %v4110
    %5705 = vmatprep.subr.bf16.mxu0 %v4129
    %5706 = vmatpush1.bf16.msra.mxu0 %v4128
    %5707 = vmatprep.subr.bf16.mxu0 %v4147
    %5708 = vmatpush1.bf16.msra.mxu0 %v4146
    %5709 = vmatprep.subr.bf16.mxu0 %v4165
    %5710 = vmatpush1.bf16.msra.mxu0 %v4164
    %5711 = vmatprep.subr.bf16.mxu0 %v4183
    %5712 = vmatpush1.bf16.msra.mxu0 %v4182
    %5713 = vmatprep.subr.bf16.mxu0 %v4201
    %5714 = vmatpush1.bf16.msra.mxu0 %v4200
    %5715 = vmatprep.subr.bf16.mxu0 %v4219
    %5716 = vmatpush1.bf16.msra.mxu0 %v4218
    %5717 = vmatprep.mubr.bf16.mxu0 %v101
    %5718 = vmatmul.mubr.bf16.gmra.mrb[0].mxu0 %v100
    %v5719 = vpop.f32.mrb[0].mxu0
    %v5720 = vadd.f32 %v5677, %v5719
    %v5721 = vpop.f32.mrb[0].mxu0
    %v5722 = vadd.f32 %v5679, %v5721
    %v5723 = vpop.f32.mrb[0].mxu0
    %v5724 = vadd.f32 %v5681, %v5723
    %v5725 = vpop.f32.mrb[0].mxu0
    %v5726 = vadd.f32 %v5683, %v5725
    %5727 = vdwg.mxu0
    %5728 = vmatprep.subr.bf16.mxu0 %v4237
    %5729 = vmatpush1.bf16.msra.mxu0 %v4236
    %5730 = vmatprep.subr.bf16.mxu0 %v4255
    %5731 = vmatpush1.bf16.msra.mxu0 %v4254
    %5732 = vmatprep.subr.bf16.mxu0 %v4273
    %5733 = vmatpush1.bf16.msra.mxu0 %v4272
    %5734 = vmatprep.subr.bf16.mxu0 %v4291
    %5735 = vmatpush1.bf16.msra.mxu0 %v4290
    %5736 = vmatprep.subr.bf16.mxu0 %v4309
    %5737 = vmatpush1.bf16.msra.mxu0 %v4308
    %5738 = vmatprep.subr.bf16.mxu0 %v4327
    %5739 = vmatpush1.bf16.msra.mxu0 %v4326
    %5740 = vmatprep.subr.bf16.mxu0 %v4345
    %5741 = vmatpush1.bf16.msra.mxu0 %v4344
    %5742 = vmatprep.subr.bf16.mxu0 %v4363
    %5743 = vmatpush1.bf16.msra.mxu0 %v4362
    %5744 = vmatprep.subr.bf16.mxu0 %v4381
    %5745 = vmatpush1.bf16.msra.mxu0 %v4380
    %5746 = vmatprep.subr.bf16.mxu0 %v4399
    %5747 = vmatpush1.bf16.msra.mxu0 %v4398
    %5748 = vmatprep.subr.bf16.mxu0 %v4417
    %5749 = vmatpush1.bf16.msra.mxu0 %v4416
    %5750 = vmatprep.subr.bf16.mxu0 %v4435
    %5751 = vmatpush1.bf16.msra.mxu0 %v4434
    %5752 = vmatprep.subr.bf16.mxu0 %v4453
    %5753 = vmatpush1.bf16.msra.mxu0 %v4452
    %5754 = vmatprep.subr.bf16.mxu0 %v4471
    %5755 = vmatpush1.bf16.msra.mxu0 %v4470
    %5756 = vmatprep.subr.bf16.mxu0 %v4489
    %5757 = vmatpush1.bf16.msra.mxu0 %v4488
    %5758 = vmatprep.subr.bf16.mxu0 %v4507
    %5759 = vmatpush1.bf16.msra.mxu0 %v4506
    %5760 = vmatprep.mubr.bf16.mxu0 %v103
    %5761 = vmatmul.mubr.bf16.gmra.mrb[0].mxu0 %v102
    %v5762 = vpop.f32.mrb[0].mxu0
    %v5763 = vadd.f32 %v5720, %v5762
    %v5764 = vpop.f32.mrb[0].mxu0
    %v5765 = vadd.f32 %v5722, %v5764
    %v5766 = vpop.f32.mrb[0].mxu0
    %v5767 = vadd.f32 %v5724, %v5766
    %v5768 = vpop.f32.mrb[0].mxu0
    %v5769 = vadd.f32 %v5726, %v5768
    %5770 = vdwg.mxu0
    %5771 = vmatprep.subr.bf16.mxu0 %v3663
    %5772 = vmatpush1.bf16.msra.mxu0 %v3662
    %5773 = vmatprep.subr.bf16.mxu0 %v3681
    %5774 = vmatpush1.bf16.msra.mxu0 %v3680
    %5775 = vmatprep.subr.bf16.mxu0 %v3699
    %5776 = vmatpush1.bf16.msra.mxu0 %v3698
    %5777 = vmatprep.subr.bf16.mxu0 %v3717
    %5778 = vmatpush1.bf16.msra.mxu0 %v3716
    %5779 = vmatprep.subr.bf16.mxu0 %v3735
    %5780 = vmatpush1.bf16.msra.mxu0 %v3734
    %5781 = vmatprep.subr.bf16.mxu0 %v3753
    %5782 = vmatpush1.bf16.msra.mxu0 %v3752
    %5783 = vmatprep.subr.bf16.mxu0 %v3771
    %5784 = vmatpush1.bf16.msra.mxu0 %v3770
    %5785 = vmatprep.subr.bf16.mxu0 %v3789
    %5786 = vmatpush1.bf16.msra.mxu0 %v3788
    %5787 = vmatprep.subr.bf16.mxu0 %v3807
    %5788 = vmatpush1.bf16.msra.mxu0 %v3806
    %5789 = vmatprep.subr.bf16.mxu0 %v3825
    %5790 = vmatpush1.bf16.msra.mxu0 %v3824
    %5791 = vmatprep.subr.bf16.mxu0 %v3843
    %5792 = vmatpush1.bf16.msra.mxu0 %v3842
    %5793 = vmatprep.subr.bf16.mxu0 %v3861
    %5794 = vmatpush1.bf16.msra.mxu0 %v3860
    %5795 = vmatprep.subr.bf16.mxu0 %v3879
    %5796 = vmatpush1.bf16.msra.mxu0 %v3878
    %5797 = vmatprep.subr.bf16.mxu0 %v3897
    %5798 = vmatpush1.bf16.msra.mxu0 %v3896
    %5799 = vmatprep.subr.bf16.mxu0 %v3915
    %5800 = vmatpush1.bf16.msra.mxu0 %v3914
    %5801 = vmatprep.subr.bf16.mxu0 %v3933
    %5802 = vmatpush1.bf16.msra.mxu0 %v3932
    %5803 = vmatprep.mubr.bf16.mxu0 %v99
    %5804 = vmatmul.mubr.bf16.gmra.mrb[0].mxu0 %v98
    %v5805 = vpop.f32.mrb[0].mxu0
    %v5806 = vadd.f32 %v1001, %v5805
    %v5807 = vpop.f32.mrb[0].mxu0
    %v5808 = vadd.f32 %v1005, %v5807
    %v5809 = vpop.f32.mrb[0].mxu0
    %v5810 = vadd.f32 %v1001, %v5809
    %v5811 = vpop.f32.mrb[0].mxu0
    %v5812 = vadd.f32 %v1005, %v5811
    %5813 = vdwg.mxu0
    %5814 = vmatprep.subr.bf16.mxu0 %v3951
    %5815 = vmatpush1.bf16.msra.mxu0 %v3950
    %5816 = vmatprep.subr.bf16.mxu0 %v3969
    %5817 = vmatpush1.bf16.msra.mxu0 %v3968
    %5818 = vmatprep.subr.bf16.mxu0 %v3987
    %5819 = vmatpush1.bf16.msra.mxu0 %v3986
    %5820 = vmatprep.subr.bf16.mxu0 %v4005
    %5821 = vmatpush1.bf16.msra.mxu0 %v4004
    %5822 = vmatprep.subr.bf16.mxu0 %v4023
    %5823 = vmatpush1.bf16.msra.mxu0 %v4022
    %5824 = vmatprep.subr.bf16.mxu0 %v4041
    %5825 = vmatpush1.bf16.msra.mxu0 %v4040
    %5826 = vmatprep.subr.bf16.mxu0 %v4059
    %5827 = vmatpush1.bf16.msra.mxu0 %v4058
    %5828 = vmatprep.subr.bf16.mxu0 %v4077
    %5829 = vmatpush1.bf16.msra.mxu0 %v4076
    %5830 = vmatprep.subr.bf16.mxu0 %v4095
    %5831 = vmatpush1.bf16.msra.mxu0 %v4094
    %5832 = vmatprep.subr.bf16.mxu0 %v4113
    %5833 = vmatpush1.bf16.msra.mxu0 %v4112
    %5834 = vmatprep.subr.bf16.mxu0 %v4131
    %5835 = vmatpush1.bf16.msra.mxu0 %v4130
    %5836 = vmatprep.subr.bf16.mxu0 %v4149
    %5837 = vmatpush1.bf16.msra.mxu0 %v4148
    %5838 = vmatprep.subr.bf16.mxu0 %v4167
    %5839 = vmatpush1.bf16.msra.mxu0 %v4166
    %5840 = vmatprep.subr.bf16.mxu0 %v4185
    %5841 = vmatpush1.bf16.msra.mxu0 %v4184
    %5842 = vmatprep.subr.bf16.mxu0 %v4203
    %5843 = vmatpush1.bf16.msra.mxu0 %v4202
    %5844 = vmatprep.subr.bf16.mxu0 %v4221
    %5845 = vmatpush1.bf16.msra.mxu0 %v4220
    %5846 = vmatprep.mubr.bf16.mxu0 %v101
    %5847 = vmatmul.mubr.bf16.gmra.mrb[0].mxu0 %v100
    %v5848 = vpop.f32.mrb[0].mxu0
    %v5849 = vadd.f32 %v5806, %v5848
    %v5850 = vpop.f32.mrb[0].mxu0
    %v5851 = vadd.f32 %v5808, %v5850
    %v5852 = vpop.f32.mrb[0].mxu0
    %v5853 = vadd.f32 %v5810, %v5852
    %v5854 = vpop.f32.mrb[0].mxu0
    %v5855 = vadd.f32 %v5812, %v5854
    %5856 = vdwg.mxu0
    %5857 = vmatprep.subr.bf16.mxu0 %v4239
    %5858 = vmatpush1.bf16.msra.mxu0 %v4238
    %5859 = vmatprep.subr.bf16.mxu0 %v4257
    %5860 = vmatpush1.bf16.msra.mxu0 %v4256
    %5861 = vmatprep.subr.bf16.mxu0 %v4275
    %5862 = vmatpush1.bf16.msra.mxu0 %v4274
    %5863 = vmatprep.subr.bf16.mxu0 %v4293
    %5864 = vmatpush1.bf16.msra.mxu0 %v4292
    %5865 = vmatprep.subr.bf16.mxu0 %v4311
    %5866 = vmatpush1.bf16.msra.mxu0 %v4310
    %5867 = vmatprep.subr.bf16.mxu0 %v4329
    %5868 = vmatpush1.bf16.msra.mxu0 %v4328
    %5869 = vmatprep.subr.bf16.mxu0 %v4347
    %5870 = vmatpush1.bf16.msra.mxu0 %v4346
    %5871 = vmatprep.subr.bf16.mxu0 %v4365
    %5872 = vmatpush1.bf16.msra.mxu0 %v4364
    %5873 = vmatprep.subr.bf16.mxu0 %v4383
    %5874 = vmatpush1.bf16.msra.mxu0 %v4382
    %5875 = vmatprep.subr.bf16.mxu0 %v4401
    %5876 = vmatpush1.bf16.msra.mxu0 %v4400
    %5877 = vmatprep.subr.bf16.mxu0 %v4419
    %5878 = vmatpush1.bf16.msra.mxu0 %v4418
    %5879 = vmatprep.subr.bf16.mxu0 %v4437
    %5880 = vmatpush1.bf16.msra.mxu0 %v4436
    %5881 = vmatprep.subr.bf16.mxu0 %v4455
    %5882 = vmatpush1.bf16.msra.mxu0 %v4454
    %5883 = vmatprep.subr.bf16.mxu0 %v4473
    %5884 = vmatpush1.bf16.msra.mxu0 %v4472
    %5885 = vmatprep.subr.bf16.mxu0 %v4491
    %5886 = vmatpush1.bf16.msra.mxu0 %v4490
    %5887 = vmatprep.subr.bf16.mxu0 %v4509
    %5888 = vmatpush1.bf16.msra.mxu0 %v4508
    %5889 = vmatprep.mubr.bf16.mxu0 %v103
    %5890 = vmatmul.mubr.bf16.gmra.mrb[0].mxu0 %v102
    %v5891 = vpop.f32.mrb[0].mxu0
    %v5892 = vadd.f32 %v5849, %v5891
    %v5893 = vpop.f32.mrb[0].mxu0
    %v5894 = vadd.f32 %v5851, %v5893
    %v5895 = vpop.f32.mrb[0].mxu0
    %v5896 = vadd.f32 %v5853, %v5895
    %v5897 = vpop.f32.mrb[0].mxu0
    %v5898 = vadd.f32 %v5855, %v5897
    %5899 = vdwg.mxu0
    %5900 = vmatprep.subr.bf16.mxu0 %v3665
    %5901 = vmatpush1.bf16.msra.mxu0 %v3664
    %5902 = vmatprep.subr.bf16.mxu0 %v3683
    %5903 = vmatpush1.bf16.msra.mxu0 %v3682
    %5904 = vmatprep.subr.bf16.mxu0 %v3701
    %5905 = vmatpush1.bf16.msra.mxu0 %v3700
    %5906 = vmatprep.subr.bf16.mxu0 %v3719
    %5907 = vmatpush1.bf16.msra.mxu0 %v3718
    %5908 = vmatprep.subr.bf16.mxu0 %v3737
    %5909 = vmatpush1.bf16.msra.mxu0 %v3736
    %5910 = vmatprep.subr.bf16.mxu0 %v3755
    %5911 = vmatpush1.bf16.msra.mxu0 %v3754
    %5912 = vmatprep.subr.bf16.mxu0 %v3773
    %5913 = vmatpush1.bf16.msra.mxu0 %v3772
    %5914 = vmatprep.subr.bf16.mxu0 %v3791
    %5915 = vmatpush1.bf16.msra.mxu0 %v3790
    %5916 = vmatprep.subr.bf16.mxu0 %v3809
    %5917 = vmatpush1.bf16.msra.mxu0 %v3808
    %5918 = vmatprep.subr.bf16.mxu0 %v3827
    %5919 = vmatpush1.bf16.msra.mxu0 %v3826
    %5920 = vmatprep.subr.bf16.mxu0 %v3845
    %5921 = vmatpush1.bf16.msra.mxu0 %v3844
    %5922 = vmatprep.subr.bf16.mxu0 %v3863
    %5923 = vmatpush1.bf16.msra.mxu0 %v3862
    %5924 = vmatprep.subr.bf16.mxu0 %v3881
    %5925 = vmatpush1.bf16.msra.mxu0 %v3880
    %5926 = vmatprep.subr.bf16.mxu0 %v3899
    %5927 = vmatpush1.bf16.msra.mxu0 %v3898
    %5928 = vmatprep.subr.bf16.mxu0 %v3917
    %5929 = vmatpush1.bf16.msra.mxu0 %v3916
    %5930 = vmatprep.subr.bf16.mxu0 %v3935
    %5931 = vmatpush1.bf16.msra.mxu0 %v3934
    %5932 = vmatprep.mubr.bf16.mxu0 %v99
    %5933 = vmatmul.mubr.bf16.gmra.mrb[0].mxu0 %v98
    %v5934 = vpop.f32.mrb[0].mxu0
    %v5935 = vadd.f32 %v1009, %v5934
    %v5936 = vpop.f32.mrb[0].mxu0
    %v5937 = vadd.f32 %v1013, %v5936
    %v5938 = vpop.f32.mrb[0].mxu0
    %v5939 = vadd.f32 %v1009, %v5938
    %v5940 = vpop.f32.mrb[0].mxu0
    %v5941 = vadd.f32 %v1013, %v5940
    %5942 = vdwg.mxu0
    %5943 = vmatprep.subr.bf16.mxu0 %v3953
    %5944 = vmatpush1.bf16.msra.mxu0 %v3952
    %5945 = vmatprep.subr.bf16.mxu0 %v3971
    %5946 = vmatpush1.bf16.msra.mxu0 %v3970
    %5947 = vmatprep.subr.bf16.mxu0 %v3989
    %5948 = vmatpush1.bf16.msra.mxu0 %v3988
    %5949 = vmatprep.subr.bf16.mxu0 %v4007
    %5950 = vmatpush1.bf16.msra.mxu0 %v4006
    %5951 = vmatprep.subr.bf16.mxu0 %v4025
    %5952 = vmatpush1.bf16.msra.mxu0 %v4024
    %5953 = vmatprep.subr.bf16.mxu0 %v4043
    %5954 = vmatpush1.bf16.msra.mxu0 %v4042
    %5955 = vmatprep.subr.bf16.mxu0 %v4061
    %5956 = vmatpush1.bf16.msra.mxu0 %v4060
    %5957 = vmatprep.subr.bf16.mxu0 %v4079
    %5958 = vmatpush1.bf16.msra.mxu0 %v4078
    %5959 = vmatprep.subr.bf16.mxu0 %v4097
    %5960 = vmatpush1.bf16.msra.mxu0 %v4096
    %5961 = vmatprep.subr.bf16.mxu0 %v4115
    %5962 = vmatpush1.bf16.msra.mxu0 %v4114
    %5963 = vmatprep.subr.bf16.mxu0 %v4133
    %5964 = vmatpush1.bf16.msra.mxu0 %v4132
    %5965 = vmatprep.subr.bf16.mxu0 %v4151
    %5966 = vmatpush1.bf16.msra.mxu0 %v4150
    %5967 = vmatprep.subr.bf16.mxu0 %v4169
    %5968 = vmatpush1.bf16.msra.mxu0 %v4168
    %5969 = vmatprep.subr.bf16.mxu0 %v4187
    %5970 = vmatpush1.bf16.msra.mxu0 %v4186
    %5971 = vmatprep.subr.bf16.mxu0 %v4205
    %5972 = vmatpush1.bf16.msra.mxu0 %v4204
    %5973 = vmatprep.subr.bf16.mxu0 %v4223
    %5974 = vmatpush1.bf16.msra.mxu0 %v4222
    %5975 = vmatprep.mubr.bf16.mxu0 %v101
    %5976 = vmatmul.mubr.bf16.gmra.mrb[0].mxu0 %v100
    %v5977 = vpop.f32.mrb[0].mxu0
    %v5978 = vadd.f32 %v5935, %v5977
    %v5979 = vpop.f32.mrb[0].mxu0
    %v5980 = vadd.f32 %v5937, %v5979
    %v5981 = vpop.f32.mrb[0].mxu0
    %v5982 = vadd.f32 %v5939, %v5981
    %v5983 = vpop.f32.mrb[0].mxu0
    %v5984 = vadd.f32 %v5941, %v5983
    %5985 = vdwg.mxu0
    %5986 = vmatprep.subr.bf16.mxu0 %v4241
    %5987 = vmatpush1.bf16.msra.mxu0 %v4240
    %5988 = vmatprep.subr.bf16.mxu0 %v4259
    %5989 = vmatpush1.bf16.msra.mxu0 %v4258
    %5990 = vmatprep.subr.bf16.mxu0 %v4277
    %5991 = vmatpush1.bf16.msra.mxu0 %v4276
    %5992 = vmatprep.subr.bf16.mxu0 %v4295
    %5993 = vmatpush1.bf16.msra.mxu0 %v4294
    %5994 = vmatprep.subr.bf16.mxu0 %v4313
    %5995 = vmatpush1.bf16.msra.mxu0 %v4312
    %5996 = vmatprep.subr.bf16.mxu0 %v4331
    %5997 = vmatpush1.bf16.msra.mxu0 %v4330
    %5998 = vmatprep.subr.bf16.mxu0 %v4349
    %5999 = vmatpush1.bf16.msra.mxu0 %v4348
    %6000 = vmatprep.subr.bf16.mxu0 %v4367
    %6001 = vmatpush1.bf16.msra.mxu0 %v4366
    %6002 = vmatprep.subr.bf16.mxu0 %v4385
    %6003 = vmatpush1.bf16.msra.mxu0 %v4384
    %6004 = vmatprep.subr.bf16.mxu0 %v4403
    %6005 = vmatpush1.bf16.msra.mxu0 %v4402
    %6006 = vmatprep.subr.bf16.mxu0 %v4421
    %6007 = vmatpush1.bf16.msra.mxu0 %v4420
    %6008 = vmatprep.subr.bf16.mxu0 %v4439
    %6009 = vmatpush1.bf16.msra.mxu0 %v4438
    %6010 = vmatprep.subr.bf16.mxu0 %v4457
    %6011 = vmatpush1.bf16.msra.mxu0 %v4456
    %6012 = vmatprep.subr.bf16.mxu0 %v4475
    %6013 = vmatpush1.bf16.msra.mxu0 %v4474
    %6014 = vmatprep.subr.bf16.mxu0 %v4493
    %6015 = vmatpush1.bf16.msra.mxu0 %v4492
    %6016 = vmatprep.subr.bf16.mxu0 %v4511
    %6017 = vmatpush1.bf16.msra.mxu0 %v4510
    %6018 = vmatprep.mubr.bf16.mxu0 %v103
    %6019 = vmatmul.mubr.bf16.gmra.mrb[0].mxu0 %v102
    %v6020 = vpop.f32.mrb[0].mxu0
    %v6021 = vadd.f32 %v5978, %v6020
    %v6022 = vpop.f32.mrb[0].mxu0
    %v6023 = vadd.f32 %v5980, %v6022
    %v6024 = vpop.f32.mrb[0].mxu0
    %v6025 = vadd.f32 %v5982, %v6024
    %v6026 = vpop.f32.mrb[0].mxu0
    %v6027 = vadd.f32 %v5984, %v6026
    %6028 = vdwg.mxu0
    %6029 = vmatprep.subr.bf16.mxu0 %v3667
    %6030 = vmatpush1.bf16.msra.mxu0 %v3666
    %6031 = vmatprep.subr.bf16.mxu0 %v3685
    %6032 = vmatpush1.bf16.msra.mxu0 %v3684
    %6033 = vmatprep.subr.bf16.mxu0 %v3703
    %6034 = vmatpush1.bf16.msra.mxu0 %v3702
    %6035 = vmatprep.subr.bf16.mxu0 %v3721
    %6036 = vmatpush1.bf16.msra.mxu0 %v3720
    %6037 = vmatprep.subr.bf16.mxu0 %v3739
    %6038 = vmatpush1.bf16.msra.mxu0 %v3738
    %6039 = vmatprep.subr.bf16.mxu0 %v3757
    %6040 = vmatpush1.bf16.msra.mxu0 %v3756
    %6041 = vmatprep.subr.bf16.mxu0 %v3775
    %6042 = vmatpush1.bf16.msra.mxu0 %v3774
    %6043 = vmatprep.subr.bf16.mxu0 %v3793
    %6044 = vmatpush1.bf16.msra.mxu0 %v3792
    %6045 = vmatprep.subr.bf16.mxu0 %v3811
    %6046 = vmatpush1.bf16.msra.mxu0 %v3810
    %6047 = vmatprep.subr.bf16.mxu0 %v3829
    %6048 = vmatpush1.bf16.msra.mxu0 %v3828
    %6049 = vmatprep.subr.bf16.mxu0 %v3847
    %6050 = vmatpush1.bf16.msra.mxu0 %v3846
    %6051 = vmatprep.subr.bf16.mxu0 %v3865
    %6052 = vmatpush1.bf16.msra.mxu0 %v3864
    %6053 = vmatprep.subr.bf16.mxu0 %v3883
    %6054 = vmatpush1.bf16.msra.mxu0 %v3882
    %6055 = vmatprep.subr.bf16.mxu0 %v3901
    %6056 = vmatpush1.bf16.msra.mxu0 %v3900
    %6057 = vmatprep.subr.bf16.mxu0 %v3919
    %6058 = vmatpush1.bf16.msra.mxu0 %v3918
    %6059 = vmatprep.subr.bf16.mxu0 %v3937
    %6060 = vmatpush1.bf16.msra.mxu0 %v3936
    %6061 = vmatprep.mubr.bf16.mxu0 %v99
    %6062 = vmatmul.mubr.bf16.gmra.mrb[0].mxu0 %v98
    %v6063 = vpop.f32.mrb[0].mxu0
    %v6064 = vadd.f32 %v1017, %v6063
    %v6065 = vpop.f32.mrb[0].mxu0
    %v6066 = vadd.f32 %v1021, %v6065
    %v6067 = vpop.f32.mrb[0].mxu0
    %v6068 = vadd.f32 %v1017, %v6067
    %v6069 = vpop.f32.mrb[0].mxu0
    %v6070 = vadd.f32 %v1021, %v6069
    %6071 = vdwg.mxu0
    %6072 = vmatprep.subr.bf16.mxu0 %v3955
    %6073 = vmatpush1.bf16.msra.mxu0 %v3954
    %6074 = vmatprep.subr.bf16.mxu0 %v3973
    %6075 = vmatpush1.bf16.msra.mxu0 %v3972
    %6076 = vmatprep.subr.bf16.mxu0 %v3991
    %6077 = vmatpush1.bf16.msra.mxu0 %v3990
    %6078 = vmatprep.subr.bf16.mxu0 %v4009
    %6079 = vmatpush1.bf16.msra.mxu0 %v4008
    %6080 = vmatprep.subr.bf16.mxu0 %v4027
    %6081 = vmatpush1.bf16.msra.mxu0 %v4026
    %6082 = vmatprep.subr.bf16.mxu0 %v4045
    %6083 = vmatpush1.bf16.msra.mxu0 %v4044
    %6084 = vmatprep.subr.bf16.mxu0 %v4063
    %6085 = vmatpush1.bf16.msra.mxu0 %v4062
    %6086 = vmatprep.subr.bf16.mxu0 %v4081
    %6087 = vmatpush1.bf16.msra.mxu0 %v4080
    %6088 = vmatprep.subr.bf16.mxu0 %v4099
    %6089 = vmatpush1.bf16.msra.mxu0 %v4098
    %6090 = vmatprep.subr.bf16.mxu0 %v4117
    %6091 = vmatpush1.bf16.msra.mxu0 %v4116
    %6092 = vmatprep.subr.bf16.mxu0 %v4135
    %6093 = vmatpush1.bf16.msra.mxu0 %v4134
    %6094 = vmatprep.subr.bf16.mxu0 %v4153
    %6095 = vmatpush1.bf16.msra.mxu0 %v4152
    %6096 = vmatprep.subr.bf16.mxu0 %v4171
    %6097 = vmatpush1.bf16.msra.mxu0 %v4170
    %6098 = vmatprep.subr.bf16.mxu0 %v4189
    %6099 = vmatpush1.bf16.msra.mxu0 %v4188
    %6100 = vmatprep.subr.bf16.mxu0 %v4207
    %6101 = vmatpush1.bf16.msra.mxu0 %v4206
    %6102 = vmatprep.subr.bf16.mxu0 %v4225
    %6103 = vmatpush1.bf16.msra.mxu0 %v4224
    %6104 = vmatprep.mubr.bf16.mxu0 %v101
    %6105 = vmatmul.mubr.bf16.gmra.mrb[0].mxu0 %v100
    %v6106 = vpop.f32.mrb[0].mxu0
    %v6107 = vadd.f32 %v6064, %v6106
    %v6108 = vpop.f32.mrb[0].mxu0
    %v6109 = vadd.f32 %v6066, %v6108
    %v6110 = vpop.f32.mrb[0].mxu0
    %v6111 = vadd.f32 %v6068, %v6110
    %v6112 = vpop.f32.mrb[0].mxu0
    %v6113 = vadd.f32 %v6070, %v6112
    %6114 = vdwg.mxu0
    %6115 = vmatprep.subr.bf16.mxu0 %v4243
    %6116 = vmatpush1.bf16.msra.mxu0 %v4242
    %6117 = vmatprep.subr.bf16.mxu0 %v4261
    %6118 = vmatpush1.bf16.msra.mxu0 %v4260
    %6119 = vmatprep.subr.bf16.mxu0 %v4279
    %6120 = vmatpush1.bf16.msra.mxu0 %v4278
    %6121 = vmatprep.subr.bf16.mxu0 %v4297
    %6122 = vmatpush1.bf16.msra.mxu0 %v4296
    %6123 = vmatprep.subr.bf16.mxu0 %v4315
    %6124 = vmatpush1.bf16.msra.mxu0 %v4314
    %6125 = vmatprep.subr.bf16.mxu0 %v4333
    %6126 = vmatpush1.bf16.msra.mxu0 %v4332
    %6127 = vmatprep.subr.bf16.mxu0 %v4351
    %6128 = vmatpush1.bf16.msra.mxu0 %v4350
    %6129 = vmatprep.subr.bf16.mxu0 %v4369
    %6130 = vmatpush1.bf16.msra.mxu0 %v4368
    %6131 = vmatprep.subr.bf16.mxu0 %v4387
    %6132 = vmatpush1.bf16.msra.mxu0 %v4386
    %6133 = vmatprep.subr.bf16.mxu0 %v4405
    %6134 = vmatpush1.bf16.msra.mxu0 %v4404
    %6135 = vmatprep.subr.bf16.mxu0 %v4423
    %6136 = vmatpush1.bf16.msra.mxu0 %v4422
    %6137 = vmatprep.subr.bf16.mxu0 %v4441
    %6138 = vmatpush1.bf16.msra.mxu0 %v4440
    %6139 = vmatprep.subr.bf16.mxu0 %v4459
    %6140 = vmatpush1.bf16.msra.mxu0 %v4458
    %6141 = vmatprep.subr.bf16.mxu0 %v4477
    %6142 = vmatpush1.bf16.msra.mxu0 %v4476
    %6143 = vmatprep.subr.bf16.mxu0 %v4495
    %6144 = vmatpush1.bf16.msra.mxu0 %v4494
    %6145 = vmatprep.subr.bf16.mxu0 %v4513
    %6146 = vmatpush1.bf16.msra.mxu0 %v4512
    %6147 = vmatprep.mubr.bf16.mxu0 %v103
    %6148 = vmatmul.mubr.bf16.gmra.mrb[0].mxu0 %v102
    %v6149 = vpop.f32.mrb[0].mxu0
    %v6150 = vadd.f32 %v6107, %v6149
    %v6151 = vpop.f32.mrb[0].mxu0
    %v6152 = vadd.f32 %v6109, %v6151
    %v6153 = vpop.f32.mrb[0].mxu0
    %v6154 = vadd.f32 %v6111, %v6153
    %v6155 = vpop.f32.mrb[0].mxu0
    %v6156 = vadd.f32 %v6113, %v6155
    %6157 = vdwg.mxu0
    %6158 = vmatprep.subr.bf16.mxu0 %v3669
    %6159 = vmatpush1.bf16.msra.mxu0 %v3668
    %6160 = vmatprep.subr.bf16.mxu0 %v3687
    %6161 = vmatpush1.bf16.msra.mxu0 %v3686
    %6162 = vmatprep.subr.bf16.mxu0 %v3705
    %6163 = vmatpush1.bf16.msra.mxu0 %v3704
    %6164 = vmatprep.subr.bf16.mxu0 %v3723
    %6165 = vmatpush1.bf16.msra.mxu0 %v3722
    %6166 = vmatprep.subr.bf16.mxu0 %v3741
    %6167 = vmatpush1.bf16.msra.mxu0 %v3740
    %6168 = vmatprep.subr.bf16.mxu0 %v3759
    %6169 = vmatpush1.bf16.msra.mxu0 %v3758
    %6170 = vmatprep.subr.bf16.mxu0 %v3777
    %6171 = vmatpush1.bf16.msra.mxu0 %v3776
    %6172 = vmatprep.subr.bf16.mxu0 %v3795
    %6173 = vmatpush1.bf16.msra.mxu0 %v3794
    %6174 = vmatprep.subr.bf16.mxu0 %v3813
    %6175 = vmatpush1.bf16.msra.mxu0 %v3812
    %6176 = vmatprep.subr.bf16.mxu0 %v3831
    %6177 = vmatpush1.bf16.msra.mxu0 %v3830
    %6178 = vmatprep.subr.bf16.mxu0 %v3849
    %6179 = vmatpush1.bf16.msra.mxu0 %v3848
    %6180 = vmatprep.subr.bf16.mxu0 %v3867
    %6181 = vmatpush1.bf16.msra.mxu0 %v3866
    %6182 = vmatprep.subr.bf16.mxu0 %v3885
    %6183 = vmatpush1.bf16.msra.mxu0 %v3884
    %6184 = vmatprep.subr.bf16.mxu0 %v3903
    %6185 = vmatpush1.bf16.msra.mxu0 %v3902
    %6186 = vmatprep.subr.bf16.mxu0 %v3921
    %6187 = vmatpush1.bf16.msra.mxu0 %v3920
    %6188 = vmatprep.subr.bf16.mxu0 %v3939
    %6189 = vmatpush1.bf16.msra.mxu0 %v3938
    %6190 = vmatprep.mubr.bf16.mxu0 %v99
    %6191 = vmatmul.mubr.bf16.gmra.mrb[0].mxu0 %v98
    %v6192 = vpop.f32.mrb[0].mxu0
    %v6193 = vadd.f32 %v1025, %v6192
    %v6194 = vpop.f32.mrb[0].mxu0
    %v6195 = vadd.f32 %v1029, %v6194
    %v6196 = vpop.f32.mrb[0].mxu0
    %v6197 = vadd.f32 %v1025, %v6196
    %v6198 = vpop.f32.mrb[0].mxu0
    %v6199 = vadd.f32 %v1029, %v6198
    %6200 = vdwg.mxu0
    %6201 = vmatprep.subr.bf16.mxu0 %v3957
    %6202 = vmatpush1.bf16.msra.mxu0 %v3956
    %6203 = vmatprep.subr.bf16.mxu0 %v3975
    %6204 = vmatpush1.bf16.msra.mxu0 %v3974
    %6205 = vmatprep.subr.bf16.mxu0 %v3993
    %6206 = vmatpush1.bf16.msra.mxu0 %v3992
    %6207 = vmatprep.subr.bf16.mxu0 %v4011
    %6208 = vmatpush1.bf16.msra.mxu0 %v4010
    %6209 = vmatprep.subr.bf16.mxu0 %v4029
    %6210 = vmatpush1.bf16.msra.mxu0 %v4028
    %6211 = vmatprep.subr.bf16.mxu0 %v4047
    %6212 = vmatpush1.bf16.msra.mxu0 %v4046
    %6213 = vmatprep.subr.bf16.mxu0 %v4065
    %6214 = vmatpush1.bf16.msra.mxu0 %v4064
    %6215 = vmatprep.subr.bf16.mxu0 %v4083
    %6216 = vmatpush1.bf16.msra.mxu0 %v4082
    %6217 = vmatprep.subr.bf16.mxu0 %v4101
    %6218 = vmatpush1.bf16.msra.mxu0 %v4100
    %6219 = vmatprep.subr.bf16.mxu0 %v4119
    %6220 = vmatpush1.bf16.msra.mxu0 %v4118
    %6221 = vmatprep.subr.bf16.mxu0 %v4137
    %6222 = vmatpush1.bf16.msra.mxu0 %v4136
    %6223 = vmatprep.subr.bf16.mxu0 %v4155
    %6224 = vmatpush1.bf16.msra.mxu0 %v4154
    %6225 = vmatprep.subr.bf16.mxu0 %v4173
    %6226 = vmatpush1.bf16.msra.mxu0 %v4172
    %6227 = vmatprep.subr.bf16.mxu0 %v4191
    %6228 = vmatpush1.bf16.msra.mxu0 %v4190
    %6229 = vmatprep.subr.bf16.mxu0 %v4209
    %6230 = vmatpush1.bf16.msra.mxu0 %v4208
    %6231 = vmatprep.subr.bf16.mxu0 %v4227
    %6232 = vmatpush1.bf16.msra.mxu0 %v4226
    %6233 = vmatprep.mubr.bf16.mxu0 %v101
    %6234 = vmatmul.mubr.bf16.gmra.mrb[0].mxu0 %v100
    %v6235 = vpop.f32.mrb[0].mxu0
    %v6236 = vadd.f32 %v6193, %v6235
    %v6237 = vpop.f32.mrb[0].mxu0
    %v6238 = vadd.f32 %v6195, %v6237
    %v6239 = vpop.f32.mrb[0].mxu0
    %v6240 = vadd.f32 %v6197, %v6239
    %v6241 = vpop.f32.mrb[0].mxu0
    %v6242 = vadd.f32 %v6199, %v6241
    %6243 = vdwg.mxu0
    %6244 = vmatprep.subr.bf16.mxu0 %v4245
    %6245 = vmatpush1.bf16.msra.mxu0 %v4244
    %6246 = vmatprep.subr.bf16.mxu0 %v4263
    %6247 = vmatpush1.bf16.msra.mxu0 %v4262
    %6248 = vmatprep.subr.bf16.mxu0 %v4281
    %6249 = vmatpush1.bf16.msra.mxu0 %v4280
    %6250 = vmatprep.subr.bf16.mxu0 %v4299
    %6251 = vmatpush1.bf16.msra.mxu0 %v4298
    %6252 = vmatprep.subr.bf16.mxu0 %v4317
    %6253 = vmatpush1.bf16.msra.mxu0 %v4316
    %6254 = vmatprep.subr.bf16.mxu0 %v4335
    %6255 = vmatpush1.bf16.msra.mxu0 %v4334
    %6256 = vmatprep.subr.bf16.mxu0 %v4353
    %6257 = vmatpush1.bf16.msra.mxu0 %v4352
    %6258 = vmatprep.subr.bf16.mxu0 %v4371
    %6259 = vmatpush1.bf16.msra.mxu0 %v4370
    %6260 = vmatprep.subr.bf16.mxu0 %v4389
    %6261 = vmatpush1.bf16.msra.mxu0 %v4388
    %6262 = vmatprep.subr.bf16.mxu0 %v4407
    %6263 = vmatpush1.bf16.msra.mxu0 %v4406
    %6264 = vmatprep.subr.bf16.mxu0 %v4425
    %6265 = vmatpush1.bf16.msra.mxu0 %v4424
    %6266 = vmatprep.subr.bf16.mxu0 %v4443
    %6267 = vmatpush1.bf16.msra.mxu0 %v4442
    %6268 = vmatprep.subr.bf16.mxu0 %v4461
    %6269 = vmatpush1.bf16.msra.mxu0 %v4460
    %6270 = vmatprep.subr.bf16.mxu0 %v4479
    %6271 = vmatpush1.bf16.msra.mxu0 %v4478
    %6272 = vmatprep.subr.bf16.mxu0 %v4497
    %6273 = vmatpush1.bf16.msra.mxu0 %v4496
    %6274 = vmatprep.subr.bf16.mxu0 %v4515
    %6275 = vmatpush1.bf16.msra.mxu0 %v4514
    %6276 = vmatprep.mubr.bf16.mxu0 %v103
    %6277 = vmatmul.mubr.bf16.gmra.mrb[0].mxu0 %v102
    %v6278 = vpop.f32.mrb[0].mxu0
    %v6279 = vadd.f32 %v6236, %v6278
    %v6280 = vpop.f32.mrb[0].mxu0
    %v6281 = vadd.f32 %v6238, %v6280
    %v6282 = vpop.f32.mrb[0].mxu0
    %v6283 = vadd.f32 %v6240, %v6282
    %v6284 = vpop.f32.mrb[0].mxu0
    %v6285 = vadd.f32 %v6242, %v6284
    %6286 = vdwg.mxu0
    %6287 = vmatprep.subr.bf16.mxu0 %v3671
    %6288 = vmatpush1.bf16.msra.mxu0 %v3670
    %6289 = vmatprep.subr.bf16.mxu0 %v3689
    %6290 = vmatpush1.bf16.msra.mxu0 %v3688
    %6291 = vmatprep.subr.bf16.mxu0 %v3707
    %6292 = vmatpush1.bf16.msra.mxu0 %v3706
    %6293 = vmatprep.subr.bf16.mxu0 %v3725
    %6294 = vmatpush1.bf16.msra.mxu0 %v3724
    %6295 = vmatprep.subr.bf16.mxu0 %v3743
    %6296 = vmatpush1.bf16.msra.mxu0 %v3742
    %6297 = vmatprep.subr.bf16.mxu0 %v3761
    %6298 = vmatpush1.bf16.msra.mxu0 %v3760
    %6299 = vmatprep.subr.bf16.mxu0 %v3779
    %6300 = vmatpush1.bf16.msra.mxu0 %v3778
    %6301 = vmatprep.subr.bf16.mxu0 %v3797
    %6302 = vmatpush1.bf16.msra.mxu0 %v3796
    %6303 = vmatprep.subr.bf16.mxu0 %v3815
    %6304 = vmatpush1.bf16.msra.mxu0 %v3814
    %6305 = vmatprep.subr.bf16.mxu0 %v3833
    %6306 = vmatpush1.bf16.msra.mxu0 %v3832
    %6307 = vmatprep.subr.bf16.mxu0 %v3851
    %6308 = vmatpush1.bf16.msra.mxu0 %v3850
    %6309 = vmatprep.subr.bf16.mxu0 %v3869
    %6310 = vmatpush1.bf16.msra.mxu0 %v3868
    %6311 = vmatprep.subr.bf16.mxu0 %v3887
    %6312 = vmatpush1.bf16.msra.mxu0 %v3886
    %6313 = vmatprep.subr.bf16.mxu0 %v3905
    %6314 = vmatpush1.bf16.msra.mxu0 %v3904
    %6315 = vmatprep.subr.bf16.mxu0 %v3923
    %6316 = vmatpush1.bf16.msra.mxu0 %v3922
    %6317 = vmatprep.subr.bf16.mxu0 %v3941
    %6318 = vmatpush1.bf16.msra.mxu0 %v3940
    %6319 = vmatprep.mubr.bf16.mxu0 %v99
    %6320 = vmatmul.mubr.bf16.gmra.mrb[0].mxu0 %v98
    %v6321 = vpop.f32.mrb[0].mxu0
    %v6322 = vadd.f32 %v1033, %v6321
    %v6323 = vpop.f32.mrb[0].mxu0
    %v6324 = vadd.f32 %v1037, %v6323
    %v6325 = vpop.f32.mrb[0].mxu0
    %v6326 = vadd.f32 %v1033, %v6325
    %v6327 = vpop.f32.mrb[0].mxu0
    %v6328 = vadd.f32 %v1037, %v6327
    %6329 = vdwg.mxu0
    %6330 = vmatprep.subr.bf16.mxu0 %v3959
    %6331 = vmatpush1.bf16.msra.mxu0 %v3958
    %6332 = vmatprep.subr.bf16.mxu0 %v3977
    %6333 = vmatpush1.bf16.msra.mxu0 %v3976
    %6334 = vmatprep.subr.bf16.mxu0 %v3995
    %6335 = vmatpush1.bf16.msra.mxu0 %v3994
    %6336 = vmatprep.subr.bf16.mxu0 %v4013
    %6337 = vmatpush1.bf16.msra.mxu0 %v4012
    %6338 = vmatprep.subr.bf16.mxu0 %v4031
    %6339 = vmatpush1.bf16.msra.mxu0 %v4030
    %6340 = vmatprep.subr.bf16.mxu0 %v4049
    %6341 = vmatpush1.bf16.msra.mxu0 %v4048
    %6342 = vmatprep.subr.bf16.mxu0 %v4067
    %6343 = vmatpush1.bf16.msra.mxu0 %v4066
    %6344 = vmatprep.subr.bf16.mxu0 %v4085
    %6345 = vmatpush1.bf16.msra.mxu0 %v4084
    %6346 = vmatprep.subr.bf16.mxu0 %v4103
    %6347 = vmatpush1.bf16.msra.mxu0 %v4102
    %6348 = vmatprep.subr.bf16.mxu0 %v4121
    %6349 = vmatpush1.bf16.msra.mxu0 %v4120
    %6350 = vmatprep.subr.bf16.mxu0 %v4139
    %6351 = vmatpush1.bf16.msra.mxu0 %v4138
    %6352 = vmatprep.subr.bf16.mxu0 %v4157
    %6353 = vmatpush1.bf16.msra.mxu0 %v4156
    %6354 = vmatprep.subr.bf16.mxu0 %v4175
    %6355 = vmatpush1.bf16.msra.mxu0 %v4174
    %6356 = vmatprep.subr.bf16.mxu0 %v4193
    %6357 = vmatpush1.bf16.msra.mxu0 %v4192
    %6358 = vmatprep.subr.bf16.mxu0 %v4211
    %6359 = vmatpush1.bf16.msra.mxu0 %v4210
    %6360 = vmatprep.subr.bf16.mxu0 %v4229
    %6361 = vmatpush1.bf16.msra.mxu0 %v4228
    %6362 = vmatprep.mubr.bf16.mxu0 %v101
    %6363 = vmatmul.mubr.bf16.gmra.mrb[0].mxu0 %v100
    %v6364 = vpop.f32.mrb[0].mxu0
    %v6365 = vadd.f32 %v6322, %v6364
    %v6366 = vpop.f32.mrb[0].mxu0
    %v6367 = vadd.f32 %v6324, %v6366
    %v6368 = vpop.f32.mrb[0].mxu0
    %v6369 = vadd.f32 %v6326, %v6368
    %v6370 = vpop.f32.mrb[0].mxu0
    %v6371 = vadd.f32 %v6328, %v6370
    %6372 = vdwg.mxu0
    %6373 = vmatprep.subr.bf16.mxu0 %v4247
    %6374 = vmatpush1.bf16.msra.mxu0 %v4246
    %6375 = vmatprep.subr.bf16.mxu0 %v4265
    %6376 = vmatpush1.bf16.msra.mxu0 %v4264
    %6377 = vmatprep.subr.bf16.mxu0 %v4283
    %6378 = vmatpush1.bf16.msra.mxu0 %v4282
    %6379 = vmatprep.subr.bf16.mxu0 %v4301
    %6380 = vmatpush1.bf16.msra.mxu0 %v4300
    %6381 = vmatprep.subr.bf16.mxu0 %v4319
    %6382 = vmatpush1.bf16.msra.mxu0 %v4318
    %6383 = vmatprep.subr.bf16.mxu0 %v4337
    %6384 = vmatpush1.bf16.msra.mxu0 %v4336
    %6385 = vmatprep.subr.bf16.mxu0 %v4355
    %6386 = vmatpush1.bf16.msra.mxu0 %v4354
    %6387 = vmatprep.subr.bf16.mxu0 %v4373
    %6388 = vmatpush1.bf16.msra.mxu0 %v4372
    %6389 = vmatprep.subr.bf16.mxu0 %v4391
    %6390 = vmatpush1.bf16.msra.mxu0 %v4390
    %6391 = vmatprep.subr.bf16.mxu0 %v4409
    %6392 = vmatpush1.bf16.msra.mxu0 %v4408
    %6393 = vmatprep.subr.bf16.mxu0 %v4427
    %6394 = vmatpush1.bf16.msra.mxu0 %v4426
    %6395 = vmatprep.subr.bf16.mxu0 %v4445
    %6396 = vmatpush1.bf16.msra.mxu0 %v4444
    %6397 = vmatprep.subr.bf16.mxu0 %v4463
    %6398 = vmatpush1.bf16.msra.mxu0 %v4462
    %6399 = vmatprep.subr.bf16.mxu0 %v4481
    %6400 = vmatpush1.bf16.msra.mxu0 %v4480
    %6401 = vmatprep.subr.bf16.mxu0 %v4499
    %6402 = vmatpush1.bf16.msra.mxu0 %v4498
    %6403 = vmatprep.subr.bf16.mxu0 %v4517
    %6404 = vmatpush1.bf16.msra.mxu0 %v4516
    %6405 = vmatprep.mubr.bf16.mxu0 %v103
    %6406 = vmatmul.mubr.bf16.gmra.mrb[0].mxu0 %v102
    %v6407 = vpop.f32.mrb[0].mxu0
    %v6408 = vadd.f32 %v6365, %v6407
    %v6409 = vpop.f32.mrb[0].mxu0
    %v6410 = vadd.f32 %v6367, %v6409
    %v6411 = vpop.f32.mrb[0].mxu0
    %v6412 = vadd.f32 %v6369, %v6411
    %v6413 = vpop.f32.mrb[0].mxu0
    %v6414 = vadd.f32 %v6371, %v6413
    %6415 = vdwg.mxu0
    %6416 = vmatprep.subr.bf16.mxu0 %v3673
    %6417 = vmatpush1.bf16.msra.mxu0 %v3672
    %6418 = vmatprep.subr.bf16.mxu0 %v3691
    %6419 = vmatpush1.bf16.msra.mxu0 %v3690
    %6420 = vmatprep.subr.bf16.mxu0 %v3709
    %6421 = vmatpush1.bf16.msra.mxu0 %v3708
    %6422 = vmatprep.subr.bf16.mxu0 %v3727
    %6423 = vmatpush1.bf16.msra.mxu0 %v3726
    %6424 = vmatprep.subr.bf16.mxu0 %v3745
    %6425 = vmatpush1.bf16.msra.mxu0 %v3744
    %6426 = vmatprep.subr.bf16.mxu0 %v3763
    %6427 = vmatpush1.bf16.msra.mxu0 %v3762
    %6428 = vmatprep.subr.bf16.mxu0 %v3781
    %6429 = vmatpush1.bf16.msra.mxu0 %v3780
    %6430 = vmatprep.subr.bf16.mxu0 %v3799
    %6431 = vmatpush1.bf16.msra.mxu0 %v3798
    %6432 = vmatprep.subr.bf16.mxu0 %v3817
    %6433 = vmatpush1.bf16.msra.mxu0 %v3816
    %6434 = vmatprep.subr.bf16.mxu0 %v3835
    %6435 = vmatpush1.bf16.msra.mxu0 %v3834
    %6436 = vmatprep.subr.bf16.mxu0 %v3853
    %6437 = vmatpush1.bf16.msra.mxu0 %v3852
    %6438 = vmatprep.subr.bf16.mxu0 %v3871
    %6439 = vmatpush1.bf16.msra.mxu0 %v3870
    %6440 = vmatprep.subr.bf16.mxu0 %v3889
    %6441 = vmatpush1.bf16.msra.mxu0 %v3888
    %6442 = vmatprep.subr.bf16.mxu0 %v3907
    %6443 = vmatpush1.bf16.msra.mxu0 %v3906
    %6444 = vmatprep.subr.bf16.mxu0 %v3925
    %6445 = vmatpush1.bf16.msra.mxu0 %v3924
    %6446 = vmatprep.subr.bf16.mxu0 %v3943
    %6447 = vmatpush1.bf16.msra.mxu0 %v3942
    %6448 = vmatprep.mubr.bf16.mxu0 %v99
    %6449 = vmatmul.mubr.bf16.gmra.mrb[0].mxu0 %v98
    %v6450 = vpop.f32.mrb[0].mxu0
    %v6451 = vadd.f32 %v1041, %v6450
    %v6452 = vpop.f32.mrb[0].mxu0
    %v6453 = vadd.f32 %v1045, %v6452
    %v6454 = vpop.f32.mrb[0].mxu0
    %v6455 = vadd.f32 %v1041, %v6454
    %v6456 = vpop.f32.mrb[0].mxu0
    %v6457 = vadd.f32 %v1045, %v6456
    %6458 = vdwg.mxu0
    %6459 = vmatprep.subr.bf16.mxu0 %v3961
    %6460 = vmatpush1.bf16.msra.mxu0 %v3960
    %6461 = vmatprep.subr.bf16.mxu0 %v3979
    %6462 = vmatpush1.bf16.msra.mxu0 %v3978
    %6463 = vmatprep.subr.bf16.mxu0 %v3997
    %6464 = vmatpush1.bf16.msra.mxu0 %v3996
    %6465 = vmatprep.subr.bf16.mxu0 %v4015
    %6466 = vmatpush1.bf16.msra.mxu0 %v4014
    %6467 = vmatprep.subr.bf16.mxu0 %v4033
    %6468 = vmatpush1.bf16.msra.mxu0 %v4032
    %6469 = vmatprep.subr.bf16.mxu0 %v4051
    %6470 = vmatpush1.bf16.msra.mxu0 %v4050
    %6471 = vmatprep.subr.bf16.mxu0 %v4069
    %6472 = vmatpush1.bf16.msra.mxu0 %v4068
    %6473 = vmatprep.subr.bf16.mxu0 %v4087
    %6474 = vmatpush1.bf16.msra.mxu0 %v4086
    %6475 = vmatprep.subr.bf16.mxu0 %v4105
    %6476 = vmatpush1.bf16.msra.mxu0 %v4104
    %6477 = vmatprep.subr.bf16.mxu0 %v4123
    %6478 = vmatpush1.bf16.msra.mxu0 %v4122
    %6479 = vmatprep.subr.bf16.mxu0 %v4141
    %6480 = vmatpush1.bf16.msra.mxu0 %v4140
    %6481 = vmatprep.subr.bf16.mxu0 %v4159
    %6482 = vmatpush1.bf16.msra.mxu0 %v4158
    %6483 = vmatprep.subr.bf16.mxu0 %v4177
    %6484 = vmatpush1.bf16.msra.mxu0 %v4176
    %6485 = vmatprep.subr.bf16.mxu0 %v4195
    %6486 = vmatpush1.bf16.msra.mxu0 %v4194
    %6487 = vmatprep.subr.bf16.mxu0 %v4213
    %6488 = vmatpush1.bf16.msra.mxu0 %v4212
    %6489 = vmatprep.subr.bf16.mxu0 %v4231
    %6490 = vmatpush1.bf16.msra.mxu0 %v4230
    %6491 = vmatprep.mubr.bf16.mxu0 %v101
    %6492 = vmatmul.mubr.bf16.gmra.mrb[0].mxu0 %v100
    %v6493 = vpop.f32.mrb[0].mxu0
    %v6494 = vadd.f32 %v6451, %v6493
    %v6495 = vpop.f32.mrb[0].mxu0
    %v6496 = vadd.f32 %v6453, %v6495
    %v6497 = vpop.f32.mrb[0].mxu0
    %v6498 = vadd.f32 %v6455, %v6497
    %v6499 = vpop.f32.mrb[0].mxu0
    %v6500 = vadd.f32 %v6457, %v6499
    %6501 = vdwg.mxu0
    %6502 = vmatprep.subr.bf16.mxu0 %v4249
    %6503 = vmatpush1.bf16.msra.mxu0 %v4248
    %6504 = vmatprep.subr.bf16.mxu0 %v4267
    %6505 = vmatpush1.bf16.msra.mxu0 %v4266
    %6506 = vmatprep.subr.bf16.mxu0 %v4285
    %6507 = vmatpush1.bf16.msra.mxu0 %v4284
    %6508 = vmatprep.subr.bf16.mxu0 %v4303
    %6509 = vmatpush1.bf16.msra.mxu0 %v4302
    %6510 = vmatprep.subr.bf16.mxu0 %v4321
    %6511 = vmatpush1.bf16.msra.mxu0 %v4320
    %6512 = vmatprep.subr.bf16.mxu0 %v4339
    %6513 = vmatpush1.bf16.msra.mxu0 %v4338
    %6514 = vmatprep.subr.bf16.mxu0 %v4357
    %6515 = vmatpush1.bf16.msra.mxu0 %v4356
    %6516 = vmatprep.subr.bf16.mxu0 %v4375
    %6517 = vmatpush1.bf16.msra.mxu0 %v4374
    %6518 = vmatprep.subr.bf16.mxu0 %v4393
    %6519 = vmatpush1.bf16.msra.mxu0 %v4392
    %6520 = vmatprep.subr.bf16.mxu0 %v4411
    %6521 = vmatpush1.bf16.msra.mxu0 %v4410
    %6522 = vmatprep.subr.bf16.mxu0 %v4429
    %6523 = vmatpush1.bf16.msra.mxu0 %v4428
    %6524 = vmatprep.subr.bf16.mxu0 %v4447
    %6525 = vmatpush1.bf16.msra.mxu0 %v4446
    %6526 = vmatprep.subr.bf16.mxu0 %v4465
    %6527 = vmatpush1.bf16.msra.mxu0 %v4464
    %6528 = vmatprep.subr.bf16.mxu0 %v4483
    %6529 = vmatpush1.bf16.msra.mxu0 %v4482
    %6530 = vmatprep.subr.bf16.mxu0 %v4501
    %6531 = vmatpush1.bf16.msra.mxu0 %v4500
    %6532 = vmatprep.subr.bf16.mxu0 %v4519
    %6533 = vmatpush1.bf16.msra.mxu0 %v4518
    %6534 = vmatprep.mubr.bf16.mxu0 %v103
    %6535 = vmatmul.mubr.bf16.gmra.mrb[0].mxu0 %v102
    %v6536 = vpop.f32.mrb[0].mxu0
    %v6537 = vadd.f32 %v6494, %v6536
    %v6538 = vpop.f32.mrb[0].mxu0
    %v6539 = vadd.f32 %v6496, %v6538
    %v6540 = vpop.f32.mrb[0].mxu0
    %v6541 = vadd.f32 %v6498, %v6540
    %v6542 = vpop.f32.mrb[0].mxu0
    %v6543 = vadd.f32 %v6500, %v6542
    %6544 = vdwg.mxu0
    %v6545 = vpack.c.bf16 %v5505, %v5505
    %v6546 = vpack.c.bf16 %v5892, %v5892
    %v6547 = vpack.c.bf16 %v6279, %v6279
    %6548 = vmatprep.subr.bf16.mxu0 0
    %6549 = vmatpush1.bf16.xpose.msra.mxu0 %v6546
    %6550 = vmatprep.subr.bf16.mxu0 0
    %6551 = vmatpush1.bf16.xpose.msra.mxu0 0
    %6552 = vmatprep.subr.bf16.mxu0 0
    %6553 = vmatpush1.bf16.xpose.msra.mxu0 0
    %6554 = vmatprep.subr.bf16.mxu0 0
    %6555 = vmatpush1.bf16.xpose.msra.mxu0 0
    %6556 = vmatprep.subr.bf16.mxu0 0
    %6557 = vmatpush1.bf16.xpose.msra.mxu0 0
    %6558 = vmatprep.subr.bf16.mxu0 0
    %6559 = vmatpush1.bf16.xpose.msra.mxu0 0
    %6560 = vmatprep.subr.bf16.mxu0 0
    %6561 = vmatpush1.bf16.xpose.msra.mxu0 0
    %6562 = vmatprep.subr.bf16.mxu0 0
    %6563 = vmatpush1.bf16.xpose.msra.mxu0 0
    %6564 = vmatprep.subr.bf16.mxu0 0
    %6565 = vmatpush1.bf16.xpose.msra.mxu0 0
    %6566 = vmatprep.subr.bf16.mxu0 0
    %6567 = vmatpush1.bf16.xpose.msra.mxu0 0
    %6568 = vmatprep.subr.bf16.mxu0 0
    %6569 = vmatpush1.bf16.xpose.msra.mxu0 0
    %6570 = vmatprep.subr.bf16.mxu0 0
    %6571 = vmatpush1.bf16.xpose.msra.mxu0 0
    %6572 = vmatprep.subr.bf16.mxu0 0
    %6573 = vmatpush1.bf16.xpose.msra.mxu0 0
    %6574 = vmatprep.subr.bf16.mxu0 0
    %6575 = vmatpush1.bf16.xpose.msra.mxu0 0
    %6576 = vmatprep.subr.bf16.mxu0 0
    %6577 = vmatpush1.bf16.xpose.msra.mxu0 0
    %6578 = vmatprep.subr.bf16.mxu0 0
    %6579 = vmatpush1.bf16.xpose.msra.mxu0 0
    %6580 = vmatprep.mubr.bf16.mxu0 0
    %6581 = vmatmul.mubr.bf16.gmra.mrb[0].mxu0 %v6545
    %v6582 = vpop.f32.mrb[0].mxu0
    %v6583 = vadd.f32 0.0, %v6582
    %v6584 = vpop.f32.mrb[0].mxu0
    %v6585 = vpop.f32.mrb[0].mxu0
    %v6586 = vpop.f32.mrb[0].mxu0
    %6587 = vdwg.mxu0
    %v6588 = vmul.f32 %v6583, 0.088388346
    %vm6589 = vcmask 64512
    %v6590 = vsel %vm6589, %v6588, -inf
    %6591 = vmax.xlane.f32.xlu0 %v6590
    %v6592 = vpop.xlane.xlu0 %6591
    %v6593 = vsub.f32 %v6588, %v6592
    %v6594 = vmul.f32 %v6593, 1.442695
    %v6595 = vpow.pop %v6594
    %v6596 = vsel %vm6589, %v6595, 0.0
    %6597 = vadd.xlane.f32.xlu0 %v6596
    %v6598 = vpop.xlane.xlu0 %6597
    %v6599 = vrcp.pop %v6598
    %v6600 = vmul.f32 %v6595, %v6599
    %v6601 = vpack.c.bf16 %v6600, %v6600
    %v6603 = vsel %vm6589, %v6601, 0
    %vm6605 = vcmask 1043456
    %v6607 = vsel %vm6605, %v6547, 0
    %6609 = vmatprep.subr.bf16.mxu0 0
    %6610 = vmatpush1.bf16.msra.mxu0 %v6607
    %6611 = vmatprep.subr.bf16.mxu0 0
    %6612 = vmatpush1.bf16.msra.mxu0 0
    %6613 = vmatprep.subr.bf16.mxu0 0
    %6614 = vmatpush1.bf16.msra.mxu0 0
    %6615 = vmatprep.subr.bf16.mxu0 0
    %6616 = vmatpush1.bf16.msra.mxu0 0
    %6617 = vmatprep.subr.bf16.mxu0 0
    %6618 = vmatpush1.bf16.msra.mxu0 0
    %6619 = vmatprep.subr.bf16.mxu0 0
    %6620 = vmatpush1.bf16.msra.mxu0 0
    %6621 = vmatprep.subr.bf16.mxu0 0
    %6622 = vmatpush1.bf16.msra.mxu0 0
    %6623 = vmatprep.subr.bf16.mxu0 0
    %6624 = vmatpush1.bf16.msra.mxu0 0
    %6625 = vmatprep.subr.bf16.mxu0 0
    %6626 = vmatpush1.bf16.msra.mxu0 0
    %6627 = vmatprep.subr.bf16.mxu0 0
    %6628 = vmatpush1.bf16.msra.mxu0 0
    %6629 = vmatprep.subr.bf16.mxu0 0
    %6630 = vmatpush1.bf16.msra.mxu0 0
    %6631 = vmatprep.subr.bf16.mxu0 0
    %6632 = vmatpush1.bf16.msra.mxu0 0
    %6633 = vmatprep.subr.bf16.mxu0 0
    %6634 = vmatpush1.bf16.msra.mxu0 0
    %6635 = vmatprep.subr.bf16.mxu0 0
    %6636 = vmatpush1.bf16.msra.mxu0 0
    %6637 = vmatprep.subr.bf16.mxu0 0
    %6638 = vmatpush1.bf16.msra.mxu0 0
    %6639 = vmatprep.subr.bf16.mxu0 0
    %6640 = vmatpush1.bf16.msra.mxu0 0
    %6641 = vmatprep.mubr.bf16.mxu0 0
    %6642 = vmatmul.mubr.bf16.gmra.mrb[0].mxu0 %v6603
    %v6643 = vpop.f32.mrb[0].mxu0
    %v6644 = vadd.f32 0.0, %v6643
    %v6645 = vpop.f32.mrb[0].mxu0
    %v6646 = vpop.f32.mrb[0].mxu0
    %v6647 = vpop.f32.mrb[0].mxu0
    %6648 = vdwg.mxu0
    %6649 = vst [vmem:[#allocation2] sm:$0xff] %v6644
    %v6650 = vpack.c.bf16 %v5507, %v5507
    %v6651 = vpack.c.bf16 %v5894, %v5894
    %v6652 = vpack.c.bf16 %v6281, %v6281
    %6653 = vmatprep.subr.bf16.mxu0 0
    %6654 = vmatpush1.bf16.xpose.msra.mxu0 %v6651
    %6655 = vmatprep.subr.bf16.mxu0 0
    %6656 = vmatpush1.bf16.xpose.msra.mxu0 0
    %6657 = vmatprep.subr.bf16.mxu0 0
    %6658 = vmatpush1.bf16.xpose.msra.mxu0 0
    %6659 = vmatprep.subr.bf16.mxu0 0
    %6660 = vmatpush1.bf16.xpose.msra.mxu0 0
    %6661 = vmatprep.subr.bf16.mxu0 0
    %6662 = vmatpush1.bf16.xpose.msra.mxu0 0
    %6663 = vmatprep.subr.bf16.mxu0 0
    %6664 = vmatpush1.bf16.xpose.msra.mxu0 0
    %6665 = vmatprep.subr.bf16.mxu0 0
    %6666 = vmatpush1.bf16.xpose.msra.mxu0 0
    %6667 = vmatprep.subr.bf16.mxu0 0
    %6668 = vmatpush1.bf16.xpose.msra.mxu0 0
    %6669 = vmatprep.subr.bf16.mxu0 0
    %6670 = vmatpush1.bf16.xpose.msra.mxu0 0
    %6671 = vmatprep.subr.bf16.mxu0 0
    %6672 = vmatpush1.bf16.xpose.msra.mxu0 0
    %6673 = vmatprep.subr.bf16.mxu0 0
    %6674 = vmatpush1.bf16.xpose.msra.mxu0 0
    %6675 = vmatprep.subr.bf16.mxu0 0
    %6676 = vmatpush1.bf16.xpose.msra.mxu0 0
    %6677 = vmatprep.subr.bf16.mxu0 0
    %6678 = vmatpush1.bf16.xpose.msra.mxu0 0
    %6679 = vmatprep.subr.bf16.mxu0 0
    %6680 = vmatpush1.bf16.xpose.msra.mxu0 0
    %6681 = vmatprep.subr.bf16.mxu0 0
    %6682 = vmatpush1.bf16.xpose.msra.mxu0 0
    %6683 = vmatprep.subr.bf16.mxu0 0
    %6684 = vmatpush1.bf16.xpose.msra.mxu0 0
    %6685 = vmatprep.mubr.bf16.mxu0 0
    %6686 = vmatmul.mubr.bf16.gmra.mrb[0].mxu0 %v6650
    %v6687 = vpop.f32.mrb[0].mxu0
    %v6688 = vadd.f32 0.0, %v6687
    %v6689 = vpop.f32.mrb[0].mxu0
    %v6690 = vpop.f32.mrb[0].mxu0
    %v6691 = vpop.f32.mrb[0].mxu0
    %6692 = vdwg.mxu0
    %v6693 = vmul.f32 %v6688, 0.088388346
    %v6694 = vsel %vm6589, %v6693, -inf
    %6695 = vmax.xlane.f32.xlu0 %v6694
    %v6696 = vpop.xlane.xlu0 %6695
    %v6697 = vsub.f32 %v6693, %v6696
    %v6698 = vmul.f32 %v6697, 1.442695
    %v6699 = vpow.pop %v6698
    %v6700 = vsel %vm6589, %v6699, 0.0
    %6701 = vadd.xlane.f32.xlu0 %v6700
    %v6702 = vpop.xlane.xlu0 %6701
    %v6703 = vrcp.pop %v6702
    %v6704 = vmul.f32 %v6699, %v6703
    %v6705 = vpack.c.bf16 %v6704, %v6704
    %v6707 = vsel %vm6589, %v6705, 0
    %v6710 = vsel %vm6605, %v6652, 0
    %6712 = vmatprep.subr.bf16.mxu0 0
    %6713 = vmatpush1.bf16.msra.mxu0 %v6710
    %6714 = vmatprep.subr.bf16.mxu0 0
    %6715 = vmatpush1.bf16.msra.mxu0 0
    %6716 = vmatprep.subr.bf16.mxu0 0
    %6717 = vmatpush1.bf16.msra.mxu0 0
    %6718 = vmatprep.subr.bf16.mxu0 0
    %6719 = vmatpush1.bf16.msra.mxu0 0
    %6720 = vmatprep.subr.bf16.mxu0 0
    %6721 = vmatpush1.bf16.msra.mxu0 0
    %6722 = vmatprep.subr.bf16.mxu0 0
    %6723 = vmatpush1.bf16.msra.mxu0 0
    %6724 = vmatprep.subr.bf16.mxu0 0
    %6725 = vmatpush1.bf16.msra.mxu0 0
    %6726 = vmatprep.subr.bf16.mxu0 0
    %6727 = vmatpush1.bf16.msra.mxu0 0
    %6728 = vmatprep.subr.bf16.mxu0 0
    %6729 = vmatpush1.bf16.msra.mxu0 0
    %6730 = vmatprep.subr.bf16.mxu0 0
    %6731 = vmatpush1.bf16.msra.mxu0 0
    %6732 = vmatprep.subr.bf16.mxu0 0
    %6733 = vmatpush1.bf16.msra.mxu0 0
    %6734 = vmatprep.subr.bf16.mxu0 0
    %6735 = vmatpush1.bf16.msra.mxu0 0
    %6736 = vmatprep.subr.bf16.mxu0 0
    %6737 = vmatpush1.bf16.msra.mxu0 0
    %6738 = vmatprep.subr.bf16.mxu0 0
    %6739 = vmatpush1.bf16.msra.mxu0 0
    %6740 = vmatprep.subr.bf16.mxu0 0
    %6741 = vmatpush1.bf16.msra.mxu0 0
    %6742 = vmatprep.subr.bf16.mxu0 0
    %6743 = vmatpush1.bf16.msra.mxu0 0
    %6744 = vmatprep.mubr.bf16.mxu0 0
    %6745 = vmatmul.mubr.bf16.gmra.mrb[0].mxu0 %v6707
    %v6746 = vpop.f32.mrb[0].mxu0
    %v6747 = vadd.f32 0.0, %v6746
    %v6748 = vpop.f32.mrb[0].mxu0
    %v6749 = vpop.f32.mrb[0].mxu0
    %v6750 = vpop.f32.mrb[0].mxu0
    %6751 = vdwg.mxu0
    %6752 = vst [vmem:[#allocation2 + $0x8] sm:$0xff] %v6747
    %v6753 = vpack.c.bf16 %v5634, %v5634
    %v6754 = vpack.c.bf16 %v6021, %v6021
    %v6755 = vpack.c.bf16 %v6408, %v6408
    %6756 = vmatprep.subr.bf16.mxu0 0
    %6757 = vmatpush1.bf16.xpose.msra.mxu0 %v6754
    %6758 = vmatprep.subr.bf16.mxu0 0
    %6759 = vmatpush1.bf16.xpose.msra.mxu0 0
    %6760 = vmatprep.subr.bf16.mxu0 0
    %6761 = vmatpush1.bf16.xpose.msra.mxu0 0
    %6762 = vmatprep.subr.bf16.mxu0 0
    %6763 = vmatpush1.bf16.xpose.msra.mxu0 0
    %6764 = vmatprep.subr.bf16.mxu0 0
    %6765 = vmatpush1.bf16.xpose.msra.mxu0 0
    %6766 = vmatprep.subr.bf16.mxu0 0
    %6767 = vmatpush1.bf16.xpose.msra.mxu0 0
    %6768 = vmatprep.subr.bf16.mxu0 0
    %6769 = vmatpush1.bf16.xpose.msra.mxu0 0
    %6770 = vmatprep.subr.bf16.mxu0 0
    %6771 = vmatpush1.bf16.xpose.msra.mxu0 0
    %6772 = vmatprep.subr.bf16.mxu0 0
    %6773 = vmatpush1.bf16.xpose.msra.mxu0 0
    %6774 = vmatprep.subr.bf16.mxu0 0
    %6775 = vmatpush1.bf16.xpose.msra.mxu0 0
    %6776 = vmatprep.subr.bf16.mxu0 0
    %6777 = vmatpush1.bf16.xpose.msra.mxu0 0
    %6778 = vmatprep.subr.bf16.mxu0 0
    %6779 = vmatpush1.bf16.xpose.msra.mxu0 0
    %6780 = vmatprep.subr.bf16.mxu0 0
    %6781 = vmatpush1.bf16.xpose.msra.mxu0 0
    %6782 = vmatprep.subr.bf16.mxu0 0
    %6783 = vmatpush1.bf16.xpose.msra.mxu0 0
    %6784 = vmatprep.subr.bf16.mxu0 0
    %6785 = vmatpush1.bf16.xpose.msra.mxu0 0
    %6786 = vmatprep.subr.bf16.mxu0 0
    %6787 = vmatpush1.bf16.xpose.msra.mxu0 0
    %6788 = vmatprep.mubr.bf16.mxu0 0
    %6789 = vmatmul.mubr.bf16.gmra.mrb[0].mxu0 %v6753
    %v6790 = vpop.f32.mrb[0].mxu0
    %v6791 = vadd.f32 0.0, %v6790
    %v6792 = vpop.f32.mrb[0].mxu0
    %v6793 = vpop.f32.mrb[0].mxu0
    %v6794 = vpop.f32.mrb[0].mxu0
    %6795 = vdwg.mxu0
    %v6796 = vmul.f32 %v6791, 0.088388346
    %v6797 = vsel %vm6589, %v6796, -inf
    %6798 = vmax.xlane.f32.xlu0 %v6797
    %v6799 = vpop.xlane.xlu0 %6798
    %v6800 = vsub.f32 %v6796, %v6799
    %v6801 = vmul.f32 %v6800, 1.442695
    %v6802 = vpow.pop %v6801
    %v6803 = vsel %vm6589, %v6802, 0.0
    %6804 = vadd.xlane.f32.xlu0 %v6803
    %v6805 = vpop.xlane.xlu0 %6804
    %v6806 = vrcp.pop %v6805
    %v6807 = vmul.f32 %v6802, %v6806
    %v6808 = vpack.c.bf16 %v6807, %v6807
    %v6810 = vsel %vm6589, %v6808, 0
    %v6813 = vsel %vm6605, %v6755, 0
    %6815 = vmatprep.subr.bf16.mxu0 0
    %6816 = vmatpush1.bf16.msra.mxu0 %v6813
    %6817 = vmatprep.subr.bf16.mxu0 0
    %6818 = vmatpush1.bf16.msra.mxu0 0
    %6819 = vmatprep.subr.bf16.mxu0 0
    %6820 = vmatpush1.bf16.msra.mxu0 0
    %6821 = vmatprep.subr.bf16.mxu0 0
    %6822 = vmatpush1.bf16.msra.mxu0 0
    %6823 = vmatprep.subr.bf16.mxu0 0
    %6824 = vmatpush1.bf16.msra.mxu0 0
    %6825 = vmatprep.subr.bf16.mxu0 0
    %6826 = vmatpush1.bf16.msra.mxu0 0
    %6827 = vmatprep.subr.bf16.mxu0 0
    %6828 = vmatpush1.bf16.msra.mxu0 0
    %6829 = vmatprep.subr.bf16.mxu0 0
    %6830 = vmatpush1.bf16.msra.mxu0 0
    %6831 = vmatprep.subr.bf16.mxu0 0
    %6832 = vmatpush1.bf16.msra.mxu0 0
    %6833 = vmatprep.subr.bf16.mxu0 0
    %6834 = vmatpush1.bf16.msra.mxu0 0
    %6835 = vmatprep.subr.bf16.mxu0 0
    %6836 = vmatpush1.bf16.msra.mxu0 0
    %6837 = vmatprep.subr.bf16.mxu0 0
    %6838 = vmatpush1.bf16.msra.mxu0 0
    %6839 = vmatprep.subr.bf16.mxu0 0
    %6840 = vmatpush1.bf16.msra.mxu0 0
    %6841 = vmatprep.subr.bf16.mxu0 0
    %6842 = vmatpush1.bf16.msra.mxu0 0
    %6843 = vmatprep.subr.bf16.mxu0 0
    %6844 = vmatpush1.bf16.msra.mxu0 0
    %6845 = vmatprep.subr.bf16.mxu0 0
    %6846 = vmatpush1.bf16.msra.mxu0 0
    %6847 = vmatprep.mubr.bf16.mxu0 0
    %6848 = vmatmul.mubr.bf16.gmra.mrb[0].mxu0 %v6810
    %v6849 = vpop.f32.mrb[0].mxu0
    %v6850 = vadd.f32 0.0, %v6849
    %v6851 = vpop.f32.mrb[0].mxu0
    %v6852 = vpop.f32.mrb[0].mxu0
    %v6853 = vpop.f32.mrb[0].mxu0
    %6854 = vdwg.mxu0
    %6855 = vst [vmem:[#allocation2 + $0x10] sm:$0xff] %v6850
    %v6856 = vpack.c.bf16 %v5636, %v5636
    %v6857 = vpack.c.bf16 %v6023, %v6023
    %v6858 = vpack.c.bf16 %v6410, %v6410
    %6859 = vmatprep.subr.bf16.mxu0 0
    %6860 = vmatpush1.bf16.xpose.msra.mxu0 %v6857
    %6861 = vmatprep.subr.bf16.mxu0 0
    %6862 = vmatpush1.bf16.xpose.msra.mxu0 0
    %6863 = vmatprep.subr.bf16.mxu0 0
    %6864 = vmatpush1.bf16.xpose.msra.mxu0 0
    %6865 = vmatprep.subr.bf16.mxu0 0
    %6866 = vmatpush1.bf16.xpose.msra.mxu0 0
    %6867 = vmatprep.subr.bf16.mxu0 0
    %6868 = vmatpush1.bf16.xpose.msra.mxu0 0
    %6869 = vmatprep.subr.bf16.mxu0 0
    %6870 = vmatpush1.bf16.xpose.msra.mxu0 0
    %6871 = vmatprep.subr.bf16.mxu0 0
    %6872 = vmatpush1.bf16.xpose.msra.mxu0 0
    %6873 = vmatprep.subr.bf16.mxu0 0
    %6874 = vmatpush1.bf16.xpose.msra.mxu0 0
    %6875 = vmatprep.subr.bf16.mxu0 0
    %6876 = vmatpush1.bf16.xpose.msra.mxu0 0
    %6877 = vmatprep.subr.bf16.mxu0 0
    %6878 = vmatpush1.bf16.xpose.msra.mxu0 0
    %6879 = vmatprep.subr.bf16.mxu0 0
    %6880 = vmatpush1.bf16.xpose.msra.mxu0 0
    %6881 = vmatprep.subr.bf16.mxu0 0
    %6882 = vmatpush1.bf16.xpose.msra.mxu0 0
    %6883 = vmatprep.subr.bf16.mxu0 0
    %6884 = vmatpush1.bf16.xpose.msra.mxu0 0
    %6885 = vmatprep.subr.bf16.mxu0 0
    %6886 = vmatpush1.bf16.xpose.msra.mxu0 0
    %6887 = vmatprep.subr.bf16.mxu0 0
    %6888 = vmatpush1.bf16.xpose.msra.mxu0 0
    %6889 = vmatprep.subr.bf16.mxu0 0
    %6890 = vmatpush1.bf16.xpose.msra.mxu0 0
    %6891 = vmatprep.mubr.bf16.mxu0 0
    %6892 = vmatmul.mubr.bf16.gmra.mrb[0].mxu0 %v6856
    %v6893 = vpop.f32.mrb[0].mxu0
    %v6894 = vadd.f32 0.0, %v6893
    %v6895 = vpop.f32.mrb[0].mxu0
    %v6896 = vpop.f32.mrb[0].mxu0
    %v6897 = vpop.f32.mrb[0].mxu0
    %6898 = vdwg.mxu0
    %v6899 = vmul.f32 %v6894, 0.088388346
    %v6900 = vsel %vm6589, %v6899, -inf
    %6901 = vmax.xlane.f32.xlu0 %v6900
    %v6902 = vpop.xlane.xlu0 %6901
    %v6903 = vsub.f32 %v6899, %v6902
    %v6904 = vmul.f32 %v6903, 1.442695
    %v6905 = vpow.pop %v6904
    %v6906 = vsel %vm6589, %v6905, 0.0
    %6907 = vadd.xlane.f32.xlu0 %v6906
    %v6908 = vpop.xlane.xlu0 %6907
    %v6909 = vrcp.pop %v6908
    %v6910 = vmul.f32 %v6905, %v6909
    %v6911 = vpack.c.bf16 %v6910, %v6910
    %v6913 = vsel %vm6589, %v6911, 0
    %v6916 = vsel %vm6605, %v6858, 0
    %6918 = vmatprep.subr.bf16.mxu0 0
    %6919 = vmatpush1.bf16.msra.mxu0 %v6916
    %6920 = vmatprep.subr.bf16.mxu0 0
    %6921 = vmatpush1.bf16.msra.mxu0 0
    %6922 = vmatprep.subr.bf16.mxu0 0
    %6923 = vmatpush1.bf16.msra.mxu0 0
    %6924 = vmatprep.subr.bf16.mxu0 0
    %6925 = vmatpush1.bf16.msra.mxu0 0
    %6926 = vmatprep.subr.bf16.mxu0 0
    %6927 = vmatpush1.bf16.msra.mxu0 0
    %6928 = vmatprep.subr.bf16.mxu0 0
    %6929 = vmatpush1.bf16.msra.mxu0 0
    %6930 = vmatprep.subr.bf16.mxu0 0
    %6931 = vmatpush1.bf16.msra.mxu0 0
    %6932 = vmatprep.subr.bf16.mxu0 0
    %6933 = vmatpush1.bf16.msra.mxu0 0
    %6934 = vmatprep.subr.bf16.mxu0 0
    %6935 = vmatpush1.bf16.msra.mxu0 0
    %6936 = vmatprep.subr.bf16.mxu0 0
    %6937 = vmatpush1.bf16.msra.mxu0 0
    %6938 = vmatprep.subr.bf16.mxu0 0
    %6939 = vmatpush1.bf16.msra.mxu0 0
    %6940 = vmatprep.subr.bf16.mxu0 0
    %6941 = vmatpush1.bf16.msra.mxu0 0
    %6942 = vmatprep.subr.bf16.mxu0 0
    %6943 = vmatpush1.bf16.msra.mxu0 0
    %6944 = vmatprep.subr.bf16.mxu0 0
    %6945 = vmatpush1.bf16.msra.mxu0 0
    %6946 = vmatprep.subr.bf16.mxu0 0
    %6947 = vmatpush1.bf16.msra.mxu0 0
    %6948 = vmatprep.subr.bf16.mxu0 0
    %6949 = vmatpush1.bf16.msra.mxu0 0
    %6950 = vmatprep.mubr.bf16.mxu0 0
    %6951 = vmatmul.mubr.bf16.gmra.mrb[0].mxu0 %v6913
    %v6952 = vpop.f32.mrb[0].mxu0
    %v6953 = vadd.f32 0.0, %v6952
    %v6954 = vpop.f32.mrb[0].mxu0
    %v6955 = vpop.f32.mrb[0].mxu0
    %v6956 = vpop.f32.mrb[0].mxu0
    %6957 = vdwg.mxu0
    %6958 = vst [vmem:[#allocation2 + $0x18] sm:$0xff] %v6953
    %v6959 = vpack.c.bf16 %v5763, %v5763
    %v6960 = vpack.c.bf16 %v6150, %v6150
    %v6961 = vpack.c.bf16 %v6537, %v6537
    %6962 = vmatprep.subr.bf16.mxu0 0
    %6963 = vmatpush1.bf16.xpose.msra.mxu0 %v6960
    %6964 = vmatprep.subr.bf16.mxu0 0
    %6965 = vmatpush1.bf16.xpose.msra.mxu0 0
    %6966 = vmatprep.subr.bf16.mxu0 0
    %6967 = vmatpush1.bf16.xpose.msra.mxu0 0
    %6968 = vmatprep.subr.bf16.mxu0 0
    %6969 = vmatpush1.bf16.xpose.msra.mxu0 0
    %6970 = vmatprep.subr.bf16.mxu0 0
    %6971 = vmatpush1.bf16.xpose.msra.mxu0 0
    %6972 = vmatprep.subr.bf16.mxu0 0
    %6973 = vmatpush1.bf16.xpose.msra.mxu0 0
    %6974 = vmatprep.subr.bf16.mxu0 0
    %6975 = vmatpush1.bf16.xpose.msra.mxu0 0
    %6976 = vmatprep.subr.bf16.mxu0 0
    %6977 = vmatpush1.bf16.xpose.msra.mxu0 0
    %6978 = vmatprep.subr.bf16.mxu0 0
    %6979 = vmatpush1.bf16.xpose.msra.mxu0 0
    %6980 = vmatprep.subr.bf16.mxu0 0
    %6981 = vmatpush1.bf16.xpose.msra.mxu0 0
    %6982 = vmatprep.subr.bf16.mxu0 0
    %6983 = vmatpush1.bf16.xpose.msra.mxu0 0
    %6984 = vmatprep.subr.bf16.mxu0 0
    %6985 = vmatpush1.bf16.xpose.msra.mxu0 0
    %6986 = vmatprep.subr.bf16.mxu0 0
    %6987 = vmatpush1.bf16.xpose.msra.mxu0 0
    %6988 = vmatprep.subr.bf16.mxu0 0
    %6989 = vmatpush1.bf16.xpose.msra.mxu0 0
    %6990 = vmatprep.subr.bf16.mxu0 0
    %6991 = vmatpush1.bf16.xpose.msra.mxu0 0
    %6992 = vmatprep.subr.bf16.mxu0 0
    %6993 = vmatpush1.bf16.xpose.msra.mxu0 0
    %6994 = vmatprep.mubr.bf16.mxu0 0
    %6995 = vmatmul.mubr.bf16.gmra.mrb[0].mxu0 %v6959
    %v6996 = vpop.f32.mrb[0].mxu0
    %v6997 = vadd.f32 0.0, %v6996
    %v6998 = vpop.f32.mrb[0].mxu0
    %v6999 = vpop.f32.mrb[0].mxu0
    %v7000 = vpop.f32.mrb[0].mxu0
    %7001 = vdwg.mxu0
    %v7002 = vmul.f32 %v6997, 0.088388346
    %v7003 = vsel %vm6589, %v7002, -inf
    %7004 = vmax.xlane.f32.xlu0 %v7003
    %v7005 = vpop.xlane.xlu0 %7004
    %v7006 = vsub.f32 %v7002, %v7005
    %v7007 = vmul.f32 %v7006, 1.442695
    %v7008 = vpow.pop %v7007
    %v7009 = vsel %vm6589, %v7008, 0.0
    %7010 = vadd.xlane.f32.xlu0 %v7009
    %v7011 = vpop.xlane.xlu0 %7010
    %v7012 = vrcp.pop %v7011
    %v7013 = vmul.f32 %v7008, %v7012
    %v7014 = vpack.c.bf16 %v7013, %v7013
    %v7016 = vsel %vm6589, %v7014, 0
    %v7019 = vsel %vm6605, %v6961, 0
    %7021 = vmatprep.subr.bf16.mxu0 0
    %7022 = vmatpush1.bf16.msra.mxu0 %v7019
    %7023 = vmatprep.subr.bf16.mxu0 0
    %7024 = vmatpush1.bf16.msra.mxu0 0
    %7025 = vmatprep.subr.bf16.mxu0 0
    %7026 = vmatpush1.bf16.msra.mxu0 0
    %7027 = vmatprep.subr.bf16.mxu0 0
    %7028 = vmatpush1.bf16.msra.mxu0 0
    %7029 = vmatprep.subr.bf16.mxu0 0
    %7030 = vmatpush1.bf16.msra.mxu0 0
    %7031 = vmatprep.subr.bf16.mxu0 0
    %7032 = vmatpush1.bf16.msra.mxu0 0
    %7033 = vmatprep.subr.bf16.mxu0 0
    %7034 = vmatpush1.bf16.msra.mxu0 0
    %7035 = vmatprep.subr.bf16.mxu0 0
    %7036 = vmatpush1.bf16.msra.mxu0 0
    %7037 = vmatprep.subr.bf16.mxu0 0
    %7038 = vmatpush1.bf16.msra.mxu0 0
    %7039 = vmatprep.subr.bf16.mxu0 0
    %7040 = vmatpush1.bf16.msra.mxu0 0
    %7041 = vmatprep.subr.bf16.mxu0 0
    %7042 = vmatpush1.bf16.msra.mxu0 0
    %7043 = vmatprep.subr.bf16.mxu0 0
    %7044 = vmatpush1.bf16.msra.mxu0 0
    %7045 = vmatprep.subr.bf16.mxu0 0
    %7046 = vmatpush1.bf16.msra.mxu0 0
    %7047 = vmatprep.subr.bf16.mxu0 0
    %7048 = vmatpush1.bf16.msra.mxu0 0
    %7049 = vmatprep.subr.bf16.mxu0 0
    %7050 = vmatpush1.bf16.msra.mxu0 0
    %7051 = vmatprep.subr.bf16.mxu0 0
    %7052 = vmatpush1.bf16.msra.mxu0 0
    %7053 = vmatprep.mubr.bf16.mxu0 0
    %7054 = vmatmul.mubr.bf16.gmra.mrb[0].mxu0 %v7016
    %v7055 = vpop.f32.mrb[0].mxu0
    %v7056 = vadd.f32 0.0, %v7055
    %v7057 = vpop.f32.mrb[0].mxu0
    %v7058 = vpop.f32.mrb[0].mxu0
    %v7059 = vpop.f32.mrb[0].mxu0
    %7060 = vdwg.mxu0
    %7061 = vst [vmem:[#allocation2 + $0x20] sm:$0xff] %v7056
    %v7062 = vpack.c.bf16 %v5765, %v5765
    %v7063 = vpack.c.bf16 %v6152, %v6152
    %v7064 = vpack.c.bf16 %v6539, %v6539
    %7065 = vmatprep.subr.bf16.mxu0 0
    %7066 = vmatpush1.bf16.xpose.msra.mxu0 %v7063
    %7067 = vmatprep.subr.bf16.mxu0 0
    %7068 = vmatpush1.bf16.xpose.msra.mxu0 0
    %7069 = vmatprep.subr.bf16.mxu0 0
    %7070 = vmatpush1.bf16.xpose.msra.mxu0 0
    %7071 = vmatprep.subr.bf16.mxu0 0
    %7072 = vmatpush1.bf16.xpose.msra.mxu0 0
    %7073 = vmatprep.subr.bf16.mxu0 0
    %7074 = vmatpush1.bf16.xpose.msra.mxu0 0
    %7075 = vmatprep.subr.bf16.mxu0 0
    %7076 = vmatpush1.bf16.xpose.msra.mxu0 0
    %7077 = vmatprep.subr.bf16.mxu0 0
    %7078 = vmatpush1.bf16.xpose.msra.mxu0 0
    %7079 = vmatprep.subr.bf16.mxu0 0
    %7080 = vmatpush1.bf16.xpose.msra.mxu0 0
    %7081 = vmatprep.subr.bf16.mxu0 0
    %7082 = vmatpush1.bf16.xpose.msra.mxu0 0
    %7083 = vmatprep.subr.bf16.mxu0 0
    %7084 = vmatpush1.bf16.xpose.msra.mxu0 0
    %7085 = vmatprep.subr.bf16.mxu0 0
    %7086 = vmatpush1.bf16.xpose.msra.mxu0 0
    %7087 = vmatprep.subr.bf16.mxu0 0
    %7088 = vmatpush1.bf16.xpose.msra.mxu0 0
    %7089 = vmatprep.subr.bf16.mxu0 0
    %7090 = vmatpush1.bf16.xpose.msra.mxu0 0
    %7091 = vmatprep.subr.bf16.mxu0 0
    %7092 = vmatpush1.bf16.xpose.msra.mxu0 0
    %7093 = vmatprep.subr.bf16.mxu0 0
    %7094 = vmatpush1.bf16.xpose.msra.mxu0 0
    %7095 = vmatprep.subr.bf16.mxu0 0
    %7096 = vmatpush1.bf16.xpose.msra.mxu0 0
    %7097 = vmatprep.mubr.bf16.mxu0 0
    %7098 = vmatmul.mubr.bf16.gmra.mrb[0].mxu0 %v7062
    %v7099 = vpop.f32.mrb[0].mxu0
    %v7100 = vadd.f32 0.0, %v7099
    %v7101 = vpop.f32.mrb[0].mxu0
    %v7102 = vpop.f32.mrb[0].mxu0
    %v7103 = vpop.f32.mrb[0].mxu0
    %7104 = vdwg.mxu0
    %v7105 = vmul.f32 %v7100, 0.088388346
    %v7106 = vsel %vm6589, %v7105, -inf
    %7107 = vmax.xlane.f32.xlu0 %v7106
    %v7108 = vpop.xlane.xlu0 %7107
    %v7109 = vsub.f32 %v7105, %v7108
    %v7110 = vmul.f32 %v7109, 1.442695
    %v7111 = vpow.pop %v7110
    %v7112 = vsel %vm6589, %v7111, 0.0
    %7113 = vadd.xlane.f32.xlu0 %v7112
    %v7114 = vpop.xlane.xlu0 %7113
    %v7115 = vrcp.pop %v7114
    %v7116 = vmul.f32 %v7111, %v7115
    %v7117 = vpack.c.bf16 %v7116, %v7116
    %v7119 = vsel %vm6589, %v7117, 0
    %v7122 = vsel %vm6605, %v7064, 0
    %7124 = vmatprep.subr.bf16.mxu0 0
    %7125 = vmatpush1.bf16.msra.mxu0 %v7122
    %7126 = vmatprep.subr.bf16.mxu0 0
    %7127 = vmatpush1.bf16.msra.mxu0 0
    %7128 = vmatprep.subr.bf16.mxu0 0
    %7129 = vmatpush1.bf16.msra.mxu0 0
    %7130 = vmatprep.subr.bf16.mxu0 0
    %7131 = vmatpush1.bf16.msra.mxu0 0
    %7132 = vmatprep.subr.bf16.mxu0 0
    %7133 = vmatpush1.bf16.msra.mxu0 0
    %7134 = vmatprep.subr.bf16.mxu0 0
    %7135 = vmatpush1.bf16.msra.mxu0 0
    %7136 = vmatprep.subr.bf16.mxu0 0
    %7137 = vmatpush1.bf16.msra.mxu0 0
    %7138 = vmatprep.subr.bf16.mxu0 0
    %7139 = vmatpush1.bf16.msra.mxu0 0
    %7140 = vmatprep.subr.bf16.mxu0 0
    %7141 = vmatpush1.bf16.msra.mxu0 0
    %7142 = vmatprep.subr.bf16.mxu0 0
    %7143 = vmatpush1.bf16.msra.mxu0 0
    %7144 = vmatprep.subr.bf16.mxu0 0
    %7145 = vmatpush1.bf16.msra.mxu0 0
    %7146 = vmatprep.subr.bf16.mxu0 0
    %7147 = vmatpush1.bf16.msra.mxu0 0
    %7148 = vmatprep.subr.bf16.mxu0 0
    %7149 = vmatpush1.bf16.msra.mxu0 0
    %7150 = vmatprep.subr.bf16.mxu0 0
    %7151 = vmatpush1.bf16.msra.mxu0 0
    %7152 = vmatprep.subr.bf16.mxu0 0
    %7153 = vmatpush1.bf16.msra.mxu0 0
    %7154 = vmatprep.subr.bf16.mxu0 0
    %7155 = vmatpush1.bf16.msra.mxu0 0
    %7156 = vmatprep.mubr.bf16.mxu0 0
    %7157 = vmatmul.mubr.bf16.gmra.mrb[0].mxu0 %v7119
    %v7158 = vpop.f32.mrb[0].mxu0
    %v7159 = vadd.f32 0.0, %v7158
    %v7160 = vpop.f32.mrb[0].mxu0
    %v7161 = vpop.f32.mrb[0].mxu0
    %v7162 = vpop.f32.mrb[0].mxu0
    %7163 = vdwg.mxu0
    %7164 = vst [vmem:[#allocation2 + $0x28] sm:$0xff] %v7159
    %v7165 = vpack.c.bf16 %v5509, %v5509
    %v7166 = vpack.c.bf16 %v5896, %v5896
    %v7167 = vpack.c.bf16 %v6283, %v6283
    %7168 = vmatprep.subr.bf16.mxu0 0
    %7169 = vmatpush1.bf16.xpose.msra.mxu0 %v7166
    %7170 = vmatprep.subr.bf16.mxu0 0
    %7171 = vmatpush1.bf16.xpose.msra.mxu0 0
    %7172 = vmatprep.subr.bf16.mxu0 0
    %7173 = vmatpush1.bf16.xpose.msra.mxu0 0
    %7174 = vmatprep.subr.bf16.mxu0 0
    %7175 = vmatpush1.bf16.xpose.msra.mxu0 0
    %7176 = vmatprep.subr.bf16.mxu0 0
    %7177 = vmatpush1.bf16.xpose.msra.mxu0 0
    %7178 = vmatprep.subr.bf16.mxu0 0
    %7179 = vmatpush1.bf16.xpose.msra.mxu0 0
    %7180 = vmatprep.subr.bf16.mxu0 0
    %7181 = vmatpush1.bf16.xpose.msra.mxu0 0
    %7182 = vmatprep.subr.bf16.mxu0 0
    %7183 = vmatpush1.bf16.xpose.msra.mxu0 0
    %7184 = vmatprep.subr.bf16.mxu0 0
    %7185 = vmatpush1.bf16.xpose.msra.mxu0 0
    %7186 = vmatprep.subr.bf16.mxu0 0
    %7187 = vmatpush1.bf16.xpose.msra.mxu0 0
    %7188 = vmatprep.subr.bf16.mxu0 0
    %7189 = vmatpush1.bf16.xpose.msra.mxu0 0
    %7190 = vmatprep.subr.bf16.mxu0 0
    %7191 = vmatpush1.bf16.xpose.msra.mxu0 0
    %7192 = vmatprep.subr.bf16.mxu0 0
    %7193 = vmatpush1.bf16.xpose.msra.mxu0 0
    %7194 = vmatprep.subr.bf16.mxu0 0
    %7195 = vmatpush1.bf16.xpose.msra.mxu0 0
    %7196 = vmatprep.subr.bf16.mxu0 0
    %7197 = vmatpush1.bf16.xpose.msra.mxu0 0
    %7198 = vmatprep.subr.bf16.mxu0 0
    %7199 = vmatpush1.bf16.xpose.msra.mxu0 0
    %7200 = vmatprep.mubr.bf16.mxu0 0
    %7201 = vmatmul.mubr.bf16.gmra.mrb[0].mxu0 %v7165
    %v7202 = vpop.f32.mrb[0].mxu0
    %v7203 = vadd.f32 0.0, %v7202
    %v7204 = vpop.f32.mrb[0].mxu0
    %v7205 = vpop.f32.mrb[0].mxu0
    %v7206 = vpop.f32.mrb[0].mxu0
    %7207 = vdwg.mxu0
    %v7208 = vmul.f32 %v7203, 0.088388346
    %v7209 = vsel %vm6589, %v7208, -inf
    %7210 = vmax.xlane.f32.xlu0 %v7209
    %v7211 = vpop.xlane.xlu0 %7210
    %v7212 = vsub.f32 %v7208, %v7211
    %v7213 = vmul.f32 %v7212, 1.442695
    %v7214 = vpow.pop %v7213
    %v7215 = vsel %vm6589, %v7214, 0.0
    %7216 = vadd.xlane.f32.xlu0 %v7215
    %v7217 = vpop.xlane.xlu0 %7216
    %v7218 = vrcp.pop %v7217
    %v7219 = vmul.f32 %v7214, %v7218
    %v7220 = vpack.c.bf16 %v7219, %v7219
    %v7222 = vsel %vm6589, %v7220, 0
    %v7225 = vsel %vm6605, %v7167, 0
    %7227 = vmatprep.subr.bf16.mxu0 0
    %7228 = vmatpush1.bf16.msra.mxu0 %v7225
    %7229 = vmatprep.subr.bf16.mxu0 0
    %7230 = vmatpush1.bf16.msra.mxu0 0
    %7231 = vmatprep.subr.bf16.mxu0 0
    %7232 = vmatpush1.bf16.msra.mxu0 0
    %7233 = vmatprep.subr.bf16.mxu0 0
    %7234 = vmatpush1.bf16.msra.mxu0 0
    %7235 = vmatprep.subr.bf16.mxu0 0
    %7236 = vmatpush1.bf16.msra.mxu0 0
    %7237 = vmatprep.subr.bf16.mxu0 0
    %7238 = vmatpush1.bf16.msra.mxu0 0
    %7239 = vmatprep.subr.bf16.mxu0 0
    %7240 = vmatpush1.bf16.msra.mxu0 0
    %7241 = vmatprep.subr.bf16.mxu0 0
    %7242 = vmatpush1.bf16.msra.mxu0 0
    %7243 = vmatprep.subr.bf16.mxu0 0
    %7244 = vmatpush1.bf16.msra.mxu0 0
    %7245 = vmatprep.subr.bf16.mxu0 0
    %7246 = vmatpush1.bf16.msra.mxu0 0
    %7247 = vmatprep.subr.bf16.mxu0 0
    %7248 = vmatpush1.bf16.msra.mxu0 0
    %7249 = vmatprep.subr.bf16.mxu0 0
    %7250 = vmatpush1.bf16.msra.mxu0 0
    %7251 = vmatprep.subr.bf16.mxu0 0
    %7252 = vmatpush1.bf16.msra.mxu0 0
    %7253 = vmatprep.subr.bf16.mxu0 0
    %7254 = vmatpush1.bf16.msra.mxu0 0
    %7255 = vmatprep.subr.bf16.mxu0 0
    %7256 = vmatpush1.bf16.msra.mxu0 0
    %7257 = vmatprep.subr.bf16.mxu0 0
    %7258 = vmatpush1.bf16.msra.mxu0 0
    %7259 = vmatprep.mubr.bf16.mxu0 0
    %7260 = vmatmul.mubr.bf16.gmra.mrb[0].mxu0 %v7222
    %v7261 = vpop.f32.mrb[0].mxu0
    %v7262 = vadd.f32 0.0, %v7261
    %v7263 = vpop.f32.mrb[0].mxu0
    %v7264 = vpop.f32.mrb[0].mxu0
    %v7265 = vpop.f32.mrb[0].mxu0
    %7266 = vdwg.mxu0
    %7267 = vst [vmem:[#allocation2 + $0x30] sm:$0xff] %v7262
    %v7268 = vpack.c.bf16 %v5511, %v5511
    %v7269 = vpack.c.bf16 %v5898, %v5898
    %v7270 = vpack.c.bf16 %v6285, %v6285
    %7271 = vmatprep.subr.bf16.mxu0 0
    %7272 = vmatpush1.bf16.xpose.msra.mxu0 %v7269
    %7273 = vmatprep.subr.bf16.mxu0 0
    %7274 = vmatpush1.bf16.xpose.msra.mxu0 0
    %7275 = vmatprep.subr.bf16.mxu0 0
    %7276 = vmatpush1.bf16.xpose.msra.mxu0 0
    %7277 = vmatprep.subr.bf16.mxu0 0
    %7278 = vmatpush1.bf16.xpose.msra.mxu0 0
    %7279 = vmatprep.subr.bf16.mxu0 0
    %7280 = vmatpush1.bf16.xpose.msra.mxu0 0
    %7281 = vmatprep.subr.bf16.mxu0 0
    %7282 = vmatpush1.bf16.xpose.msra.mxu0 0
    %7283 = vmatprep.subr.bf16.mxu0 0
    %7284 = vmatpush1.bf16.xpose.msra.mxu0 0
    %7285 = vmatprep.subr.bf16.mxu0 0
    %7286 = vmatpush1.bf16.xpose.msra.mxu0 0
    %7287 = vmatprep.subr.bf16.mxu0 0
    %7288 = vmatpush1.bf16.xpose.msra.mxu0 0
    %7289 = vmatprep.subr.bf16.mxu0 0
    %7290 = vmatpush1.bf16.xpose.msra.mxu0 0
    %7291 = vmatprep.subr.bf16.mxu0 0
    %7292 = vmatpush1.bf16.xpose.msra.mxu0 0
    %7293 = vmatprep.subr.bf16.mxu0 0
    %7294 = vmatpush1.bf16.xpose.msra.mxu0 0
    %7295 = vmatprep.subr.bf16.mxu0 0
    %7296 = vmatpush1.bf16.xpose.msra.mxu0 0
    %7297 = vmatprep.subr.bf16.mxu0 0
    %7298 = vmatpush1.bf16.xpose.msra.mxu0 0
    %7299 = vmatprep.subr.bf16.mxu0 0
    %7300 = vmatpush1.bf16.xpose.msra.mxu0 0
    %7301 = vmatprep.subr.bf16.mxu0 0
    %7302 = vmatpush1.bf16.xpose.msra.mxu0 0
    %7303 = vmatprep.mubr.bf16.mxu0 0
    %7304 = vmatmul.mubr.bf16.gmra.mrb[0].mxu0 %v7268
    %v7305 = vpop.f32.mrb[0].mxu0
    %v7306 = vadd.f32 0.0, %v7305
    %v7307 = vpop.f32.mrb[0].mxu0
    %v7308 = vpop.f32.mrb[0].mxu0
    %v7309 = vpop.f32.mrb[0].mxu0
    %7310 = vdwg.mxu0
    %v7311 = vmul.f32 %v7306, 0.088388346
    %v7312 = vsel %vm6589, %v7311, -inf
    %7313 = vmax.xlane.f32.xlu0 %v7312
    %v7314 = vpop.xlane.xlu0 %7313
    %v7315 = vsub.f32 %v7311, %v7314
    %v7316 = vmul.f32 %v7315, 1.442695
    %v7317 = vpow.pop %v7316
    %v7318 = vsel %vm6589, %v7317, 0.0
    %7319 = vadd.xlane.f32.xlu0 %v7318
    %v7320 = vpop.xlane.xlu0 %7319
    %v7321 = vrcp.pop %v7320
    %v7322 = vmul.f32 %v7317, %v7321
    %v7323 = vpack.c.bf16 %v7322, %v7322
    %v7325 = vsel %vm6589, %v7323, 0
    %v7328 = vsel %vm6605, %v7270, 0
    %7330 = vmatprep.subr.bf16.mxu0 0
    %7331 = vmatpush1.bf16.msra.mxu0 %v7328
    %7332 = vmatprep.subr.bf16.mxu0 0
    %7333 = vmatpush1.bf16.msra.mxu0 0
    %7334 = vmatprep.subr.bf16.mxu0 0
    %7335 = vmatpush1.bf16.msra.mxu0 0
    %7336 = vmatprep.subr.bf16.mxu0 0
    %7337 = vmatpush1.bf16.msra.mxu0 0
    %7338 = vmatprep.subr.bf16.mxu0 0
    %7339 = vmatpush1.bf16.msra.mxu0 0
    %7340 = vmatprep.subr.bf16.mxu0 0
    %7341 = vmatpush1.bf16.msra.mxu0 0
    %7342 = vmatprep.subr.bf16.mxu0 0
    %7343 = vmatpush1.bf16.msra.mxu0 0
    %7344 = vmatprep.subr.bf16.mxu0 0
    %7345 = vmatpush1.bf16.msra.mxu0 0
    %7346 = vmatprep.subr.bf16.mxu0 0
    %7347 = vmatpush1.bf16.msra.mxu0 0
    %7348 = vmatprep.subr.bf16.mxu0 0
    %7349 = vmatpush1.bf16.msra.mxu0 0
    %7350 = vmatprep.subr.bf16.mxu0 0
    %7351 = vmatpush1.bf16.msra.mxu0 0
    %7352 = vmatprep.subr.bf16.mxu0 0
    %7353 = vmatpush1.bf16.msra.mxu0 0
    %7354 = vmatprep.subr.bf16.mxu0 0
    %7355 = vmatpush1.bf16.msra.mxu0 0
    %7356 = vmatprep.subr.bf16.mxu0 0
    %7357 = vmatpush1.bf16.msra.mxu0 0
    %7358 = vmatprep.subr.bf16.mxu0 0
    %7359 = vmatpush1.bf16.msra.mxu0 0
    %7360 = vmatprep.subr.bf16.mxu0 0
    %7361 = vmatpush1.bf16.msra.mxu0 0
    %7362 = vmatprep.mubr.bf16.mxu0 0
    %7363 = vmatmul.mubr.bf16.gmra.mrb[0].mxu0 %v7325
    %v7364 = vpop.f32.mrb[0].mxu0
    %v7365 = vadd.f32 0.0, %v7364
    %v7366 = vpop.f32.mrb[0].mxu0
    %v7367 = vpop.f32.mrb[0].mxu0
    %v7368 = vpop.f32.mrb[0].mxu0
    %7369 = vdwg.mxu0
    %7370 = vst [vmem:[#allocation2 + $0x38] sm:$0xff] %v7365
    %v7371 = vpack.c.bf16 %v5638, %v5638
    %v7372 = vpack.c.bf16 %v6025, %v6025
    %v7373 = vpack.c.bf16 %v6412, %v6412
    %7374 = vmatprep.subr.bf16.mxu0 0
    %7375 = vmatpush1.bf16.xpose.msra.mxu0 %v7372
    %7376 = vmatprep.subr.bf16.mxu0 0
    %7377 = vmatpush1.bf16.xpose.msra.mxu0 0
    %7378 = vmatprep.subr.bf16.mxu0 0
    %7379 = vmatpush1.bf16.xpose.msra.mxu0 0
    %7380 = vmatprep.subr.bf16.mxu0 0
    %7381 = vmatpush1.bf16.xpose.msra.mxu0 0
    %7382 = vmatprep.subr.bf16.mxu0 0
    %7383 = vmatpush1.bf16.xpose.msra.mxu0 0
    %7384 = vmatprep.subr.bf16.mxu0 0
    %7385 = vmatpush1.bf16.xpose.msra.mxu0 0
    %7386 = vmatprep.subr.bf16.mxu0 0
    %7387 = vmatpush1.bf16.xpose.msra.mxu0 0
    %7388 = vmatprep.subr.bf16.mxu0 0
    %7389 = vmatpush1.bf16.xpose.msra.mxu0 0
    %7390 = vmatprep.subr.bf16.mxu0 0
    %7391 = vmatpush1.bf16.xpose.msra.mxu0 0
    %7392 = vmatprep.subr.bf16.mxu0 0
    %7393 = vmatpush1.bf16.xpose.msra.mxu0 0
    %7394 = vmatprep.subr.bf16.mxu0 0
    %7395 = vmatpush1.bf16.xpose.msra.mxu0 0
    %7396 = vmatprep.subr.bf16.mxu0 0
    %7397 = vmatpush1.bf16.xpose.msra.mxu0 0
    %7398 = vmatprep.subr.bf16.mxu0 0
    %7399 = vmatpush1.bf16.xpose.msra.mxu0 0
    %7400 = vmatprep.subr.bf16.mxu0 0
    %7401 = vmatpush1.bf16.xpose.msra.mxu0 0
    %7402 = vmatprep.subr.bf16.mxu0 0
    %7403 = vmatpush1.bf16.xpose.msra.mxu0 0
    %7404 = vmatprep.subr.bf16.mxu0 0
    %7405 = vmatpush1.bf16.xpose.msra.mxu0 0
    %7406 = vmatprep.mubr.bf16.mxu0 0
    %7407 = vmatmul.mubr.bf16.gmra.mrb[0].mxu0 %v7371
    %v7408 = vpop.f32.mrb[0].mxu0
    %v7409 = vadd.f32 0.0, %v7408
    %v7410 = vpop.f32.mrb[0].mxu0
    %v7411 = vpop.f32.mrb[0].mxu0
    %v7412 = vpop.f32.mrb[0].mxu0
    %7413 = vdwg.mxu0
    %v7414 = vmul.f32 %v7409, 0.088388346
    %v7415 = vsel %vm6589, %v7414, -inf
    %7416 = vmax.xlane.f32.xlu0 %v7415
    %v7417 = vpop.xlane.xlu0 %7416
    %v7418 = vsub.f32 %v7414, %v7417
    %v7419 = vmul.f32 %v7418, 1.442695
    %v7420 = vpow.pop %v7419
    %v7421 = vsel %vm6589, %v7420, 0.0
    %7422 = vadd.xlane.f32.xlu0 %v7421
    %v7423 = vpop.xlane.xlu0 %7422
    %v7424 = vrcp.pop %v7423
    %v7425 = vmul.f32 %v7420, %v7424
    %v7426 = vpack.c.bf16 %v7425, %v7425
    %v7428 = vsel %vm6589, %v7426, 0
    %v7431 = vsel %vm6605, %v7373, 0
    %7433 = vmatprep.subr.bf16.mxu0 0
    %7434 = vmatpush1.bf16.msra.mxu0 %v7431
    %7435 = vmatprep.subr.bf16.mxu0 0
    %7436 = vmatpush1.bf16.msra.mxu0 0
    %7437 = vmatprep.subr.bf16.mxu0 0
    %7438 = vmatpush1.bf16.msra.mxu0 0
    %7439 = vmatprep.subr.bf16.mxu0 0
    %7440 = vmatpush1.bf16.msra.mxu0 0
    %7441 = vmatprep.subr.bf16.mxu0 0
    %7442 = vmatpush1.bf16.msra.mxu0 0
    %7443 = vmatprep.subr.bf16.mxu0 0
    %7444 = vmatpush1.bf16.msra.mxu0 0
    %7445 = vmatprep.subr.bf16.mxu0 0
    %7446 = vmatpush1.bf16.msra.mxu0 0
    %7447 = vmatprep.subr.bf16.mxu0 0
    %7448 = vmatpush1.bf16.msra.mxu0 0
    %7449 = vmatprep.subr.bf16.mxu0 0
    %7450 = vmatpush1.bf16.msra.mxu0 0
    %7451 = vmatprep.subr.bf16.mxu0 0
    %7452 = vmatpush1.bf16.msra.mxu0 0
    %7453 = vmatprep.subr.bf16.mxu0 0
    %7454 = vmatpush1.bf16.msra.mxu0 0
    %7455 = vmatprep.subr.bf16.mxu0 0
    %7456 = vmatpush1.bf16.msra.mxu0 0
    %7457 = vmatprep.subr.bf16.mxu0 0
    %7458 = vmatpush1.bf16.msra.mxu0 0
    %7459 = vmatprep.subr.bf16.mxu0 0
    %7460 = vmatpush1.bf16.msra.mxu0 0
    %7461 = vmatprep.subr.bf16.mxu0 0
    %7462 = vmatpush1.bf16.msra.mxu0 0
    %7463 = vmatprep.subr.bf16.mxu0 0
    %7464 = vmatpush1.bf16.msra.mxu0 0
    %7465 = vmatprep.mubr.bf16.mxu0 0
    %7466 = vmatmul.mubr.bf16.gmra.mrb[0].mxu0 %v7428
    %v7467 = vpop.f32.mrb[0].mxu0
    %v7468 = vadd.f32 0.0, %v7467
    %v7469 = vpop.f32.mrb[0].mxu0
    %v7470 = vpop.f32.mrb[0].mxu0
    %v7471 = vpop.f32.mrb[0].mxu0
    %7472 = vdwg.mxu0
    %7473 = vst [vmem:[#allocation2 + $0x40] sm:$0xff] %v7468
    %v7474 = vpack.c.bf16 %v5640, %v5640
    %v7475 = vpack.c.bf16 %v6027, %v6027
    %v7476 = vpack.c.bf16 %v6414, %v6414
    %7477 = vmatprep.subr.bf16.mxu0 0
    %7478 = vmatpush1.bf16.xpose.msra.mxu0 %v7475
    %7479 = vmatprep.subr.bf16.mxu0 0
    %7480 = vmatpush1.bf16.xpose.msra.mxu0 0
    %7481 = vmatprep.subr.bf16.mxu0 0
    %7482 = vmatpush1.bf16.xpose.msra.mxu0 0
    %7483 = vmatprep.subr.bf16.mxu0 0
    %7484 = vmatpush1.bf16.xpose.msra.mxu0 0
    %7485 = vmatprep.subr.bf16.mxu0 0
    %7486 = vmatpush1.bf16.xpose.msra.mxu0 0
    %7487 = vmatprep.subr.bf16.mxu0 0
    %7488 = vmatpush1.bf16.xpose.msra.mxu0 0
    %7489 = vmatprep.subr.bf16.mxu0 0
    %7490 = vmatpush1.bf16.xpose.msra.mxu0 0
    %7491 = vmatprep.subr.bf16.mxu0 0
    %7492 = vmatpush1.bf16.xpose.msra.mxu0 0
    %7493 = vmatprep.subr.bf16.mxu0 0
    %7494 = vmatpush1.bf16.xpose.msra.mxu0 0
    %7495 = vmatprep.subr.bf16.mxu0 0
    %7496 = vmatpush1.bf16.xpose.msra.mxu0 0
    %7497 = vmatprep.subr.bf16.mxu0 0
    %7498 = vmatpush1.bf16.xpose.msra.mxu0 0
    %7499 = vmatprep.subr.bf16.mxu0 0
    %7500 = vmatpush1.bf16.xpose.msra.mxu0 0
    %7501 = vmatprep.subr.bf16.mxu0 0
    %7502 = vmatpush1.bf16.xpose.msra.mxu0 0
    %7503 = vmatprep.subr.bf16.mxu0 0
    %7504 = vmatpush1.bf16.xpose.msra.mxu0 0
    %7505 = vmatprep.subr.bf16.mxu0 0
    %7506 = vmatpush1.bf16.xpose.msra.mxu0 0
    %7507 = vmatprep.subr.bf16.mxu0 0
    %7508 = vmatpush1.bf16.xpose.msra.mxu0 0
    %7509 = vmatprep.mubr.bf16.mxu0 0
    %7510 = vmatmul.mubr.bf16.gmra.mrb[0].mxu0 %v7474
    %v7511 = vpop.f32.mrb[0].mxu0
    %v7512 = vadd.f32 0.0, %v7511
    %v7513 = vpop.f32.mrb[0].mxu0
    %v7514 = vpop.f32.mrb[0].mxu0
    %v7515 = vpop.f32.mrb[0].mxu0
    %7516 = vdwg.mxu0
    %v7517 = vmul.f32 %v7512, 0.088388346
    %v7518 = vsel %vm6589, %v7517, -inf
    %7519 = vmax.xlane.f32.xlu0 %v7518
    %v7520 = vpop.xlane.xlu0 %7519
    %v7521 = vsub.f32 %v7517, %v7520
    %v7522 = vmul.f32 %v7521, 1.442695
    %v7523 = vpow.pop %v7522
    %v7524 = vsel %vm6589, %v7523, 0.0
    %7525 = vadd.xlane.f32.xlu0 %v7524
    %v7526 = vpop.xlane.xlu0 %7525
    %v7527 = vrcp.pop %v7526
    %v7528 = vmul.f32 %v7523, %v7527
    %v7529 = vpack.c.bf16 %v7528, %v7528
    %v7531 = vsel %vm6589, %v7529, 0
    %v7534 = vsel %vm6605, %v7476, 0
    %7536 = vmatprep.subr.bf16.mxu0 0
    %7537 = vmatpush1.bf16.msra.mxu0 %v7534
    %7538 = vmatprep.subr.bf16.mxu0 0
    %7539 = vmatpush1.bf16.msra.mxu0 0
    %7540 = vmatprep.subr.bf16.mxu0 0
    %7541 = vmatpush1.bf16.msra.mxu0 0
    %7542 = vmatprep.subr.bf16.mxu0 0
    %7543 = vmatpush1.bf16.msra.mxu0 0
    %7544 = vmatprep.subr.bf16.mxu0 0
    %7545 = vmatpush1.bf16.msra.mxu0 0
    %7546 = vmatprep.subr.bf16.mxu0 0
    %7547 = vmatpush1.bf16.msra.mxu0 0
    %7548 = vmatprep.subr.bf16.mxu0 0
    %7549 = vmatpush1.bf16.msra.mxu0 0
    %7550 = vmatprep.subr.bf16.mxu0 0
    %7551 = vmatpush1.bf16.msra.mxu0 0
    %7552 = vmatprep.subr.bf16.mxu0 0
    %7553 = vmatpush1.bf16.msra.mxu0 0
    %7554 = vmatprep.subr.bf16.mxu0 0
    %7555 = vmatpush1.bf16.msra.mxu0 0
    %7556 = vmatprep.subr.bf16.mxu0 0
    %7557 = vmatpush1.bf16.msra.mxu0 0
    %7558 = vmatprep.subr.bf16.mxu0 0
    %7559 = vmatpush1.bf16.msra.mxu0 0
    %7560 = vmatprep.subr.bf16.mxu0 0
    %7561 = vmatpush1.bf16.msra.mxu0 0
    %7562 = vmatprep.subr.bf16.mxu0 0
    %7563 = vmatpush1.bf16.msra.mxu0 0
    %7564 = vmatprep.subr.bf16.mxu0 0
    %7565 = vmatpush1.bf16.msra.mxu0 0
    %7566 = vmatprep.subr.bf16.mxu0 0
    %7567 = vmatpush1.bf16.msra.mxu0 0
    %7568 = vmatprep.mubr.bf16.mxu0 0
    %7569 = vmatmul.mubr.bf16.gmra.mrb[0].mxu0 %v7531
    %v7570 = vpop.f32.mrb[0].mxu0
    %v7571 = vadd.f32 0.0, %v7570
    %v7572 = vpop.f32.mrb[0].mxu0
    %v7573 = vpop.f32.mrb[0].mxu0
    %v7574 = vpop.f32.mrb[0].mxu0
    %7575 = vdwg.mxu0
    %7576 = vst [vmem:[#allocation2 + $0x48] sm:$0xff] %v7571
    %v7577 = vpack.c.bf16 %v5767, %v5767
    %v7578 = vpack.c.bf16 %v6154, %v6154
    %v7579 = vpack.c.bf16 %v6541, %v6541
    %7580 = vmatprep.subr.bf16.mxu0 0
    %7581 = vmatpush1.bf16.xpose.msra.mxu0 %v7578
    %7582 = vmatprep.subr.bf16.mxu0 0
    %7583 = vmatpush1.bf16.xpose.msra.mxu0 0
    %7584 = vmatprep.subr.bf16.mxu0 0
    %7585 = vmatpush1.bf16.xpose.msra.mxu0 0
    %7586 = vmatprep.subr.bf16.mxu0 0
    %7587 = vmatpush1.bf16.xpose.msra.mxu0 0
    %7588 = vmatprep.subr.bf16.mxu0 0
    %7589 = vmatpush1.bf16.xpose.msra.mxu0 0
    %7590 = vmatprep.subr.bf16.mxu0 0
    %7591 = vmatpush1.bf16.xpose.msra.mxu0 0
    %7592 = vmatprep.subr.bf16.mxu0 0
    %7593 = vmatpush1.bf16.xpose.msra.mxu0 0
    %7594 = vmatprep.subr.bf16.mxu0 0
    %7595 = vmatpush1.bf16.xpose.msra.mxu0 0
    %7596 = vmatprep.subr.bf16.mxu0 0
    %7597 = vmatpush1.bf16.xpose.msra.mxu0 0
    %7598 = vmatprep.subr.bf16.mxu0 0
    %7599 = vmatpush1.bf16.xpose.msra.mxu0 0
    %7600 = vmatprep.subr.bf16.mxu0 0
    %7601 = vmatpush1.bf16.xpose.msra.mxu0 0
    %7602 = vmatprep.subr.bf16.mxu0 0
    %7603 = vmatpush1.bf16.xpose.msra.mxu0 0
    %7604 = vmatprep.subr.bf16.mxu0 0
    %7605 = vmatpush1.bf16.xpose.msra.mxu0 0
    %7606 = vmatprep.subr.bf16.mxu0 0
    %7607 = vmatpush1.bf16.xpose.msra.mxu0 0
    %7608 = vmatprep.subr.bf16.mxu0 0
    %7609 = vmatpush1.bf16.xpose.msra.mxu0 0
    %7610 = vmatprep.subr.bf16.mxu0 0
    %7611 = vmatpush1.bf16.xpose.msra.mxu0 0
    %7612 = vmatprep.mubr.bf16.mxu0 0
    %7613 = vmatmul.mubr.bf16.gmra.mrb[0].mxu0 %v7577
    %v7614 = vpop.f32.mrb[0].mxu0
    %v7615 = vadd.f32 0.0, %v7614
    %v7616 = vpop.f32.mrb[0].mxu0
    %v7617 = vpop.f32.mrb[0].mxu0
    %v7618 = vpop.f32.mrb[0].mxu0
    %7619 = vdwg.mxu0
    %v7620 = vmul.f32 %v7615, 0.088388346
    %v7621 = vsel %vm6589, %v7620, -inf
    %7622 = vmax.xlane.f32.xlu0 %v7621
    %v7623 = vpop.xlane.xlu0 %7622
    %v7624 = vsub.f32 %v7620, %v7623
    %v7625 = vmul.f32 %v7624, 1.442695
    %v7626 = vpow.pop %v7625
    %v7627 = vsel %vm6589, %v7626, 0.0
    %7628 = vadd.xlane.f32.xlu0 %v7627
    %v7629 = vpop.xlane.xlu0 %7628
    %v7630 = vrcp.pop %v7629
    %v7631 = vmul.f32 %v7626, %v7630
    %v7632 = vpack.c.bf16 %v7631, %v7631
    %v7634 = vsel %vm6589, %v7632, 0
    %v7637 = vsel %vm6605, %v7579, 0
    %7639 = vmatprep.subr.bf16.mxu0 0
    %7640 = vmatpush1.bf16.msra.mxu0 %v7637
    %7641 = vmatprep.subr.bf16.mxu0 0
    %7642 = vmatpush1.bf16.msra.mxu0 0
    %7643 = vmatprep.subr.bf16.mxu0 0
    %7644 = vmatpush1.bf16.msra.mxu0 0
    %7645 = vmatprep.subr.bf16.mxu0 0
    %7646 = vmatpush1.bf16.msra.mxu0 0
    %7647 = vmatprep.subr.bf16.mxu0 0
    %7648 = vmatpush1.bf16.msra.mxu0 0
    %7649 = vmatprep.subr.bf16.mxu0 0
    %7650 = vmatpush1.bf16.msra.mxu0 0
    %7651 = vmatprep.subr.bf16.mxu0 0
    %7652 = vmatpush1.bf16.msra.mxu0 0
    %7653 = vmatprep.subr.bf16.mxu0 0
    %7654 = vmatpush1.bf16.msra.mxu0 0
    %7655 = vmatprep.subr.bf16.mxu0 0
    %7656 = vmatpush1.bf16.msra.mxu0 0
    %7657 = vmatprep.subr.bf16.mxu0 0
    %7658 = vmatpush1.bf16.msra.mxu0 0
    %7659 = vmatprep.subr.bf16.mxu0 0
    %7660 = vmatpush1.bf16.msra.mxu0 0
    %7661 = vmatprep.subr.bf16.mxu0 0
    %7662 = vmatpush1.bf16.msra.mxu0 0
    %7663 = vmatprep.subr.bf16.mxu0 0
    %7664 = vmatpush1.bf16.msra.mxu0 0
    %7665 = vmatprep.subr.bf16.mxu0 0
    %7666 = vmatpush1.bf16.msra.mxu0 0
    %7667 = vmatprep.subr.bf16.mxu0 0
    %7668 = vmatpush1.bf16.msra.mxu0 0
    %7669 = vmatprep.subr.bf16.mxu0 0
    %7670 = vmatpush1.bf16.msra.mxu0 0
    %7671 = vmatprep.mubr.bf16.mxu0 0
    %7672 = vmatmul.mubr.bf16.gmra.mrb[0].mxu0 %v7634
    %v7673 = vpop.f32.mrb[0].mxu0
    %v7674 = vadd.f32 0.0, %v7673
    %v7675 = vpop.f32.mrb[0].mxu0
    %v7676 = vpop.f32.mrb[0].mxu0
    %v7677 = vpop.f32.mrb[0].mxu0
    %7678 = vdwg.mxu0
    %7679 = vst [vmem:[#allocation2 + $0x50] sm:$0xff] %v7674
    %v7680 = vpack.c.bf16 %v5769, %v5769
    %v7681 = vpack.c.bf16 %v6156, %v6156
    %v7682 = vpack.c.bf16 %v6543, %v6543
    %7683 = vmatprep.subr.bf16.mxu0 0
    %7684 = vmatpush1.bf16.xpose.msra.mxu0 %v7681
    %7685 = vmatprep.subr.bf16.mxu0 0
    %7686 = vmatpush1.bf16.xpose.msra.mxu0 0
    %7687 = vmatprep.subr.bf16.mxu0 0
    %7688 = vmatpush1.bf16.xpose.msra.mxu0 0
    %7689 = vmatprep.subr.bf16.mxu0 0
    %7690 = vmatpush1.bf16.xpose.msra.mxu0 0
    %7691 = vmatprep.subr.bf16.mxu0 0
    %7692 = vmatpush1.bf16.xpose.msra.mxu0 0
    %7693 = vmatprep.subr.bf16.mxu0 0
    %7694 = vmatpush1.bf16.xpose.msra.mxu0 0
    %7695 = vmatprep.subr.bf16.mxu0 0
    %7696 = vmatpush1.bf16.xpose.msra.mxu0 0
    %7697 = vmatprep.subr.bf16.mxu0 0
    %7698 = vmatpush1.bf16.xpose.msra.mxu0 0
    %7699 = vmatprep.subr.bf16.mxu0 0
    %7700 = vmatpush1.bf16.xpose.msra.mxu0 0
    %7701 = vmatprep.subr.bf16.mxu0 0
    %7702 = vmatpush1.bf16.xpose.msra.mxu0 0
    %7703 = vmatprep.subr.bf16.mxu0 0
    %7704 = vmatpush1.bf16.xpose.msra.mxu0 0
    %7705 = vmatprep.subr.bf16.mxu0 0
    %7706 = vmatpush1.bf16.xpose.msra.mxu0 0
    %7707 = vmatprep.subr.bf16.mxu0 0
    %7708 = vmatpush1.bf16.xpose.msra.mxu0 0
    %7709 = vmatprep.subr.bf16.mxu0 0
    %7710 = vmatpush1.bf16.xpose.msra.mxu0 0
    %7711 = vmatprep.subr.bf16.mxu0 0
    %7712 = vmatpush1.bf16.xpose.msra.mxu0 0
    %7713 = vmatprep.subr.bf16.mxu0 0
    %7714 = vmatpush1.bf16.xpose.msra.mxu0 0
    %7715 = vmatprep.mubr.bf16.mxu0 0
    %7716 = vmatmul.mubr.bf16.gmra.mrb[0].mxu0 %v7680
    %v7717 = vpop.f32.mrb[0].mxu0
    %v7718 = vadd.f32 0.0, %v7717
    %v7719 = vpop.f32.mrb[0].mxu0
    %v7720 = vpop.f32.mrb[0].mxu0
    %v7721 = vpop.f32.mrb[0].mxu0
    %7722 = vdwg.mxu0
    %v7723 = vmul.f32 %v7718, 0.088388346
    %v7724 = vsel %vm6589, %v7723, -inf
    %7725 = vmax.xlane.f32.xlu0 %v7724
    %v7726 = vpop.xlane.xlu0 %7725
    %v7727 = vsub.f32 %v7723, %v7726
    %v7728 = vmul.f32 %v7727, 1.442695
    %v7729 = vpow.pop %v7728
    %v7730 = vsel %vm6589, %v7729, 0.0
    %7731 = vadd.xlane.f32.xlu0 %v7730
    %v7732 = vpop.xlane.xlu0 %7731
    %v7733 = vrcp.pop %v7732
    %v7734 = vmul.f32 %v7729, %v7733
    %v7735 = vpack.c.bf16 %v7734, %v7734
    %v7737 = vsel %vm6589, %v7735, 0
    %v7740 = vsel %vm6605, %v7682, 0
    %7742 = vmatprep.subr.bf16.mxu0 0
    %7743 = vmatpush1.bf16.msra.mxu0 %v7740
    %7744 = vmatprep.subr.bf16.mxu0 0
    %7745 = vmatpush1.bf16.msra.mxu0 0
    %7746 = vmatprep.subr.bf16.mxu0 0
    %7747 = vmatpush1.bf16.msra.mxu0 0
    %7748 = vmatprep.subr.bf16.mxu0 0
    %7749 = vmatpush1.bf16.msra.mxu0 0
    %7750 = vmatprep.subr.bf16.mxu0 0
    %7751 = vmatpush1.bf16.msra.mxu0 0
    %7752 = vmatprep.subr.bf16.mxu0 0
    %7753 = vmatpush1.bf16.msra.mxu0 0
    %7754 = vmatprep.subr.bf16.mxu0 0
    %7755 = vmatpush1.bf16.msra.mxu0 0
    %7756 = vmatprep.subr.bf16.mxu0 0
    %7757 = vmatpush1.bf16.msra.mxu0 0
    %7758 = vmatprep.subr.bf16.mxu0 0
    %7759 = vmatpush1.bf16.msra.mxu0 0
    %7760 = vmatprep.subr.bf16.mxu0 0
    %7761 = vmatpush1.bf16.msra.mxu0 0
    %7762 = vmatprep.subr.bf16.mxu0 0
    %7763 = vmatpush1.bf16.msra.mxu0 0
    %7764 = vmatprep.subr.bf16.mxu0 0
    %7765 = vmatpush1.bf16.msra.mxu0 0
    %7766 = vmatprep.subr.bf16.mxu0 0
    %7767 = vmatpush1.bf16.msra.mxu0 0
    %7768 = vmatprep.subr.bf16.mxu0 0
    %7769 = vmatpush1.bf16.msra.mxu0 0
    %7770 = vmatprep.subr.bf16.mxu0 0
    %7771 = vmatpush1.bf16.msra.mxu0 0
    %7772 = vmatprep.subr.bf16.mxu0 0
    %7773 = vmatpush1.bf16.msra.mxu0 0
    %7774 = vmatprep.mubr.bf16.mxu0 0
    %7775 = vmatmul.mubr.bf16.gmra.mrb[0].mxu0 %v7737
    %v7776 = vpop.f32.mrb[0].mxu0
    %v7777 = vadd.f32 0.0, %v7776
    %v7778 = vpop.f32.mrb[0].mxu0
    %v7779 = vpop.f32.mrb[0].mxu0
    %v7780 = vpop.f32.mrb[0].mxu0
    %7781 = vdwg.mxu0
    %7782 = vst [vmem:[#allocation2 + $0x58] sm:$0xff] %v7777
    %v7783 = vld [vmem:[#allocation2] sm:$0xff]
    %v7784 = vld [vmem:[#allocation2 + $0x8] sm:$0xff]
    %v7785 = vld [vmem:[#allocation2 + $0x10] sm:$0xff]
    %v7786 = vld [vmem:[#allocation2 + $0x18] sm:$0xff]
    %v7787 = vld [vmem:[#allocation2 + $0x20] sm:$0xff]
    %v7788 = vld [vmem:[#allocation2 + $0x28] sm:$0xff]
    %v7789 = vld [vmem:[#allocation2 + $0x30] sm:$0xff]
    %v7790 = vld [vmem:[#allocation2 + $0x38] sm:$0xff]
    %v7791 = vld [vmem:[#allocation2 + $0x40] sm:$0xff]
    %v7792 = vld [vmem:[#allocation2 + $0x48] sm:$0xff]
    %v7793 = vld [vmem:[#allocation2 + $0x50] sm:$0xff]
    %v7794 = vld [vmem:[#allocation2 + $0x58] sm:$0xff]
    %v7795 = vpack.c.bf16 %v7789, %v7783
    %v7796 = vpack.c.bf16 %v7790, %v7784
    %v7797 = vpack.c.bf16 %v7791, %v7785
    %v7798 = vpack.c.bf16 %v7792, %v7786
    %v7799 = vpack.c.bf16 %v7793, %v7787
    %v7800 = vpack.c.bf16 %v7794, %v7788
    %v7801 = vld [vmem:[#allocation9] sm:$0xff]
    %v7802 = vld [vmem:[#allocation9 + $0x8] sm:$0xff]
    %v7803 = vld [vmem:[#allocation9 + $0x10] sm:$0xff]
    %v7804 = vld [vmem:[#allocation9 + $0x18] sm:$0xff]
    %v7805 = vld [vmem:[#allocation9 + $0x20] sm:$0xff]
    %v7806 = vld [vmem:[#allocation9 + $0x28] sm:$0xff]
    %v7807 = vld [vmem:[#allocation9 + $0x30] sm:$0xff]
    %v7808 = vld [vmem:[#allocation9 + $0x38] sm:$0xff]
    %v7809 = vld [vmem:[#allocation9 + $0x40] sm:$0xff]
    %v7810 = vld [vmem:[#allocation9 + $0x48] sm:$0xff]
    %v7811 = vld [vmem:[#allocation9 + $0x50] sm:$0xff]
    %v7812 = vld [vmem:[#allocation9 + $0x58] sm:$0xff]
    %v7813 = vld [vmem:[#allocation9 + $0x60] sm:$0xff]
    %v7814 = vld [vmem:[#allocation9 + $0x68] sm:$0xff]
    %v7815 = vld [vmem:[#allocation9 + $0x70] sm:$0xff]
    %v7816 = vld [vmem:[#allocation9 + $0x78] sm:$0xff]
    %v7817 = vld [vmem:[#allocation9 + $0x80] sm:$0xff]
    %v7818 = vld [vmem:[#allocation9 + $0x88] sm:$0xff]
    %v7819 = vld [vmem:[#allocation9 + $0x90] sm:$0xff]
    %v7820 = vld [vmem:[#allocation9 + $0x98] sm:$0xff]
    %v7821 = vld [vmem:[#allocation9 + $0xa0] sm:$0xff]
    %v7822 = vld [vmem:[#allocation9 + $0xa8] sm:$0xff]
    %v7823 = vld [vmem:[#allocation9 + $0xb0] sm:$0xff]
    %v7824 = vld [vmem:[#allocation9 + $0xb8] sm:$0xff]
    %v7825 = vld [vmem:[#allocation9 + $0xc0] sm:$0xff]
    %v7826 = vld [vmem:[#allocation9 + $0xc8] sm:$0xff]
    %v7827 = vld [vmem:[#allocation9 + $0xd0] sm:$0xff]
    %v7828 = vld [vmem:[#allocation9 + $0xd8] sm:$0xff]
    %v7829 = vld [vmem:[#allocation9 + $0xe0] sm:$0xff]
    %v7830 = vld [vmem:[#allocation9 + $0xe8] sm:$0xff]
    %v7831 = vld [vmem:[#allocation9 + $0xf0] sm:$0xff]
    %v7832 = vld [vmem:[#allocation9 + $0xf8] sm:$0xff]
    %v7833 = vld [vmem:[#allocation9 + $0x100] sm:$0xff]
    %v7834 = vld [vmem:[#allocation9 + $0x108] sm:$0xff]
    %v7835 = vld [vmem:[#allocation9 + $0x110] sm:$0xff]
    %v7836 = vld [vmem:[#allocation9 + $0x118] sm:$0xff]
    %v7837 = vld [vmem:[#allocation9 + $0x120] sm:$0xff]
    %v7838 = vld [vmem:[#allocation9 + $0x128] sm:$0xff]
    %v7839 = vld [vmem:[#allocation9 + $0x130] sm:$0xff]
    %v7840 = vld [vmem:[#allocation9 + $0x138] sm:$0xff]
    %v7841 = vld [vmem:[#allocation9 + $0x140] sm:$0xff]
    %v7842 = vld [vmem:[#allocation9 + $0x148] sm:$0xff]
    %v7843 = vld [vmem:[#allocation9 + $0x150] sm:$0xff]
    %v7844 = vld [vmem:[#allocation9 + $0x158] sm:$0xff]
    %v7845 = vld [vmem:[#allocation9 + $0x160] sm:$0xff]
    %v7846 = vld [vmem:[#allocation9 + $0x168] sm:$0xff]
    %v7847 = vld [vmem:[#allocation9 + $0x170] sm:$0xff]
    %v7848 = vld [vmem:[#allocation9 + $0x178] sm:$0xff]
    %v7849 = vld [vmem:[#allocation9 + $0x180] sm:$0xff]
    %v7850 = vld [vmem:[#allocation9 + $0x188] sm:$0xff]
    %v7851 = vld [vmem:[#allocation9 + $0x190] sm:$0xff]
    %v7852 = vld [vmem:[#allocation9 + $0x198] sm:$0xff]
    %v7853 = vld [vmem:[#allocation9 + $0x1a0] sm:$0xff]
    %v7854 = vld [vmem:[#allocation9 + $0x1a8] sm:$0xff]
    %v7855 = vld [vmem:[#allocation9 + $0x1b0] sm:$0xff]
    %v7856 = vld [vmem:[#allocation9 + $0x1b8] sm:$0xff]
    %v7857 = vld [vmem:[#allocation9 + $0x1c0] sm:$0xff]
    %v7858 = vld [vmem:[#allocation9 + $0x1c8] sm:$0xff]
    %v7859 = vld [vmem:[#allocation9 + $0x1d0] sm:$0xff]
    %v7860 = vld [vmem:[#allocation9 + $0x1d8] sm:$0xff]
    %v7861 = vld [vmem:[#allocation9 + $0x1e0] sm:$0xff]
    %v7862 = vld [vmem:[#allocation9 + $0x1e8] sm:$0xff]
    %v7863 = vld [vmem:[#allocation9 + $0x1f0] sm:$0xff]
    %v7864 = vld [vmem:[#allocation9 + $0x1f8] sm:$0xff]
    %v7865 = vld [vmem:[#allocation9 + $0x200] sm:$0xff]
    %v7866 = vld [vmem:[#allocation9 + $0x208] sm:$0xff]
    %v7867 = vld [vmem:[#allocation9 + $0x210] sm:$0xff]
    %v7868 = vld [vmem:[#allocation9 + $0x218] sm:$0xff]
    %v7869 = vld [vmem:[#allocation9 + $0x220] sm:$0xff]
    %v7870 = vld [vmem:[#allocation9 + $0x228] sm:$0xff]
    %v7871 = vld [vmem:[#allocation9 + $0x230] sm:$0xff]
    %v7872 = vld [vmem:[#allocation9 + $0x238] sm:$0xff]
    %v7873 = vld [vmem:[#allocation9 + $0x240] sm:$0xff]
    %v7874 = vld [vmem:[#allocation9 + $0x248] sm:$0xff]
    %v7875 = vld [vmem:[#allocation9 + $0x250] sm:$0xff]
    %v7876 = vld [vmem:[#allocation9 + $0x258] sm:$0xff]
    %v7877 = vld [vmem:[#allocation9 + $0x260] sm:$0xff]
    %v7878 = vld [vmem:[#allocation9 + $0x268] sm:$0xff]
    %v7879 = vld [vmem:[#allocation9 + $0x270] sm:$0xff]
    %v7880 = vld [vmem:[#allocation9 + $0x278] sm:$0xff]
    %v7881 = vld [vmem:[#allocation9 + $0x280] sm:$0xff]
    %v7882 = vld [vmem:[#allocation9 + $0x288] sm:$0xff]
    %v7883 = vld [vmem:[#allocation9 + $0x290] sm:$0xff]
    %v7884 = vld [vmem:[#allocation9 + $0x298] sm:$0xff]
    %v7885 = vld [vmem:[#allocation9 + $0x2a0] sm:$0xff]
    %v7886 = vld [vmem:[#allocation9 + $0x2a8] sm:$0xff]
    %v7887 = vld [vmem:[#allocation9 + $0x2b0] sm:$0xff]
    %v7888 = vld [vmem:[#allocation9 + $0x2b8] sm:$0xff]
    %v7889 = vld [vmem:[#allocation9 + $0x2c0] sm:$0xff]
    %v7890 = vld [vmem:[#allocation9 + $0x2c8] sm:$0xff]
    %v7891 = vld [vmem:[#allocation9 + $0x2d0] sm:$0xff]
    %v7892 = vld [vmem:[#allocation9 + $0x2d8] sm:$0xff]
    %v7893 = vld [vmem:[#allocation9 + $0x2e0] sm:$0xff]
    %v7894 = vld [vmem:[#allocation9 + $0x2e8] sm:$0xff]
    %v7895 = vld [vmem:[#allocation9 + $0x2f0] sm:$0xff]
    %v7896 = vld [vmem:[#allocation9 + $0x2f8] sm:$0xff]
    %v7897 = vld [vmem:[#allocation9 + $0x300] sm:$0xff]
    %v7898 = vld [vmem:[#allocation9 + $0x308] sm:$0xff]
    %v7899 = vld [vmem:[#allocation9 + $0x310] sm:$0xff]
    %v7900 = vld [vmem:[#allocation9 + $0x318] sm:$0xff]
    %v7901 = vld [vmem:[#allocation9 + $0x320] sm:$0xff]
    %v7902 = vld [vmem:[#allocation9 + $0x328] sm:$0xff]
    %v7903 = vld [vmem:[#allocation9 + $0x330] sm:$0xff]
    %v7904 = vld [vmem:[#allocation9 + $0x338] sm:$0xff]
    %v7905 = vld [vmem:[#allocation9 + $0x340] sm:$0xff]
    %v7906 = vld [vmem:[#allocation9 + $0x348] sm:$0xff]
    %v7907 = vld [vmem:[#allocation9 + $0x350] sm:$0xff]
    %v7908 = vld [vmem:[#allocation9 + $0x358] sm:$0xff]
    %v7909 = vld [vmem:[#allocation9 + $0x360] sm:$0xff]
    %v7910 = vld [vmem:[#allocation9 + $0x368] sm:$0xff]
    %v7911 = vld [vmem:[#allocation9 + $0x370] sm:$0xff]
    %v7912 = vld [vmem:[#allocation9 + $0x378] sm:$0xff]
    %v7913 = vld [vmem:[#allocation9 + $0x380] sm:$0xff]
    %v7914 = vld [vmem:[#allocation9 + $0x388] sm:$0xff]
    %v7915 = vld [vmem:[#allocation9 + $0x390] sm:$0xff]
    %v7916 = vld [vmem:[#allocation9 + $0x398] sm:$0xff]
    %v7917 = vld [vmem:[#allocation9 + $0x3a0] sm:$0xff]
    %v7918 = vld [vmem:[#allocation9 + $0x3a8] sm:$0xff]
    %v7919 = vld [vmem:[#allocation9 + $0x3b0] sm:$0xff]
    %v7920 = vld [vmem:[#allocation9 + $0x3b8] sm:$0xff]
    %v7921 = vld [vmem:[#allocation9 + $0x3c0] sm:$0xff]
    %v7922 = vld [vmem:[#allocation9 + $0x3c8] sm:$0xff]
    %v7923 = vld [vmem:[#allocation9 + $0x3d0] sm:$0xff]
    %v7924 = vld [vmem:[#allocation9 + $0x3d8] sm:$0xff]
    %v7925 = vld [vmem:[#allocation9 + $0x3e0] sm:$0xff]
    %v7926 = vld [vmem:[#allocation9 + $0x3e8] sm:$0xff]
    %v7927 = vld [vmem:[#allocation9 + $0x3f0] sm:$0xff]
    %v7928 = vld [vmem:[#allocation9 + $0x3f8] sm:$0xff]
    %v7929 = vld [vmem:[#allocation9 + $0x400] sm:$0xff]
    %v7930 = vld [vmem:[#allocation9 + $0x408] sm:$0xff]
    %v7931 = vld [vmem:[#allocation9 + $0x410] sm:$0xff]
    %v7932 = vld [vmem:[#allocation9 + $0x418] sm:$0xff]
    %v7933 = vld [vmem:[#allocation9 + $0x420] sm:$0xff]
    %v7934 = vld [vmem:[#allocation9 + $0x428] sm:$0xff]
    %v7935 = vld [vmem:[#allocation9 + $0x430] sm:$0xff]
    %v7936 = vld [vmem:[#allocation9 + $0x438] sm:$0xff]
    %v7937 = vld [vmem:[#allocation9 + $0x440] sm:$0xff]
    %v7938 = vld [vmem:[#allocation9 + $0x448] sm:$0xff]
    %v7939 = vld [vmem:[#allocation9 + $0x450] sm:$0xff]
    %v7940 = vld [vmem:[#allocation9 + $0x458] sm:$0xff]
    %v7941 = vld [vmem:[#allocation9 + $0x460] sm:$0xff]
    %v7942 = vld [vmem:[#allocation9 + $0x468] sm:$0xff]
    %v7943 = vld [vmem:[#allocation9 + $0x470] sm:$0xff]
    %v7944 = vld [vmem:[#allocation9 + $0x478] sm:$0xff]
    %v7945 = vld [vmem:[#allocation9 + $0x480] sm:$0xff]
    %v7946 = vld [vmem:[#allocation9 + $0x488] sm:$0xff]
    %v7947 = vld [vmem:[#allocation9 + $0x490] sm:$0xff]
    %v7948 = vld [vmem:[#allocation9 + $0x498] sm:$0xff]
    %v7949 = vld [vmem:[#allocation9 + $0x4a0] sm:$0xff]
    %v7950 = vld [vmem:[#allocation9 + $0x4a8] sm:$0xff]
    %v7951 = vld [vmem:[#allocation9 + $0x4b0] sm:$0xff]
    %v7952 = vld [vmem:[#allocation9 + $0x4b8] sm:$0xff]
    %v7953 = vld [vmem:[#allocation9 + $0x4c0] sm:$0xff]
    %v7954 = vld [vmem:[#allocation9 + $0x4c8] sm:$0xff]
    %v7955 = vld [vmem:[#allocation9 + $0x4d0] sm:$0xff]
    %v7956 = vld [vmem:[#allocation9 + $0x4d8] sm:$0xff]
    %v7957 = vld [vmem:[#allocation9 + $0x4e0] sm:$0xff]
    %v7958 = vld [vmem:[#allocation9 + $0x4e8] sm:$0xff]
    %v7959 = vld [vmem:[#allocation9 + $0x4f0] sm:$0xff]
    %v7960 = vld [vmem:[#allocation9 + $0x4f8] sm:$0xff]
    %v7961 = vld [vmem:[#allocation9 + $0x500] sm:$0xff]
    %v7962 = vld [vmem:[#allocation9 + $0x508] sm:$0xff]
    %v7963 = vld [vmem:[#allocation9 + $0x510] sm:$0xff]
    %v7964 = vld [vmem:[#allocation9 + $0x518] sm:$0xff]
    %v7965 = vld [vmem:[#allocation9 + $0x520] sm:$0xff]
    %v7966 = vld [vmem:[#allocation9 + $0x528] sm:$0xff]
    %v7967 = vld [vmem:[#allocation9 + $0x530] sm:$0xff]
    %v7968 = vld [vmem:[#allocation9 + $0x538] sm:$0xff]
    %v7969 = vld [vmem:[#allocation9 + $0x540] sm:$0xff]
    %v7970 = vld [vmem:[#allocation9 + $0x548] sm:$0xff]
    %v7971 = vld [vmem:[#allocation9 + $0x550] sm:$0xff]
    %v7972 = vld [vmem:[#allocation9 + $0x558] sm:$0xff]
    %v7973 = vld [vmem:[#allocation9 + $0x560] sm:$0xff]
    %v7974 = vld [vmem:[#allocation9 + $0x568] sm:$0xff]
    %v7975 = vld [vmem:[#allocation9 + $0x570] sm:$0xff]
    %v7976 = vld [vmem:[#allocation9 + $0x578] sm:$0xff]
    %v7977 = vld [vmem:[#allocation9 + $0x580] sm:$0xff]
    %v7978 = vld [vmem:[#allocation9 + $0x588] sm:$0xff]
    %v7979 = vld [vmem:[#allocation9 + $0x590] sm:$0xff]
    %v7980 = vld [vmem:[#allocation9 + $0x598] sm:$0xff]
    %v7981 = vld [vmem:[#allocation9 + $0x5a0] sm:$0xff]
    %v7982 = vld [vmem:[#allocation9 + $0x5a8] sm:$0xff]
    %v7983 = vld [vmem:[#allocation9 + $0x5b0] sm:$0xff]
    %v7984 = vld [vmem:[#allocation9 + $0x5b8] sm:$0xff]
    %v7985 = vld [vmem:[#allocation9 + $0x5c0] sm:$0xff]
    %v7986 = vld [vmem:[#allocation9 + $0x5c8] sm:$0xff]
    %v7987 = vld [vmem:[#allocation9 + $0x5d0] sm:$0xff]
    %v7988 = vld [vmem:[#allocation9 + $0x5d8] sm:$0xff]
    %v7989 = vld [vmem:[#allocation9 + $0x5e0] sm:$0xff]
    %v7990 = vld [vmem:[#allocation9 + $0x5e8] sm:$0xff]
    %v7991 = vld [vmem:[#allocation9 + $0x5f0] sm:$0xff]
    %v7992 = vld [vmem:[#allocation9 + $0x5f8] sm:$0xff]
    %v7993 = vld [vmem:[#allocation9 + $0x600] sm:$0xff]
    %v7994 = vld [vmem:[#allocation9 + $0x608] sm:$0xff]
    %v7995 = vld [vmem:[#allocation9 + $0x610] sm:$0xff]
    %v7996 = vld [vmem:[#allocation9 + $0x618] sm:$0xff]
    %v7997 = vld [vmem:[#allocation9 + $0x620] sm:$0xff]
    %v7998 = vld [vmem:[#allocation9 + $0x628] sm:$0xff]
    %v7999 = vld [vmem:[#allocation9 + $0x630] sm:$0xff]
    %v8000 = vld [vmem:[#allocation9 + $0x638] sm:$0xff]
    %v8001 = vld [vmem:[#allocation9 + $0x640] sm:$0xff]
    %v8002 = vld [vmem:[#allocation9 + $0x648] sm:$0xff]
    %v8003 = vld [vmem:[#allocation9 + $0x650] sm:$0xff]
    %v8004 = vld [vmem:[#allocation9 + $0x658] sm:$0xff]
    %v8005 = vld [vmem:[#allocation9 + $0x660] sm:$0xff]
    %v8006 = vld [vmem:[#allocation9 + $0x668] sm:$0xff]
    %v8007 = vld [vmem:[#allocation9 + $0x670] sm:$0xff]
    %v8008 = vld [vmem:[#allocation9 + $0x678] sm:$0xff]
    %v8009 = vld [vmem:[#allocation9 + $0x680] sm:$0xff]
    %v8010 = vld [vmem:[#allocation9 + $0x688] sm:$0xff]
    %v8011 = vld [vmem:[#allocation9 + $0x690] sm:$0xff]
    %v8012 = vld [vmem:[#allocation9 + $0x698] sm:$0xff]
    %v8013 = vld [vmem:[#allocation9 + $0x6a0] sm:$0xff]
    %v8014 = vld [vmem:[#allocation9 + $0x6a8] sm:$0xff]
    %v8015 = vld [vmem:[#allocation9 + $0x6b0] sm:$0xff]
    %v8016 = vld [vmem:[#allocation9 + $0x6b8] sm:$0xff]
    %v8017 = vld [vmem:[#allocation9 + $0x6c0] sm:$0xff]
    %v8018 = vld [vmem:[#allocation9 + $0x6c8] sm:$0xff]
    %v8019 = vld [vmem:[#allocation9 + $0x6d0] sm:$0xff]
    %v8020 = vld [vmem:[#allocation9 + $0x6d8] sm:$0xff]
    %v8021 = vld [vmem:[#allocation9 + $0x6e0] sm:$0xff]
    %v8022 = vld [vmem:[#allocation9 + $0x6e8] sm:$0xff]
    %v8023 = vld [vmem:[#allocation9 + $0x6f0] sm:$0xff]
    %v8024 = vld [vmem:[#allocation9 + $0x6f8] sm:$0xff]
    %v8025 = vld [vmem:[#allocation9 + $0x700] sm:$0xff]
    %v8026 = vld [vmem:[#allocation9 + $0x708] sm:$0xff]
    %v8027 = vld [vmem:[#allocation9 + $0x710] sm:$0xff]
    %v8028 = vld [vmem:[#allocation9 + $0x718] sm:$0xff]
    %v8029 = vld [vmem:[#allocation9 + $0x720] sm:$0xff]
    %v8030 = vld [vmem:[#allocation9 + $0x728] sm:$0xff]
    %v8031 = vld [vmem:[#allocation9 + $0x730] sm:$0xff]
    %v8032 = vld [vmem:[#allocation9 + $0x738] sm:$0xff]
    %v8033 = vld [vmem:[#allocation9 + $0x740] sm:$0xff]
    %v8034 = vld [vmem:[#allocation9 + $0x748] sm:$0xff]
    %v8035 = vld [vmem:[#allocation9 + $0x750] sm:$0xff]
    %v8036 = vld [vmem:[#allocation9 + $0x758] sm:$0xff]
    %v8037 = vld [vmem:[#allocation9 + $0x760] sm:$0xff]
    %v8038 = vld [vmem:[#allocation9 + $0x768] sm:$0xff]
    %v8039 = vld [vmem:[#allocation9 + $0x770] sm:$0xff]
    %v8040 = vld [vmem:[#allocation9 + $0x778] sm:$0xff]
    %v8041 = vld [vmem:[#allocation9 + $0x780] sm:$0xff]
    %v8042 = vld [vmem:[#allocation9 + $0x788] sm:$0xff]
    %v8043 = vld [vmem:[#allocation9 + $0x790] sm:$0xff]
    %v8044 = vld [vmem:[#allocation9 + $0x798] sm:$0xff]
    %v8045 = vld [vmem:[#allocation9 + $0x7a0] sm:$0xff]
    %v8046 = vld [vmem:[#allocation9 + $0x7a8] sm:$0xff]
    %v8047 = vld [vmem:[#allocation9 + $0x7b0] sm:$0xff]
    %v8048 = vld [vmem:[#allocation9 + $0x7b8] sm:$0xff]
    %v8049 = vld [vmem:[#allocation9 + $0x7c0] sm:$0xff]
    %v8050 = vld [vmem:[#allocation9 + $0x7c8] sm:$0xff]
    %v8051 = vld [vmem:[#allocation9 + $0x7d0] sm:$0xff]
    %v8052 = vld [vmem:[#allocation9 + $0x7d8] sm:$0xff]
    %v8053 = vld [vmem:[#allocation9 + $0x7e0] sm:$0xff]
    %v8054 = vld [vmem:[#allocation9 + $0x7e8] sm:$0xff]
    %v8055 = vld [vmem:[#allocation9 + $0x7f0] sm:$0xff]
    %v8056 = vld [vmem:[#allocation9 + $0x7f8] sm:$0xff]
    %v8057 = vld [vmem:[#allocation9 + $0x800] sm:$0xff]
    %v8058 = vld [vmem:[#allocation9 + $0x808] sm:$0xff]
    %v8059 = vld [vmem:[#allocation9 + $0x810] sm:$0xff]
    %v8060 = vld [vmem:[#allocation9 + $0x818] sm:$0xff]
    %v8061 = vld [vmem:[#allocation9 + $0x820] sm:$0xff]
    %v8062 = vld [vmem:[#allocation9 + $0x828] sm:$0xff]
    %v8063 = vld [vmem:[#allocation9 + $0x830] sm:$0xff]
    %v8064 = vld [vmem:[#allocation9 + $0x838] sm:$0xff]
    %v8065 = vld [vmem:[#allocation9 + $0x840] sm:$0xff]
    %v8066 = vld [vmem:[#allocation9 + $0x848] sm:$0xff]
    %v8067 = vld [vmem:[#allocation9 + $0x850] sm:$0xff]
    %v8068 = vld [vmem:[#allocation9 + $0x858] sm:$0xff]
    %v8069 = vld [vmem:[#allocation9 + $0x860] sm:$0xff]
    %v8070 = vld [vmem:[#allocation9 + $0x868] sm:$0xff]
    %v8071 = vld [vmem:[#allocation9 + $0x870] sm:$0xff]
    %v8072 = vld [vmem:[#allocation9 + $0x878] sm:$0xff]
    %v8073 = vld [vmem:[#allocation9 + $0x880] sm:$0xff]
    %v8074 = vld [vmem:[#allocation9 + $0x888] sm:$0xff]
    %v8075 = vld [vmem:[#allocation9 + $0x890] sm:$0xff]
    %v8076 = vld [vmem:[#allocation9 + $0x898] sm:$0xff]
    %v8077 = vld [vmem:[#allocation9 + $0x8a0] sm:$0xff]
    %v8078 = vld [vmem:[#allocation9 + $0x8a8] sm:$0xff]
    %v8079 = vld [vmem:[#allocation9 + $0x8b0] sm:$0xff]
    %v8080 = vld [vmem:[#allocation9 + $0x8b8] sm:$0xff]
    %v8081 = vld [vmem:[#allocation9 + $0x8c0] sm:$0xff]
    %v8082 = vld [vmem:[#allocation9 + $0x8c8] sm:$0xff]
    %v8083 = vld [vmem:[#allocation9 + $0x8d0] sm:$0xff]
    %v8084 = vld [vmem:[#allocation9 + $0x8d8] sm:$0xff]
    %v8085 = vld [vmem:[#allocation9 + $0x8e0] sm:$0xff]
    %v8086 = vld [vmem:[#allocation9 + $0x8e8] sm:$0xff]
    %v8087 = vld [vmem:[#allocation9 + $0x8f0] sm:$0xff]
    %v8088 = vld [vmem:[#allocation9 + $0x8f8] sm:$0xff]
    %v8089 = vld [vmem:[#allocation11] sm:$0x3f]
    %v8091 = vlaneseq
    %v8092 = vshrl.u32 %v8091, 7
    %v8093 = vsub.s32 0, %v8092
    %v8094 = vrot.slane %v8089, %v8093
    %v8095 = vlaneseq
    %v8096 = vshrl.u32 %v8095, 7
    %v8097 = vsub.s32 1, %v8096
    %v8098 = vrot.slane %v8089, %v8097
    %v8099 = vlaneseq
    %v8100 = vshrl.u32 %v8099, 7
    %v8101 = vsub.s32 2, %v8100
    %v8102 = vrot.slane %v8089, %v8101
    %v8103 = vlaneseq
    %v8104 = vshrl.u32 %v8103, 7
    %v8105 = vsub.s32 3, %v8104
    %v8106 = vrot.slane %v8089, %v8105
    %v8107 = vlaneseq
    %v8108 = vshrl.u32 %v8107, 7
    %v8109 = vsub.s32 4, %v8108
    %v8110 = vrot.slane %v8089, %v8109
    %v8111 = vlaneseq
    %v8112 = vshrl.u32 %v8111, 7
    %v8113 = vsub.s32 5, %v8112
    %v8114 = vrot.slane %v8089, %v8113
    %v8409 = vunpack.c.l.b16 %v7801
    %v8410 = vunpack.c.h.b16 %v7801
    %v8411 = vunpack.c.l.b16 %v7802
    %v8412 = vunpack.c.h.b16 %v7802
    %v8413 = vunpack.c.l.b16 %v7803
    %v8414 = vunpack.c.h.b16 %v7803
    %v8415 = vunpack.c.l.b16 %v7804
    %v8416 = vunpack.c.h.b16 %v7804
    %v8417 = vunpack.c.l.b16 %v7805
    %v8418 = vunpack.c.h.b16 %v7805
    %v8419 = vunpack.c.l.b16 %v7806
    %v8420 = vunpack.c.h.b16 %v7806
    %v8421 = vunpack.c.l.b16 %v7807
    %v8422 = vunpack.c.h.b16 %v7807
    %v8423 = vunpack.c.l.b16 %v7808
    %v8424 = vunpack.c.h.b16 %v7808
    %v8425 = vunpack.c.l.b16 %v7809
    %v8426 = vunpack.c.h.b16 %v7809
    %v8427 = vunpack.c.l.b16 %v7810
    %v8428 = vunpack.c.h.b16 %v7810
    %v8429 = vunpack.c.l.b16 %v7811
    %v8430 = vunpack.c.h.b16 %v7811
    %v8431 = vunpack.c.l.b16 %v7812
    %v8432 = vunpack.c.h.b16 %v7812
    %v8433 = vunpack.c.l.b16 %v7813
    %v8434 = vunpack.c.h.b16 %v7813
    %v8435 = vunpack.c.l.b16 %v7814
    %v8436 = vunpack.c.h.b16 %v7814
    %v8437 = vunpack.c.l.b16 %v7815
    %v8438 = vunpack.c.h.b16 %v7815
    %v8439 = vunpack.c.l.b16 %v7816
    %v8440 = vunpack.c.h.b16 %v7816
    %v8441 = vunpack.c.l.b16 %v7817
    %v8442 = vunpack.c.h.b16 %v7817
    %v8443 = vunpack.c.l.b16 %v7818
    %v8444 = vunpack.c.h.b16 %v7818
    %v8445 = vunpack.c.l.b16 %v7819
    %v8446 = vunpack.c.h.b16 %v7819
    %v8447 = vunpack.c.l.b16 %v7820
    %v8448 = vunpack.c.h.b16 %v7820
    %v8449 = vunpack.c.l.b16 %v7821
    %v8450 = vunpack.c.h.b16 %v7821
    %v8451 = vunpack.c.l.b16 %v7822
    %v8452 = vunpack.c.h.b16 %v7822
    %v8453 = vunpack.c.l.b16 %v7823
    %v8454 = vunpack.c.h.b16 %v7823
    %v8455 = vunpack.c.l.b16 %v7824
    %v8456 = vunpack.c.h.b16 %v7824
    %v8457 = vunpack.c.l.b16 %v7825
    %v8458 = vunpack.c.h.b16 %v7825
    %v8459 = vunpack.c.l.b16 %v7826
    %v8460 = vunpack.c.h.b16 %v7826
    %v8461 = vunpack.c.l.b16 %v7827
    %v8462 = vunpack.c.h.b16 %v7827
    %v8463 = vunpack.c.l.b16 %v7828
    %v8464 = vunpack.c.h.b16 %v7828
    %v8465 = vunpack.c.l.b16 %v7829
    %v8466 = vunpack.c.h.b16 %v7829
    %v8467 = vunpack.c.l.b16 %v7830
    %v8468 = vunpack.c.h.b16 %v7830
    %v8469 = vunpack.c.l.b16 %v7831
    %v8470 = vunpack.c.h.b16 %v7831
    %v8471 = vunpack.c.l.b16 %v7832
    %v8472 = vunpack.c.h.b16 %v7832
    %v8473 = vunpack.c.l.b16 %v7833
    %v8474 = vunpack.c.h.b16 %v7833
    %v8475 = vunpack.c.l.b16 %v7834
    %v8476 = vunpack.c.h.b16 %v7834
    %v8477 = vunpack.c.l.b16 %v7835
    %v8478 = vunpack.c.h.b16 %v7835
    %v8479 = vunpack.c.l.b16 %v7836
    %v8480 = vunpack.c.h.b16 %v7836
    %v8481 = vunpack.c.l.b16 %v7837
    %v8482 = vunpack.c.h.b16 %v7837
    %v8483 = vunpack.c.l.b16 %v7838
    %v8484 = vunpack.c.h.b16 %v7838
    %v8485 = vunpack.c.l.b16 %v7839
    %v8486 = vunpack.c.h.b16 %v7839
    %v8487 = vunpack.c.l.b16 %v7840
    %v8488 = vunpack.c.h.b16 %v7840
    %v8489 = vunpack.c.l.b16 %v7841
    %v8490 = vunpack.c.h.b16 %v7841
    %v8491 = vunpack.c.l.b16 %v7842
    %v8492 = vunpack.c.h.b16 %v7842
    %v8493 = vunpack.c.l.b16 %v7843
    %v8494 = vunpack.c.h.b16 %v7843
    %v8495 = vunpack.c.l.b16 %v7844
    %v8496 = vunpack.c.h.b16 %v7844
    %v8497 = vunpack.c.l.b16 %v7845
    %v8498 = vunpack.c.h.b16 %v7845
    %v8499 = vunpack.c.l.b16 %v7846
    %v8500 = vunpack.c.h.b16 %v7846
    %v8501 = vunpack.c.l.b16 %v7847
    %v8502 = vunpack.c.h.b16 %v7847
    %v8503 = vunpack.c.l.b16 %v7848
    %v8504 = vunpack.c.h.b16 %v7848
    %v8505 = vunpack.c.l.b16 %v7849
    %v8506 = vunpack.c.h.b16 %v7849
    %v8507 = vunpack.c.l.b16 %v7850
    %v8508 = vunpack.c.h.b16 %v7850
    %v8509 = vunpack.c.l.b16 %v7851
    %v8510 = vunpack.c.h.b16 %v7851
    %v8511 = vunpack.c.l.b16 %v7852
    %v8512 = vunpack.c.h.b16 %v7852
    %v8513 = vunpack.c.l.b16 %v7853
    %v8514 = vunpack.c.h.b16 %v7853
    %v8515 = vunpack.c.l.b16 %v7854
    %v8516 = vunpack.c.h.b16 %v7854
    %v8517 = vunpack.c.l.b16 %v7855
    %v8518 = vunpack.c.h.b16 %v7855
    %v8519 = vunpack.c.l.b16 %v7856
    %v8520 = vunpack.c.h.b16 %v7856
    %v8521 = vunpack.c.l.b16 %v7857
    %v8522 = vunpack.c.h.b16 %v7857
    %v8523 = vunpack.c.l.b16 %v7858
    %v8524 = vunpack.c.h.b16 %v7858
    %v8525 = vunpack.c.l.b16 %v7859
    %v8526 = vunpack.c.h.b16 %v7859
    %v8527 = vunpack.c.l.b16 %v7860
    %v8528 = vunpack.c.h.b16 %v7860
    %v8529 = vunpack.c.l.b16 %v7861
    %v8530 = vunpack.c.h.b16 %v7861
    %v8531 = vunpack.c.l.b16 %v7862
    %v8532 = vunpack.c.h.b16 %v7862
    %v8533 = vunpack.c.l.b16 %v7863
    %v8534 = vunpack.c.h.b16 %v7863
    %v8535 = vunpack.c.l.b16 %v7864
    %v8536 = vunpack.c.h.b16 %v7864
    %v8537 = vunpack.c.l.b16 %v7865
    %v8538 = vunpack.c.h.b16 %v7865
    %v8539 = vunpack.c.l.b16 %v7866
    %v8540 = vunpack.c.h.b16 %v7866
    %v8541 = vunpack.c.l.b16 %v7867
    %v8542 = vunpack.c.h.b16 %v7867
    %v8543 = vunpack.c.l.b16 %v7868
    %v8544 = vunpack.c.h.b16 %v7868
    %v8545 = vunpack.c.l.b16 %v7869
    %v8546 = vunpack.c.h.b16 %v7869
    %v8547 = vunpack.c.l.b16 %v7870
    %v8548 = vunpack.c.h.b16 %v7870
    %v8549 = vunpack.c.l.b16 %v7871
    %v8550 = vunpack.c.h.b16 %v7871
    %v8551 = vunpack.c.l.b16 %v7872
    %v8552 = vunpack.c.h.b16 %v7872
    %v8553 = vunpack.c.l.b16 %v7873
    %v8554 = vunpack.c.h.b16 %v7873
    %v8555 = vunpack.c.l.b16 %v7874
    %v8556 = vunpack.c.h.b16 %v7874
    %v8557 = vunpack.c.l.b16 %v7875
    %v8558 = vunpack.c.h.b16 %v7875
    %v8559 = vunpack.c.l.b16 %v7876
    %v8560 = vunpack.c.h.b16 %v7876
    %v8561 = vunpack.c.l.b16 %v7877
    %v8562 = vunpack.c.h.b16 %v7877
    %v8563 = vunpack.c.l.b16 %v7878
    %v8564 = vunpack.c.h.b16 %v7878
    %v8565 = vunpack.c.l.b16 %v7879
    %v8566 = vunpack.c.h.b16 %v7879
    %v8567 = vunpack.c.l.b16 %v7880
    %v8568 = vunpack.c.h.b16 %v7880
    %v8569 = vunpack.c.l.b16 %v7881
    %v8570 = vunpack.c.h.b16 %v7881
    %v8571 = vunpack.c.l.b16 %v7882
    %v8572 = vunpack.c.h.b16 %v7882
    %v8573 = vunpack.c.l.b16 %v7883
    %v8574 = vunpack.c.h.b16 %v7883
    %v8575 = vunpack.c.l.b16 %v7884
    %v8576 = vunpack.c.h.b16 %v7884
    %v8577 = vunpack.c.l.b16 %v7885
    %v8578 = vunpack.c.h.b16 %v7885
    %v8579 = vunpack.c.l.b16 %v7886
    %v8580 = vunpack.c.h.b16 %v7886
    %v8581 = vunpack.c.l.b16 %v7887
    %v8582 = vunpack.c.h.b16 %v7887
    %v8583 = vunpack.c.l.b16 %v7888
    %v8584 = vunpack.c.h.b16 %v7888
    %v8585 = vunpack.c.l.b16 %v7889
    %v8586 = vunpack.c.h.b16 %v7889
    %v8587 = vunpack.c.l.b16 %v7890
    %v8588 = vunpack.c.h.b16 %v7890
    %v8589 = vunpack.c.l.b16 %v7891
    %v8590 = vunpack.c.h.b16 %v7891
    %v8591 = vunpack.c.l.b16 %v7892
    %v8592 = vunpack.c.h.b16 %v7892
    %v8593 = vunpack.c.l.b16 %v7893
    %v8594 = vunpack.c.h.b16 %v7893
    %v8595 = vunpack.c.l.b16 %v7894
    %v8596 = vunpack.c.h.b16 %v7894
    %v8597 = vunpack.c.l.b16 %v7895
    %v8598 = vunpack.c.h.b16 %v7895
    %v8599 = vunpack.c.l.b16 %v7896
    %v8600 = vunpack.c.h.b16 %v7896
    %v8601 = vunpack.c.l.b16 %v7897
    %v8602 = vunpack.c.h.b16 %v7897
    %v8603 = vunpack.c.l.b16 %v7898
    %v8604 = vunpack.c.h.b16 %v7898
    %v8605 = vunpack.c.l.b16 %v7899
    %v8606 = vunpack.c.h.b16 %v7899
    %v8607 = vunpack.c.l.b16 %v7900
    %v8608 = vunpack.c.h.b16 %v7900
    %v8609 = vunpack.c.l.b16 %v7901
    %v8610 = vunpack.c.h.b16 %v7901
    %v8611 = vunpack.c.l.b16 %v7902
    %v8612 = vunpack.c.h.b16 %v7902
    %v8613 = vunpack.c.l.b16 %v7903
    %v8614 = vunpack.c.h.b16 %v7903
    %v8615 = vunpack.c.l.b16 %v7904
    %v8616 = vunpack.c.h.b16 %v7904
    %v8617 = vunpack.c.l.b16 %v7905
    %v8618 = vunpack.c.h.b16 %v7905
    %v8619 = vunpack.c.l.b16 %v7906
    %v8620 = vunpack.c.h.b16 %v7906
    %v8621 = vunpack.c.l.b16 %v7907
    %v8622 = vunpack.c.h.b16 %v7907
    %v8623 = vunpack.c.l.b16 %v7908
    %v8624 = vunpack.c.h.b16 %v7908
    %v8625 = vunpack.c.l.b16 %v7909
    %v8626 = vunpack.c.h.b16 %v7909
    %v8627 = vunpack.c.l.b16 %v7910
    %v8628 = vunpack.c.h.b16 %v7910
    %v8629 = vunpack.c.l.b16 %v7911
    %v8630 = vunpack.c.h.b16 %v7911
    %v8631 = vunpack.c.l.b16 %v7912
    %v8632 = vunpack.c.h.b16 %v7912
    %v8633 = vunpack.c.l.b16 %v7913
    %v8634 = vunpack.c.h.b16 %v7913
    %v8635 = vunpack.c.l.b16 %v7914
    %v8636 = vunpack.c.h.b16 %v7914
    %v8637 = vunpack.c.l.b16 %v7915
    %v8638 = vunpack.c.h.b16 %v7915
    %v8639 = vunpack.c.l.b16 %v7916
    %v8640 = vunpack.c.h.b16 %v7916
    %v8641 = vunpack.c.l.b16 %v7917
    %v8642 = vunpack.c.h.b16 %v7917
    %v8643 = vunpack.c.l.b16 %v7918
    %v8644 = vunpack.c.h.b16 %v7918
    %v8645 = vunpack.c.l.b16 %v7919
    %v8646 = vunpack.c.h.b16 %v7919
    %v8647 = vunpack.c.l.b16 %v7920
    %v8648 = vunpack.c.h.b16 %v7920
    %v8649 = vunpack.c.l.b16 %v7921
    %v8650 = vunpack.c.h.b16 %v7921
    %v8651 = vunpack.c.l.b16 %v7922
    %v8652 = vunpack.c.h.b16 %v7922
    %v8653 = vunpack.c.l.b16 %v7923
    %v8654 = vunpack.c.h.b16 %v7923
    %v8655 = vunpack.c.l.b16 %v7924
    %v8656 = vunpack.c.h.b16 %v7924
    %v8657 = vunpack.c.l.b16 %v7925
    %v8658 = vunpack.c.h.b16 %v7925
    %v8659 = vunpack.c.l.b16 %v7926
    %v8660 = vunpack.c.h.b16 %v7926
    %v8661 = vunpack.c.l.b16 %v7927
    %v8662 = vunpack.c.h.b16 %v7927
    %v8663 = vunpack.c.l.b16 %v7928
    %v8664 = vunpack.c.h.b16 %v7928
    %v8665 = vunpack.c.l.b16 %v7929
    %v8666 = vunpack.c.h.b16 %v7929
    %v8667 = vunpack.c.l.b16 %v7930
    %v8668 = vunpack.c.h.b16 %v7930
    %v8669 = vunpack.c.l.b16 %v7931
    %v8670 = vunpack.c.h.b16 %v7931
    %v8671 = vunpack.c.l.b16 %v7932
    %v8672 = vunpack.c.h.b16 %v7932
    %v8673 = vunpack.c.l.b16 %v7933
    %v8674 = vunpack.c.h.b16 %v7933
    %v8675 = vunpack.c.l.b16 %v7934
    %v8676 = vunpack.c.h.b16 %v7934
    %v8677 = vunpack.c.l.b16 %v7935
    %v8678 = vunpack.c.h.b16 %v7935
    %v8679 = vunpack.c.l.b16 %v7936
    %v8680 = vunpack.c.h.b16 %v7936
    %v8681 = vunpack.c.l.b16 %v7937
    %v8682 = vunpack.c.h.b16 %v7937
    %v8683 = vunpack.c.l.b16 %v7938
    %v8684 = vunpack.c.h.b16 %v7938
    %v8685 = vunpack.c.l.b16 %v7939
    %v8686 = vunpack.c.h.b16 %v7939
    %v8687 = vunpack.c.l.b16 %v7940
    %v8688 = vunpack.c.h.b16 %v7940
    %v8689 = vunpack.c.l.b16 %v7941
    %v8690 = vunpack.c.h.b16 %v7941
    %v8691 = vunpack.c.l.b16 %v7942
    %v8692 = vunpack.c.h.b16 %v7942
    %v8693 = vunpack.c.l.b16 %v7943
    %v8694 = vunpack.c.h.b16 %v7943
    %v8695 = vunpack.c.l.b16 %v7944
    %v8696 = vunpack.c.h.b16 %v7944
    %v8697 = vunpack.c.l.b16 %v7945
    %v8698 = vunpack.c.h.b16 %v7945
    %v8699 = vunpack.c.l.b16 %v7946
    %v8700 = vunpack.c.h.b16 %v7946
    %v8701 = vunpack.c.l.b16 %v7947
    %v8702 = vunpack.c.h.b16 %v7947
    %v8703 = vunpack.c.l.b16 %v7948
    %v8704 = vunpack.c.h.b16 %v7948
    %v8705 = vunpack.c.l.b16 %v7949
    %v8706 = vunpack.c.h.b16 %v7949
    %v8707 = vunpack.c.l.b16 %v7950
    %v8708 = vunpack.c.h.b16 %v7950
    %v8709 = vunpack.c.l.b16 %v7951
    %v8710 = vunpack.c.h.b16 %v7951
    %v8711 = vunpack.c.l.b16 %v7952
    %v8712 = vunpack.c.h.b16 %v7952
    %v8713 = vunpack.c.l.b16 %v7953
    %v8714 = vunpack.c.h.b16 %v7953
    %v8715 = vunpack.c.l.b16 %v7954
    %v8716 = vunpack.c.h.b16 %v7954
    %v8717 = vunpack.c.l.b16 %v7955
    %v8718 = vunpack.c.h.b16 %v7955
    %v8719 = vunpack.c.l.b16 %v7956
    %v8720 = vunpack.c.h.b16 %v7956
    %v8721 = vunpack.c.l.b16 %v7957
    %v8722 = vunpack.c.h.b16 %v7957
    %v8723 = vunpack.c.l.b16 %v7958
    %v8724 = vunpack.c.h.b16 %v7958
    %v8725 = vunpack.c.l.b16 %v7959
    %v8726 = vunpack.c.h.b16 %v7959
    %v8727 = vunpack.c.l.b16 %v7960
    %v8728 = vunpack.c.h.b16 %v7960
    %v8729 = vunpack.c.l.b16 %v7961
    %v8730 = vunpack.c.h.b16 %v7961
    %v8731 = vunpack.c.l.b16 %v7962
    %v8732 = vunpack.c.h.b16 %v7962
    %v8733 = vunpack.c.l.b16 %v7963
    %v8734 = vunpack.c.h.b16 %v7963
    %v8735 = vunpack.c.l.b16 %v7964
    %v8736 = vunpack.c.h.b16 %v7964
    %v8737 = vunpack.c.l.b16 %v7965
    %v8738 = vunpack.c.h.b16 %v7965
    %v8739 = vunpack.c.l.b16 %v7966
    %v8740 = vunpack.c.h.b16 %v7966
    %v8741 = vunpack.c.l.b16 %v7967
    %v8742 = vunpack.c.h.b16 %v7967
    %v8743 = vunpack.c.l.b16 %v7968
    %v8744 = vunpack.c.h.b16 %v7968
    %v8745 = vunpack.c.l.b16 %v7969
    %v8746 = vunpack.c.h.b16 %v7969
    %v8747 = vunpack.c.l.b16 %v7970
    %v8748 = vunpack.c.h.b16 %v7970
    %v8749 = vunpack.c.l.b16 %v7971
    %v8750 = vunpack.c.h.b16 %v7971
    %v8751 = vunpack.c.l.b16 %v7972
    %v8752 = vunpack.c.h.b16 %v7972
    %v8753 = vunpack.c.l.b16 %v7973
    %v8754 = vunpack.c.h.b16 %v7973
    %v8755 = vunpack.c.l.b16 %v7974
    %v8756 = vunpack.c.h.b16 %v7974
    %v8757 = vunpack.c.l.b16 %v7975
    %v8758 = vunpack.c.h.b16 %v7975
    %v8759 = vunpack.c.l.b16 %v7976
    %v8760 = vunpack.c.h.b16 %v7976
    %v8761 = vunpack.c.l.b16 %v7977
    %v8762 = vunpack.c.h.b16 %v7977
    %v8763 = vunpack.c.l.b16 %v7978
    %v8764 = vunpack.c.h.b16 %v7978
    %v8765 = vunpack.c.l.b16 %v7979
    %v8766 = vunpack.c.h.b16 %v7979
    %v8767 = vunpack.c.l.b16 %v7980
    %v8768 = vunpack.c.h.b16 %v7980
    %v8769 = vunpack.c.l.b16 %v7981
    %v8770 = vunpack.c.h.b16 %v7981
    %v8771 = vunpack.c.l.b16 %v7982
    %v8772 = vunpack.c.h.b16 %v7982
    %v8773 = vunpack.c.l.b16 %v7983
    %v8774 = vunpack.c.h.b16 %v7983
    %v8775 = vunpack.c.l.b16 %v7984
    %v8776 = vunpack.c.h.b16 %v7984
    %v8777 = vunpack.c.l.b16 %v7985
    %v8778 = vunpack.c.h.b16 %v7985
    %v8779 = vunpack.c.l.b16 %v7986
    %v8780 = vunpack.c.h.b16 %v7986
    %v8781 = vunpack.c.l.b16 %v7987
    %v8782 = vunpack.c.h.b16 %v7987
    %v8783 = vunpack.c.l.b16 %v7988
    %v8784 = vunpack.c.h.b16 %v7988
    %v8785 = vunpack.c.l.b16 %v7989
    %v8786 = vunpack.c.h.b16 %v7989
    %v8787 = vunpack.c.l.b16 %v7990
    %v8788 = vunpack.c.h.b16 %v7990
    %v8789 = vunpack.c.l.b16 %v7991
    %v8790 = vunpack.c.h.b16 %v7991
    %v8791 = vunpack.c.l.b16 %v7992
    %v8792 = vunpack.c.h.b16 %v7992
    %v8793 = vunpack.c.l.b16 %v7993
    %v8794 = vunpack.c.h.b16 %v7993
    %v8795 = vunpack.c.l.b16 %v7994
    %v8796 = vunpack.c.h.b16 %v7994
    %v8797 = vunpack.c.l.b16 %v7995
    %v8798 = vunpack.c.h.b16 %v7995
    %v8799 = vunpack.c.l.b16 %v7996
    %v8800 = vunpack.c.h.b16 %v7996
    %v8801 = vunpack.c.l.b16 %v7997
    %v8802 = vunpack.c.h.b16 %v7997
    %v8803 = vunpack.c.l.b16 %v7998
    %v8804 = vunpack.c.h.b16 %v7998
    %v8805 = vunpack.c.l.b16 %v7999
    %v8806 = vunpack.c.h.b16 %v7999
    %v8807 = vunpack.c.l.b16 %v8000
    %v8808 = vunpack.c.h.b16 %v8000
    %v8809 = vunpack.c.l.b16 %v8001
    %v8810 = vunpack.c.h.b16 %v8001
    %v8811 = vunpack.c.l.b16 %v8002
    %v8812 = vunpack.c.h.b16 %v8002
    %v8813 = vunpack.c.l.b16 %v8003
    %v8814 = vunpack.c.h.b16 %v8003
    %v8815 = vunpack.c.l.b16 %v8004
    %v8816 = vunpack.c.h.b16 %v8004
    %v8817 = vunpack.c.l.b16 %v8005
    %v8818 = vunpack.c.h.b16 %v8005
    %v8819 = vunpack.c.l.b16 %v8006
    %v8820 = vunpack.c.h.b16 %v8006
    %v8821 = vunpack.c.l.b16 %v8007
    %v8822 = vunpack.c.h.b16 %v8007
    %v8823 = vunpack.c.l.b16 %v8008
    %v8824 = vunpack.c.h.b16 %v8008
    %v8825 = vunpack.c.l.b16 %v8009
    %v8826 = vunpack.c.h.b16 %v8009
    %v8827 = vunpack.c.l.b16 %v8010
    %v8828 = vunpack.c.h.b16 %v8010
    %v8829 = vunpack.c.l.b16 %v8011
    %v8830 = vunpack.c.h.b16 %v8011
    %v8831 = vunpack.c.l.b16 %v8012
    %v8832 = vunpack.c.h.b16 %v8012
    %v8833 = vunpack.c.l.b16 %v8013
    %v8834 = vunpack.c.h.b16 %v8013
    %v8835 = vunpack.c.l.b16 %v8014
    %v8836 = vunpack.c.h.b16 %v8014
    %v8837 = vunpack.c.l.b16 %v8015
    %v8838 = vunpack.c.h.b16 %v8015
    %v8839 = vunpack.c.l.b16 %v8016
    %v8840 = vunpack.c.h.b16 %v8016
    %v8841 = vunpack.c.l.b16 %v8017
    %v8842 = vunpack.c.h.b16 %v8017
    %v8843 = vunpack.c.l.b16 %v8018
    %v8844 = vunpack.c.h.b16 %v8018
    %v8845 = vunpack.c.l.b16 %v8019
    %v8846 = vunpack.c.h.b16 %v8019
    %v8847 = vunpack.c.l.b16 %v8020
    %v8848 = vunpack.c.h.b16 %v8020
    %v8849 = vunpack.c.l.b16 %v8021
    %v8850 = vunpack.c.h.b16 %v8021
    %v8851 = vunpack.c.l.b16 %v8022
    %v8852 = vunpack.c.h.b16 %v8022
    %v8853 = vunpack.c.l.b16 %v8023
    %v8854 = vunpack.c.h.b16 %v8023
    %v8855 = vunpack.c.l.b16 %v8024
    %v8856 = vunpack.c.h.b16 %v8024
    %v8857 = vunpack.c.l.b16 %v8025
    %v8858 = vunpack.c.h.b16 %v8025
    %v8859 = vunpack.c.l.b16 %v8026
    %v8860 = vunpack.c.h.b16 %v8026
    %v8861 = vunpack.c.l.b16 %v8027
    %v8862 = vunpack.c.h.b16 %v8027
    %v8863 = vunpack.c.l.b16 %v8028
    %v8864 = vunpack.c.h.b16 %v8028
    %v8865 = vunpack.c.l.b16 %v8029
    %v8866 = vunpack.c.h.b16 %v8029
    %v8867 = vunpack.c.l.b16 %v8030
    %v8868 = vunpack.c.h.b16 %v8030
    %v8869 = vunpack.c.l.b16 %v8031
    %v8870 = vunpack.c.h.b16 %v8031
    %v8871 = vunpack.c.l.b16 %v8032
    %v8872 = vunpack.c.h.b16 %v8032
    %v8873 = vunpack.c.l.b16 %v8033
    %v8874 = vunpack.c.h.b16 %v8033
    %v8875 = vunpack.c.l.b16 %v8034
    %v8876 = vunpack.c.h.b16 %v8034
    %v8877 = vunpack.c.l.b16 %v8035
    %v8878 = vunpack.c.h.b16 %v8035
    %v8879 = vunpack.c.l.b16 %v8036
    %v8880 = vunpack.c.h.b16 %v8036
    %v8881 = vunpack.c.l.b16 %v8037
    %v8882 = vunpack.c.h.b16 %v8037
    %v8883 = vunpack.c.l.b16 %v8038
    %v8884 = vunpack.c.h.b16 %v8038
    %v8885 = vunpack.c.l.b16 %v8039
    %v8886 = vunpack.c.h.b16 %v8039
    %v8887 = vunpack.c.l.b16 %v8040
    %v8888 = vunpack.c.h.b16 %v8040
    %v8889 = vunpack.c.l.b16 %v8041
    %v8890 = vunpack.c.h.b16 %v8041
    %v8891 = vunpack.c.l.b16 %v8042
    %v8892 = vunpack.c.h.b16 %v8042
    %v8893 = vunpack.c.l.b16 %v8043
    %v8894 = vunpack.c.h.b16 %v8043
    %v8895 = vunpack.c.l.b16 %v8044
    %v8896 = vunpack.c.h.b16 %v8044
    %v8897 = vunpack.c.l.b16 %v8045
    %v8898 = vunpack.c.h.b16 %v8045
    %v8899 = vunpack.c.l.b16 %v8046
    %v8900 = vunpack.c.h.b16 %v8046
    %v8901 = vunpack.c.l.b16 %v8047
    %v8902 = vunpack.c.h.b16 %v8047
    %v8903 = vunpack.c.l.b16 %v8048
    %v8904 = vunpack.c.h.b16 %v8048
    %v8905 = vunpack.c.l.b16 %v8049
    %v8906 = vunpack.c.h.b16 %v8049
    %v8907 = vunpack.c.l.b16 %v8050
    %v8908 = vunpack.c.h.b16 %v8050
    %v8909 = vunpack.c.l.b16 %v8051
    %v8910 = vunpack.c.h.b16 %v8051
    %v8911 = vunpack.c.l.b16 %v8052
    %v8912 = vunpack.c.h.b16 %v8052
    %v8913 = vunpack.c.l.b16 %v8053
    %v8914 = vunpack.c.h.b16 %v8053
    %v8915 = vunpack.c.l.b16 %v8054
    %v8916 = vunpack.c.h.b16 %v8054
    %v8917 = vunpack.c.l.b16 %v8055
    %v8918 = vunpack.c.h.b16 %v8055
    %v8919 = vunpack.c.l.b16 %v8056
    %v8920 = vunpack.c.h.b16 %v8056
    %v8921 = vunpack.c.l.b16 %v8057
    %v8922 = vunpack.c.h.b16 %v8057
    %v8923 = vunpack.c.l.b16 %v8058
    %v8924 = vunpack.c.h.b16 %v8058
    %v8925 = vunpack.c.l.b16 %v8059
    %v8926 = vunpack.c.h.b16 %v8059
    %v8927 = vunpack.c.l.b16 %v8060
    %v8928 = vunpack.c.h.b16 %v8060
    %v8929 = vunpack.c.l.b16 %v8061
    %v8930 = vunpack.c.h.b16 %v8061
    %v8931 = vunpack.c.l.b16 %v8062
    %v8932 = vunpack.c.h.b16 %v8062
    %v8933 = vunpack.c.l.b16 %v8063
    %v8934 = vunpack.c.h.b16 %v8063
    %v8935 = vunpack.c.l.b16 %v8064
    %v8936 = vunpack.c.h.b16 %v8064
    %v8937 = vunpack.c.l.b16 %v8065
    %v8938 = vunpack.c.h.b16 %v8065
    %v8939 = vunpack.c.l.b16 %v8066
    %v8940 = vunpack.c.h.b16 %v8066
    %v8941 = vunpack.c.l.b16 %v8067
    %v8942 = vunpack.c.h.b16 %v8067
    %v8943 = vunpack.c.l.b16 %v8068
    %v8944 = vunpack.c.h.b16 %v8068
    %v8945 = vunpack.c.l.b16 %v8069
    %v8946 = vunpack.c.h.b16 %v8069
    %v8947 = vunpack.c.l.b16 %v8070
    %v8948 = vunpack.c.h.b16 %v8070
    %v8949 = vunpack.c.l.b16 %v8071
    %v8950 = vunpack.c.h.b16 %v8071
    %v8951 = vunpack.c.l.b16 %v8072
    %v8952 = vunpack.c.h.b16 %v8072
    %v8953 = vunpack.c.l.b16 %v8073
    %v8954 = vunpack.c.h.b16 %v8073
    %v8955 = vunpack.c.l.b16 %v8074
    %v8956 = vunpack.c.h.b16 %v8074
    %v8957 = vunpack.c.l.b16 %v8075
    %v8958 = vunpack.c.h.b16 %v8075
    %v8959 = vunpack.c.l.b16 %v8076
    %v8960 = vunpack.c.h.b16 %v8076
    %v8961 = vunpack.c.l.b16 %v8077
    %v8962 = vunpack.c.h.b16 %v8077
    %v8963 = vunpack.c.l.b16 %v8078
    %v8964 = vunpack.c.h.b16 %v8078
    %v8965 = vunpack.c.l.b16 %v8079
    %v8966 = vunpack.c.h.b16 %v8079
    %v8967 = vunpack.c.l.b16 %v8080
    %v8968 = vunpack.c.h.b16 %v8080
    %v8969 = vunpack.c.l.b16 %v8081
    %v8970 = vunpack.c.h.b16 %v8081
    %v8971 = vunpack.c.l.b16 %v8082
    %v8972 = vunpack.c.h.b16 %v8082
    %v8973 = vunpack.c.l.b16 %v8083
    %v8974 = vunpack.c.h.b16 %v8083
    %v8975 = vunpack.c.l.b16 %v8084
    %v8976 = vunpack.c.h.b16 %v8084
    %v8977 = vunpack.c.l.b16 %v8085
    %v8978 = vunpack.c.h.b16 %v8085
    %v8979 = vunpack.c.l.b16 %v8086
    %v8980 = vunpack.c.h.b16 %v8086
    %v8981 = vunpack.c.l.b16 %v8087
    %v8982 = vunpack.c.h.b16 %v8087
    %v8983 = vunpack.c.l.b16 %v8088
    %v8984 = vunpack.c.h.b16 %v8088
    %v8985 = vpack.c.b16 %v8415, %v8409
    %v8986 = vpack.c.b16 %v8416, %v8410
    %v8987 = vpack.c.b16 %v8417, %v8411
    %v8988 = vpack.c.b16 %v8418, %v8412
    %v8989 = vpack.c.b16 %v8419, %v8413
    %v8990 = vpack.c.b16 %v8420, %v8414
    %v8991 = vpack.c.b16 %v8427, %v8421
    %v8992 = vpack.c.b16 %v8428, %v8422
    %v8993 = vpack.c.b16 %v8429, %v8423
    %v8994 = vpack.c.b16 %v8430, %v8424
    %v8995 = vpack.c.b16 %v8431, %v8425
    %v8996 = vpack.c.b16 %v8432, %v8426
    %v8997 = vpack.c.b16 %v8439, %v8433
    %v8998 = vpack.c.b16 %v8440, %v8434
    %v8999 = vpack.c.b16 %v8441, %v8435
    %v9000 = vpack.c.b16 %v8442, %v8436
    %v9001 = vpack.c.b16 %v8443, %v8437
    %v9002 = vpack.c.b16 %v8444, %v8438
    %v9003 = vpack.c.b16 %v8451, %v8445
    %v9004 = vpack.c.b16 %v8452, %v8446
    %v9005 = vpack.c.b16 %v8453, %v8447
    %v9006 = vpack.c.b16 %v8454, %v8448
    %v9007 = vpack.c.b16 %v8455, %v8449
    %v9008 = vpack.c.b16 %v8456, %v8450
    %v9009 = vpack.c.b16 %v8463, %v8457
    %v9010 = vpack.c.b16 %v8464, %v8458
    %v9011 = vpack.c.b16 %v8465, %v8459
    %v9012 = vpack.c.b16 %v8466, %v8460
    %v9013 = vpack.c.b16 %v8467, %v8461
    %v9014 = vpack.c.b16 %v8468, %v8462
    %v9015 = vpack.c.b16 %v8475, %v8469
    %v9016 = vpack.c.b16 %v8476, %v8470
    %v9017 = vpack.c.b16 %v8477, %v8471
    %v9018 = vpack.c.b16 %v8478, %v8472
    %v9019 = vpack.c.b16 %v8479, %v8473
    %v9020 = vpack.c.b16 %v8480, %v8474
    %v9021 = vpack.c.b16 %v8487, %v8481
    %v9022 = vpack.c.b16 %v8488, %v8482
    %v9023 = vpack.c.b16 %v8489, %v8483
    %v9024 = vpack.c.b16 %v8490, %v8484
    %v9025 = vpack.c.b16 %v8491, %v8485
    %v9026 = vpack.c.b16 %v8492, %v8486
    %v9027 = vpack.c.b16 %v8499, %v8493
    %v9028 = vpack.c.b16 %v8500, %v8494
    %v9029 = vpack.c.b16 %v8501, %v8495
    %v9030 = vpack.c.b16 %v8502, %v8496
    %v9031 = vpack.c.b16 %v8503, %v8497
    %v9032 = vpack.c.b16 %v8504, %v8498
    %v9033 = vpack.c.b16 %v8511, %v8505
    %v9034 = vpack.c.b16 %v8512, %v8506
    %v9035 = vpack.c.b16 %v8513, %v8507
    %v9036 = vpack.c.b16 %v8514, %v8508
    %v9037 = vpack.c.b16 %v8515, %v8509
    %v9038 = vpack.c.b16 %v8516, %v8510
    %v9039 = vpack.c.b16 %v8523, %v8517
    %v9040 = vpack.c.b16 %v8524, %v8518
    %v9041 = vpack.c.b16 %v8525, %v8519
    %v9042 = vpack.c.b16 %v8526, %v8520
    %v9043 = vpack.c.b16 %v8527, %v8521
    %v9044 = vpack.c.b16 %v8528, %v8522
    %v9045 = vpack.c.b16 %v8535, %v8529
    %v9046 = vpack.c.b16 %v8536, %v8530
    %v9047 = vpack.c.b16 %v8537, %v8531
    %v9048 = vpack.c.b16 %v8538, %v8532
    %v9049 = vpack.c.b16 %v8539, %v8533
    %v9050 = vpack.c.b16 %v8540, %v8534
    %v9051 = vpack.c.b16 %v8547, %v8541
    %v9052 = vpack.c.b16 %v8548, %v8542
    %v9053 = vpack.c.b16 %v8549, %v8543
    %v9054 = vpack.c.b16 %v8550, %v8544
    %v9055 = vpack.c.b16 %v8551, %v8545
    %v9056 = vpack.c.b16 %v8552, %v8546
    %v9057 = vpack.c.b16 %v8559, %v8553
    %v9058 = vpack.c.b16 %v8560, %v8554
    %v9059 = vpack.c.b16 %v8561, %v8555
    %v9060 = vpack.c.b16 %v8562, %v8556
    %v9061 = vpack.c.b16 %v8563, %v8557
    %v9062 = vpack.c.b16 %v8564, %v8558
    %v9063 = vpack.c.b16 %v8571, %v8565
    %v9064 = vpack.c.b16 %v8572, %v8566
    %v9065 = vpack.c.b16 %v8573, %v8567
    %v9066 = vpack.c.b16 %v8574, %v8568
    %v9067 = vpack.c.b16 %v8575, %v8569
    %v9068 = vpack.c.b16 %v8576, %v8570
    %v9069 = vpack.c.b16 %v8583, %v8577
    %v9070 = vpack.c.b16 %v8584, %v8578
    %v9071 = vpack.c.b16 %v8585, %v8579
    %v9072 = vpack.c.b16 %v8586, %v8580
    %v9073 = vpack.c.b16 %v8587, %v8581
    %v9074 = vpack.c.b16 %v8588, %v8582
    %v9075 = vpack.c.b16 %v8595, %v8589
    %v9076 = vpack.c.b16 %v8596, %v8590
    %v9077 = vpack.c.b16 %v8597, %v8591
    %v9078 = vpack.c.b16 %v8598, %v8592
    %v9079 = vpack.c.b16 %v8599, %v8593
    %v9080 = vpack.c.b16 %v8600, %v8594
    %v9081 = vpack.c.b16 %v8607, %v8601
    %v9082 = vpack.c.b16 %v8608, %v8602
    %v9083 = vpack.c.b16 %v8609, %v8603
    %v9084 = vpack.c.b16 %v8610, %v8604
    %v9085 = vpack.c.b16 %v8611, %v8605
    %v9086 = vpack.c.b16 %v8612, %v8606
    %v9087 = vpack.c.b16 %v8619, %v8613
    %v9088 = vpack.c.b16 %v8620, %v8614
    %v9089 = vpack.c.b16 %v8621, %v8615
    %v9090 = vpack.c.b16 %v8622, %v8616
    %v9091 = vpack.c.b16 %v8623, %v8617
    %v9092 = vpack.c.b16 %v8624, %v8618
    %v9093 = vpack.c.b16 %v8631, %v8625
    %v9094 = vpack.c.b16 %v8632, %v8626
    %v9095 = vpack.c.b16 %v8633, %v8627
    %v9096 = vpack.c.b16 %v8634, %v8628
    %v9097 = vpack.c.b16 %v8635, %v8629
    %v9098 = vpack.c.b16 %v8636, %v8630
    %v9099 = vpack.c.b16 %v8643, %v8637
    %v9100 = vpack.c.b16 %v8644, %v8638
    %v9101 = vpack.c.b16 %v8645, %v8639
    %v9102 = vpack.c.b16 %v8646, %v8640
    %v9103 = vpack.c.b16 %v8647, %v8641
    %v9104 = vpack.c.b16 %v8648, %v8642
    %v9105 = vpack.c.b16 %v8655, %v8649
    %v9106 = vpack.c.b16 %v8656, %v8650
    %v9107 = vpack.c.b16 %v8657, %v8651
    %v9108 = vpack.c.b16 %v8658, %v8652
    %v9109 = vpack.c.b16 %v8659, %v8653
    %v9110 = vpack.c.b16 %v8660, %v8654
    %v9111 = vpack.c.b16 %v8667, %v8661
    %v9112 = vpack.c.b16 %v8668, %v8662
    %v9113 = vpack.c.b16 %v8669, %v8663
    %v9114 = vpack.c.b16 %v8670, %v8664
    %v9115 = vpack.c.b16 %v8671, %v8665
    %v9116 = vpack.c.b16 %v8672, %v8666
    %v9117 = vpack.c.b16 %v8679, %v8673
    %v9118 = vpack.c.b16 %v8680, %v8674
    %v9119 = vpack.c.b16 %v8681, %v8675
    %v9120 = vpack.c.b16 %v8682, %v8676
    %v9121 = vpack.c.b16 %v8683, %v8677
    %v9122 = vpack.c.b16 %v8684, %v8678
    %v9123 = vpack.c.b16 %v8691, %v8685
    %v9124 = vpack.c.b16 %v8692, %v8686
    %v9125 = vpack.c.b16 %v8693, %v8687
    %v9126 = vpack.c.b16 %v8694, %v8688
    %v9127 = vpack.c.b16 %v8695, %v8689
    %v9128 = vpack.c.b16 %v8696, %v8690
    %v9129 = vpack.c.b16 %v8703, %v8697
    %v9130 = vpack.c.b16 %v8704, %v8698
    %v9131 = vpack.c.b16 %v8705, %v8699
    %v9132 = vpack.c.b16 %v8706, %v8700
    %v9133 = vpack.c.b16 %v8707, %v8701
    %v9134 = vpack.c.b16 %v8708, %v8702
    %v9135 = vpack.c.b16 %v8715, %v8709
    %v9136 = vpack.c.b16 %v8716, %v8710
    %v9137 = vpack.c.b16 %v8717, %v8711
    %v9138 = vpack.c.b16 %v8718, %v8712
    %v9139 = vpack.c.b16 %v8719, %v8713
    %v9140 = vpack.c.b16 %v8720, %v8714
    %v9141 = vpack.c.b16 %v8727, %v8721
    %v9142 = vpack.c.b16 %v8728, %v8722
    %v9143 = vpack.c.b16 %v8729, %v8723
    %v9144 = vpack.c.b16 %v8730, %v8724
    %v9145 = vpack.c.b16 %v8731, %v8725
    %v9146 = vpack.c.b16 %v8732, %v8726
    %v9147 = vpack.c.b16 %v8739, %v8733
    %v9148 = vpack.c.b16 %v8740, %v8734
    %v9149 = vpack.c.b16 %v8741, %v8735
    %v9150 = vpack.c.b16 %v8742, %v8736
    %v9151 = vpack.c.b16 %v8743, %v8737
    %v9152 = vpack.c.b16 %v8744, %v8738
    %v9153 = vpack.c.b16 %v8751, %v8745
    %v9154 = vpack.c.b16 %v8752, %v8746
    %v9155 = vpack.c.b16 %v8753, %v8747
    %v9156 = vpack.c.b16 %v8754, %v8748
    %v9157 = vpack.c.b16 %v8755, %v8749
    %v9158 = vpack.c.b16 %v8756, %v8750
    %v9159 = vpack.c.b16 %v8763, %v8757
    %v9160 = vpack.c.b16 %v8764, %v8758
    %v9161 = vpack.c.b16 %v8765, %v8759
    %v9162 = vpack.c.b16 %v8766, %v8760
    %v9163 = vpack.c.b16 %v8767, %v8761
    %v9164 = vpack.c.b16 %v8768, %v8762
    %v9165 = vpack.c.b16 %v8775, %v8769
    %v9166 = vpack.c.b16 %v8776, %v8770
    %v9167 = vpack.c.b16 %v8777, %v8771
    %v9168 = vpack.c.b16 %v8778, %v8772
    %v9169 = vpack.c.b16 %v8779, %v8773
    %v9170 = vpack.c.b16 %v8780, %v8774
    %v9171 = vpack.c.b16 %v8787, %v8781
    %v9172 = vpack.c.b16 %v8788, %v8782
    %v9173 = vpack.c.b16 %v8789, %v8783
    %v9174 = vpack.c.b16 %v8790, %v8784
    %v9175 = vpack.c.b16 %v8791, %v8785
    %v9176 = vpack.c.b16 %v8792, %v8786
    %v9177 = vpack.c.b16 %v8799, %v8793
    %v9178 = vpack.c.b16 %v8800, %v8794
    %v9179 = vpack.c.b16 %v8801, %v8795
    %v9180 = vpack.c.b16 %v8802, %v8796
    %v9181 = vpack.c.b16 %v8803, %v8797
    %v9182 = vpack.c.b16 %v8804, %v8798
    %v9183 = vpack.c.b16 %v8811, %v8805
    %v9184 = vpack.c.b16 %v8812, %v8806
    %v9185 = vpack.c.b16 %v8813, %v8807
    %v9186 = vpack.c.b16 %v8814, %v8808
    %v9187 = vpack.c.b16 %v8815, %v8809
    %v9188 = vpack.c.b16 %v8816, %v8810
    %v9189 = vpack.c.b16 %v8823, %v8817
    %v9190 = vpack.c.b16 %v8824, %v8818
    %v9191 = vpack.c.b16 %v8825, %v8819
    %v9192 = vpack.c.b16 %v8826, %v8820
    %v9193 = vpack.c.b16 %v8827, %v8821
    %v9194 = vpack.c.b16 %v8828, %v8822
    %v9195 = vpack.c.b16 %v8835, %v8829
    %v9196 = vpack.c.b16 %v8836, %v8830
    %v9197 = vpack.c.b16 %v8837, %v8831
    %v9198 = vpack.c.b16 %v8838, %v8832
    %v9199 = vpack.c.b16 %v8839, %v8833
    %v9200 = vpack.c.b16 %v8840, %v8834
    %v9201 = vpack.c.b16 %v8847, %v8841
    %v9202 = vpack.c.b16 %v8848, %v8842
    %v9203 = vpack.c.b16 %v8849, %v8843
    %v9204 = vpack.c.b16 %v8850, %v8844
    %v9205 = vpack.c.b16 %v8851, %v8845
    %v9206 = vpack.c.b16 %v8852, %v8846
    %v9207 = vpack.c.b16 %v8859, %v8853
    %v9208 = vpack.c.b16 %v8860, %v8854
    %v9209 = vpack.c.b16 %v8861, %v8855
    %v9210 = vpack.c.b16 %v8862, %v8856
    %v9211 = vpack.c.b16 %v8863, %v8857
    %v9212 = vpack.c.b16 %v8864, %v8858
    %v9213 = vpack.c.b16 %v8871, %v8865
    %v9214 = vpack.c.b16 %v8872, %v8866
    %v9215 = vpack.c.b16 %v8873, %v8867
    %v9216 = vpack.c.b16 %v8874, %v8868
    %v9217 = vpack.c.b16 %v8875, %v8869
    %v9218 = vpack.c.b16 %v8876, %v8870
    %v9219 = vpack.c.b16 %v8883, %v8877
    %v9220 = vpack.c.b16 %v8884, %v8878
    %v9221 = vpack.c.b16 %v8885, %v8879
    %v9222 = vpack.c.b16 %v8886, %v8880
    %v9223 = vpack.c.b16 %v8887, %v8881
    %v9224 = vpack.c.b16 %v8888, %v8882
    %v9225 = vpack.c.b16 %v8895, %v8889
    %v9226 = vpack.c.b16 %v8896, %v8890
    %v9227 = vpack.c.b16 %v8897, %v8891
    %v9228 = vpack.c.b16 %v8898, %v8892
    %v9229 = vpack.c.b16 %v8899, %v8893
    %v9230 = vpack.c.b16 %v8900, %v8894
    %v9231 = vpack.c.b16 %v8907, %v8901
    %v9232 = vpack.c.b16 %v8908, %v8902
    %v9233 = vpack.c.b16 %v8909, %v8903
    %v9234 = vpack.c.b16 %v8910, %v8904
    %v9235 = vpack.c.b16 %v8911, %v8905
    %v9236 = vpack.c.b16 %v8912, %v8906
    %v9237 = vpack.c.b16 %v8919, %v8913
    %v9238 = vpack.c.b16 %v8920, %v8914
    %v9239 = vpack.c.b16 %v8921, %v8915
    %v9240 = vpack.c.b16 %v8922, %v8916
    %v9241 = vpack.c.b16 %v8923, %v8917
    %v9242 = vpack.c.b16 %v8924, %v8918
    %v9243 = vpack.c.b16 %v8931, %v8925
    %v9244 = vpack.c.b16 %v8932, %v8926
    %v9245 = vpack.c.b16 %v8933, %v8927
    %v9246 = vpack.c.b16 %v8934, %v8928
    %v9247 = vpack.c.b16 %v8935, %v8929
    %v9248 = vpack.c.b16 %v8936, %v8930
    %v9249 = vpack.c.b16 %v8943, %v8937
    %v9250 = vpack.c.b16 %v8944, %v8938
    %v9251 = vpack.c.b16 %v8945, %v8939
    %v9252 = vpack.c.b16 %v8946, %v8940
    %v9253 = vpack.c.b16 %v8947, %v8941
    %v9254 = vpack.c.b16 %v8948, %v8942
    %v9255 = vpack.c.b16 %v8955, %v8949
    %v9256 = vpack.c.b16 %v8956, %v8950
    %v9257 = vpack.c.b16 %v8957, %v8951
    %v9258 = vpack.c.b16 %v8958, %v8952
    %v9259 = vpack.c.b16 %v8959, %v8953
    %v9260 = vpack.c.b16 %v8960, %v8954
    %v9261 = vpack.c.b16 %v8967, %v8961
    %v9262 = vpack.c.b16 %v8968, %v8962
    %v9263 = vpack.c.b16 %v8969, %v8963
    %v9264 = vpack.c.b16 %v8970, %v8964
    %v9265 = vpack.c.b16 %v8971, %v8965
    %v9266 = vpack.c.b16 %v8972, %v8966
    %v9267 = vpack.c.b16 %v8979, %v8973
    %v9268 = vpack.c.b16 %v8980, %v8974
    %v9269 = vpack.c.b16 %v8981, %v8975
    %v9270 = vpack.c.b16 %v8982, %v8976
    %v9271 = vpack.c.b16 %v8983, %v8977
    %v9272 = vpack.c.b16 %v8984, %v8978
    %9561 = vmatprep.subr.bf16.mxu0 %v8986
    %9562 = vmatpush1.bf16.msra.mxu0 %v8985
    %9563 = vmatprep.subr.bf16.mxu0 %v8992
    %9564 = vmatpush1.bf16.msra.mxu0 %v8991
    %9565 = vmatprep.subr.bf16.mxu0 %v8998
    %9566 = vmatpush1.bf16.msra.mxu0 %v8997
    %9567 = vmatprep.subr.bf16.mxu0 %v9004
    %9568 = vmatpush1.bf16.msra.mxu0 %v9003
    %9569 = vmatprep.subr.bf16.mxu0 %v9010
    %9570 = vmatpush1.bf16.msra.mxu0 %v9009
    %9571 = vmatprep.subr.bf16.mxu0 %v9016
    %9572 = vmatpush1.bf16.msra.mxu0 %v9015
    %9573 = vmatprep.subr.bf16.mxu0 %v9022
    %9574 = vmatpush1.bf16.msra.mxu0 %v9021
    %9575 = vmatprep.subr.bf16.mxu0 %v9028
    %9576 = vmatpush1.bf16.msra.mxu0 %v9027
    %9577 = vmatprep.subr.bf16.mxu0 %v9034
    %9578 = vmatpush1.bf16.msra.mxu0 %v9033
    %9579 = vmatprep.subr.bf16.mxu0 %v9040
    %9580 = vmatpush1.bf16.msra.mxu0 %v9039
    %9581 = vmatprep.subr.bf16.mxu0 %v9046
    %9582 = vmatpush1.bf16.msra.mxu0 %v9045
    %9583 = vmatprep.subr.bf16.mxu0 %v9052
    %9584 = vmatpush1.bf16.msra.mxu0 %v9051
    %9585 = vmatprep.subr.bf16.mxu0 %v9058
    %9586 = vmatpush1.bf16.msra.mxu0 %v9057
    %9587 = vmatprep.subr.bf16.mxu0 %v9064
    %9588 = vmatpush1.bf16.msra.mxu0 %v9063
    %9589 = vmatprep.subr.bf16.mxu0 %v9070
    %9590 = vmatpush1.bf16.msra.mxu0 %v9069
    %9591 = vmatprep.subr.bf16.mxu0 %v9076
    %9592 = vmatpush1.bf16.msra.mxu0 %v9075
    %9593 = vmatprep.mubr.bf16.mxu0 %v7796
    %9594 = vmatmul.mubr.bf16.gmra.mrb[0].mxu0 %v7795
    %v9595 = vpop.f32.mrb[0].mxu0
    %v9596 = vadd.f32 %v8094, %v9595
    %v9597 = vpop.f32.mrb[0].mxu0
    %v9598 = vadd.f32 %v8098, %v9597
    %v9599 = vpop.f32.mrb[0].mxu0
    %v9600 = vadd.f32 %v8094, %v9599
    %v9601 = vpop.f32.mrb[0].mxu0
    %v9602 = vadd.f32 %v8098, %v9601
    %9603 = vdwg.mxu0
    %9604 = vmatprep.subr.bf16.mxu0 %v9082
    %9605 = vmatpush1.bf16.msra.mxu0 %v9081
    %9606 = vmatprep.subr.bf16.mxu0 %v9088
    %9607 = vmatpush1.bf16.msra.mxu0 %v9087
    %9608 = vmatprep.subr.bf16.mxu0 %v9094
    %9609 = vmatpush1.bf16.msra.mxu0 %v9093
    %9610 = vmatprep.subr.bf16.mxu0 %v9100
    %9611 = vmatpush1.bf16.msra.mxu0 %v9099
    %9612 = vmatprep.subr.bf16.mxu0 %v9106
    %9613 = vmatpush1.bf16.msra.mxu0 %v9105
    %9614 = vmatprep.subr.bf16.mxu0 %v9112
    %9615 = vmatpush1.bf16.msra.mxu0 %v9111
    %9616 = vmatprep.subr.bf16.mxu0 %v9118
    %9617 = vmatpush1.bf16.msra.mxu0 %v9117
    %9618 = vmatprep.subr.bf16.mxu0 %v9124
    %9619 = vmatpush1.bf16.msra.mxu0 %v9123
    %9620 = vmatprep.subr.bf16.mxu0 %v9130
    %9621 = vmatpush1.bf16.msra.mxu0 %v9129
    %9622 = vmatprep.subr.bf16.mxu0 %v9136
    %9623 = vmatpush1.bf16.msra.mxu0 %v9135
    %9624 = vmatprep.subr.bf16.mxu0 %v9142
    %9625 = vmatpush1.bf16.msra.mxu0 %v9141
    %9626 = vmatprep.subr.bf16.mxu0 %v9148
    %9627 = vmatpush1.bf16.msra.mxu0 %v9147
    %9628 = vmatprep.subr.bf16.mxu0 %v9154
    %9629 = vmatpush1.bf16.msra.mxu0 %v9153
    %9630 = vmatprep.subr.bf16.mxu0 %v9160
    %9631 = vmatpush1.bf16.msra.mxu0 %v9159
    %9632 = vmatprep.subr.bf16.mxu0 %v9166
    %9633 = vmatpush1.bf16.msra.mxu0 %v9165
    %9634 = vmatprep.subr.bf16.mxu0 %v9172
    %9635 = vmatpush1.bf16.msra.mxu0 %v9171
    %9636 = vmatprep.mubr.bf16.mxu0 %v7798
    %9637 = vmatmul.mubr.bf16.gmra.mrb[0].mxu0 %v7797
    %v9638 = vpop.f32.mrb[0].mxu0
    %v9639 = vadd.f32 %v9596, %v9638
    %v9640 = vpop.f32.mrb[0].mxu0
    %v9641 = vadd.f32 %v9598, %v9640
    %v9642 = vpop.f32.mrb[0].mxu0
    %v9643 = vadd.f32 %v9600, %v9642
    %v9644 = vpop.f32.mrb[0].mxu0
    %v9645 = vadd.f32 %v9602, %v9644
    %9646 = vdwg.mxu0
    %9647 = vmatprep.subr.bf16.mxu0 %v9178
    %9648 = vmatpush1.bf16.msra.mxu0 %v9177
    %9649 = vmatprep.subr.bf16.mxu0 %v9184
    %9650 = vmatpush1.bf16.msra.mxu0 %v9183
    %9651 = vmatprep.subr.bf16.mxu0 %v9190
    %9652 = vmatpush1.bf16.msra.mxu0 %v9189
    %9653 = vmatprep.subr.bf16.mxu0 %v9196
    %9654 = vmatpush1.bf16.msra.mxu0 %v9195
    %9655 = vmatprep.subr.bf16.mxu0 %v9202
    %9656 = vmatpush1.bf16.msra.mxu0 %v9201
    %9657 = vmatprep.subr.bf16.mxu0 %v9208
    %9658 = vmatpush1.bf16.msra.mxu0 %v9207
    %9659 = vmatprep.subr.bf16.mxu0 %v9214
    %9660 = vmatpush1.bf16.msra.mxu0 %v9213
    %9661 = vmatprep.subr.bf16.mxu0 %v9220
    %9662 = vmatpush1.bf16.msra.mxu0 %v9219
    %9663 = vmatprep.subr.bf16.mxu0 %v9226
    %9664 = vmatpush1.bf16.msra.mxu0 %v9225
    %9665 = vmatprep.subr.bf16.mxu0 %v9232
    %9666 = vmatpush1.bf16.msra.mxu0 %v9231
    %9667 = vmatprep.subr.bf16.mxu0 %v9238
    %9668 = vmatpush1.bf16.msra.mxu0 %v9237
    %9669 = vmatprep.subr.bf16.mxu0 %v9244
    %9670 = vmatpush1.bf16.msra.mxu0 %v9243
    %9671 = vmatprep.subr.bf16.mxu0 %v9250
    %9672 = vmatpush1.bf16.msra.mxu0 %v9249
    %9673 = vmatprep.subr.bf16.mxu0 %v9256
    %9674 = vmatpush1.bf16.msra.mxu0 %v9255
    %9675 = vmatprep.subr.bf16.mxu0 %v9262
    %9676 = vmatpush1.bf16.msra.mxu0 %v9261
    %9677 = vmatprep.subr.bf16.mxu0 %v9268
    %9678 = vmatpush1.bf16.msra.mxu0 %v9267
    %9679 = vmatprep.mubr.bf16.mxu0 %v7800
    %9680 = vmatmul.mubr.bf16.gmra.mrb[0].mxu0 %v7799
    %v9681 = vpop.f32.mrb[0].mxu0
    %v9682 = vadd.f32 %v9639, %v9681
    %v9683 = vpop.f32.mrb[0].mxu0
    %v9684 = vadd.f32 %v9641, %v9683
    %v9685 = vpop.f32.mrb[0].mxu0
    %v9686 = vadd.f32 %v9643, %v9685
    %v9687 = vpop.f32.mrb[0].mxu0
    %v9688 = vadd.f32 %v9645, %v9687
    %9689 = vdwg.mxu0
    %9690 = vmatprep.subr.bf16.mxu0 %v8988
    %9691 = vmatpush1.bf16.msra.mxu0 %v8987
    %9692 = vmatprep.subr.bf16.mxu0 %v8994
    %9693 = vmatpush1.bf16.msra.mxu0 %v8993
    %9694 = vmatprep.subr.bf16.mxu0 %v9000
    %9695 = vmatpush1.bf16.msra.mxu0 %v8999
    %9696 = vmatprep.subr.bf16.mxu0 %v9006
    %9697 = vmatpush1.bf16.msra.mxu0 %v9005
    %9698 = vmatprep.subr.bf16.mxu0 %v9012
    %9699 = vmatpush1.bf16.msra.mxu0 %v9011
    %9700 = vmatprep.subr.bf16.mxu0 %v9018
    %9701 = vmatpush1.bf16.msra.mxu0 %v9017
    %9702 = vmatprep.subr.bf16.mxu0 %v9024
    %9703 = vmatpush1.bf16.msra.mxu0 %v9023
    %9704 = vmatprep.subr.bf16.mxu0 %v9030
    %9705 = vmatpush1.bf16.msra.mxu0 %v9029
    %9706 = vmatprep.subr.bf16.mxu0 %v9036
    %9707 = vmatpush1.bf16.msra.mxu0 %v9035
    %9708 = vmatprep.subr.bf16.mxu0 %v9042
    %9709 = vmatpush1.bf16.msra.mxu0 %v9041
    %9710 = vmatprep.subr.bf16.mxu0 %v9048
    %9711 = vmatpush1.bf16.msra.mxu0 %v9047
    %9712 = vmatprep.subr.bf16.mxu0 %v9054
    %9713 = vmatpush1.bf16.msra.mxu0 %v9053
    %9714 = vmatprep.subr.bf16.mxu0 %v9060
    %9715 = vmatpush1.bf16.msra.mxu0 %v9059
    %9716 = vmatprep.subr.bf16.mxu0 %v9066
    %9717 = vmatpush1.bf16.msra.mxu0 %v9065
    %9718 = vmatprep.subr.bf16.mxu0 %v9072
    %9719 = vmatpush1.bf16.msra.mxu0 %v9071
    %9720 = vmatprep.subr.bf16.mxu0 %v9078
    %9721 = vmatpush1.bf16.msra.mxu0 %v9077
    %9722 = vmatprep.mubr.bf16.mxu0 %v7796
    %9723 = vmatmul.mubr.bf16.gmra.mrb[0].mxu0 %v7795
    %v9724 = vpop.f32.mrb[0].mxu0
    %v9725 = vadd.f32 %v8102, %v9724
    %v9726 = vpop.f32.mrb[0].mxu0
    %v9727 = vadd.f32 %v8106, %v9726
    %v9728 = vpop.f32.mrb[0].mxu0
    %v9729 = vadd.f32 %v8102, %v9728
    %v9730 = vpop.f32.mrb[0].mxu0
    %v9731 = vadd.f32 %v8106, %v9730
    %9732 = vdwg.mxu0
    %9733 = vmatprep.subr.bf16.mxu0 %v9084
    %9734 = vmatpush1.bf16.msra.mxu0 %v9083
    %9735 = vmatprep.subr.bf16.mxu0 %v9090
    %9736 = vmatpush1.bf16.msra.mxu0 %v9089
    %9737 = vmatprep.subr.bf16.mxu0 %v9096
    %9738 = vmatpush1.bf16.msra.mxu0 %v9095
    %9739 = vmatprep.subr.bf16.mxu0 %v9102
    %9740 = vmatpush1.bf16.msra.mxu0 %v9101
    %9741 = vmatprep.subr.bf16.mxu0 %v9108
    %9742 = vmatpush1.bf16.msra.mxu0 %v9107
    %9743 = vmatprep.subr.bf16.mxu0 %v9114
    %9744 = vmatpush1.bf16.msra.mxu0 %v9113
    %9745 = vmatprep.subr.bf16.mxu0 %v9120
    %9746 = vmatpush1.bf16.msra.mxu0 %v9119
    %9747 = vmatprep.subr.bf16.mxu0 %v9126
    %9748 = vmatpush1.bf16.msra.mxu0 %v9125
    %9749 = vmatprep.subr.bf16.mxu0 %v9132
    %9750 = vmatpush1.bf16.msra.mxu0 %v9131
    %9751 = vmatprep.subr.bf16.mxu0 %v9138
    %9752 = vmatpush1.bf16.msra.mxu0 %v9137
    %9753 = vmatprep.subr.bf16.mxu0 %v9144
    %9754 = vmatpush1.bf16.msra.mxu0 %v9143
    %9755 = vmatprep.subr.bf16.mxu0 %v9150
    %9756 = vmatpush1.bf16.msra.mxu0 %v9149
    %9757 = vmatprep.subr.bf16.mxu0 %v9156
    %9758 = vmatpush1.bf16.msra.mxu0 %v9155
    %9759 = vmatprep.subr.bf16.mxu0 %v9162
    %9760 = vmatpush1.bf16.msra.mxu0 %v9161
    %9761 = vmatprep.subr.bf16.mxu0 %v9168
    %9762 = vmatpush1.bf16.msra.mxu0 %v9167
    %9763 = vmatprep.subr.bf16.mxu0 %v9174
    %9764 = vmatpush1.bf16.msra.mxu0 %v9173
    %9765 = vmatprep.mubr.bf16.mxu0 %v7798
    %9766 = vmatmul.mubr.bf16.gmra.mrb[0].mxu0 %v7797
    %v9767 = vpop.f32.mrb[0].mxu0
    %v9768 = vadd.f32 %v9725, %v9767
    %v9769 = vpop.f32.mrb[0].mxu0
    %v9770 = vadd.f32 %v9727, %v9769
    %v9771 = vpop.f32.mrb[0].mxu0
    %v9772 = vadd.f32 %v9729, %v9771
    %v9773 = vpop.f32.mrb[0].mxu0
    %v9774 = vadd.f32 %v9731, %v9773
    %9775 = vdwg.mxu0
    %9776 = vmatprep.subr.bf16.mxu0 %v9180
    %9777 = vmatpush1.bf16.msra.mxu0 %v9179
    %9778 = vmatprep.subr.bf16.mxu0 %v9186
    %9779 = vmatpush1.bf16.msra.mxu0 %v9185
    %9780 = vmatprep.subr.bf16.mxu0 %v9192
    %9781 = vmatpush1.bf16.msra.mxu0 %v9191
    %9782 = vmatprep.subr.bf16.mxu0 %v9198
    %9783 = vmatpush1.bf16.msra.mxu0 %v9197
    %9784 = vmatprep.subr.bf16.mxu0 %v9204
    %9785 = vmatpush1.bf16.msra.mxu0 %v9203
    %9786 = vmatprep.subr.bf16.mxu0 %v9210
    %9787 = vmatpush1.bf16.msra.mxu0 %v9209
    %9788 = vmatprep.subr.bf16.mxu0 %v9216
    %9789 = vmatpush1.bf16.msra.mxu0 %v9215
    %9790 = vmatprep.subr.bf16.mxu0 %v9222
    %9791 = vmatpush1.bf16.msra.mxu0 %v9221
    %9792 = vmatprep.subr.bf16.mxu0 %v9228
    %9793 = vmatpush1.bf16.msra.mxu0 %v9227
    %9794 = vmatprep.subr.bf16.mxu0 %v9234
    %9795 = vmatpush1.bf16.msra.mxu0 %v9233
    %9796 = vmatprep.subr.bf16.mxu0 %v9240
    %9797 = vmatpush1.bf16.msra.mxu0 %v9239
    %9798 = vmatprep.subr.bf16.mxu0 %v9246
    %9799 = vmatpush1.bf16.msra.mxu0 %v9245
    %9800 = vmatprep.subr.bf16.mxu0 %v9252
    %9801 = vmatpush1.bf16.msra.mxu0 %v9251
    %9802 = vmatprep.subr.bf16.mxu0 %v9258
    %9803 = vmatpush1.bf16.msra.mxu0 %v9257
    %9804 = vmatprep.subr.bf16.mxu0 %v9264
    %9805 = vmatpush1.bf16.msra.mxu0 %v9263
    %9806 = vmatprep.subr.bf16.mxu0 %v9270
    %9807 = vmatpush1.bf16.msra.mxu0 %v9269
    %9808 = vmatprep.mubr.bf16.mxu0 %v7800
    %9809 = vmatmul.mubr.bf16.gmra.mrb[0].mxu0 %v7799
    %v9810 = vpop.f32.mrb[0].mxu0
    %v9811 = vadd.f32 %v9768, %v9810
    %v9812 = vpop.f32.mrb[0].mxu0
    %v9813 = vadd.f32 %v9770, %v9812
    %v9814 = vpop.f32.mrb[0].mxu0
    %v9815 = vadd.f32 %v9772, %v9814
    %v9816 = vpop.f32.mrb[0].mxu0
    %v9817 = vadd.f32 %v9774, %v9816
    %9818 = vdwg.mxu0
    %9819 = vmatprep.subr.bf16.mxu0 %v8990
    %9820 = vmatpush1.bf16.msra.mxu0 %v8989
    %9821 = vmatprep.subr.bf16.mxu0 %v8996
    %9822 = vmatpush1.bf16.msra.mxu0 %v8995
    %9823 = vmatprep.subr.bf16.mxu0 %v9002
    %9824 = vmatpush1.bf16.msra.mxu0 %v9001
    %9825 = vmatprep.subr.bf16.mxu0 %v9008
    %9826 = vmatpush1.bf16.msra.mxu0 %v9007
    %9827 = vmatprep.subr.bf16.mxu0 %v9014
    %9828 = vmatpush1.bf16.msra.mxu0 %v9013
    %9829 = vmatprep.subr.bf16.mxu0 %v9020
    %9830 = vmatpush1.bf16.msra.mxu0 %v9019
    %9831 = vmatprep.subr.bf16.mxu0 %v9026
    %9832 = vmatpush1.bf16.msra.mxu0 %v9025
    %9833 = vmatprep.subr.bf16.mxu0 %v9032
    %9834 = vmatpush1.bf16.msra.mxu0 %v9031
    %9835 = vmatprep.subr.bf16.mxu0 %v9038
    %9836 = vmatpush1.bf16.msra.mxu0 %v9037
    %9837 = vmatprep.subr.bf16.mxu0 %v9044
    %9838 = vmatpush1.bf16.msra.mxu0 %v9043
    %9839 = vmatprep.subr.bf16.mxu0 %v9050
    %9840 = vmatpush1.bf16.msra.mxu0 %v9049
    %9841 = vmatprep.subr.bf16.mxu0 %v9056
    %9842 = vmatpush1.bf16.msra.mxu0 %v9055
    %9843 = vmatprep.subr.bf16.mxu0 %v9062
    %9844 = vmatpush1.bf16.msra.mxu0 %v9061
    %9845 = vmatprep.subr.bf16.mxu0 %v9068
    %9846 = vmatpush1.bf16.msra.mxu0 %v9067
    %9847 = vmatprep.subr.bf16.mxu0 %v9074
    %9848 = vmatpush1.bf16.msra.mxu0 %v9073
    %9849 = vmatprep.subr.bf16.mxu0 %v9080
    %9850 = vmatpush1.bf16.msra.mxu0 %v9079
    %9851 = vmatprep.mubr.bf16.mxu0 %v7796
    %9852 = vmatmul.mubr.bf16.gmra.mrb[0].mxu0 %v7795
    %v9853 = vpop.f32.mrb[0].mxu0
    %v9854 = vadd.f32 %v8110, %v9853
    %v9855 = vpop.f32.mrb[0].mxu0
    %v9856 = vadd.f32 %v8114, %v9855
    %v9857 = vpop.f32.mrb[0].mxu0
    %v9858 = vadd.f32 %v8110, %v9857
    %v9859 = vpop.f32.mrb[0].mxu0
    %v9860 = vadd.f32 %v8114, %v9859
    %9861 = vdwg.mxu0
    %9862 = vmatprep.subr.bf16.mxu0 %v9086
    %9863 = vmatpush1.bf16.msra.mxu0 %v9085
    %9864 = vmatprep.subr.bf16.mxu0 %v9092
    %9865 = vmatpush1.bf16.msra.mxu0 %v9091
    %9866 = vmatprep.subr.bf16.mxu0 %v9098
    %9867 = vmatpush1.bf16.msra.mxu0 %v9097
    %9868 = vmatprep.subr.bf16.mxu0 %v9104
    %9869 = vmatpush1.bf16.msra.mxu0 %v9103
    %9870 = vmatprep.subr.bf16.mxu0 %v9110
    %9871 = vmatpush1.bf16.msra.mxu0 %v9109
    %9872 = vmatprep.subr.bf16.mxu0 %v9116
    %9873 = vmatpush1.bf16.msra.mxu0 %v9115
    %9874 = vmatprep.subr.bf16.mxu0 %v9122
    %9875 = vmatpush1.bf16.msra.mxu0 %v9121
    %9876 = vmatprep.subr.bf16.mxu0 %v9128
    %9877 = vmatpush1.bf16.msra.mxu0 %v9127
    %9878 = vmatprep.subr.bf16.mxu0 %v9134
    %9879 = vmatpush1.bf16.msra.mxu0 %v9133
    %9880 = vmatprep.subr.bf16.mxu0 %v9140
    %9881 = vmatpush1.bf16.msra.mxu0 %v9139
    %9882 = vmatprep.subr.bf16.mxu0 %v9146
    %9883 = vmatpush1.bf16.msra.mxu0 %v9145
    %9884 = vmatprep.subr.bf16.mxu0 %v9152
    %9885 = vmatpush1.bf16.msra.mxu0 %v9151
    %9886 = vmatprep.subr.bf16.mxu0 %v9158
    %9887 = vmatpush1.bf16.msra.mxu0 %v9157
    %9888 = vmatprep.subr.bf16.mxu0 %v9164
    %9889 = vmatpush1.bf16.msra.mxu0 %v9163
    %9890 = vmatprep.subr.bf16.mxu0 %v9170
    %9891 = vmatpush1.bf16.msra.mxu0 %v9169
    %9892 = vmatprep.subr.bf16.mxu0 %v9176
    %9893 = vmatpush1.bf16.msra.mxu0 %v9175
    %9894 = vmatprep.mubr.bf16.mxu0 %v7798
    %9895 = vmatmul.mubr.bf16.gmra.mrb[0].mxu0 %v7797
    %v9896 = vpop.f32.mrb[0].mxu0
    %v9897 = vadd.f32 %v9854, %v9896
    %v9898 = vpop.f32.mrb[0].mxu0
    %v9899 = vadd.f32 %v9856, %v9898
    %v9900 = vpop.f32.mrb[0].mxu0
    %v9901 = vadd.f32 %v9858, %v9900
    %v9902 = vpop.f32.mrb[0].mxu0
    %v9903 = vadd.f32 %v9860, %v9902
    %9904 = vdwg.mxu0
    %9905 = vmatprep.subr.bf16.mxu0 %v9182
    %9906 = vmatpush1.bf16.msra.mxu0 %v9181
    %9907 = vmatprep.subr.bf16.mxu0 %v9188
    %9908 = vmatpush1.bf16.msra.mxu0 %v9187
    %9909 = vmatprep.subr.bf16.mxu0 %v9194
    %9910 = vmatpush1.bf16.msra.mxu0 %v9193
    %9911 = vmatprep.subr.bf16.mxu0 %v9200
    %9912 = vmatpush1.bf16.msra.mxu0 %v9199
    %9913 = vmatprep.subr.bf16.mxu0 %v9206
    %9914 = vmatpush1.bf16.msra.mxu0 %v9205
    %9915 = vmatprep.subr.bf16.mxu0 %v9212
    %9916 = vmatpush1.bf16.msra.mxu0 %v9211
    %9917 = vmatprep.subr.bf16.mxu0 %v9218
    %9918 = vmatpush1.bf16.msra.mxu0 %v9217
    %9919 = vmatprep.subr.bf16.mxu0 %v9224
    %9920 = vmatpush1.bf16.msra.mxu0 %v9223
    %9921 = vmatprep.subr.bf16.mxu0 %v9230
    %9922 = vmatpush1.bf16.msra.mxu0 %v9229
    %9923 = vmatprep.subr.bf16.mxu0 %v9236
    %9924 = vmatpush1.bf16.msra.mxu0 %v9235
    %9925 = vmatprep.subr.bf16.mxu0 %v9242
    %9926 = vmatpush1.bf16.msra.mxu0 %v9241
    %9927 = vmatprep.subr.bf16.mxu0 %v9248
    %9928 = vmatpush1.bf16.msra.mxu0 %v9247
    %9929 = vmatprep.subr.bf16.mxu0 %v9254
    %9930 = vmatpush1.bf16.msra.mxu0 %v9253
    %9931 = vmatprep.subr.bf16.mxu0 %v9260
    %9932 = vmatpush1.bf16.msra.mxu0 %v9259
    %9933 = vmatprep.subr.bf16.mxu0 %v9266
    %9934 = vmatpush1.bf16.msra.mxu0 %v9265
    %9935 = vmatprep.subr.bf16.mxu0 %v9272
    %9936 = vmatpush1.bf16.msra.mxu0 %v9271
    %9937 = vmatprep.mubr.bf16.mxu0 %v7800
    %9938 = vmatmul.mubr.bf16.gmra.mrb[0].mxu0 %v7799
    %v9939 = vpop.f32.mrb[0].mxu0
    %v9940 = vadd.f32 %v9897, %v9939
    %v9941 = vpop.f32.mrb[0].mxu0
    %v9942 = vadd.f32 %v9899, %v9941
    %v9943 = vpop.f32.mrb[0].mxu0
    %v9944 = vadd.f32 %v9901, %v9943
    %v9945 = vpop.f32.mrb[0].mxu0
    %v9946 = vadd.f32 %v9903, %v9945
    %9947 = vdwg.mxu0
    %9948 = vst [vmem:[#allocation12] sm:$0xff] %v9682
    %9949 = vst [vmem:[#allocation12 + $0x8] sm:$0xff] %v9684
    %9950 = vst [vmem:[#allocation12 + $0x10] sm:$0xff] %v9811
    %9951 = vst [vmem:[#allocation12 + $0x18] sm:$0xff] %v9813
    %9952 = vst [vmem:[#allocation12 + $0x20] sm:$0xff] %v9940
    %9953 = vst [vmem:[#allocation12 + $0x28] sm:$0xff] %v9942
    %9954 = vst [vmem:[#allocation12 + $0x30] sm:$0xff] %v9686
    %9955 = vst [vmem:[#allocation12 + $0x38] sm:$0xff] %v9688
    %9956 = vst [vmem:[#allocation12 + $0x40] sm:$0xff] %v9815
    %9957 = vst [vmem:[#allocation12 + $0x48] sm:$0xff] %v9817
    %9958 = vst [vmem:[#allocation12 + $0x50] sm:$0xff] %v9944
    %9959 = vst [vmem:[#allocation12 + $0x58] sm:$0xff] %v9946
    // Predicated region
    $region42: #{tpu_custom_call.1} parent=1 // pred_check
      _
    $region43: #{tpu_custom_call.1} parent=1 // pred_check_branch
      %9961 = sbr.rel (0) target = $region45
    $region44: #{tpu_custom_call.1} parent=1 // pred_region
      %s9963 = ssub.s32 1536, 1536
      %9964 = vsyncadd [#allocation5], %s9963
      %s9965 = sshll.u32 [#allocation12], 4
      %s9966 = int_to_ptr.vmem [resolvable:$true] %s9965
      %9971 = dma.vmem_to_hbm [thread:$0]  %s9966, 1536, %s5, [#allocation5], 768, 768, 48
    $region45: #{tpu_custom_call.1} parent=1 // pred_fallthru
      _
    // Predicated region
    $region46: #{tpu_custom_call.1} parent=1 // pred_check
      _
    $region47: #{tpu_custom_call.1} parent=1 // pred_check_branch
      %9973 = sbr.rel (0) target = $region49
    $region48: #{tpu_custom_call.1} parent=1 // pred_region
      %9974 = dma.done [#allocation5], 1536
    $region49: #{tpu_custom_call.1} parent=1 // pred_fallthru
      _
    %9975 = vsyncpa [#allocation4], 1
    %9976 = vsyncpa [#allocation7], 1
    %9977 = vsyncpa [#allocation10], 1
    %9978 = vsyncpa [#allocation5], 1

</llo_original>
